<compile_context>
chip_gen: v7x
topology: tpu7x:2x2x1
jax: 0.10.0
libtpu: 0.0.40
codegen_flags: <defaults>
</compile_context>

<pallas_src>
import functools
import numpy as np

import jax
import jax.numpy as jnp
from jax.experimental import pallas as pl
from jax.experimental.pallas import tpu as pltpu

# ----------------------------- hyper-parameters ------------------------------
B = 2                 # batch_size
SEQ_LEN = 8           # pred_start / L_enc
PRED_LEN = 4          # pred_len == pred_steps
ENC_IN = 4
LAG = 1
HID = 32              # lstm_hidden_size
ENC_LAYERS = 2        # encoder lstm layers
DEC_LAYERS = 1
N_HEADS = 4
D_MODEL = 32
MARK = 4              # timeF features for freq='h'

ENC_INPUT = ENC_IN + LAG          # 5
DEC_INPUT = ENC_IN + LAG - 1      # 4
E_HEAD = D_MODEL // N_HEADS       # 8
OUT_SIZE = DEC_LAYERS * HID // N_HEADS  # 8
ENC_C = ENC_LAYERS * HID          # 64  (enc embedding c_in)
DEC_C = DEC_LAYERS * HID          # 32  (dec embedding c_in, yjqm input)
ROWS16 = B * SEQ_LEN              # 16

_VMEM = functools.partial(pl.BlockSpec, memory_space=pltpu.MemorySpace.VMEM)


# --------------- exact replica of torch .view((B, T, L*Hd)) on (T, L, B, Hd) ----------
def _enc_view_row_sources():
    """For each row r of the torch view, return the (time, layer) whose (B, HID) hidden,
    flattened row-major, forms that 64-wide row.  Verified with numpy."""
    flat = np.arange(SEQ_LEN * ENC_LAYERS * B * HID).reshape(SEQ_LEN, ENC_LAYERS, B, HID)
    view = flat.reshape(B * SEQ_LEN, ENC_LAYERS * HID)   # raw row-major reinterpretation
    srcs = []
    for r in range(B * SEQ_LEN):
        t0, l0, b0, d0 = np.unravel_index(int(view[r, 0]), flat.shape)
        assert b0 == 0 and d0 == 0 and np.array_equal(view[r], flat[t0, l0].reshape(-1)), \
            "torch .view layout assumption violated for these hyper-parameters"
        srcs.append((int(t0), int(l0)))
    return srcs


ENC_VIEW_SRC = _enc_view_row_sources()
ENC_ROW = {src: r for r, src in enumerate(ENC_VIEW_SRC)}   # (t, layer) -> view row


# ----------------------------- weight-slab layout (static) ---------------------------
SLAB_SPEC = [
    ('enc_wih0', (ENC_INPUT, 4 * HID)),
    ('enc_whh0', (HID, 4 * HID)),
    ('enc_b0', (1, 4 * HID)),
    ('enc_wih1', (HID, 4 * HID)),
    ('enc_whh1', (HID, 4 * HID)),
    ('enc_b1', (1, 4 * HID)),
    ('dec_wih', (DEC_INPUT, 4 * HID)),
    ('dec_whh', (HID, 4 * HID)),
    ('dec_b', (1, 4 * HID)),
    ('enc_conv_a', (HID, 3 * D_MODEL)),
    ('enc_conv_b', (HID, 3 * D_MODEL)),
    ('p_plus', (ROWS16, ROWS16)),
    ('p_minus', (ROWS16, ROWS16)),
    ('blk_outer', (ROWS16, ROWS16)),
    ('blk_sel', (ROWS16, B)),
    ('blk_selT', (B, ROWS16)),
    ('perm_bt16', (ROWS16, ROWS16)),
    ('enc_temp', (MARK, D_MODEL)),
    ('pe_enc16', (ROWS16, D_MODEL)),
    ('enc_nw16', (ROWS16, D_MODEL)),
    ('enc_nb16', (ROWS16, D_MODEL)),
    ('dec_conv', (DEC_C, D_MODEL)),
    ('dec_temp', (MARK, D_MODEL)),
    ('pe_dec', (1, D_MODEL)),
    ('dec_nw', (1, D_MODEL)),
    ('dec_nb', (1, D_MODEL)),
    ('head_sum', (D_MODEL, N_HEADS)),
    ('head_expand', (N_HEADS, D_MODEL)),
    ('out_bd', (D_MODEL, HID)),
    ('out_bias', (1, HID)),
    ('out_nw', (1, HID)),
    ('out_nb', (1, HID)),
    ('yj_w', (HID, 3)),
    ('yj_b', (1, 3)),
]
SLAB_W = 128


def _build_layout():
    layout = {}
    off = 0
    for name, (r, c) in SLAB_SPEC:
        layout[name] = (off, r, c)
        off += ((r + 7) // 8) * 8            # 8-sublane aligned sections
    return layout, off


LAYOUT, SLAB_ROWS = _build_layout()

# PyTorch LSTM gate order is [i, f, g, o]; the kernel wants [i, f, o, g] so one sigmoid
# covers the contiguous first 96 lanes and one tanh the last 32.
GATE_PERM = np.concatenate([np.arange(0, 2 * HID),
                            np.arange(3 * HID, 4 * HID),
                            np.arange(2 * HID, 3 * HID)])


# ------------------------------- fused Pallas kernel ---------------------------------
def fused_forward_kernel(
    # inputs
    x_enc_ref,        # (B, SEQ_LEN, ENC_INPUT)     natural layout
    xme_ref,          # (B, SEQ_LEN, MARK)          natural layout
    x_dec_ref,        # (PRED_LEN, B, DEC_INPUT)    time-major
    xmd_ref,          # (PRED_LEN, B, MARK)         time-major
    w_ref,            # (SLAB_ROWS, 128)            packed weight slab
    # outputs
    params_ref,       # (PRED_LEN*B, 3)   [lamda, sigmoid(mu), softplus(sigma)]
    nan_ref,          # (1, 1)            1.0 iff any hidden_permute value is NaN
    # scratch
    a_scr,            # (16, HID)  view rows, batch-element-0 halves
    b_scr,            # (16, HID)  view rows, batch-element-1 halves
    hp_scr,           # (PRED_LEN*B, HID) hidden_permute per step (row = t*B + b)
):
    f32 = jnp.float32

    def w(name):
        off, r, c = LAYOUT[name]
        return w_ref[pl.ds(off, r), pl.ds(0, c)]

    def gate_act(gates, c):
        # gate columns are host-side permuted to [i | f | o | g]
        sig = jax.nn.sigmoid(gates[:, 0:3 * HID])
        g = jnp.tanh(gates[:, 3 * HID:4 * HID])
        i = sig[:, 0:HID]
        f = sig[:, HID:2 * HID]
        o = sig[:, 2 * HID:3 * HID]
        c_new = f * c + i * g
        return o * jnp.tanh(c_new), c_new

    def ln_rows(x, wt, bs):
        mu = jnp.mean(x, axis=-1, keepdims=True)
        var = jnp.mean((x - mu) ** 2, axis=-1, keepdims=True)
        return (x - mu) * jax.lax.rsqrt(var + 1e-5) * wt + bs

    # ---------------- encoder LSTM: 8 steps x 2 layers, unrolled ----------------------
    # Layer-0 input projections for ALL steps in one matmul, permuted to (t, b) row
    # order with a constant selector matmul: nothing but h @ Whh sits on the recurrence.
    xe16 = x_enc_ref[...].reshape(ROWS16, ENC_INPUT)            # rows = b*T + t
    xw0 = jnp.dot(w('perm_bt16'),
                  jnp.dot(xe16, w('enc_wih0'), preferred_element_type=f32),
                  preferred_element_type=f32) + w('enc_b0')     # rows = t*B + b
    e_whh0 = w('enc_whh0')
    e_wih1 = w('enc_wih1')
    e_whh1 = w('enc_whh1')
    e_b1 = w('enc_b1')

    h0 = jnp.zeros((B, HID), f32)
    c0 = jnp.zeros((B, HID), f32)
    h1 = jnp.zeros((B, HID), f32)
    c1 = jnp.zeros((B, HID), f32)
    # TODO(synk): nn.LSTM inter-layer dropout (training mode) is treated as inactive here.
    for t in range(SEQ_LEN):
        g0 = jnp.dot(h0, e_whh0, preferred_element_type=f32) + xw0[B * t:B * (t + 1), :]
        h0, c0 = gate_act(g0, c0)
        g1 = (jnp.dot(h1, e_whh1, preferred_element_type=f32)
              + jnp.dot(h0, e_wih1, preferred_element_type=f32) + e_b1)
        h1, c1 = gate_act(g1, c1)
        # scatter into the torch `.view((B, T, L*Hd))` row layout; batch halves go to
        # separate slabs so the conv matmuls never need a 64-lane concat.
        r0 = ENC_ROW[(t, 0)]
        a_scr[pl.ds(r0, 1), :] = h0[0:1, :]
        b_scr[pl.ds(r0, 1), :] = h0[1:2, :]
        r1 = ENC_ROW[(t, 1)]
        a_scr[pl.ds(r1, 1), :] = h1[0:1, :]
        b_scr[pl.ds(r1, 1), :] = h1[1:2, :]

    a_mat = a_scr[...]                                          # (16, 32)
    b_mat = b_scr[...]                                          # (16, 32)

    # -------- encoder DataEmbedding: circular conv (k=3) + timeF linear + PE ----------
    taps = (jnp.dot(a_mat, w('enc_conv_a'), preferred_element_type=f32)
            + jnp.dot(b_mat, w('enc_conv_b'), preferred_element_type=f32))   # (16, 96)
    tap_prev = taps[:, 0:D_MODEL]
    tap_mid = taps[:, D_MODEL:2 * D_MODEL]
    tap_next = taps[:, 2 * D_MODEL:3 * D_MODEL]
    # within-batch-block circular shifts as constant permutation matmuls (MXU has slack)
    emb_tok = (tap_mid
               + jnp.dot(w('p_plus'), tap_prev, preferred_element_type=f32)
               + jnp.dot(w('p_minus'), tap_next, preferred_element_type=f32))
    xme16 = xme_ref[...].reshape(ROWS16, MARK)
    emb = (emb_tok
           + jnp.dot(xme16, w('enc_temp'), preferred_element_type=f32)
           + w('pe_enc16'))                                                  # (16, 32)

    # ---------------- enc_norm: LayerNorm over all (L_enc, H, E) per batch -------------
    blk_outer = w('blk_outer')                                  # same-block 0/1 selector
    inv_n = 1.0 / float(SEQ_LEN * D_MODEL)
    blk_row_sum = jnp.dot(blk_outer, emb, preferred_element_type=f32)
    mean = jnp.sum(blk_row_sum, axis=1, keepdims=True) * inv_n               # (16, 1)
    d = emb - mean
    blk_sq_sum = jnp.dot(blk_outer, d * d, preferred_element_type=f32)
    var = jnp.sum(blk_sq_sum, axis=1, keepdims=True) * inv_n                 # (16, 1)
    enck = d * jax.lax.rsqrt(var + 1e-5) * w('enc_nw16') + w('enc_nb16')     # keys==values

    # ----------------------------- decoder: 4 steps, unrolled -------------------------
    d_wih = w('dec_wih')
    d_whh = w('dec_whh')
    d_b = w('dec_b')
    dec_conv = w('dec_conv')
    dec_temp = w('dec_temp')
    pe_dec = w('pe_dec')
    dec_nw = w('dec_nw')
    dec_nb = w('dec_nb')
    out_nw = w('out_nw')
    out_nb = w('out_nb')
    head_sum = w('head_sum')        # (32, 4): per-head reduce, softmax scale folded in
    head_expand = w('head_expand')  # (4, 32): per-head broadcast back to lanes
    out_bd = w('out_bd')            # (32, 32): block-diagonal out_projection over heads
    out_bias = w('out_bias')
    blk_sel = w('blk_sel')          # (16, 2): broadcast per-batch query to its key rows
    blk_selT = w('blk_selT')        # (2, 16): per-batch sum over key rows

    hdec = jnp.zeros((B, HID), f32)
    cdec = jnp.zeros((B, HID), f32)
    # TODO(synk): FullAttention's attention_dropout (p=0.1, training mode) is treated as
    # inactive (eval) here.
    for t in range(PRED_LEN):
        # LSTM cell (next-step hidden is the attention output, per the reference)
        gd = (jnp.dot(hdec, d_whh, preferred_element_type=f32)
              + jnp.dot(x_dec_ref[t], d_wih, preferred_element_type=f32) + d_b)
        h_lstm, cdec = gate_act(gd, cdec)

        # decoder DataEmbedding (L_dec = 1) + dec_norm
        emb_d = (jnp.dot(h_lstm, dec_conv, preferred_element_type=f32)
                 + jnp.dot(xmd_ref[t], dec_temp, preferred_element_type=f32)
                 + pe_dec)
        q = ln_rows(emb_d, dec_nw, dec_nb)                      # (B, 32), lanes = (head, E)

        # FullAttention (mask_flag=False), all heads and both batches vectorized
        q16 = jnp.dot(blk_sel, q, preferred_element_type=f32)                # (16, 32)
        prod = q16 * enck
        scores = jnp.dot(prod, head_sum, preferred_element_type=f32)         # (16, 4)
        m = jnp.max(scores, axis=0, keepdims=True)   # global per-head stabilizer (cancels)
        p = jnp.exp(scores - m)
        denom = jnp.dot(blk_outer, p, preferred_element_type=f32)            # block sums
        attn = p / denom                                                     # softmax over S
        ctx = jnp.dot(attn, head_expand, preferred_element_type=f32) * enck  # (16, 32)
        y = jnp.dot(blk_selT, ctx, preferred_element_type=f32)               # (B, 32)

        # shared per-head out_projection as ONE block-diagonal matmul, then out_norm
        y = jnp.dot(y, out_bd, preferred_element_type=f32) + out_bias
        hdec = ln_rows(y, out_nw, out_nb)            # == hidden_permute & next dec hidden
        hp_scr[pl.ds(B * t, B), :] = hdec

    # ------------------------------ fused YJQM heads ----------------------------------
    hp_all = hp_scr[...]                                                     # (8, 32)
    pre = jnp.dot(hp_all, w('yj_w'), preferred_element_type=f32) + w('yj_b')
    col = jax.lax.broadcasted_iota(jnp.int32, pre.shape, 1)
    params_ref[...] = jnp.where(col == 0, pre,
                                jnp.where(col == 1, jax.nn.sigmoid(pre),
                                          jax.nn.softplus(pre)))

    # NaN stop-flag computed in-kernel (hidden_permute never leaves the kernel)
    nan_f = jnp.where(hp_all != hp_all, jnp.float32(1.0), jnp.float32(0.0))
    nan_ref[...] = jnp.max(jnp.max(nan_f, axis=1, keepdims=True), axis=0, keepdims=True)


def fused_forward_call(w_slab, enc_in, x_mark_enc, x_dec_t, xmd_t):
    out_shapes = (jax.ShapeDtypeStruct((PRED_LEN * B, 3), jnp.float32),
                  jax.ShapeDtypeStruct((1, 1), jnp.float32))
    return pl.pallas_call(
        fused_forward_kernel,
        out_shape=out_shapes,
        in_specs=[_VMEM()] * 5,
        out_specs=(_VMEM(), _VMEM()),
        scratch_shapes=[pltpu.VMEM((ROWS16, HID), jnp.float32),
                        pltpu.VMEM((ROWS16, HID), jnp.float32),
                        pltpu.VMEM((PRED_LEN * B, HID), jnp.float32)],
    )(enc_in, x_mark_enc, x_dec_t, xmd_t, w_slab)


# ------------------------------------ parameters -------------------------------------
def positional_embedding(length, d_model):
    position = np.arange(length, dtype=np.float32)[:, None]
    div_term = np.exp(np.arange(0, d_model, 2, dtype=np.float32)
                      * -(np.log(10000.0) / d_model))
    pe = np.zeros((length, d_model), np.float32)
    pe[:, 0::2] = np.sin(position * div_term)
    pe[:, 1::2] = np.cos(position * div_term)
    return pe


def pack_slab(pieces):
    slab = np.zeros((SLAB_ROWS, SLAB_W), np.float32)
    for name, (r, c) in SLAB_SPEC:
        off = LAYOUT[name][0]
        arr = np.asarray(pieces[name], np.float32)
        assert arr.shape == (r, c), (name, arr.shape, (r, c))
        slab[off:off + r, :c] = arr
    return jnp.asarray(slab)


def init_weights(seed=42):
    rng = np.random.default_rng(seed)

    def nrm(*shape, scale=0.1):
        return (scale * rng.standard_normal(shape)).astype(np.float32)

    p = {}

    def lstm_block(in_dim):
        w_ih = nrm(in_dim, 4 * HID)
        w_hh = nrm(HID, 4 * HID)
        bias = np.zeros((1, 4 * HID), np.float32)
        bias[:, HID:2 * HID] = 2.0   # forget-gate bias 1.0 in both b_ih and b_hh
        return w_ih[:, GATE_PERM], w_hh[:, GATE_PERM], bias[:, GATE_PERM]

    p['enc_wih0'], p['enc_whh0'], p['enc_b0'] = lstm_block(ENC_INPUT)
    p['enc_wih1'], p['enc_whh1'], p['enc_b1'] = lstm_block(HID)
    p['dec_wih'], p['dec_whh'], p['dec_b'] = lstm_block(DEC_INPUT)

    # encoder TokenEmbedding (Conv1d k=3 circular, bias=False), split into batch halves
    conv_enc = nrm(D_MODEL, ENC_C, 3)            # torch layout (out, in, k)
    p['enc_conv_a'] = np.concatenate([conv_enc[:, :HID, k].T for k in range(3)], axis=1)
    p['enc_conv_b'] = np.concatenate([conv_enc[:, HID:, k].T for k in range(3)], axis=1)

    # constant selector / permutation matrices
    rows = np.arange(ROWS16)
    blk = rows // SEQ_LEN
    t_in = rows % SEQ_LEN
    pp = np.zeros((ROWS16, ROWS16), np.float32)
    pm = np.zeros((ROWS16, ROWS16), np.float32)
    pp[rows, blk * SEQ_LEN + (t_in - 1) % SEQ_LEN] = 1.0   # out[t] = in[t-1] within block
    pm[rows, blk * SEQ_LEN + (t_in + 1) % SEQ_LEN] = 1.0   # out[t] = in[t+1] within block
    p['p_plus'] = pp
    p['p_minus'] = pm
    p['blk_outer'] = (blk[:, None] == blk[None, :]).astype(np.float32)
    p['blk_sel'] = (blk[:, None] == np.arange(B)[None, :]).astype(np.float32)
    p['blk_selT'] = p['blk_sel'].T.copy()
    perm = np.zeros((ROWS16, ROWS16), np.float32)          # (b*T + t) -> (t*B + b)
    for b_i in range(B):
        for t_i in range(SEQ_LEN):
            perm[t_i * B + b_i, b_i * SEQ_LEN + t_i] = 1.0
    p['perm_bt16'] = perm

    # encoder temporal (timeF) embedding, positional embedding, enc_norm affine (tiled)
    p['enc_temp'] = nrm(MARK, D_MODEL)
    p['pe_enc16'] = np.tile(positional_embedding(SEQ_LEN, D_MODEL), (B, 1))
    p['enc_nw16'] = np.ones((ROWS16, D_MODEL), np.float32)
    p['enc_nb16'] = np.zeros((ROWS16, D_MODEL), np.float32)

    # decoder DataEmbedding (L_dec = 1 -> circular conv taps collapse)
    conv_dec = nrm(D_MODEL, DEC_C, 3)
    p['dec_conv'] = (conv_dec[:, :, 0] + conv_dec[:, :, 1] + conv_dec[:, :, 2]).T
    p['dec_temp'] = nrm(MARK, D_MODEL)
    p['pe_dec'] = positional_embedding(1, D_MODEL)
    p['dec_nw'] = np.ones((1, D_MODEL), np.float32)
    p['dec_nb'] = np.zeros((1, D_MODEL), np.float32)
    p['out_nw'] = np.ones((1, HID), np.float32)
    p['out_nb'] = np.zeros((1, HID), np.float32)

    # attention head reduce / expand selectors (softmax 1/sqrt(E) scale folded in)
    lane = np.arange(D_MODEL)[:, None]
    head = np.arange(N_HEADS)[None, :]
    sel = (lane // E_HEAD == head).astype(np.float32)
    p['head_sum'] = sel / np.sqrt(np.float32(E_HEAD))
    p['head_expand'] = sel.T.copy()

    # out_projection Linear(E_dec, out_size), shared across heads -> block-diagonal
    out_w = nrm(E_HEAD, OUT_SIZE)
    out_b = nrm(1, OUT_SIZE)
    p['out_bd'] = np.kron(np.eye(N_HEADS, dtype=np.float32), out_w)
    p['out_bias'] = np.tile(out_b, (1, N_HEADS))

    # YJQM heads fused into one (HID, 3) matmul
    p['yj_w'] = np.concatenate([nrm(DEC_C, 1), nrm(DEC_C, 1), nrm(DEC_C, 1)], axis=1)
    p['yj_b'] = np.concatenate([nrm(1, 1), nrm(1, 1), nrm(1, 1)], axis=1)

    return pack_slab(p)


# ---------------------------------------- forward ------------------------------------
def probability_forecast_train(w_slab, enc_in, dec_in, x_mark_enc, x_mark_dec, labels):
    # encoder inputs go in natural (B, T, F) layout; only the tiny decoder-side inputs
    # are pre-transposed so the kernel can index decoder steps on the leading axis.
    x_dec_t = jnp.transpose(dec_in, (1, 0, 2))        # (Tp, B, F)
    xmd_t = jnp.transpose(x_mark_dec, (1, 0, 2))      # (Tp, B, MARK)

    params_all, nan_flag = fused_forward_call(w_slab, enc_in, x_mark_enc, x_dec_t, xmd_t)

    params = params_all.reshape(PRED_LEN, B, 3)
    lam = params[..., 0]
    mu = params[..., 1]
    sig = params[..., 2]
    loss_list = [(lam[t], mu[t], sig[t], labels[:, t]) for t in range(PRED_LEN)]
    # TODO(synk): torch breaks out of the decode loop and clears loss_list on the first
    # NaN; that data-dependent early exit is replaced by an in-kernel post-hoc NaN flag.
    stop_flag = nan_flag[0, 0] != 0.0
    return loss_list, stop_flag


def model_forward(w_slab, x_enc, x_mark_enc, x_dec, y_enc, x_mark_dec):
    # task_name == 'probability_forecast' training ("labels") path
    batch = jnp.concatenate([x_enc, y_enc[:, -PRED_LEN:, :]], axis=1)
    enc_in = batch[:, :SEQ_LEN, :]
    dec_in = batch[:, -PRED_LEN:, :-1]
    labels = batch[:, -PRED_LEN:, -1]
    return probability_forecast_train(w_slab, enc_in, dec_in, x_mark_enc, x_mark_dec,
                                      labels)


# ------------------------------------------ main -------------------------------------
if __name__ == "__main__":
    key = jax.random.PRNGKey(0)
    k1, k2, k3, k4, k5 = jax.random.split(key, 5)
    x_enc = jax.random.normal(k1, (B, SEQ_LEN, ENC_INPUT), jnp.float32)
    x_mark_enc = jax.random.normal(k2, (B, SEQ_LEN, MARK), jnp.float32)
    x_dec = jax.random.normal(k3, (B, PRED_LEN, ENC_INPUT), jnp.float32)  # unused by fwd
    y_enc = jax.random.normal(k4, (B, PRED_LEN, ENC_INPUT), jnp.float32)
    x_mark_dec = jax.random.normal(k5, (B, PRED_LEN, MARK), jnp.float32)

    w_slab = init_weights()

    fwd = jax.jit(model_forward)
    loss_list, stop_flag = fwd(w_slab, x_enc, x_mark_enc, x_dec, y_enc, x_mark_dec)
    loss_list, stop_flag = jax.tree_util.tree_map(jax.block_until_ready,
                                                  (loss_list, stop_flag))

    finite = all(bool(jnp.all(jnp.isfinite(a))) for tup in loss_list for a in tup)
    assert finite and not bool(stop_flag), "non-finite output"
    print("KERNEL_OK")
</pallas_src>

<mosaic_0001>
module attributes {stable_mosaic.version = 11 : i64} {
  func.func @fused_forward_kernel(%arg0: memref<2x8x5xf32, #tpu.memory_space<vmem>>, %arg1: memref<2x8x4xf32, #tpu.memory_space<vmem>>, %arg2: memref<4x2x4xf32, #tpu.memory_space<vmem>>, %arg3: memref<4x2x4xf32, #tpu.memory_space<vmem>>, %arg4: memref<576x128xf32, #tpu.memory_space<vmem>>, %arg5: memref<8x3xf32, #tpu.memory_space<vmem>>, %arg6: memref<1x1xf32, #tpu.memory_space<vmem>>, %arg7: memref<16x32xf32, #tpu.memory_space<vmem>>, %arg8: memref<16x32xf32, #tpu.memory_space<vmem>>, %arg9: memref<8x32xf32, #tpu.memory_space<vmem>>) attributes {dimension_semantics = [], scalar_prefetch = 0 : i64, scratch_operands = 3 : i64, tpu.core_type = #tpu.core_type<tc>} {
    %c0 = arith.constant 0 : index
    %c0_0 = arith.constant 0 : index
    %c0_1 = arith.constant 0 : index
    %0 = vector.load %arg0[%c0, %c0_0, %c0_1] : memref<2x8x5xf32, #tpu.memory_space<vmem>>, vector<2x8x5xf32>
    %1 = vector.shape_cast %0 : vector<2x8x5xf32> to vector<16x5xf32>
    %c304 = arith.constant 304 : index
    %c0_2 = arith.constant 0 : index
    %2 = vector.load %arg4[%c304, %c0_2] : memref<576x128xf32, #tpu.memory_space<vmem>>, vector<16x16xf32>
    %c0_3 = arith.constant 0 : index
    %c0_4 = arith.constant 0 : index
    %3 = vector.load %arg4[%c0_3, %c0_4] : memref<576x128xf32, #tpu.memory_space<vmem>>, vector<5x128xf32>
    %cst = arith.constant dense<0.000000e+00> : vector<16x128xf32>
    %4 = tpu.matmul %1, %3, %cst {dimension_numbers = #tpu.dot_dimension_numbers<[1], [0], [0], [1], [0, 0, 1, 1], [], []>} : vector<16x5xf32>, vector<5x128xf32>, vector<16x128xf32> -> vector<16x128xf32>
    %cst_5 = arith.constant dense<0.000000e+00> : vector<16x128xf32>
    %5 = tpu.matmul %2, %4, %cst_5 {dimension_numbers = #tpu.dot_dimension_numbers<[1], [0], [0], [1], [0, 0, 1, 1], [], []>} : vector<16x16xf32>, vector<16x128xf32>, vector<16x128xf32> -> vector<16x128xf32>
    %c40 = arith.constant 40 : index
    %c0_6 = arith.constant 0 : index
    %6 = vector.load %arg4[%c40, %c0_6] : memref<576x128xf32, #tpu.memory_space<vmem>>, vector<1x128xf32>
    %7 = vector.broadcast %6 : vector<1x128xf32> to vector<16x128xf32>
    %8 = arith.addf %5, %7 : vector<16x128xf32>
    %c8 = arith.constant 8 : index
    %c0_7 = arith.constant 0 : index
    %9 = vector.load %arg4[%c8, %c0_7] : memref<576x128xf32, #tpu.memory_space<vmem>>, vector<32x128xf32>
    %c48 = arith.constant 48 : index
    %c0_8 = arith.constant 0 : index
    %10 = vector.load %arg4[%c48, %c0_8] : memref<576x128xf32, #tpu.memory_space<vmem>>, vector<32x128xf32>
    %c80 = arith.constant 80 : index
    %c0_9 = arith.constant 0 : index
    %11 = vector.load %arg4[%c80, %c0_9] : memref<576x128xf32, #tpu.memory_space<vmem>>, vector<32x128xf32>
    %c112 = arith.constant 112 : index
    %c0_10 = arith.constant 0 : index
    %12 = vector.load %arg4[%c112, %c0_10] : memref<576x128xf32, #tpu.memory_space<vmem>>, vector<1x128xf32>
    %cst_11 = arith.constant 0.000000e+00 : f32
    %13 = vector.broadcast %cst_11 : f32 to vector<2x32xf32>
    %cst_12 = arith.constant 0.000000e+00 : f32
    %14 = vector.broadcast %cst_12 : f32 to vector<2x32xf32>
    %cst_13 = arith.constant 0.000000e+00 : f32
    %15 = vector.broadcast %cst_13 : f32 to vector<2x32xf32>
    %cst_14 = arith.constant 0.000000e+00 : f32
    %16 = vector.broadcast %cst_14 : f32 to vector<2x32xf32>
    %cst_15 = arith.constant dense<0.000000e+00> : vector<2x128xf32>
    %17 = tpu.matmul %13, %9, %cst_15 {dimension_numbers = #tpu.dot_dimension_numbers<[1], [0], [0], [1], [0, 0, 1, 1], [], []>} : vector<2x32xf32>, vector<32x128xf32>, vector<2x128xf32> -> vector<2x128xf32>
    %18 = vector.extract_strided_slice %8 {offsets = [0, 0], sizes = [2, 128], strides = [1, 1]} : vector<16x128xf32> to vector<2x128xf32>
    %19 = arith.addf %17, %18 : vector<2x128xf32>
    %20 = vector.extract_strided_slice %19 {offsets = [0, 0], sizes = [2, 96], strides = [1, 1]} : vector<2x128xf32> to vector<2x96xf32>
    %21 = arith.negf %20 : vector<2x96xf32>
    %22 = math.exp %21 : vector<2x96xf32>
    %cst_16 = arith.constant 1.000000e+00 : f32
    %23 = vector.broadcast %cst_16 : f32 to vector<2x96xf32>
    %24 = arith.addf %23, %22 : vector<2x96xf32>
    %25 = arith.divf %23, %24 : vector<2x96xf32>
    %26 = vector.extract_strided_slice %19 {offsets = [0, 96], sizes = [2, 32], strides = [1, 1]} : vector<2x128xf32> to vector<2x32xf32>
    %27 = math.tanh %26 : vector<2x32xf32>
    %28 = vector.extract_strided_slice %25 {offsets = [0, 0], sizes = [2, 32], strides = [1, 1]} : vector<2x96xf32> to vector<2x32xf32>
    %29 = vector.extract_strided_slice %25 {offsets = [0, 32], sizes = [2, 32], strides = [1, 1]} : vector<2x96xf32> to vector<2x32xf32>
    %30 = vector.extract_strided_slice %25 {offsets = [0, 64], sizes = [2, 32], strides = [1, 1]} : vector<2x96xf32> to vector<2x32xf32>
    %31 = arith.mulf %29, %14 : vector<2x32xf32>
    %32 = arith.mulf %28, %27 : vector<2x32xf32>
    %33 = arith.addf %31, %32 : vector<2x32xf32>
    %34 = math.tanh %33 : vector<2x32xf32>
    %35 = arith.mulf %30, %34 : vector<2x32xf32>
    %cst_17 = arith.constant dense<0.000000e+00> : vector<2x128xf32>
    %36 = tpu.matmul %15, %11, %cst_17 {dimension_numbers = #tpu.dot_dimension_numbers<[1], [0], [0], [1], [0, 0, 1, 1], [], []>} : vector<2x32xf32>, vector<32x128xf32>, vector<2x128xf32> -> vector<2x128xf32>
    %cst_18 = arith.constant dense<0.000000e+00> : vector<2x128xf32>
    %37 = tpu.matmul %35, %10, %cst_18 {dimension_numbers = #tpu.dot_dimension_numbers<[1], [0], [0], [1], [0, 0, 1, 1], [], []>} : vector<2x32xf32>, vector<32x128xf32>, vector<2x128xf32> -> vector<2x128xf32>
    %38 = arith.addf %36, %37 : vector<2x128xf32>
    %39 = vector.broadcast %12 : vector<1x128xf32> to vector<2x128xf32>
    %40 = arith.addf %38, %39 : vector<2x128xf32>
    %41 = vector.extract_strided_slice %40 {offsets = [0, 0], sizes = [2, 96], strides = [1, 1]} : vector<2x128xf32> to vector<2x96xf32>
    %42 = arith.negf %41 : vector<2x96xf32>
    %43 = math.exp %42 : vector<2x96xf32>
    %cst_19 = arith.constant 1.000000e+00 : f32
    %44 = vector.broadcast %cst_19 : f32 to vector<2x96xf32>
    %45 = arith.addf %44, %43 : vector<2x96xf32>
    %46 = arith.divf %44, %45 : vector<2x96xf32>
    %47 = vector.extract_strided_slice %40 {offsets = [0, 96], sizes = [2, 32], strides = [1, 1]} : vector<2x128xf32> to vector<2x32xf32>
    %48 = math.tanh %47 : vector<2x32xf32>
    %49 = vector.extract_strided_slice %46 {offsets = [0, 0], sizes = [2, 32], strides = [1, 1]} : vector<2x96xf32> to vector<2x32xf32>
    %50 = vector.extract_strided_slice %46 {offsets = [0, 32], sizes = [2, 32], strides = [1, 1]} : vector<2x96xf32> to vector<2x32xf32>
    %51 = vector.extract_strided_slice %46 {offsets = [0, 64], sizes = [2, 32], strides = [1, 1]} : vector<2x96xf32> to vector<2x32xf32>
    %52 = arith.mulf %50, %16 : vector<2x32xf32>
    %53 = arith.mulf %49, %48 : vector<2x32xf32>
    %54 = arith.addf %52, %53 : vector<2x32xf32>
    %55 = math.tanh %54 : vector<2x32xf32>
    %56 = arith.mulf %51, %55 : vector<2x32xf32>
    %57 = vector.extract_strided_slice %35 {offsets = [0, 0], sizes = [1, 32], strides = [1, 1]} : vector<2x32xf32> to vector<1x32xf32>
    %c0_20 = arith.constant 0 : index
    %c0_21 = arith.constant 0 : index
    %58 = vector.load %arg7[%c0_20, %c0_21] : memref<16x32xf32, #tpu.memory_space<vmem>>, vector<1x32xf32>
    tpu.vector_store %arg7[%c0_20, %c0_21], %57 {strides = array<i32>} : memref<16x32xf32, #tpu.memory_space<vmem>>, vector<1x32xf32>,
    %59 = vector.extract_strided_slice %35 {offsets = [1, 0], sizes = [1, 32], strides = [1, 1]} : vector<2x32xf32> to vector<1x32xf32>
    %c0_22 = arith.constant 0 : index
    %c0_23 = arith.constant 0 : index
    %60 = vector.load %arg8[%c0_22, %c0_23] : memref<16x32xf32, #tpu.memory_space<vmem>>, vector<1x32xf32>
    tpu.vector_store %arg8[%c0_22, %c0_23], %59 {strides = array<i32>} : memref<16x32xf32, #tpu.memory_space<vmem>>, vector<1x32xf32>,
    %61 = vector.extract_strided_slice %56 {offsets = [0, 0], sizes = [1, 32], strides = [1, 1]} : vector<2x32xf32> to vector<1x32xf32>
    %c1 = arith.constant 1 : index
    %c0_24 = arith.constant 0 : index
    %62 = vector.load %arg7[%c1, %c0_24] : memref<16x32xf32, #tpu.memory_space<vmem>>, vector<1x32xf32>
    tpu.vector_store %arg7[%c1, %c0_24], %61 {strides = array<i32>} : memref<16x32xf32, #tpu.memory_space<vmem>>, vector<1x32xf32>,
    %63 = vector.extract_strided_slice %56 {offsets = [1, 0], sizes = [1, 32], strides = [1, 1]} : vector<2x32xf32> to vector<1x32xf32>
    %c1_25 = arith.constant 1 : index
    %c0_26 = arith.constant 0 : index
    %64 = vector.load %arg8[%c1_25, %c0_26] : memref<16x32xf32, #tpu.memory_space<vmem>>, vector<1x32xf32>
    tpu.vector_store %arg8[%c1_25, %c0_26], %63 {strides = array<i32>} : memref<16x32xf32, #tpu.memory_space<vmem>>, vector<1x32xf32>,
    %cst_27 = arith.constant dense<0.000000e+00> : vector<2x128xf32>
    %65 = tpu.matmul %35, %9, %cst_27 {dimension_numbers = #tpu.dot_dimension_numbers<[1], [0], [0], [1], [0, 0, 1, 1], [], []>} : vector<2x32xf32>, vector<32x128xf32>, vector<2x128xf32> -> vector<2x128xf32>
    %66 = vector.extract_strided_slice %8 {offsets = [2, 0], sizes = [2, 128], strides = [1, 1]} : vector<16x128xf32> to vector<2x128xf32>
    %67 = arith.addf %65, %66 : vector<2x128xf32>
    %68 = vector.extract_strided_slice %67 {offsets = [0, 0], sizes = [2, 96], strides = [1, 1]} : vector<2x128xf32> to vector<2x96xf32>
    %69 = arith.negf %68 : vector<2x96xf32>
    %70 = math.exp %69 : vector<2x96xf32>
    %cst_28 = arith.constant 1.000000e+00 : f32
    %71 = vector.broadcast %cst_28 : f32 to vector<2x96xf32>
    %72 = arith.addf %71, %70 : vector<2x96xf32>
    %73 = arith.divf %71, %72 : vector<2x96xf32>
    %74 = vector.extract_strided_slice %67 {offsets = [0, 96], sizes = [2, 32], strides = [1, 1]} : vector<2x128xf32> to vector<2x32xf32>
    %75 = math.tanh %74 : vector<2x32xf32>
    %76 = vector.extract_strided_slice %73 {offsets = [0, 0], sizes = [2, 32], strides = [1, 1]} : vector<2x96xf32> to vector<2x32xf32>
    %77 = vector.extract_strided_slice %73 {offsets = [0, 32], sizes = [2, 32], strides = [1, 1]} : vector<2x96xf32> to vector<2x32xf32>
    %78 = vector.extract_strided_slice %73 {offsets = [0, 64], sizes = [2, 32], strides = [1, 1]} : vector<2x96xf32> to vector<2x32xf32>
    %79 = arith.mulf %77, %33 : vector<2x32xf32>
    %80 = arith.mulf %76, %75 : vector<2x32xf32>
    %81 = arith.addf %79, %80 : vector<2x32xf32>
    %82 = math.tanh %81 : vector<2x32xf32>
    %83 = arith.mulf %78, %82 : vector<2x32xf32>
    %cst_29 = arith.constant dense<0.000000e+00> : vector<2x128xf32>
    %84 = tpu.matmul %56, %11, %cst_29 {dimension_numbers = #tpu.dot_dimension_numbers<[1], [0], [0], [1], [0, 0, 1, 1], [], []>} : vector<2x32xf32>, vector<32x128xf32>, vector<2x128xf32> -> vector<2x128xf32>
    %cst_30 = arith.constant dense<0.000000e+00> : vector<2x128xf32>
    %85 = tpu.matmul %83, %10, %cst_30 {dimension_numbers = #tpu.dot_dimension_numbers<[1], [0], [0], [1], [0, 0, 1, 1], [], []>} : vector<2x32xf32>, vector<32x128xf32>, vector<2x128xf32> -> vector<2x128xf32>
    %86 = arith.addf %84, %85 : vector<2x128xf32>
    %87 = vector.broadcast %12 : vector<1x128xf32> to vector<2x128xf32>
    %88 = arith.addf %86, %87 : vector<2x128xf32>
    %89 = vector.extract_strided_slice %88 {offsets = [0, 0], sizes = [2, 96], strides = [1, 1]} : vector<2x128xf32> to vector<2x96xf32>
    %90 = arith.negf %89 : vector<2x96xf32>
    %91 = math.exp %90 : vector<2x96xf32>
    %cst_31 = arith.constant 1.000000e+00 : f32
    %92 = vector.broadcast %cst_31 : f32 to vector<2x96xf32>
    %93 = arith.addf %92, %91 : vector<2x96xf32>
    %94 = arith.divf %92, %93 : vector<2x96xf32>
    %95 = vector.extract_strided_slice %88 {offsets = [0, 96], sizes = [2, 32], strides = [1, 1]} : vector<2x128xf32> to vector<2x32xf32>
    %96 = math.tanh %95 : vector<2x32xf32>
    %97 = vector.extract_strided_slice %94 {offsets = [0, 0], sizes = [2, 32], strides = [1, 1]} : vector<2x96xf32> to vector<2x32xf32>
    %98 = vector.extract_strided_slice %94 {offsets = [0, 32], sizes = [2, 32], strides = [1, 1]} : vector<2x96xf32> to vector<2x32xf32>
    %99 = vector.extract_strided_slice %94 {offsets = [0, 64], sizes = [2, 32], strides = [1, 1]} : vector<2x96xf32> to vector<2x32xf32>
    %100 = arith.mulf %98, %54 : vector<2x32xf32>
    %101 = arith.mulf %97, %96 : vector<2x32xf32>
    %102 = arith.addf %100, %101 : vector<2x32xf32>
    %103 = math.tanh %102 : vector<2x32xf32>
    %104 = arith.mulf %99, %103 : vector<2x32xf32>
    %105 = vector.extract_strided_slice %83 {offsets = [0, 0], sizes = [1, 32], strides = [1, 1]} : vector<2x32xf32> to vector<1x32xf32>
    %c2 = arith.constant 2 : index
    %c0_32 = arith.constant 0 : index
    %106 = vector.load %arg7[%c2, %c0_32] : memref<16x32xf32, #tpu.memory_space<vmem>>, vector<1x32xf32>
    tpu.vector_store %arg7[%c2, %c0_32], %105 {strides = array<i32>} : memref<16x32xf32, #tpu.memory_space<vmem>>, vector<1x32xf32>,
    %107 = vector.extract_strided_slice %83 {offsets = [1, 0], sizes = [1, 32], strides = [1, 1]} : vector<2x32xf32> to vector<1x32xf32>
    %c2_33 = arith.constant 2 : index
    %c0_34 = arith.constant 0 : index
    %108 = vector.load %arg8[%c2_33, %c0_34] : memref<16x32xf32, #tpu.memory_space<vmem>>, vector<1x32xf32>
    tpu.vector_store %arg8[%c2_33, %c0_34], %107 {strides = array<i32>} : memref<16x32xf32, #tpu.memory_space<vmem>>, vector<1x32xf32>,
    %109 = vector.extract_strided_slice %104 {offsets = [0, 0], sizes = [1, 32], strides = [1, 1]} : vector<2x32xf32> to vector<1x32xf32>
    %c3 = arith.constant 3 : index
    %c0_35 = arith.constant 0 : index
    %110 = vector.load %arg7[%c3, %c0_35] : memref<16x32xf32, #tpu.memory_space<vmem>>, vector<1x32xf32>
    tpu.vector_store %arg7[%c3, %c0_35], %109 {strides = array<i32>} : memref<16x32xf32, #tpu.memory_space<vmem>>, vector<1x32xf32>,
    %111 = vector.extract_strided_slice %104 {offsets = [1, 0], sizes = [1, 32], strides = [1, 1]} : vector<2x32xf32> to vector<1x32xf32>
    %c3_36 = arith.constant 3 : index
    %c0_37 = arith.constant 0 : index
    %112 = vector.load %arg8[%c3_36, %c0_37] : memref<16x32xf32, #tpu.memory_space<vmem>>, vector<1x32xf32>
    tpu.vector_store %arg8[%c3_36, %c0_37], %111 {strides = array<i32>} : memref<16x32xf32, #tpu.memory_space<vmem>>, vector<1x32xf32>,
    %cst_38 = arith.constant dense<0.000000e+00> : vector<2x128xf32>
    %113 = tpu.matmul %83, %9, %cst_38 {dimension_numbers = #tpu.dot_dimension_numbers<[1], [0], [0], [1], [0, 0, 1, 1], [], []>} : vector<2x32xf32>, vector<32x128xf32>, vector<2x128xf32> -> vector<2x128xf32>
    %114 = vector.extract_strided_slice %8 {offsets = [4, 0], sizes = [2, 128], strides = [1, 1]} : vector<16x128xf32> to vector<2x128xf32>
    %115 = arith.addf %113, %114 : vector<2x128xf32>
    %116 = vector.extract_strided_slice %115 {offsets = [0, 0], sizes = [2, 96], strides = [1, 1]} : vector<2x128xf32> to vector<2x96xf32>
    %117 = arith.negf %116 : vector<2x96xf32>
    %118 = math.exp %117 : vector<2x96xf32>
    %cst_39 = arith.constant 1.000000e+00 : f32
    %119 = vector.broadcast %cst_39 : f32 to vector<2x96xf32>
    %120 = arith.addf %119, %118 : vector<2x96xf32>
    %121 = arith.divf %119, %120 : vector<2x96xf32>
    %122 = vector.extract_strided_slice %115 {offsets = [0, 96], sizes = [2, 32], strides = [1, 1]} : vector<2x128xf32> to vector<2x32xf32>
    %123 = math.tanh %122 : vector<2x32xf32>
    %124 = vector.extract_strided_slice %121 {offsets = [0, 0], sizes = [2, 32], strides = [1, 1]} : vector<2x96xf32> to vector<2x32xf32>
    %125 = vector.extract_strided_slice %121 {offsets = [0, 32], sizes = [2, 32], strides = [1, 1]} : vector<2x96xf32> to vector<2x32xf32>
    %126 = vector.extract_strided_slice %121 {offsets = [0, 64], sizes = [2, 32], strides = [1, 1]} : vector<2x96xf32> to vector<2x32xf32>
    %127 = arith.mulf %125, %81 : vector<2x32xf32>
    %128 = arith.mulf %124, %123 : vector<2x32xf32>
    %129 = arith.addf %127, %128 : vector<2x32xf32>
    %130 = math.tanh %129 : vector<2x32xf32>
    %131 = arith.mulf %126, %130 : vector<2x32xf32>
    %cst_40 = arith.constant dense<0.000000e+00> : vector<2x128xf32>
    %132 = tpu.matmul %104, %11, %cst_40 {dimension_numbers = #tpu.dot_dimension_numbers<[1], [0], [0], [1], [0, 0, 1, 1], [], []>} : vector<2x32xf32>, vector<32x128xf32>, vector<2x128xf32> -> vector<2x128xf32>
    %cst_41 = arith.constant dense<0.000000e+00> : vector<2x128xf32>
    %133 = tpu.matmul %131, %10, %cst_41 {dimension_numbers = #tpu.dot_dimension_numbers<[1], [0], [0], [1], [0, 0, 1, 1], [], []>} : vector<2x32xf32>, vector<32x128xf32>, vector<2x128xf32> -> vector<2x128xf32>
    %134 = arith.addf %132, %133 : vector<2x128xf32>
    %135 = vector.broadcast %12 : vector<1x128xf32> to vector<2x128xf32>
    %136 = arith.addf %134, %135 : vector<2x128xf32>
    %137 = vector.extract_strided_slice %136 {offsets = [0, 0], sizes = [2, 96], strides = [1, 1]} : vector<2x128xf32> to vector<2x96xf32>
    %138 = arith.negf %137 : vector<2x96xf32>
    %139 = math.exp %138 : vector<2x96xf32>
    %cst_42 = arith.constant 1.000000e+00 : f32
    %140 = vector.broadcast %cst_42 : f32 to vector<2x96xf32>
    %141 = arith.addf %140, %139 : vector<2x96xf32>
    %142 = arith.divf %140, %141 : vector<2x96xf32>
    %143 = vector.extract_strided_slice %136 {offsets = [0, 96], sizes = [2, 32], strides = [1, 1]} : vector<2x128xf32> to vector<2x32xf32>
    %144 = math.tanh %143 : vector<2x32xf32>
    %145 = vector.extract_strided_slice %142 {offsets = [0, 0], sizes = [2, 32], strides = [1, 1]} : vector<2x96xf32> to vector<2x32xf32>
    %146 = vector.extract_strided_slice %142 {offsets = [0, 32], sizes = [2, 32], strides = [1, 1]} : vector<2x96xf32> to vector<2x32xf32>
    %147 = vector.extract_strided_slice %142 {offsets = [0, 64], sizes = [2, 32], strides = [1, 1]} : vector<2x96xf32> to vector<2x32xf32>
    %148 = arith.mulf %146, %102 : vector<2x32xf32>
    %149 = arith.mulf %145, %144 : vector<2x32xf32>
    %150 = arith.addf %148, %149 : vector<2x32xf32>
    %151 = math.tanh %150 : vector<2x32xf32>
    %152 = arith.mulf %147, %151 : vector<2x32xf32>
    %153 = vector.extract_strided_slice %131 {offsets = [0, 0], sizes = [1, 32], strides = [1, 1]} : vector<2x32xf32> to vector<1x32xf32>
    %c4 = arith.constant 4 : index
    %c0_43 = arith.constant 0 : index
    %154 = vector.load %arg7[%c4, %c0_43] : memref<16x32xf32, #tpu.memory_space<vmem>>, vector<1x32xf32>
    tpu.vector_store %arg7[%c4, %c0_43], %153 {strides = array<i32>} : memref<16x32xf32, #tpu.memory_space<vmem>>, vector<1x32xf32>,
    %155 = vector.extract_strided_slice %131 {offsets = [1, 0], sizes = [1, 32], strides = [1, 1]} : vector<2x32xf32> to vector<1x32xf32>
    %c4_44 = arith.constant 4 : index
    %c0_45 = arith.constant 0 : index
    %156 = vector.load %arg8[%c4_44, %c0_45] : memref<16x32xf32, #tpu.memory_space<vmem>>, vector<1x32xf32>
    tpu.vector_store %arg8[%c4_44, %c0_45], %155 {strides = array<i32>} : memref<16x32xf32, #tpu.memory_space<vmem>>, vector<1x32xf32>,
    %157 = vector.extract_strided_slice %152 {offsets = [0, 0], sizes = [1, 32], strides = [1, 1]} : vector<2x32xf32> to vector<1x32xf32>
    %c5 = arith.constant 5 : index
    %c0_46 = arith.constant 0 : index
    %158 = vector.load %arg7[%c5, %c0_46] : memref<16x32xf32, #tpu.memory_space<vmem>>, vector<1x32xf32>
    tpu.vector_store %arg7[%c5, %c0_46], %157 {strides = array<i32>} : memref<16x32xf32, #tpu.memory_space<vmem>>, vector<1x32xf32>,
    %159 = vector.extract_strided_slice %152 {offsets = [1, 0], sizes = [1, 32], strides = [1, 1]} : vector<2x32xf32> to vector<1x32xf32>
    %c5_47 = arith.constant 5 : index
    %c0_48 = arith.constant 0 : index
    %160 = vector.load %arg8[%c5_47, %c0_48] : memref<16x32xf32, #tpu.memory_space<vmem>>, vector<1x32xf32>
    tpu.vector_store %arg8[%c5_47, %c0_48], %159 {strides = array<i32>} : memref<16x32xf32, #tpu.memory_space<vmem>>, vector<1x32xf32>,
    %cst_49 = arith.constant dense<0.000000e+00> : vector<2x128xf32>
    %161 = tpu.matmul %131, %9, %cst_49 {dimension_numbers = #tpu.dot_dimension_numbers<[1], [0], [0], [1], [0, 0, 1, 1], [], []>} : vector<2x32xf32>, vector<32x128xf32>, vector<2x128xf32> -> vector<2x128xf32>
    %162 = vector.extract_strided_slice %8 {offsets = [6, 0], sizes = [2, 128], strides = [1, 1]} : vector<16x128xf32> to vector<2x128xf32>
    %163 = arith.addf %161, %162 : vector<2x128xf32>
    %164 = vector.extract_strided_slice %163 {offsets = [0, 0], sizes = [2, 96], strides = [1, 1]} : vector<2x128xf32> to vector<2x96xf32>
    %165 = arith.negf %164 : vector<2x96xf32>
    %166 = math.exp %165 : vector<2x96xf32>
    %cst_50 = arith.constant 1.000000e+00 : f32
    %167 = vector.broadcast %cst_50 : f32 to vector<2x96xf32>
    %168 = arith.addf %167, %166 : vector<2x96xf32>
    %169 = arith.divf %167, %168 : vector<2x96xf32>
    %170 = vector.extract_strided_slice %163 {offsets = [0, 96], sizes = [2, 32], strides = [1, 1]} : vector<2x128xf32> to vector<2x32xf32>
    %171 = math.tanh %170 : vector<2x32xf32>
    %172 = vector.extract_strided_slice %169 {offsets = [0, 0], sizes = [2, 32], strides = [1, 1]} : vector<2x96xf32> to vector<2x32xf32>
    %173 = vector.extract_strided_slice %169 {offsets = [0, 32], sizes = [2, 32], strides = [1, 1]} : vector<2x96xf32> to vector<2x32xf32>
    %174 = vector.extract_strided_slice %169 {offsets = [0, 64], sizes = [2, 32], strides = [1, 1]} : vector<2x96xf32> to vector<2x32xf32>
    %175 = arith.mulf %173, %129 : vector<2x32xf32>
    %176 = arith.mulf %172, %171 : vector<2x32xf32>
    %177 = arith.addf %175, %176 : vector<2x32xf32>
    %178 = math.tanh %177 : vector<2x32xf32>
    %179 = arith.mulf %174, %178 : vector<2x32xf32>
    %cst_51 = arith.constant dense<0.000000e+00> : vector<2x128xf32>
    %180 = tpu.matmul %152, %11, %cst_51 {dimension_numbers = #tpu.dot_dimension_numbers<[1], [0], [0], [1], [0, 0, 1, 1], [], []>} : vector<2x32xf32>, vector<32x128xf32>, vector<2x128xf32> -> vector<2x128xf32>
    %cst_52 = arith.constant dense<0.000000e+00> : vector<2x128xf32>
    %181 = tpu.matmul %179, %10, %cst_52 {dimension_numbers = #tpu.dot_dimension_numbers<[1], [0], [0], [1], [0, 0, 1, 1], [], []>} : vector<2x32xf32>, vector<32x128xf32>, vector<2x128xf32> -> vector<2x128xf32>
    %182 = arith.addf %180, %181 : vector<2x128xf32>
    %183 = vector.broadcast %12 : vector<1x128xf32> to vector<2x128xf32>
    %184 = arith.addf %182, %183 : vector<2x128xf32>
    %185 = vector.extract_strided_slice %184 {offsets = [0, 0], sizes = [2, 96], strides = [1, 1]} : vector<2x128xf32> to vector<2x96xf32>
    %186 = arith.negf %185 : vector<2x96xf32>
    %187 = math.exp %186 : vector<2x96xf32>
    %cst_53 = arith.constant 1.000000e+00 : f32
    %188 = vector.broadcast %cst_53 : f32 to vector<2x96xf32>
    %189 = arith.addf %188, %187 : vector<2x96xf32>
    %190 = arith.divf %188, %189 : vector<2x96xf32>
    %191 = vector.extract_strided_slice %184 {offsets = [0, 96], sizes = [2, 32], strides = [1, 1]} : vector<2x128xf32> to vector<2x32xf32>
    %192 = math.tanh %191 : vector<2x32xf32>
    %193 = vector.extract_strided_slice %190 {offsets = [0, 0], sizes = [2, 32], strides = [1, 1]} : vector<2x96xf32> to vector<2x32xf32>
    %194 = vector.extract_strided_slice %190 {offsets = [0, 32], sizes = [2, 32], strides = [1, 1]} : vector<2x96xf32> to vector<2x32xf32>
    %195 = vector.extract_strided_slice %190 {offsets = [0, 64], sizes = [2, 32], strides = [1, 1]} : vector<2x96xf32> to vector<2x32xf32>
    %196 = arith.mulf %194, %150 : vector<2x32xf32>
    %197 = arith.mulf %193, %192 : vector<2x32xf32>
    %198 = arith.addf %196, %197 : vector<2x32xf32>
    %199 = math.tanh %198 : vector<2x32xf32>
    %200 = arith.mulf %195, %199 : vector<2x32xf32>
    %201 = vector.extract_strided_slice %179 {offsets = [0, 0], sizes = [1, 32], strides = [1, 1]} : vector<2x32xf32> to vector<1x32xf32>
    %c6 = arith.constant 6 : index
    %c0_54 = arith.constant 0 : index
    %202 = vector.load %arg7[%c6, %c0_54] : memref<16x32xf32, #tpu.memory_space<vmem>>, vector<1x32xf32>
    tpu.vector_store %arg7[%c6, %c0_54], %201 {strides = array<i32>} : memref<16x32xf32, #tpu.memory_space<vmem>>, vector<1x32xf32>,
    %203 = vector.extract_strided_slice %179 {offsets = [1, 0], sizes = [1, 32], strides = [1, 1]} : vector<2x32xf32> to vector<1x32xf32>
    %c6_55 = arith.constant 6 : index
    %c0_56 = arith.constant 0 : index
    %204 = vector.load %arg8[%c6_55, %c0_56] : memref<16x32xf32, #tpu.memory_space<vmem>>, vector<1x32xf32>
    tpu.vector_store %arg8[%c6_55, %c0_56], %203 {strides = array<i32>} : memref<16x32xf32, #tpu.memory_space<vmem>>, vector<1x32xf32>,
    %205 = vector.extract_strided_slice %200 {offsets = [0, 0], sizes = [1, 32], strides = [1, 1]} : vector<2x32xf32> to vector<1x32xf32>
    %c7 = arith.constant 7 : index
    %c0_57 = arith.constant 0 : index
    %206 = vector.load %arg7[%c7, %c0_57] : memref<16x32xf32, #tpu.memory_space<vmem>>, vector<1x32xf32>
    tpu.vector_store %arg7[%c7, %c0_57], %205 {strides = array<i32>} : memref<16x32xf32, #tpu.memory_space<vmem>>, vector<1x32xf32>,
    %207 = vector.extract_strided_slice %200 {offsets = [1, 0], sizes = [1, 32], strides = [1, 1]} : vector<2x32xf32> to vector<1x32xf32>
    %c7_58 = arith.constant 7 : index
    %c0_59 = arith.constant 0 : index
    %208 = vector.load %arg8[%c7_58, %c0_59] : memref<16x32xf32, #tpu.memory_space<vmem>>, vector<1x32xf32>
    tpu.vector_store %arg8[%c7_58, %c0_59], %207 {strides = array<i32>} : memref<16x32xf32, #tpu.memory_space<vmem>>, vector<1x32xf32>,
    %cst_60 = arith.constant dense<0.000000e+00> : vector<2x128xf32>
    %209 = tpu.matmul %179, %9, %cst_60 {dimension_numbers = #tpu.dot_dimension_numbers<[1], [0], [0], [1], [0, 0, 1, 1], [], []>} : vector<2x32xf32>, vector<32x128xf32>, vector<2x128xf32> -> vector<2x128xf32>
    %210 = vector.extract_strided_slice %8 {offsets = [8, 0], sizes = [2, 128], strides = [1, 1]} : vector<16x128xf32> to vector<2x128xf32>
    %211 = arith.addf %209, %210 : vector<2x128xf32>
    %212 = vector.extract_strided_slice %211 {offsets = [0, 0], sizes = [2, 96], strides = [1, 1]} : vector<2x128xf32> to vector<2x96xf32>
    %213 = arith.negf %212 : vector<2x96xf32>
    %214 = math.exp %213 : vector<2x96xf32>
    %cst_61 = arith.constant 1.000000e+00 : f32
    %215 = vector.broadcast %cst_61 : f32 to vector<2x96xf32>
    %216 = arith.addf %215, %214 : vector<2x96xf32>
    %217 = arith.divf %215, %216 : vector<2x96xf32>
    %218 = vector.extract_strided_slice %211 {offsets = [0, 96], sizes = [2, 32], strides = [1, 1]} : vector<2x128xf32> to vector<2x32xf32>
    %219 = math.tanh %218 : vector<2x32xf32>
    %220 = vector.extract_strided_slice %217 {offsets = [0, 0], sizes = [2, 32], strides = [1, 1]} : vector<2x96xf32> to vector<2x32xf32>
    %221 = vector.extract_strided_slice %217 {offsets = [0, 32], sizes = [2, 32], strides = [1, 1]} : vector<2x96xf32> to vector<2x32xf32>
    %222 = vector.extract_strided_slice %217 {offsets = [0, 64], sizes = [2, 32], strides = [1, 1]} : vector<2x96xf32> to vector<2x32xf32>
    %223 = arith.mulf %221, %177 : vector<2x32xf32>
    %224 = arith.mulf %220, %219 : vector<2x32xf32>
    %225 = arith.addf %223, %224 : vector<2x32xf32>
    %226 = math.tanh %225 : vector<2x32xf32>
    %227 = arith.mulf %222, %226 : vector<2x32xf32>
    %cst_62 = arith.constant dense<0.000000e+00> : vector<2x128xf32>
    %228 = tpu.matmul %200, %11, %cst_62 {dimension_numbers = #tpu.dot_dimension_numbers<[1], [0], [0], [1], [0, 0, 1, 1], [], []>} : vector<2x32xf32>, vector<32x128xf32>, vector<2x128xf32> -> vector<2x128xf32>
    %cst_63 = arith.constant dense<0.000000e+00> : vector<2x128xf32>
    %229 = tpu.matmul %227, %10, %cst_63 {dimension_numbers = #tpu.dot_dimension_numbers<[1], [0], [0], [1], [0, 0, 1, 1], [], []>} : vector<2x32xf32>, vector<32x128xf32>, vector<2x128xf32> -> vector<2x128xf32>
    %230 = arith.addf %228, %229 : vector<2x128xf32>
    %231 = vector.broadcast %12 : vector<1x128xf32> to vector<2x128xf32>
    %232 = arith.addf %230, %231 : vector<2x128xf32>
    %233 = vector.extract_strided_slice %232 {offsets = [0, 0], sizes = [2, 96], strides = [1, 1]} : vector<2x128xf32> to vector<2x96xf32>
    %234 = arith.negf %233 : vector<2x96xf32>
    %235 = math.exp %234 : vector<2x96xf32>
    %cst_64 = arith.constant 1.000000e+00 : f32
    %236 = vector.broadcast %cst_64 : f32 to vector<2x96xf32>
    %237 = arith.addf %236, %235 : vector<2x96xf32>
    %238 = arith.divf %236, %237 : vector<2x96xf32>
    %239 = vector.extract_strided_slice %232 {offsets = [0, 96], sizes = [2, 32], strides = [1, 1]} : vector<2x128xf32> to vector<2x32xf32>
    %240 = math.tanh %239 : vector<2x32xf32>
    %241 = vector.extract_strided_slice %238 {offsets = [0, 0], sizes = [2, 32], strides = [1, 1]} : vector<2x96xf32> to vector<2x32xf32>
    %242 = vector.extract_strided_slice %238 {offsets = [0, 32], sizes = [2, 32], strides = [1, 1]} : vector<2x96xf32> to vector<2x32xf32>
    %243 = vector.extract_strided_slice %238 {offsets = [0, 64], sizes = [2, 32], strides = [1, 1]} : vector<2x96xf32> to vector<2x32xf32>
    %244 = arith.mulf %242, %198 : vector<2x32xf32>
    %245 = arith.mulf %241, %240 : vector<2x32xf32>
    %246 = arith.addf %244, %245 : vector<2x32xf32>
    %247 = math.tanh %246 : vector<2x32xf32>
    %248 = arith.mulf %243, %247 : vector<2x32xf32>
    %249 = vector.extract_strided_slice %227 {offsets = [0, 0], sizes = [1, 32], strides = [1, 1]} : vector<2x32xf32> to vector<1x32xf32>
    %c8_65 = arith.constant 8 : index
    %c0_66 = arith.constant 0 : index
    %250 = vector.load %arg7[%c8_65, %c0_66] : memref<16x32xf32, #tpu.memory_space<vmem>>, vector<1x32xf32>
    tpu.vector_store %arg7[%c8_65, %c0_66], %249 {strides = array<i32>} : memref<16x32xf32, #tpu.memory_space<vmem>>, vector<1x32xf32>,
    %251 = vector.extract_strided_slice %227 {offsets = [1, 0], sizes = [1, 32], strides = [1, 1]} : vector<2x32xf32> to vector<1x32xf32>
    %c8_67 = arith.constant 8 : index
    %c0_68 = arith.constant 0 : index
    %252 = vector.load %arg8[%c8_67, %c0_68] : memref<16x32xf32, #tpu.memory_space<vmem>>, vector<1x32xf32>
    tpu.vector_store %arg8[%c8_67, %c0_68], %251 {strides = array<i32>} : memref<16x32xf32, #tpu.memory_space<vmem>>, vector<1x32xf32>,
    %253 = vector.extract_strided_slice %248 {offsets = [0, 0], sizes = [1, 32], strides = [1, 1]} : vector<2x32xf32> to vector<1x32xf32>
    %c9 = arith.constant 9 : index
    %c0_69 = arith.constant 0 : index
    %254 = vector.load %arg7[%c9, %c0_69] : memref<16x32xf32, #tpu.memory_space<vmem>>, vector<1x32xf32>
    tpu.vector_store %arg7[%c9, %c0_69], %253 {strides = array<i32>} : memref<16x32xf32, #tpu.memory_space<vmem>>, vector<1x32xf32>,
    %255 = vector.extract_strided_slice %248 {offsets = [1, 0], sizes = [1, 32], strides = [1, 1]} : vector<2x32xf32> to vector<1x32xf32>
    %c9_70 = arith.constant 9 : index
    %c0_71 = arith.constant 0 : index
    %256 = vector.load %arg8[%c9_70, %c0_71] : memref<16x32xf32, #tpu.memory_space<vmem>>, vector<1x32xf32>
    tpu.vector_store %arg8[%c9_70, %c0_71], %255 {strides = array<i32>} : memref<16x32xf32, #tpu.memory_space<vmem>>, vector<1x32xf32>,
    %cst_72 = arith.constant dense<0.000000e+00> : vector<2x128xf32>
    %257 = tpu.matmul %227, %9, %cst_72 {dimension_numbers = #tpu.dot_dimension_numbers<[1], [0], [0], [1], [0, 0, 1, 1], [], []>} : vector<2x32xf32>, vector<32x128xf32>, vector<2x128xf32> -> vector<2x128xf32>
    %258 = vector.extract_strided_slice %8 {offsets = [10, 0], sizes = [2, 128], strides = [1, 1]} : vector<16x128xf32> to vector<2x128xf32>
    %259 = arith.addf %257, %258 : vector<2x128xf32>
    %260 = vector.extract_strided_slice %259 {offsets = [0, 0], sizes = [2, 96], strides = [1, 1]} : vector<2x128xf32> to vector<2x96xf32>
    %261 = arith.negf %260 : vector<2x96xf32>
    %262 = math.exp %261 : vector<2x96xf32>
    %cst_73 = arith.constant 1.000000e+00 : f32
    %263 = vector.broadcast %cst_73 : f32 to vector<2x96xf32>
    %264 = arith.addf %263, %262 : vector<2x96xf32>
    %265 = arith.divf %263, %264 : vector<2x96xf32>
    %266 = vector.extract_strided_slice %259 {offsets = [0, 96], sizes = [2, 32], strides = [1, 1]} : vector<2x128xf32> to vector<2x32xf32>
    %267 = math.tanh %266 : vector<2x32xf32>
    %268 = vector.extract_strided_slice %265 {offsets = [0, 0], sizes = [2, 32], strides = [1, 1]} : vector<2x96xf32> to vector<2x32xf32>
    %269 = vector.extract_strided_slice %265 {offsets = [0, 32], sizes = [2, 32], strides = [1, 1]} : vector<2x96xf32> to vector<2x32xf32>
    %270 = vector.extract_strided_slice %265 {offsets = [0, 64], sizes = [2, 32], strides = [1, 1]} : vector<2x96xf32> to vector<2x32xf32>
    %271 = arith.mulf %269, %225 : vector<2x32xf32>
    %272 = arith.mulf %268, %267 : vector<2x32xf32>
    %273 = arith.addf %271, %272 : vector<2x32xf32>
    %274 = math.tanh %273 : vector<2x32xf32>
    %275 = arith.mulf %270, %274 : vector<2x32xf32>
    %cst_74 = arith.constant dense<0.000000e+00> : vector<2x128xf32>
    %276 = tpu.matmul %248, %11, %cst_74 {dimension_numbers = #tpu.dot_dimension_numbers<[1], [0], [0], [1], [0, 0, 1, 1], [], []>} : vector<2x32xf32>, vector<32x128xf32>, vector<2x128xf32> -> vector<2x128xf32>
    %cst_75 = arith.constant dense<0.000000e+00> : vector<2x128xf32>
    %277 = tpu.matmul %275, %10, %cst_75 {dimension_numbers = #tpu.dot_dimension_numbers<[1], [0], [0], [1], [0, 0, 1, 1], [], []>} : vector<2x32xf32>, vector<32x128xf32>, vector<2x128xf32> -> vector<2x128xf32>
    %278 = arith.addf %276, %277 : vector<2x128xf32>
    %279 = vector.broadcast %12 : vector<1x128xf32> to vector<2x128xf32>
    %280 = arith.addf %278, %279 : vector<2x128xf32>
    %281 = vector.extract_strided_slice %280 {offsets = [0, 0], sizes = [2, 96], strides = [1, 1]} : vector<2x128xf32> to vector<2x96xf32>
    %282 = arith.negf %281 : vector<2x96xf32>
    %283 = math.exp %282 : vector<2x96xf32>
    %cst_76 = arith.constant 1.000000e+00 : f32
    %284 = vector.broadcast %cst_76 : f32 to vector<2x96xf32>
    %285 = arith.addf %284, %283 : vector<2x96xf32>
    %286 = arith.divf %284, %285 : vector<2x96xf32>
    %287 = vector.extract_strided_slice %280 {offsets = [0, 96], sizes = [2, 32], strides = [1, 1]} : vector<2x128xf32> to vector<2x32xf32>
    %288 = math.tanh %287 : vector<2x32xf32>
    %289 = vector.extract_strided_slice %286 {offsets = [0, 0], sizes = [2, 32], strides = [1, 1]} : vector<2x96xf32> to vector<2x32xf32>
    %290 = vector.extract_strided_slice %286 {offsets = [0, 32], sizes = [2, 32], strides = [1, 1]} : vector<2x96xf32> to vector<2x32xf32>
    %291 = vector.extract_strided_slice %286 {offsets = [0, 64], sizes = [2, 32], strides = [1, 1]} : vector<2x96xf32> to vector<2x32xf32>
    %292 = arith.mulf %290, %246 : vector<2x32xf32>
    %293 = arith.mulf %289, %288 : vector<2x32xf32>
    %294 = arith.addf %292, %293 : vector<2x32xf32>
    %295 = math.tanh %294 : vector<2x32xf32>
    %296 = arith.mulf %291, %295 : vector<2x32xf32>
    %297 = vector.extract_strided_slice %275 {offsets = [0, 0], sizes = [1, 32], strides = [1, 1]} : vector<2x32xf32> to vector<1x32xf32>
    %c10 = arith.constant 10 : index
    %c0_77 = arith.constant 0 : index
    %298 = vector.load %arg7[%c10, %c0_77] : memref<16x32xf32, #tpu.memory_space<vmem>>, vector<1x32xf32>
    tpu.vector_store %arg7[%c10, %c0_77], %297 {strides = array<i32>} : memref<16x32xf32, #tpu.memory_space<vmem>>, vector<1x32xf32>,
    %299 = vector.extract_strided_slice %275 {offsets = [1, 0], sizes = [1, 32], strides = [1, 1]} : vector<2x32xf32> to vector<1x32xf32>
    %c10_78 = arith.constant 10 : index
    %c0_79 = arith.constant 0 : index
    %300 = vector.load %arg8[%c10_78, %c0_79] : memref<16x32xf32, #tpu.memory_space<vmem>>, vector<1x32xf32>
    tpu.vector_store %arg8[%c10_78, %c0_79], %299 {strides = array<i32>} : memref<16x32xf32, #tpu.memory_space<vmem>>, vector<1x32xf32>,
    %301 = vector.extract_strided_slice %296 {offsets = [0, 0], sizes = [1, 32], strides = [1, 1]} : vector<2x32xf32> to vector<1x32xf32>
    %c11 = arith.constant 11 : index
    %c0_80 = arith.constant 0 : index
    %302 = vector.load %arg7[%c11, %c0_80] : memref<16x32xf32, #tpu.memory_space<vmem>>, vector<1x32xf32>
    tpu.vector_store %arg7[%c11, %c0_80], %301 {strides = array<i32>} : memref<16x32xf32, #tpu.memory_space<vmem>>, vector<1x32xf32>,
    %303 = vector.extract_strided_slice %296 {offsets = [1, 0], sizes = [1, 32], strides = [1, 1]} : vector<2x32xf32> to vector<1x32xf32>
    %c11_81 = arith.constant 11 : index
    %c0_82 = arith.constant 0 : index
    %304 = vector.load %arg8[%c11_81, %c0_82] : memref<16x32xf32, #tpu.memory_space<vmem>>, vector<1x32xf32>
    tpu.vector_store %arg8[%c11_81, %c0_82], %303 {strides = array<i32>} : memref<16x32xf32, #tpu.memory_space<vmem>>, vector<1x32xf32>,
    %cst_83 = arith.constant dense<0.000000e+00> : vector<2x128xf32>
    %305 = tpu.matmul %275, %9, %cst_83 {dimension_numbers = #tpu.dot_dimension_numbers<[1], [0], [0], [1], [0, 0, 1, 1], [], []>} : vector<2x32xf32>, vector<32x128xf32>, vector<2x128xf32> -> vector<2x128xf32>
    %306 = vector.extract_strided_slice %8 {offsets = [12, 0], sizes = [2, 128], strides = [1, 1]} : vector<16x128xf32> to vector<2x128xf32>
    %307 = arith.addf %305, %306 : vector<2x128xf32>
    %308 = vector.extract_strided_slice %307 {offsets = [0, 0], sizes = [2, 96], strides = [1, 1]} : vector<2x128xf32> to vector<2x96xf32>
    %309 = arith.negf %308 : vector<2x96xf32>
    %310 = math.exp %309 : vector<2x96xf32>
    %cst_84 = arith.constant 1.000000e+00 : f32
    %311 = vector.broadcast %cst_84 : f32 to vector<2x96xf32>
    %312 = arith.addf %311, %310 : vector<2x96xf32>
    %313 = arith.divf %311, %312 : vector<2x96xf32>
    %314 = vector.extract_strided_slice %307 {offsets = [0, 96], sizes = [2, 32], strides = [1, 1]} : vector<2x128xf32> to vector<2x32xf32>
    %315 = math.tanh %314 : vector<2x32xf32>
    %316 = vector.extract_strided_slice %313 {offsets = [0, 0], sizes = [2, 32], strides = [1, 1]} : vector<2x96xf32> to vector<2x32xf32>
    %317 = vector.extract_strided_slice %313 {offsets = [0, 32], sizes = [2, 32], strides = [1, 1]} : vector<2x96xf32> to vector<2x32xf32>
    %318 = vector.extract_strided_slice %313 {offsets = [0, 64], sizes = [2, 32], strides = [1, 1]} : vector<2x96xf32> to vector<2x32xf32>
    %319 = arith.mulf %317, %273 : vector<2x32xf32>
    %320 = arith.mulf %316, %315 : vector<2x32xf32>
    %321 = arith.addf %319, %320 : vector<2x32xf32>
    %322 = math.tanh %321 : vector<2x32xf32>
    %323 = arith.mulf %318, %322 : vector<2x32xf32>
    %cst_85 = arith.constant dense<0.000000e+00> : vector<2x128xf32>
    %324 = tpu.matmul %296, %11, %cst_85 {dimension_numbers = #tpu.dot_dimension_numbers<[1], [0], [0], [1], [0, 0, 1, 1], [], []>} : vector<2x32xf32>, vector<32x128xf32>, vector<2x128xf32> -> vector<2x128xf32>
    %cst_86 = arith.constant dense<0.000000e+00> : vector<2x128xf32>
    %325 = tpu.matmul %323, %10, %cst_86 {dimension_numbers = #tpu.dot_dimension_numbers<[1], [0], [0], [1], [0, 0, 1, 1], [], []>} : vector<2x32xf32>, vector<32x128xf32>, vector<2x128xf32> -> vector<2x128xf32>
    %326 = arith.addf %324, %325 : vector<2x128xf32>
    %327 = vector.broadcast %12 : vector<1x128xf32> to vector<2x128xf32>
    %328 = arith.addf %326, %327 : vector<2x128xf32>
    %329 = vector.extract_strided_slice %328 {offsets = [0, 0], sizes = [2, 96], strides = [1, 1]} : vector<2x128xf32> to vector<2x96xf32>
    %330 = arith.negf %329 : vector<2x96xf32>
    %331 = math.exp %330 : vector<2x96xf32>
    %cst_87 = arith.constant 1.000000e+00 : f32
    %332 = vector.broadcast %cst_87 : f32 to vector<2x96xf32>
    %333 = arith.addf %332, %331 : vector<2x96xf32>
    %334 = arith.divf %332, %333 : vector<2x96xf32>
    %335 = vector.extract_strided_slice %328 {offsets = [0, 96], sizes = [2, 32], strides = [1, 1]} : vector<2x128xf32> to vector<2x32xf32>
    %336 = math.tanh %335 : vector<2x32xf32>
    %337 = vector.extract_strided_slice %334 {offsets = [0, 0], sizes = [2, 32], strides = [1, 1]} : vector<2x96xf32> to vector<2x32xf32>
    %338 = vector.extract_strided_slice %334 {offsets = [0, 32], sizes = [2, 32], strides = [1, 1]} : vector<2x96xf32> to vector<2x32xf32>
    %339 = vector.extract_strided_slice %334 {offsets = [0, 64], sizes = [2, 32], strides = [1, 1]} : vector<2x96xf32> to vector<2x32xf32>
    %340 = arith.mulf %338, %294 : vector<2x32xf32>
    %341 = arith.mulf %337, %336 : vector<2x32xf32>
    %342 = arith.addf %340, %341 : vector<2x32xf32>
    %343 = math.tanh %342 : vector<2x32xf32>
    %344 = arith.mulf %339, %343 : vector<2x32xf32>
    %345 = vector.extract_strided_slice %323 {offsets = [0, 0], sizes = [1, 32], strides = [1, 1]} : vector<2x32xf32> to vector<1x32xf32>
    %c12 = arith.constant 12 : index
    %c0_88 = arith.constant 0 : index
    %346 = vector.load %arg7[%c12, %c0_88] : memref<16x32xf32, #tpu.memory_space<vmem>>, vector<1x32xf32>
    tpu.vector_store %arg7[%c12, %c0_88], %345 {strides = array<i32>} : memref<16x32xf32, #tpu.memory_space<vmem>>, vector<1x32xf32>,
    %347 = vector.extract_strided_slice %323 {offsets = [1, 0], sizes = [1, 32], strides = [1, 1]} : vector<2x32xf32> to vector<1x32xf32>
    %c12_89 = arith.constant 12 : index
    %c0_90 = arith.constant 0 : index
    %348 = vector.load %arg8[%c12_89, %c0_90] : memref<16x32xf32, #tpu.memory_space<vmem>>, vector<1x32xf32>
    tpu.vector_store %arg8[%c12_89, %c0_90], %347 {strides = array<i32>} : memref<16x32xf32, #tpu.memory_space<vmem>>, vector<1x32xf32>,
    %349 = vector.extract_strided_slice %344 {offsets = [0, 0], sizes = [1, 32], strides = [1, 1]} : vector<2x32xf32> to vector<1x32xf32>
    %c13 = arith.constant 13 : index
    %c0_91 = arith.constant 0 : index
    %350 = vector.load %arg7[%c13, %c0_91] : memref<16x32xf32, #tpu.memory_space<vmem>>, vector<1x32xf32>
    tpu.vector_store %arg7[%c13, %c0_91], %349 {strides = array<i32>} : memref<16x32xf32, #tpu.memory_space<vmem>>, vector<1x32xf32>,
    %351 = vector.extract_strided_slice %344 {offsets = [1, 0], sizes = [1, 32], strides = [1, 1]} : vector<2x32xf32> to vector<1x32xf32>
    %c13_92 = arith.constant 13 : index
    %c0_93 = arith.constant 0 : index
    %352 = vector.load %arg8[%c13_92, %c0_93] : memref<16x32xf32, #tpu.memory_space<vmem>>, vector<1x32xf32>
    tpu.vector_store %arg8[%c13_92, %c0_93], %351 {strides = array<i32>} : memref<16x32xf32, #tpu.memory_space<vmem>>, vector<1x32xf32>,
    %cst_94 = arith.constant dense<0.000000e+00> : vector<2x128xf32>
    %353 = tpu.matmul %323, %9, %cst_94 {dimension_numbers = #tpu.dot_dimension_numbers<[1], [0], [0], [1], [0, 0, 1, 1], [], []>} : vector<2x32xf32>, vector<32x128xf32>, vector<2x128xf32> -> vector<2x128xf32>
    %354 = vector.extract_strided_slice %8 {offsets = [14, 0], sizes = [2, 128], strides = [1, 1]} : vector<16x128xf32> to vector<2x128xf32>
    %355 = arith.addf %353, %354 : vector<2x128xf32>
    %356 = vector.extract_strided_slice %355 {offsets = [0, 0], sizes = [2, 96], strides = [1, 1]} : vector<2x128xf32> to vector<2x96xf32>
    %357 = arith.negf %356 : vector<2x96xf32>
    %358 = math.exp %357 : vector<2x96xf32>
    %cst_95 = arith.constant 1.000000e+00 : f32
    %359 = vector.broadcast %cst_95 : f32 to vector<2x96xf32>
    %360 = arith.addf %359, %358 : vector<2x96xf32>
    %361 = arith.divf %359, %360 : vector<2x96xf32>
    %362 = vector.extract_strided_slice %355 {offsets = [0, 96], sizes = [2, 32], strides = [1, 1]} : vector<2x128xf32> to vector<2x32xf32>
    %363 = math.tanh %362 : vector<2x32xf32>
    %364 = vector.extract_strided_slice %361 {offsets = [0, 0], sizes = [2, 32], strides = [1, 1]} : vector<2x96xf32> to vector<2x32xf32>
    %365 = vector.extract_strided_slice %361 {offsets = [0, 32], sizes = [2, 32], strides = [1, 1]} : vector<2x96xf32> to vector<2x32xf32>
    %366 = vector.extract_strided_slice %361 {offsets = [0, 64], sizes = [2, 32], strides = [1, 1]} : vector<2x96xf32> to vector<2x32xf32>
    %367 = arith.mulf %365, %321 : vector<2x32xf32>
    %368 = arith.mulf %364, %363 : vector<2x32xf32>
    %369 = arith.addf %367, %368 : vector<2x32xf32>
    %370 = math.tanh %369 : vector<2x32xf32>
    %371 = arith.mulf %366, %370 : vector<2x32xf32>
    %cst_96 = arith.constant dense<0.000000e+00> : vector<2x128xf32>
    %372 = tpu.matmul %344, %11, %cst_96 {dimension_numbers = #tpu.dot_dimension_numbers<[1], [0], [0], [1], [0, 0, 1, 1], [], []>} : vector<2x32xf32>, vector<32x128xf32>, vector<2x128xf32> -> vector<2x128xf32>
    %cst_97 = arith.constant dense<0.000000e+00> : vector<2x128xf32>
    %373 = tpu.matmul %371, %10, %cst_97 {dimension_numbers = #tpu.dot_dimension_numbers<[1], [0], [0], [1], [0, 0, 1, 1], [], []>} : vector<2x32xf32>, vector<32x128xf32>, vector<2x128xf32> -> vector<2x128xf32>
    %374 = arith.addf %372, %373 : vector<2x128xf32>
    %375 = vector.broadcast %12 : vector<1x128xf32> to vector<2x128xf32>
    %376 = arith.addf %374, %375 : vector<2x128xf32>
    %377 = vector.extract_strided_slice %376 {offsets = [0, 0], sizes = [2, 96], strides = [1, 1]} : vector<2x128xf32> to vector<2x96xf32>
    %378 = arith.negf %377 : vector<2x96xf32>
    %379 = math.exp %378 : vector<2x96xf32>
    %cst_98 = arith.constant 1.000000e+00 : f32
    %380 = vector.broadcast %cst_98 : f32 to vector<2x96xf32>
    %381 = arith.addf %380, %379 : vector<2x96xf32>
    %382 = arith.divf %380, %381 : vector<2x96xf32>
    %383 = vector.extract_strided_slice %376 {offsets = [0, 96], sizes = [2, 32], strides = [1, 1]} : vector<2x128xf32> to vector<2x32xf32>
    %384 = math.tanh %383 : vector<2x32xf32>
    %385 = vector.extract_strided_slice %382 {offsets = [0, 0], sizes = [2, 32], strides = [1, 1]} : vector<2x96xf32> to vector<2x32xf32>
    %386 = vector.extract_strided_slice %382 {offsets = [0, 32], sizes = [2, 32], strides = [1, 1]} : vector<2x96xf32> to vector<2x32xf32>
    %387 = vector.extract_strided_slice %382 {offsets = [0, 64], sizes = [2, 32], strides = [1, 1]} : vector<2x96xf32> to vector<2x32xf32>
    %388 = arith.mulf %386, %342 : vector<2x32xf32>
    %389 = arith.mulf %385, %384 : vector<2x32xf32>
    %390 = arith.addf %388, %389 : vector<2x32xf32>
    %391 = math.tanh %390 : vector<2x32xf32>
    %392 = arith.mulf %387, %391 : vector<2x32xf32>
    %393 = vector.extract_strided_slice %371 {offsets = [0, 0], sizes = [1, 32], strides = [1, 1]} : vector<2x32xf32> to vector<1x32xf32>
    %c14 = arith.constant 14 : index
    %c0_99 = arith.constant 0 : index
    %394 = vector.load %arg7[%c14, %c0_99] : memref<16x32xf32, #tpu.memory_space<vmem>>, vector<1x32xf32>
    tpu.vector_store %arg7[%c14, %c0_99], %393 {strides = array<i32>} : memref<16x32xf32, #tpu.memory_space<vmem>>, vector<1x32xf32>,
    %395 = vector.extract_strided_slice %371 {offsets = [1, 0], sizes = [1, 32], strides = [1, 1]} : vector<2x32xf32> to vector<1x32xf32>
    %c14_100 = arith.constant 14 : index
    %c0_101 = arith.constant 0 : index
    %396 = vector.load %arg8[%c14_100, %c0_101] : memref<16x32xf32, #tpu.memory_space<vmem>>, vector<1x32xf32>
    tpu.vector_store %arg8[%c14_100, %c0_101], %395 {strides = array<i32>} : memref<16x32xf32, #tpu.memory_space<vmem>>, vector<1x32xf32>,
    %397 = vector.extract_strided_slice %392 {offsets = [0, 0], sizes = [1, 32], strides = [1, 1]} : vector<2x32xf32> to vector<1x32xf32>
    %c15 = arith.constant 15 : index
    %c0_102 = arith.constant 0 : index
    %398 = vector.load %arg7[%c15, %c0_102] : memref<16x32xf32, #tpu.memory_space<vmem>>, vector<1x32xf32>
    tpu.vector_store %arg7[%c15, %c0_102], %397 {strides = array<i32>} : memref<16x32xf32, #tpu.memory_space<vmem>>, vector<1x32xf32>,
    %399 = vector.extract_strided_slice %392 {offsets = [1, 0], sizes = [1, 32], strides = [1, 1]} : vector<2x32xf32> to vector<1x32xf32>
    %c15_103 = arith.constant 15 : index
    %c0_104 = arith.constant 0 : index
    %400 = vector.load %arg8[%c15_103, %c0_104] : memref<16x32xf32, #tpu.memory_space<vmem>>, vector<1x32xf32>
    tpu.vector_store %arg8[%c15_103, %c0_104], %399 {strides = array<i32>} : memref<16x32xf32, #tpu.memory_space<vmem>>, vector<1x32xf32>,
    %c0_105 = arith.constant 0 : index
    %c0_106 = arith.constant 0 : index
    %401 = vector.load %arg7[%c0_105, %c0_106] : memref<16x32xf32, #tpu.memory_space<vmem>>, vector<16x32xf32>
    %c0_107 = arith.constant 0 : index
    %c0_108 = arith.constant 0 : index
    %402 = vector.load %arg8[%c0_107, %c0_108] : memref<16x32xf32, #tpu.memory_space<vmem>>, vector<16x32xf32>
    %c168 = arith.constant 168 : index
    %c0_109 = arith.constant 0 : index
    %403 = vector.load %arg4[%c168, %c0_109] : memref<576x128xf32, #tpu.memory_space<vmem>>, vector<32x96xf32>
    %cst_110 = arith.constant dense<0.000000e+00> : vector<16x96xf32>
    %404 = tpu.matmul %401, %403, %cst_110 {dimension_numbers = #tpu.dot_dimension_numbers<[1], [0], [0], [1], [0, 0, 1, 1], [], []>} : vector<16x32xf32>, vector<32x96xf32>, vector<16x96xf32> -> vector<16x96xf32>
    %c200 = arith.constant 200 : index
    %c0_111 = arith.constant 0 : index
    %405 = vector.load %arg4[%c200, %c0_111] : memref<576x128xf32, #tpu.memory_space<vmem>>, vector<32x96xf32>
    %cst_112 = arith.constant dense<0.000000e+00> : vector<16x96xf32>
    %406 = tpu.matmul %402, %405, %cst_112 {dimension_numbers = #tpu.dot_dimension_numbers<[1], [0], [0], [1], [0, 0, 1, 1], [], []>} : vector<16x32xf32>, vector<32x96xf32>, vector<16x96xf32> -> vector<16x96xf32>
    %407 = arith.addf %404, %406 : vector<16x96xf32>
    %408 = vector.extract_strided_slice %407 {offsets = [0, 0], sizes = [16, 32], strides = [1, 1]} : vector<16x96xf32> to vector<16x32xf32>
    %409 = vector.extract_strided_slice %407 {offsets = [0, 32], sizes = [16, 32], strides = [1, 1]} : vector<16x96xf32> to vector<16x32xf32>
    %410 = vector.extract_strided_slice %407 {offsets = [0, 64], sizes = [16, 32], strides = [1, 1]} : vector<16x96xf32> to vector<16x32xf32>
    %c232 = arith.constant 232 : index
    %c0_113 = arith.constant 0 : index
    %411 = vector.load %arg4[%c232, %c0_113] : memref<576x128xf32, #tpu.memory_space<vmem>>, vector<16x16xf32>
    %cst_114 = arith.constant dense<0.000000e+00> : vector<16x32xf32>
    %412 = tpu.matmul %411, %408, %cst_114 {dimension_numbers = #tpu.dot_dimension_numbers<[1], [0], [0], [1], [0, 0, 1, 1], [], []>} : vector<16x16xf32>, vector<16x32xf32>, vector<16x32xf32> -> vector<16x32xf32>
    %413 = arith.addf %409, %412 : vector<16x32xf32>
    %c248 = arith.constant 248 : index
    %c0_115 = arith.constant 0 : index
    %414 = vector.load %arg4[%c248, %c0_115] : memref<576x128xf32, #tpu.memory_space<vmem>>, vector<16x16xf32>
    %cst_116 = arith.constant dense<0.000000e+00> : vector<16x32xf32>
    %415 = tpu.matmul %414, %410, %cst_116 {dimension_numbers = #tpu.dot_dimension_numbers<[1], [0], [0], [1], [0, 0, 1, 1], [], []>} : vector<16x16xf32>, vector<16x32xf32>, vector<16x32xf32> -> vector<16x32xf32>
    %416 = arith.addf %413, %415 : vector<16x32xf32>
    %c0_117 = arith.constant 0 : index
    %c0_118 = arith.constant 0 : index
    %c0_119 = arith.constant 0 : index
    %417 = vector.load %arg1[%c0_117, %c0_118, %c0_119] : memref<2x8x4xf32, #tpu.memory_space<vmem>>, vector<2x8x4xf32>
    %418 = vector.shape_cast %417 : vector<2x8x4xf32> to vector<16x4xf32>
    %c320 = arith.constant 320 : index
    %c0_120 = arith.constant 0 : index
    %419 = vector.load %arg4[%c320, %c0_120] : memref<576x128xf32, #tpu.memory_space<vmem>>, vector<4x32xf32>
    %cst_121 = arith.constant dense<0.000000e+00> : vector<16x32xf32>
    %420 = tpu.matmul %418, %419, %cst_121 {dimension_numbers = #tpu.dot_dimension_numbers<[1], [0], [0], [1], [0, 0, 1, 1], [], []>} : vector<16x4xf32>, vector<4x32xf32>, vector<16x32xf32> -> vector<16x32xf32>
    %421 = arith.addf %416, %420 : vector<16x32xf32>
    %c328 = arith.constant 328 : index
    %c0_122 = arith.constant 0 : index
    %422 = vector.load %arg4[%c328, %c0_122] : memref<576x128xf32, #tpu.memory_space<vmem>>, vector<16x32xf32>
    %423 = arith.addf %421, %422 : vector<16x32xf32>
    %c264 = arith.constant 264 : index
    %c0_123 = arith.constant 0 : index
    %424 = vector.load %arg4[%c264, %c0_123] : memref<576x128xf32, #tpu.memory_space<vmem>>, vector<16x16xf32>
    %cst_124 = arith.constant dense<0.000000e+00> : vector<16x32xf32>
    %425 = tpu.matmul %424, %423, %cst_124 {dimension_numbers = #tpu.dot_dimension_numbers<[1], [0], [0], [1], [0, 0, 1, 1], [], []>} : vector<16x16xf32>, vector<16x32xf32>, vector<16x32xf32> -> vector<16x32xf32>
    %cst_125 = arith.constant dense<0.000000e+00> : vector<16xf32>
    %426 = vector.multi_reduction <add>, %425, %cst_125 [1] : vector<16x32xf32> to vector<16xf32>
    %427 = vector.shape_cast %426 : vector<16xf32> to vector<16x1xf32>
    %cst_126 = arith.constant 3.906250e-03 : f32
    %428 = vector.broadcast %cst_126 : f32 to vector<16x1xf32>
    %429 = arith.mulf %427, %428 : vector<16x1xf32>
    %430 = vector.broadcast %429 : vector<16x1xf32> to vector<16x32xf32>
    %431 = arith.subf %423, %430 : vector<16x32xf32>
    %432 = arith.mulf %431, %431 : vector<16x32xf32>
    %cst_127 = arith.constant dense<0.000000e+00> : vector<16x32xf32>
    %433 = tpu.matmul %424, %432, %cst_127 {dimension_numbers = #tpu.dot_dimension_numbers<[1], [0], [0], [1], [0, 0, 1, 1], [], []>} : vector<16x16xf32>, vector<16x32xf32>, vector<16x32xf32> -> vector<16x32xf32>
    %cst_128 = arith.constant dense<0.000000e+00> : vector<16xf32>
    %434 = vector.multi_reduction <add>, %433, %cst_128 [1] : vector<16x32xf32> to vector<16xf32>
    %435 = vector.shape_cast %434 : vector<16xf32> to vector<16x1xf32>
    %cst_129 = arith.constant 3.906250e-03 : f32
    %436 = vector.broadcast %cst_129 : f32 to vector<16x1xf32>
    %437 = arith.mulf %435, %436 : vector<16x1xf32>
    %cst_130 = arith.constant 9.99999974E-6 : f32
    %438 = vector.broadcast %cst_130 : f32 to vector<16x1xf32>
    %439 = arith.addf %437, %438 : vector<16x1xf32>
    %440 = math.rsqrt %439 : vector<16x1xf32>
    %441 = vector.broadcast %440 : vector<16x1xf32> to vector<16x32xf32>
    %442 = arith.mulf %431, %441 : vector<16x32xf32>
    %c344 = arith.constant 344 : index
    %c0_131 = arith.constant 0 : index
    %443 = vector.load %arg4[%c344, %c0_131] : memref<576x128xf32, #tpu.memory_space<vmem>>, vector<16x32xf32>
    %444 = arith.mulf %442, %443 : vector<16x32xf32>
    %c360 = arith.constant 360 : index
    %c0_132 = arith.constant 0 : index
    %445 = vector.load %arg4[%c360, %c0_132] : memref<576x128xf32, #tpu.memory_space<vmem>>, vector<16x32xf32>
    %446 = arith.addf %444, %445 : vector<16x32xf32>
    %c120 = arith.constant 120 : index
    %c0_133 = arith.constant 0 : index
    %447 = vector.load %arg4[%c120, %c0_133] : memref<576x128xf32, #tpu.memory_space<vmem>>, vector<4x128xf32>
    %c128 = arith.constant 128 : index
    %c0_134 = arith.constant 0 : index
    %448 = vector.load %arg4[%c128, %c0_134] : memref<576x128xf32, #tpu.memory_space<vmem>>, vector<32x128xf32>
    %c160 = arith.constant 160 : index
    %c0_135 = arith.constant 0 : index
    %449 = vector.load %arg4[%c160, %c0_135] : memref<576x128xf32, #tpu.memory_space<vmem>>, vector<1x128xf32>
    %c376 = arith.constant 376 : index
    %c0_136 = arith.constant 0 : index
    %450 = vector.load %arg4[%c376, %c0_136] : memref<576x128xf32, #tpu.memory_space<vmem>>, vector<32x32xf32>
    %c408 = arith.constant 408 : index
    %c0_137 = arith.constant 0 : index
    %451 = vector.load %arg4[%c408, %c0_137] : memref<576x128xf32, #tpu.memory_space<vmem>>, vector<4x32xf32>
    %c416 = arith.constant 416 : index
    %c0_138 = arith.constant 0 : index
    %452 = vector.load %arg4[%c416, %c0_138] : memref<576x128xf32, #tpu.memory_space<vmem>>, vector<1x32xf32>
    %c424 = arith.constant 424 : index
    %c0_139 = arith.constant 0 : index
    %453 = vector.load %arg4[%c424, %c0_139] : memref<576x128xf32, #tpu.memory_space<vmem>>, vector<1x32xf32>
    %c432 = arith.constant 432 : index
    %c0_140 = arith.constant 0 : index
    %454 = vector.load %arg4[%c432, %c0_140] : memref<576x128xf32, #tpu.memory_space<vmem>>, vector<1x32xf32>
    %c520 = arith.constant 520 : index
    %c0_141 = arith.constant 0 : index
    %455 = vector.load %arg4[%c520, %c0_141] : memref<576x128xf32, #tpu.memory_space<vmem>>, vector<1x32xf32>
    %c528 = arith.constant 528 : index
    %c0_142 = arith.constant 0 : index
    %456 = vector.load %arg4[%c528, %c0_142] : memref<576x128xf32, #tpu.memory_space<vmem>>, vector<1x32xf32>
    %c440 = arith.constant 440 : index
    %c0_143 = arith.constant 0 : index
    %457 = vector.load %arg4[%c440, %c0_143] : memref<576x128xf32, #tpu.memory_space<vmem>>, vector<32x4xf32>
    %c472 = arith.constant 472 : index
    %c0_144 = arith.constant 0 : index
    %458 = vector.load %arg4[%c472, %c0_144] : memref<576x128xf32, #tpu.memory_space<vmem>>, vector<4x32xf32>
    %c480 = arith.constant 480 : index
    %c0_145 = arith.constant 0 : index
    %459 = vector.load %arg4[%c480, %c0_145] : memref<576x128xf32, #tpu.memory_space<vmem>>, vector<32x32xf32>
    %c512 = arith.constant 512 : index
    %c0_146 = arith.constant 0 : index
    %460 = vector.load %arg4[%c512, %c0_146] : memref<576x128xf32, #tpu.memory_space<vmem>>, vector<1x32xf32>
    %c280 = arith.constant 280 : index
    %c0_147 = arith.constant 0 : index
    %461 = vector.load %arg4[%c280, %c0_147] : memref<576x128xf32, #tpu.memory_space<vmem>>, vector<16x2xf32>
    %c296 = arith.constant 296 : index
    %c0_148 = arith.constant 0 : index
    %462 = vector.load %arg4[%c296, %c0_148] : memref<576x128xf32, #tpu.memory_space<vmem>>, vector<2x16xf32>
    %cst_149 = arith.constant 0.000000e+00 : f32
    %463 = vector.broadcast %cst_149 : f32 to vector<2x32xf32>
    %cst_150 = arith.constant 0.000000e+00 : f32
    %464 = vector.broadcast %cst_150 : f32 to vector<2x32xf32>
    %cst_151 = arith.constant dense<0.000000e+00> : vector<2x128xf32>
    %465 = tpu.matmul %463, %448, %cst_151 {dimension_numbers = #tpu.dot_dimension_numbers<[1], [0], [0], [1], [0, 0, 1, 1], [], []>} : vector<2x32xf32>, vector<32x128xf32>, vector<2x128xf32> -> vector<2x128xf32>
    %c0_152 = arith.constant 0 : index
    %c0_153 = arith.constant 0 : index
    %c0_154 = arith.constant 0 : index
    %466 = vector.load %arg2[%c0_152, %c0_153, %c0_154] : memref<4x2x4xf32, #tpu.memory_space<vmem>>, vector<1x2x4xf32>
    %467 = vector.shape_cast %466 : vector<1x2x4xf32> to vector<2x4xf32>
    %cst_155 = arith.constant dense<0.000000e+00> : vector<2x128xf32>
    %468 = tpu.matmul %467, %447, %cst_155 {dimension_numbers = #tpu.dot_dimension_numbers<[1], [0], [0], [1], [0, 0, 1, 1], [], []>} : vector<2x4xf32>, vector<4x128xf32>, vector<2x128xf32> -> vector<2x128xf32>
    %469 = arith.addf %465, %468 : vector<2x128xf32>
    %470 = vector.broadcast %449 : vector<1x128xf32> to vector<2x128xf32>
    %471 = arith.addf %469, %470 : vector<2x128xf32>
    %472 = vector.extract_strided_slice %471 {offsets = [0, 0], sizes = [2, 96], strides = [1, 1]} : vector<2x128xf32> to vector<2x96xf32>
    %473 = arith.negf %472 : vector<2x96xf32>
    %474 = math.exp %473 : vector<2x96xf32>
    %cst_156 = arith.constant 1.000000e+00 : f32
    %475 = vector.broadcast %cst_156 : f32 to vector<2x96xf32>
    %476 = arith.addf %475, %474 : vector<2x96xf32>
    %477 = arith.divf %475, %476 : vector<2x96xf32>
    %478 = vector.extract_strided_slice %471 {offsets = [0, 96], sizes = [2, 32], strides = [1, 1]} : vector<2x128xf32> to vector<2x32xf32>
    %479 = math.tanh %478 : vector<2x32xf32>
    %480 = vector.extract_strided_slice %477 {offsets = [0, 0], sizes = [2, 32], strides = [1, 1]} : vector<2x96xf32> to vector<2x32xf32>
    %481 = vector.extract_strided_slice %477 {offsets = [0, 32], sizes = [2, 32], strides = [1, 1]} : vector<2x96xf32> to vector<2x32xf32>
    %482 = vector.extract_strided_slice %477 {offsets = [0, 64], sizes = [2, 32], strides = [1, 1]} : vector<2x96xf32> to vector<2x32xf32>
    %483 = arith.mulf %481, %464 : vector<2x32xf32>
    %484 = arith.mulf %480, %479 : vector<2x32xf32>
    %485 = arith.addf %483, %484 : vector<2x32xf32>
    %486 = math.tanh %485 : vector<2x32xf32>
    %487 = arith.mulf %482, %486 : vector<2x32xf32>
    %cst_157 = arith.constant dense<0.000000e+00> : vector<2x32xf32>
    %488 = tpu.matmul %487, %450, %cst_157 {dimension_numbers = #tpu.dot_dimension_numbers<[1], [0], [0], [1], [0, 0, 1, 1], [], []>} : vector<2x32xf32>, vector<32x32xf32>, vector<2x32xf32> -> vector<2x32xf32>
    %c0_158 = arith.constant 0 : index
    %c0_159 = arith.constant 0 : index
    %c0_160 = arith.constant 0 : index
    %489 = vector.load %arg3[%c0_158, %c0_159, %c0_160] : memref<4x2x4xf32, #tpu.memory_space<vmem>>, vector<1x2x4xf32>
    %490 = vector.shape_cast %489 : vector<1x2x4xf32> to vector<2x4xf32>
    %cst_161 = arith.constant dense<0.000000e+00> : vector<2x32xf32>
    %491 = tpu.matmul %490, %451, %cst_161 {dimension_numbers = #tpu.dot_dimension_numbers<[1], [0], [0], [1], [0, 0, 1, 1], [], []>} : vector<2x4xf32>, vector<4x32xf32>, vector<2x32xf32> -> vector<2x32xf32>
    %492 = arith.addf %488, %491 : vector<2x32xf32>
    %493 = vector.broadcast %452 : vector<1x32xf32> to vector<2x32xf32>
    %494 = arith.addf %492, %493 : vector<2x32xf32>
    %cst_162 = arith.constant dense<0.000000e+00> : vector<2xf32>
    %495 = vector.multi_reduction <add>, %494, %cst_162 [1] : vector<2x32xf32> to vector<2xf32>
    %496 = vector.shape_cast %495 : vector<2xf32> to vector<2x1xf32>
    %cst_163 = arith.constant 3.200000e+01 : f32
    %497 = vector.broadcast %cst_163 : f32 to vector<2x1xf32>
    %498 = arith.divf %496, %497 : vector<2x1xf32>
    %499 = vector.broadcast %498 : vector<2x1xf32> to vector<2x32xf32>
    %500 = arith.subf %494, %499 : vector<2x32xf32>
    %501 = arith.mulf %500, %500 : vector<2x32xf32>
    %cst_164 = arith.constant dense<0.000000e+00> : vector<2xf32>
    %502 = vector.multi_reduction <add>, %501, %cst_164 [1] : vector<2x32xf32> to vector<2xf32>
    %503 = vector.shape_cast %502 : vector<2xf32> to vector<2x1xf32>
    %cst_165 = arith.constant 3.200000e+01 : f32
    %504 = vector.broadcast %cst_165 : f32 to vector<2x1xf32>
    %505 = arith.divf %503, %504 : vector<2x1xf32>
    %506 = vector.broadcast %498 : vector<2x1xf32> to vector<2x32xf32>
    %507 = arith.subf %494, %506 : vector<2x32xf32>
    %cst_166 = arith.constant 9.99999974E-6 : f32
    %508 = vector.broadcast %cst_166 : f32 to vector<2x1xf32>
    %509 = arith.addf %505, %508 : vector<2x1xf32>
    %510 = math.rsqrt %509 : vector<2x1xf32>
    %511 = vector.broadcast %510 : vector<2x1xf32> to vector<2x32xf32>
    %512 = arith.mulf %507, %511 : vector<2x32xf32>
    %513 = vector.broadcast %453 : vector<1x32xf32> to vector<2x32xf32>
    %514 = arith.mulf %512, %513 : vector<2x32xf32>
    %515 = vector.broadcast %454 : vector<1x32xf32> to vector<2x32xf32>
    %516 = arith.addf %514, %515 : vector<2x32xf32>
    %cst_167 = arith.constant dense<0.000000e+00> : vector<16x32xf32>
    %517 = tpu.matmul %461, %516, %cst_167 {dimension_numbers = #tpu.dot_dimension_numbers<[1], [0], [0], [1], [0, 0, 1, 1], [], []>} : vector<16x2xf32>, vector<2x32xf32>, vector<16x32xf32> -> vector<16x32xf32>
    %518 = arith.mulf %517, %446 : vector<16x32xf32>
    %cst_168 = arith.constant dense<0.000000e+00> : vector<16x4xf32>
    %519 = tpu.matmul %518, %457, %cst_168 {dimension_numbers = #tpu.dot_dimension_numbers<[1], [0], [0], [1], [0, 0, 1, 1], [], []>} : vector<16x32xf32>, vector<32x4xf32>, vector<16x4xf32> -> vector<16x4xf32>
    %cst_169 = arith.constant dense<0xFF800000> : vector<4xf32>
    %520 = vector.multi_reduction <maximumf>, %519, %cst_169 [0] : vector<16x4xf32> to vector<4xf32>
    %521 = vector.shape_cast %520 : vector<4xf32> to vector<1x4xf32>
    %522 = vector.broadcast %521 : vector<1x4xf32> to vector<16x4xf32>
    %523 = arith.subf %519, %522 : vector<16x4xf32>
    %524 = math.exp %523 : vector<16x4xf32>
    %cst_170 = arith.constant dense<0.000000e+00> : vector<16x4xf32>
    %525 = tpu.matmul %424, %524, %cst_170 {dimension_numbers = #tpu.dot_dimension_numbers<[1], [0], [0], [1], [0, 0, 1, 1], [], []>} : vector<16x16xf32>, vector<16x4xf32>, vector<16x4xf32> -> vector<16x4xf32>
    %526 = arith.divf %524, %525 : vector<16x4xf32>
    %cst_171 = arith.constant dense<0.000000e+00> : vector<16x32xf32>
    %527 = tpu.matmul %526, %458, %cst_171 {dimension_numbers = #tpu.dot_dimension_numbers<[1], [0], [0], [1], [0, 0, 1, 1], [], []>} : vector<16x4xf32>, vector<4x32xf32>, vector<16x32xf32> -> vector<16x32xf32>
    %528 = arith.mulf %527, %446 : vector<16x32xf32>
    %cst_172 = arith.constant dense<0.000000e+00> : vector<2x32xf32>
    %529 = tpu.matmul %462, %528, %cst_172 {dimension_numbers = #tpu.dot_dimension_numbers<[1], [0], [0], [1], [0, 0, 1, 1], [], []>} : vector<2x16xf32>, vector<16x32xf32>, vector<2x32xf32> -> vector<2x32xf32>
    %cst_173 = arith.constant dense<0.000000e+00> : vector<2x32xf32>
    %530 = tpu.matmul %529, %459, %cst_173 {dimension_numbers = #tpu.dot_dimension_numbers<[1], [0], [0], [1], [0, 0, 1, 1], [], []>} : vector<2x32xf32>, vector<32x32xf32>, vector<2x32xf32> -> vector<2x32xf32>
    %531 = vector.broadcast %460 : vector<1x32xf32> to vector<2x32xf32>
    %532 = arith.addf %530, %531 : vector<2x32xf32>
    %cst_174 = arith.constant dense<0.000000e+00> : vector<2xf32>
    %533 = vector.multi_reduction <add>, %532, %cst_174 [1] : vector<2x32xf32> to vector<2xf32>
    %534 = vector.shape_cast %533 : vector<2xf32> to vector<2x1xf32>
    %cst_175 = arith.constant 3.200000e+01 : f32
    %535 = vector.broadcast %cst_175 : f32 to vector<2x1xf32>
    %536 = arith.divf %534, %535 : vector<2x1xf32>
    %537 = vector.broadcast %536 : vector<2x1xf32> to vector<2x32xf32>
    %538 = arith.subf %532, %537 : vector<2x32xf32>
    %539 = arith.mulf %538, %538 : vector<2x32xf32>
    %cst_176 = arith.constant dense<0.000000e+00> : vector<2xf32>
    %540 = vector.multi_reduction <add>, %539, %cst_176 [1] : vector<2x32xf32> to vector<2xf32>
    %541 = vector.shape_cast %540 : vector<2xf32> to vector<2x1xf32>
    %cst_177 = arith.constant 3.200000e+01 : f32
    %542 = vector.broadcast %cst_177 : f32 to vector<2x1xf32>
    %543 = arith.divf %541, %542 : vector<2x1xf32>
    %544 = vector.broadcast %536 : vector<2x1xf32> to vector<2x32xf32>
    %545 = arith.subf %532, %544 : vector<2x32xf32>
    %cst_178 = arith.constant 9.99999974E-6 : f32
    %546 = vector.broadcast %cst_178 : f32 to vector<2x1xf32>
    %547 = arith.addf %543, %546 : vector<2x1xf32>
    %548 = math.rsqrt %547 : vector<2x1xf32>
    %549 = vector.broadcast %548 : vector<2x1xf32> to vector<2x32xf32>
    %550 = arith.mulf %545, %549 : vector<2x32xf32>
    %551 = vector.broadcast %455 : vector<1x32xf32> to vector<2x32xf32>
    %552 = arith.mulf %550, %551 : vector<2x32xf32>
    %553 = vector.broadcast %456 : vector<1x32xf32> to vector<2x32xf32>
    %554 = arith.addf %552, %553 : vector<2x32xf32>
    %c0_179 = arith.constant 0 : index
    %c0_180 = arith.constant 0 : index
    %555 = vector.load %arg9[%c0_179, %c0_180] : memref<8x32xf32, #tpu.memory_space<vmem>>, vector<2x32xf32>
    tpu.vector_store %arg9[%c0_179, %c0_180], %554 {strides = array<i32>} : memref<8x32xf32, #tpu.memory_space<vmem>>, vector<2x32xf32>,
    %cst_181 = arith.constant dense<0.000000e+00> : vector<2x128xf32>
    %556 = tpu.matmul %554, %448, %cst_181 {dimension_numbers = #tpu.dot_dimension_numbers<[1], [0], [0], [1], [0, 0, 1, 1], [], []>} : vector<2x32xf32>, vector<32x128xf32>, vector<2x128xf32> -> vector<2x128xf32>
    %c1_182 = arith.constant 1 : index
    %c0_183 = arith.constant 0 : index
    %c0_184 = arith.constant 0 : index
    %557 = vector.load %arg2[%c1_182, %c0_183, %c0_184] : memref<4x2x4xf32, #tpu.memory_space<vmem>>, vector<1x2x4xf32>
    %558 = vector.shape_cast %557 : vector<1x2x4xf32> to vector<2x4xf32>
    %cst_185 = arith.constant dense<0.000000e+00> : vector<2x128xf32>
    %559 = tpu.matmul %558, %447, %cst_185 {dimension_numbers = #tpu.dot_dimension_numbers<[1], [0], [0], [1], [0, 0, 1, 1], [], []>} : vector<2x4xf32>, vector<4x128xf32>, vector<2x128xf32> -> vector<2x128xf32>
    %560 = arith.addf %556, %559 : vector<2x128xf32>
    %561 = vector.broadcast %449 : vector<1x128xf32> to vector<2x128xf32>
    %562 = arith.addf %560, %561 : vector<2x128xf32>
    %563 = vector.extract_strided_slice %562 {offsets = [0, 0], sizes = [2, 96], strides = [1, 1]} : vector<2x128xf32> to vector<2x96xf32>
    %564 = arith.negf %563 : vector<2x96xf32>
    %565 = math.exp %564 : vector<2x96xf32>
    %cst_186 = arith.constant 1.000000e+00 : f32
    %566 = vector.broadcast %cst_186 : f32 to vector<2x96xf32>
    %567 = arith.addf %566, %565 : vector<2x96xf32>
    %568 = arith.divf %566, %567 : vector<2x96xf32>
    %569 = vector.extract_strided_slice %562 {offsets = [0, 96], sizes = [2, 32], strides = [1, 1]} : vector<2x128xf32> to vector<2x32xf32>
    %570 = math.tanh %569 : vector<2x32xf32>
    %571 = vector.extract_strided_slice %568 {offsets = [0, 0], sizes = [2, 32], strides = [1, 1]} : vector<2x96xf32> to vector<2x32xf32>
    %572 = vector.extract_strided_slice %568 {offsets = [0, 32], sizes = [2, 32], strides = [1, 1]} : vector<2x96xf32> to vector<2x32xf32>
    %573 = vector.extract_strided_slice %568 {offsets = [0, 64], sizes = [2, 32], strides = [1, 1]} : vector<2x96xf32> to vector<2x32xf32>
    %574 = arith.mulf %572, %485 : vector<2x32xf32>
    %575 = arith.mulf %571, %570 : vector<2x32xf32>
    %576 = arith.addf %574, %575 : vector<2x32xf32>
    %577 = math.tanh %576 : vector<2x32xf32>
    %578 = arith.mulf %573, %577 : vector<2x32xf32>
    %cst_187 = arith.constant dense<0.000000e+00> : vector<2x32xf32>
    %579 = tpu.matmul %578, %450, %cst_187 {dimension_numbers = #tpu.dot_dimension_numbers<[1], [0], [0], [1], [0, 0, 1, 1], [], []>} : vector<2x32xf32>, vector<32x32xf32>, vector<2x32xf32> -> vector<2x32xf32>
    %c1_188 = arith.constant 1 : index
    %c0_189 = arith.constant 0 : index
    %c0_190 = arith.constant 0 : index
    %580 = vector.load %arg3[%c1_188, %c0_189, %c0_190] : memref<4x2x4xf32, #tpu.memory_space<vmem>>, vector<1x2x4xf32>
    %581 = vector.shape_cast %580 : vector<1x2x4xf32> to vector<2x4xf32>
    %cst_191 = arith.constant dense<0.000000e+00> : vector<2x32xf32>
    %582 = tpu.matmul %581, %451, %cst_191 {dimension_numbers = #tpu.dot_dimension_numbers<[1], [0], [0], [1], [0, 0, 1, 1], [], []>} : vector<2x4xf32>, vector<4x32xf32>, vector<2x32xf32> -> vector<2x32xf32>
    %583 = arith.addf %579, %582 : vector<2x32xf32>
    %584 = vector.broadcast %452 : vector<1x32xf32> to vector<2x32xf32>
    %585 = arith.addf %583, %584 : vector<2x32xf32>
    %cst_192 = arith.constant dense<0.000000e+00> : vector<2xf32>
    %586 = vector.multi_reduction <add>, %585, %cst_192 [1] : vector<2x32xf32> to vector<2xf32>
    %587 = vector.shape_cast %586 : vector<2xf32> to vector<2x1xf32>
    %cst_193 = arith.constant 3.200000e+01 : f32
    %588 = vector.broadcast %cst_193 : f32 to vector<2x1xf32>
    %589 = arith.divf %587, %588 : vector<2x1xf32>
    %590 = vector.broadcast %589 : vector<2x1xf32> to vector<2x32xf32>
    %591 = arith.subf %585, %590 : vector<2x32xf32>
    %592 = arith.mulf %591, %591 : vector<2x32xf32>
    %cst_194 = arith.constant dense<0.000000e+00> : vector<2xf32>
    %593 = vector.multi_reduction <add>, %592, %cst_194 [1] : vector<2x32xf32> to vector<2xf32>
    %594 = vector.shape_cast %593 : vector<2xf32> to vector<2x1xf32>
    %cst_195 = arith.constant 3.200000e+01 : f32
    %595 = vector.broadcast %cst_195 : f32 to vector<2x1xf32>
    %596 = arith.divf %594, %595 : vector<2x1xf32>
    %597 = vector.broadcast %589 : vector<2x1xf32> to vector<2x32xf32>
    %598 = arith.subf %585, %597 : vector<2x32xf32>
    %cst_196 = arith.constant 9.99999974E-6 : f32
    %599 = vector.broadcast %cst_196 : f32 to vector<2x1xf32>
    %600 = arith.addf %596, %599 : vector<2x1xf32>
    %601 = math.rsqrt %600 : vector<2x1xf32>
    %602 = vector.broadcast %601 : vector<2x1xf32> to vector<2x32xf32>
    %603 = arith.mulf %598, %602 : vector<2x32xf32>
    %604 = vector.broadcast %453 : vector<1x32xf32> to vector<2x32xf32>
    %605 = arith.mulf %603, %604 : vector<2x32xf32>
    %606 = vector.broadcast %454 : vector<1x32xf32> to vector<2x32xf32>
    %607 = arith.addf %605, %606 : vector<2x32xf32>
    %cst_197 = arith.constant dense<0.000000e+00> : vector<16x32xf32>
    %608 = tpu.matmul %461, %607, %cst_197 {dimension_numbers = #tpu.dot_dimension_numbers<[1], [0], [0], [1], [0, 0, 1, 1], [], []>} : vector<16x2xf32>, vector<2x32xf32>, vector<16x32xf32> -> vector<16x32xf32>
    %609 = arith.mulf %608, %446 : vector<16x32xf32>
    %cst_198 = arith.constant dense<0.000000e+00> : vector<16x4xf32>
    %610 = tpu.matmul %609, %457, %cst_198 {dimension_numbers = #tpu.dot_dimension_numbers<[1], [0], [0], [1], [0, 0, 1, 1], [], []>} : vector<16x32xf32>, vector<32x4xf32>, vector<16x4xf32> -> vector<16x4xf32>
    %cst_199 = arith.constant dense<0xFF800000> : vector<4xf32>
    %611 = vector.multi_reduction <maximumf>, %610, %cst_199 [0] : vector<16x4xf32> to vector<4xf32>
    %612 = vector.shape_cast %611 : vector<4xf32> to vector<1x4xf32>
    %613 = vector.broadcast %612 : vector<1x4xf32> to vector<16x4xf32>
    %614 = arith.subf %610, %613 : vector<16x4xf32>
    %615 = math.exp %614 : vector<16x4xf32>
    %cst_200 = arith.constant dense<0.000000e+00> : vector<16x4xf32>
    %616 = tpu.matmul %424, %615, %cst_200 {dimension_numbers = #tpu.dot_dimension_numbers<[1], [0], [0], [1], [0, 0, 1, 1], [], []>} : vector<16x16xf32>, vector<16x4xf32>, vector<16x4xf32> -> vector<16x4xf32>
    %617 = arith.divf %615, %616 : vector<16x4xf32>
    %cst_201 = arith.constant dense<0.000000e+00> : vector<16x32xf32>
    %618 = tpu.matmul %617, %458, %cst_201 {dimension_numbers = #tpu.dot_dimension_numbers<[1], [0], [0], [1], [0, 0, 1, 1], [], []>} : vector<16x4xf32>, vector<4x32xf32>, vector<16x32xf32> -> vector<16x32xf32>
    %619 = arith.mulf %618, %446 : vector<16x32xf32>
    %cst_202 = arith.constant dense<0.000000e+00> : vector<2x32xf32>
    %620 = tpu.matmul %462, %619, %cst_202 {dimension_numbers = #tpu.dot_dimension_numbers<[1], [0], [0], [1], [0, 0, 1, 1], [], []>} : vector<2x16xf32>, vector<16x32xf32>, vector<2x32xf32> -> vector<2x32xf32>
    %cst_203 = arith.constant dense<0.000000e+00> : vector<2x32xf32>
    %621 = tpu.matmul %620, %459, %cst_203 {dimension_numbers = #tpu.dot_dimension_numbers<[1], [0], [0], [1], [0, 0, 1, 1], [], []>} : vector<2x32xf32>, vector<32x32xf32>, vector<2x32xf32> -> vector<2x32xf32>
    %622 = vector.broadcast %460 : vector<1x32xf32> to vector<2x32xf32>
    %623 = arith.addf %621, %622 : vector<2x32xf32>
    %cst_204 = arith.constant dense<0.000000e+00> : vector<2xf32>
    %624 = vector.multi_reduction <add>, %623, %cst_204 [1] : vector<2x32xf32> to vector<2xf32>
    %625 = vector.shape_cast %624 : vector<2xf32> to vector<2x1xf32>
    %cst_205 = arith.constant 3.200000e+01 : f32
    %626 = vector.broadcast %cst_205 : f32 to vector<2x1xf32>
    %627 = arith.divf %625, %626 : vector<2x1xf32>
    %628 = vector.broadcast %627 : vector<2x1xf32> to vector<2x32xf32>
    %629 = arith.subf %623, %628 : vector<2x32xf32>
    %630 = arith.mulf %629, %629 : vector<2x32xf32>
    %cst_206 = arith.constant dense<0.000000e+00> : vector<2xf32>
    %631 = vector.multi_reduction <add>, %630, %cst_206 [1] : vector<2x32xf32> to vector<2xf32>
    %632 = vector.shape_cast %631 : vector<2xf32> to vector<2x1xf32>
    %cst_207 = arith.constant 3.200000e+01 : f32
    %633 = vector.broadcast %cst_207 : f32 to vector<2x1xf32>
    %634 = arith.divf %632, %633 : vector<2x1xf32>
    %635 = vector.broadcast %627 : vector<2x1xf32> to vector<2x32xf32>
    %636 = arith.subf %623, %635 : vector<2x32xf32>
    %cst_208 = arith.constant 9.99999974E-6 : f32
    %637 = vector.broadcast %cst_208 : f32 to vector<2x1xf32>
    %638 = arith.addf %634, %637 : vector<2x1xf32>
    %639 = math.rsqrt %638 : vector<2x1xf32>
    %640 = vector.broadcast %639 : vector<2x1xf32> to vector<2x32xf32>
    %641 = arith.mulf %636, %640 : vector<2x32xf32>
    %642 = vector.broadcast %455 : vector<1x32xf32> to vector<2x32xf32>
    %643 = arith.mulf %641, %642 : vector<2x32xf32>
    %644 = vector.broadcast %456 : vector<1x32xf32> to vector<2x32xf32>
    %645 = arith.addf %643, %644 : vector<2x32xf32>
    %c2_209 = arith.constant 2 : index
    %c0_210 = arith.constant 0 : index
    %646 = vector.load %arg9[%c2_209, %c0_210] : memref<8x32xf32, #tpu.memory_space<vmem>>, vector<2x32xf32>
    tpu.vector_store %arg9[%c2_209, %c0_210], %645 {strides = array<i32>} : memref<8x32xf32, #tpu.memory_space<vmem>>, vector<2x32xf32>,
    %cst_211 = arith.constant dense<0.000000e+00> : vector<2x128xf32>
    %647 = tpu.matmul %645, %448, %cst_211 {dimension_numbers = #tpu.dot_dimension_numbers<[1], [0], [0], [1], [0, 0, 1, 1], [], []>} : vector<2x32xf32>, vector<32x128xf32>, vector<2x128xf32> -> vector<2x128xf32>
    %c2_212 = arith.constant 2 : index
    %c0_213 = arith.constant 0 : index
    %c0_214 = arith.constant 0 : index
    %648 = vector.load %arg2[%c2_212, %c0_213, %c0_214] : memref<4x2x4xf32, #tpu.memory_space<vmem>>, vector<1x2x4xf32>
    %649 = vector.shape_cast %648 : vector<1x2x4xf32> to vector<2x4xf32>
    %cst_215 = arith.constant dense<0.000000e+00> : vector<2x128xf32>
    %650 = tpu.matmul %649, %447, %cst_215 {dimension_numbers = #tpu.dot_dimension_numbers<[1], [0], [0], [1], [0, 0, 1, 1], [], []>} : vector<2x4xf32>, vector<4x128xf32>, vector<2x128xf32> -> vector<2x128xf32>
    %651 = arith.addf %647, %650 : vector<2x128xf32>
    %652 = vector.broadcast %449 : vector<1x128xf32> to vector<2x128xf32>
    %653 = arith.addf %651, %652 : vector<2x128xf32>
    %654 = vector.extract_strided_slice %653 {offsets = [0, 0], sizes = [2, 96], strides = [1, 1]} : vector<2x128xf32> to vector<2x96xf32>
    %655 = arith.negf %654 : vector<2x96xf32>
    %656 = math.exp %655 : vector<2x96xf32>
    %cst_216 = arith.constant 1.000000e+00 : f32
    %657 = vector.broadcast %cst_216 : f32 to vector<2x96xf32>
    %658 = arith.addf %657, %656 : vector<2x96xf32>
    %659 = arith.divf %657, %658 : vector<2x96xf32>
    %660 = vector.extract_strided_slice %653 {offsets = [0, 96], sizes = [2, 32], strides = [1, 1]} : vector<2x128xf32> to vector<2x32xf32>
    %661 = math.tanh %660 : vector<2x32xf32>
    %662 = vector.extract_strided_slice %659 {offsets = [0, 0], sizes = [2, 32], strides = [1, 1]} : vector<2x96xf32> to vector<2x32xf32>
    %663 = vector.extract_strided_slice %659 {offsets = [0, 32], sizes = [2, 32], strides = [1, 1]} : vector<2x96xf32> to vector<2x32xf32>
    %664 = vector.extract_strided_slice %659 {offsets = [0, 64], sizes = [2, 32], strides = [1, 1]} : vector<2x96xf32> to vector<2x32xf32>
    %665 = arith.mulf %663, %576 : vector<2x32xf32>
    %666 = arith.mulf %662, %661 : vector<2x32xf32>
    %667 = arith.addf %665, %666 : vector<2x32xf32>
    %668 = math.tanh %667 : vector<2x32xf32>
    %669 = arith.mulf %664, %668 : vector<2x32xf32>
    %cst_217 = arith.constant dense<0.000000e+00> : vector<2x32xf32>
    %670 = tpu.matmul %669, %450, %cst_217 {dimension_numbers = #tpu.dot_dimension_numbers<[1], [0], [0], [1], [0, 0, 1, 1], [], []>} : vector<2x32xf32>, vector<32x32xf32>, vector<2x32xf32> -> vector<2x32xf32>
    %c2_218 = arith.constant 2 : index
    %c0_219 = arith.constant 0 : index
    %c0_220 = arith.constant 0 : index
    %671 = vector.load %arg3[%c2_218, %c0_219, %c0_220] : memref<4x2x4xf32, #tpu.memory_space<vmem>>, vector<1x2x4xf32>
    %672 = vector.shape_cast %671 : vector<1x2x4xf32> to vector<2x4xf32>
    %cst_221 = arith.constant dense<0.000000e+00> : vector<2x32xf32>
    %673 = tpu.matmul %672, %451, %cst_221 {dimension_numbers = #tpu.dot_dimension_numbers<[1], [0], [0], [1], [0, 0, 1, 1], [], []>} : vector<2x4xf32>, vector<4x32xf32>, vector<2x32xf32> -> vector<2x32xf32>
    %674 = arith.addf %670, %673 : vector<2x32xf32>
    %675 = vector.broadcast %452 : vector<1x32xf32> to vector<2x32xf32>
    %676 = arith.addf %674, %675 : vector<2x32xf32>
    %cst_222 = arith.constant dense<0.000000e+00> : vector<2xf32>
    %677 = vector.multi_reduction <add>, %676, %cst_222 [1] : vector<2x32xf32> to vector<2xf32>
    %678 = vector.shape_cast %677 : vector<2xf32> to vector<2x1xf32>
    %cst_223 = arith.constant 3.200000e+01 : f32
    %679 = vector.broadcast %cst_223 : f32 to vector<2x1xf32>
    %680 = arith.divf %678, %679 : vector<2x1xf32>
    %681 = vector.broadcast %680 : vector<2x1xf32> to vector<2x32xf32>
    %682 = arith.subf %676, %681 : vector<2x32xf32>
    %683 = arith.mulf %682, %682 : vector<2x32xf32>
    %cst_224 = arith.constant dense<0.000000e+00> : vector<2xf32>
    %684 = vector.multi_reduction <add>, %683, %cst_224 [1] : vector<2x32xf32> to vector<2xf32>
    %685 = vector.shape_cast %684 : vector<2xf32> to vector<2x1xf32>
    %cst_225 = arith.constant 3.200000e+01 : f32
    %686 = vector.broadcast %cst_225 : f32 to vector<2x1xf32>
    %687 = arith.divf %685, %686 : vector<2x1xf32>
    %688 = vector.broadcast %680 : vector<2x1xf32> to vector<2x32xf32>
    %689 = arith.subf %676, %688 : vector<2x32xf32>
    %cst_226 = arith.constant 9.99999974E-6 : f32
    %690 = vector.broadcast %cst_226 : f32 to vector<2x1xf32>
    %691 = arith.addf %687, %690 : vector<2x1xf32>
    %692 = math.rsqrt %691 : vector<2x1xf32>
    %693 = vector.broadcast %692 : vector<2x1xf32> to vector<2x32xf32>
    %694 = arith.mulf %689, %693 : vector<2x32xf32>
    %695 = vector.broadcast %453 : vector<1x32xf32> to vector<2x32xf32>
    %696 = arith.mulf %694, %695 : vector<2x32xf32>
    %697 = vector.broadcast %454 : vector<1x32xf32> to vector<2x32xf32>
    %698 = arith.addf %696, %697 : vector<2x32xf32>
    %cst_227 = arith.constant dense<0.000000e+00> : vector<16x32xf32>
    %699 = tpu.matmul %461, %698, %cst_227 {dimension_numbers = #tpu.dot_dimension_numbers<[1], [0], [0], [1], [0, 0, 1, 1], [], []>} : vector<16x2xf32>, vector<2x32xf32>, vector<16x32xf32> -> vector<16x32xf32>
    %700 = arith.mulf %699, %446 : vector<16x32xf32>
    %cst_228 = arith.constant dense<0.000000e+00> : vector<16x4xf32>
    %701 = tpu.matmul %700, %457, %cst_228 {dimension_numbers = #tpu.dot_dimension_numbers<[1], [0], [0], [1], [0, 0, 1, 1], [], []>} : vector<16x32xf32>, vector<32x4xf32>, vector<16x4xf32> -> vector<16x4xf32>
    %cst_229 = arith.constant dense<0xFF800000> : vector<4xf32>
    %702 = vector.multi_reduction <maximumf>, %701, %cst_229 [0] : vector<16x4xf32> to vector<4xf32>
    %703 = vector.shape_cast %702 : vector<4xf32> to vector<1x4xf32>
    %704 = vector.broadcast %703 : vector<1x4xf32> to vector<16x4xf32>
    %705 = arith.subf %701, %704 : vector<16x4xf32>
    %706 = math.exp %705 : vector<16x4xf32>
    %cst_230 = arith.constant dense<0.000000e+00> : vector<16x4xf32>
    %707 = tpu.matmul %424, %706, %cst_230 {dimension_numbers = #tpu.dot_dimension_numbers<[1], [0], [0], [1], [0, 0, 1, 1], [], []>} : vector<16x16xf32>, vector<16x4xf32>, vector<16x4xf32> -> vector<16x4xf32>
    %708 = arith.divf %706, %707 : vector<16x4xf32>
    %cst_231 = arith.constant dense<0.000000e+00> : vector<16x32xf32>
    %709 = tpu.matmul %708, %458, %cst_231 {dimension_numbers = #tpu.dot_dimension_numbers<[1], [0], [0], [1], [0, 0, 1, 1], [], []>} : vector<16x4xf32>, vector<4x32xf32>, vector<16x32xf32> -> vector<16x32xf32>
    %710 = arith.mulf %709, %446 : vector<16x32xf32>
    %cst_232 = arith.constant dense<0.000000e+00> : vector<2x32xf32>
    %711 = tpu.matmul %462, %710, %cst_232 {dimension_numbers = #tpu.dot_dimension_numbers<[1], [0], [0], [1], [0, 0, 1, 1], [], []>} : vector<2x16xf32>, vector<16x32xf32>, vector<2x32xf32> -> vector<2x32xf32>
    %cst_233 = arith.constant dense<0.000000e+00> : vector<2x32xf32>
    %712 = tpu.matmul %711, %459, %cst_233 {dimension_numbers = #tpu.dot_dimension_numbers<[1], [0], [0], [1], [0, 0, 1, 1], [], []>} : vector<2x32xf32>, vector<32x32xf32>, vector<2x32xf32> -> vector<2x32xf32>
    %713 = vector.broadcast %460 : vector<1x32xf32> to vector<2x32xf32>
    %714 = arith.addf %712, %713 : vector<2x32xf32>
    %cst_234 = arith.constant dense<0.000000e+00> : vector<2xf32>
    %715 = vector.multi_reduction <add>, %714, %cst_234 [1] : vector<2x32xf32> to vector<2xf32>
    %716 = vector.shape_cast %715 : vector<2xf32> to vector<2x1xf32>
    %cst_235 = arith.constant 3.200000e+01 : f32
    %717 = vector.broadcast %cst_235 : f32 to vector<2x1xf32>
    %718 = arith.divf %716, %717 : vector<2x1xf32>
    %719 = vector.broadcast %718 : vector<2x1xf32> to vector<2x32xf32>
    %720 = arith.subf %714, %719 : vector<2x32xf32>
    %721 = arith.mulf %720, %720 : vector<2x32xf32>
    %cst_236 = arith.constant dense<0.000000e+00> : vector<2xf32>
    %722 = vector.multi_reduction <add>, %721, %cst_236 [1] : vector<2x32xf32> to vector<2xf32>
    %723 = vector.shape_cast %722 : vector<2xf32> to vector<2x1xf32>
    %cst_237 = arith.constant 3.200000e+01 : f32
    %724 = vector.broadcast %cst_237 : f32 to vector<2x1xf32>
    %725 = arith.divf %723, %724 : vector<2x1xf32>
    %726 = vector.broadcast %718 : vector<2x1xf32> to vector<2x32xf32>
    %727 = arith.subf %714, %726 : vector<2x32xf32>
    %cst_238 = arith.constant 9.99999974E-6 : f32
    %728 = vector.broadcast %cst_238 : f32 to vector<2x1xf32>
    %729 = arith.addf %725, %728 : vector<2x1xf32>
    %730 = math.rsqrt %729 : vector<2x1xf32>
    %731 = vector.broadcast %730 : vector<2x1xf32> to vector<2x32xf32>
    %732 = arith.mulf %727, %731 : vector<2x32xf32>
    %733 = vector.broadcast %455 : vector<1x32xf32> to vector<2x32xf32>
    %734 = arith.mulf %732, %733 : vector<2x32xf32>
    %735 = vector.broadcast %456 : vector<1x32xf32> to vector<2x32xf32>
    %736 = arith.addf %734, %735 : vector<2x32xf32>
    %c4_239 = arith.constant 4 : index
    %c0_240 = arith.constant 0 : index
    %737 = vector.load %arg9[%c4_239, %c0_240] : memref<8x32xf32, #tpu.memory_space<vmem>>, vector<2x32xf32>
    tpu.vector_store %arg9[%c4_239, %c0_240], %736 {strides = array<i32>} : memref<8x32xf32, #tpu.memory_space<vmem>>, vector<2x32xf32>,
    %cst_241 = arith.constant dense<0.000000e+00> : vector<2x128xf32>
    %738 = tpu.matmul %736, %448, %cst_241 {dimension_numbers = #tpu.dot_dimension_numbers<[1], [0], [0], [1], [0, 0, 1, 1], [], []>} : vector<2x32xf32>, vector<32x128xf32>, vector<2x128xf32> -> vector<2x128xf32>
    %c3_242 = arith.constant 3 : index
    %c0_243 = arith.constant 0 : index
    %c0_244 = arith.constant 0 : index
    %739 = vector.load %arg2[%c3_242, %c0_243, %c0_244] : memref<4x2x4xf32, #tpu.memory_space<vmem>>, vector<1x2x4xf32>
    %740 = vector.shape_cast %739 : vector<1x2x4xf32> to vector<2x4xf32>
    %cst_245 = arith.constant dense<0.000000e+00> : vector<2x128xf32>
    %741 = tpu.matmul %740, %447, %cst_245 {dimension_numbers = #tpu.dot_dimension_numbers<[1], [0], [0], [1], [0, 0, 1, 1], [], []>} : vector<2x4xf32>, vector<4x128xf32>, vector<2x128xf32> -> vector<2x128xf32>
    %742 = arith.addf %738, %741 : vector<2x128xf32>
    %743 = vector.broadcast %449 : vector<1x128xf32> to vector<2x128xf32>
    %744 = arith.addf %742, %743 : vector<2x128xf32>
    %745 = vector.extract_strided_slice %744 {offsets = [0, 0], sizes = [2, 96], strides = [1, 1]} : vector<2x128xf32> to vector<2x96xf32>
    %746 = arith.negf %745 : vector<2x96xf32>
    %747 = math.exp %746 : vector<2x96xf32>
    %cst_246 = arith.constant 1.000000e+00 : f32
    %748 = vector.broadcast %cst_246 : f32 to vector<2x96xf32>
    %749 = arith.addf %748, %747 : vector<2x96xf32>
    %750 = arith.divf %748, %749 : vector<2x96xf32>
    %751 = vector.extract_strided_slice %744 {offsets = [0, 96], sizes = [2, 32], strides = [1, 1]} : vector<2x128xf32> to vector<2x32xf32>
    %752 = math.tanh %751 : vector<2x32xf32>
    %753 = vector.extract_strided_slice %750 {offsets = [0, 0], sizes = [2, 32], strides = [1, 1]} : vector<2x96xf32> to vector<2x32xf32>
    %754 = vector.extract_strided_slice %750 {offsets = [0, 32], sizes = [2, 32], strides = [1, 1]} : vector<2x96xf32> to vector<2x32xf32>
    %755 = vector.extract_strided_slice %750 {offsets = [0, 64], sizes = [2, 32], strides = [1, 1]} : vector<2x96xf32> to vector<2x32xf32>
    %756 = arith.mulf %754, %667 : vector<2x32xf32>
    %757 = arith.mulf %753, %752 : vector<2x32xf32>
    %758 = arith.addf %756, %757 : vector<2x32xf32>
    %759 = math.tanh %758 : vector<2x32xf32>
    %760 = arith.mulf %755, %759 : vector<2x32xf32>
    %cst_247 = arith.constant dense<0.000000e+00> : vector<2x32xf32>
    %761 = tpu.matmul %760, %450, %cst_247 {dimension_numbers = #tpu.dot_dimension_numbers<[1], [0], [0], [1], [0, 0, 1, 1], [], []>} : vector<2x32xf32>, vector<32x32xf32>, vector<2x32xf32> -> vector<2x32xf32>
    %c3_248 = arith.constant 3 : index
    %c0_249 = arith.constant 0 : index
    %c0_250 = arith.constant 0 : index
    %762 = vector.load %arg3[%c3_248, %c0_249, %c0_250] : memref<4x2x4xf32, #tpu.memory_space<vmem>>, vector<1x2x4xf32>
    %763 = vector.shape_cast %762 : vector<1x2x4xf32> to vector<2x4xf32>
    %cst_251 = arith.constant dense<0.000000e+00> : vector<2x32xf32>
    %764 = tpu.matmul %763, %451, %cst_251 {dimension_numbers = #tpu.dot_dimension_numbers<[1], [0], [0], [1], [0, 0, 1, 1], [], []>} : vector<2x4xf32>, vector<4x32xf32>, vector<2x32xf32> -> vector<2x32xf32>
    %765 = arith.addf %761, %764 : vector<2x32xf32>
    %766 = vector.broadcast %452 : vector<1x32xf32> to vector<2x32xf32>
    %767 = arith.addf %765, %766 : vector<2x32xf32>
    %cst_252 = arith.constant dense<0.000000e+00> : vector<2xf32>
    %768 = vector.multi_reduction <add>, %767, %cst_252 [1] : vector<2x32xf32> to vector<2xf32>
    %769 = vector.shape_cast %768 : vector<2xf32> to vector<2x1xf32>
    %cst_253 = arith.constant 3.200000e+01 : f32
    %770 = vector.broadcast %cst_253 : f32 to vector<2x1xf32>
    %771 = arith.divf %769, %770 : vector<2x1xf32>
    %772 = vector.broadcast %771 : vector<2x1xf32> to vector<2x32xf32>
    %773 = arith.subf %767, %772 : vector<2x32xf32>
    %774 = arith.mulf %773, %773 : vector<2x32xf32>
    %cst_254 = arith.constant dense<0.000000e+00> : vector<2xf32>
    %775 = vector.multi_reduction <add>, %774, %cst_254 [1] : vector<2x32xf32> to vector<2xf32>
    %776 = vector.shape_cast %775 : vector<2xf32> to vector<2x1xf32>
    %cst_255 = arith.constant 3.200000e+01 : f32
    %777 = vector.broadcast %cst_255 : f32 to vector<2x1xf32>
    %778 = arith.divf %776, %777 : vector<2x1xf32>
    %779 = vector.broadcast %771 : vector<2x1xf32> to vector<2x32xf32>
    %780 = arith.subf %767, %779 : vector<2x32xf32>
    %cst_256 = arith.constant 9.99999974E-6 : f32
    %781 = vector.broadcast %cst_256 : f32 to vector<2x1xf32>
    %782 = arith.addf %778, %781 : vector<2x1xf32>
    %783 = math.rsqrt %782 : vector<2x1xf32>
    %784 = vector.broadcast %783 : vector<2x1xf32> to vector<2x32xf32>
    %785 = arith.mulf %780, %784 : vector<2x32xf32>
    %786 = vector.broadcast %453 : vector<1x32xf32> to vector<2x32xf32>
    %787 = arith.mulf %785, %786 : vector<2x32xf32>
    %788 = vector.broadcast %454 : vector<1x32xf32> to vector<2x32xf32>
    %789 = arith.addf %787, %788 : vector<2x32xf32>
    %cst_257 = arith.constant dense<0.000000e+00> : vector<16x32xf32>
    %790 = tpu.matmul %461, %789, %cst_257 {dimension_numbers = #tpu.dot_dimension_numbers<[1], [0], [0], [1], [0, 0, 1, 1], [], []>} : vector<16x2xf32>, vector<2x32xf32>, vector<16x32xf32> -> vector<16x32xf32>
    %791 = arith.mulf %790, %446 : vector<16x32xf32>
    %cst_258 = arith.constant dense<0.000000e+00> : vector<16x4xf32>
    %792 = tpu.matmul %791, %457, %cst_258 {dimension_numbers = #tpu.dot_dimension_numbers<[1], [0], [0], [1], [0, 0, 1, 1], [], []>} : vector<16x32xf32>, vector<32x4xf32>, vector<16x4xf32> -> vector<16x4xf32>
    %cst_259 = arith.constant dense<0xFF800000> : vector<4xf32>
    %793 = vector.multi_reduction <maximumf>, %792, %cst_259 [0] : vector<16x4xf32> to vector<4xf32>
    %794 = vector.shape_cast %793 : vector<4xf32> to vector<1x4xf32>
    %795 = vector.broadcast %794 : vector<1x4xf32> to vector<16x4xf32>
    %796 = arith.subf %792, %795 : vector<16x4xf32>
    %797 = math.exp %796 : vector<16x4xf32>
    %cst_260 = arith.constant dense<0.000000e+00> : vector<16x4xf32>
    %798 = tpu.matmul %424, %797, %cst_260 {dimension_numbers = #tpu.dot_dimension_numbers<[1], [0], [0], [1], [0, 0, 1, 1], [], []>} : vector<16x16xf32>, vector<16x4xf32>, vector<16x4xf32> -> vector<16x4xf32>
    %799 = arith.divf %797, %798 : vector<16x4xf32>
    %cst_261 = arith.constant dense<0.000000e+00> : vector<16x32xf32>
    %800 = tpu.matmul %799, %458, %cst_261 {dimension_numbers = #tpu.dot_dimension_numbers<[1], [0], [0], [1], [0, 0, 1, 1], [], []>} : vector<16x4xf32>, vector<4x32xf32>, vector<16x32xf32> -> vector<16x32xf32>
    %801 = arith.mulf %800, %446 : vector<16x32xf32>
    %cst_262 = arith.constant dense<0.000000e+00> : vector<2x32xf32>
    %802 = tpu.matmul %462, %801, %cst_262 {dimension_numbers = #tpu.dot_dimension_numbers<[1], [0], [0], [1], [0, 0, 1, 1], [], []>} : vector<2x16xf32>, vector<16x32xf32>, vector<2x32xf32> -> vector<2x32xf32>
    %cst_263 = arith.constant dense<0.000000e+00> : vector<2x32xf32>
    %803 = tpu.matmul %802, %459, %cst_263 {dimension_numbers = #tpu.dot_dimension_numbers<[1], [0], [0], [1], [0, 0, 1, 1], [], []>} : vector<2x32xf32>, vector<32x32xf32>, vector<2x32xf32> -> vector<2x32xf32>
    %804 = vector.broadcast %460 : vector<1x32xf32> to vector<2x32xf32>
    %805 = arith.addf %803, %804 : vector<2x32xf32>
    %cst_264 = arith.constant dense<0.000000e+00> : vector<2xf32>
    %806 = vector.multi_reduction <add>, %805, %cst_264 [1] : vector<2x32xf32> to vector<2xf32>
    %807 = vector.shape_cast %806 : vector<2xf32> to vector<2x1xf32>
    %cst_265 = arith.constant 3.200000e+01 : f32
    %808 = vector.broadcast %cst_265 : f32 to vector<2x1xf32>
    %809 = arith.divf %807, %808 : vector<2x1xf32>
    %810 = vector.broadcast %809 : vector<2x1xf32> to vector<2x32xf32>
    %811 = arith.subf %805, %810 : vector<2x32xf32>
    %812 = arith.mulf %811, %811 : vector<2x32xf32>
    %cst_266 = arith.constant dense<0.000000e+00> : vector<2xf32>
    %813 = vector.multi_reduction <add>, %812, %cst_266 [1] : vector<2x32xf32> to vector<2xf32>
    %814 = vector.shape_cast %813 : vector<2xf32> to vector<2x1xf32>
    %cst_267 = arith.constant 3.200000e+01 : f32
    %815 = vector.broadcast %cst_267 : f32 to vector<2x1xf32>
    %816 = arith.divf %814, %815 : vector<2x1xf32>
    %817 = vector.broadcast %809 : vector<2x1xf32> to vector<2x32xf32>
    %818 = arith.subf %805, %817 : vector<2x32xf32>
    %cst_268 = arith.constant 9.99999974E-6 : f32
    %819 = vector.broadcast %cst_268 : f32 to vector<2x1xf32>
    %820 = arith.addf %816, %819 : vector<2x1xf32>
    %821 = math.rsqrt %820 : vector<2x1xf32>
    %822 = vector.broadcast %821 : vector<2x1xf32> to vector<2x32xf32>
    %823 = arith.mulf %818, %822 : vector<2x32xf32>
    %824 = vector.broadcast %455 : vector<1x32xf32> to vector<2x32xf32>
    %825 = arith.mulf %823, %824 : vector<2x32xf32>
    %826 = vector.broadcast %456 : vector<1x32xf32> to vector<2x32xf32>
    %827 = arith.addf %825, %826 : vector<2x32xf32>
    %c6_269 = arith.constant 6 : index
    %c0_270 = arith.constant 0 : index
    %828 = vector.load %arg9[%c6_269, %c0_270] : memref<8x32xf32, #tpu.memory_space<vmem>>, vector<2x32xf32>
    tpu.vector_store %arg9[%c6_269, %c0_270], %827 {strides = array<i32>} : memref<8x32xf32, #tpu.memory_space<vmem>>, vector<2x32xf32>,
    %c0_271 = arith.constant 0 : index
    %c0_272 = arith.constant 0 : index
    %829 = vector.load %arg9[%c0_271, %c0_272] : memref<8x32xf32, #tpu.memory_space<vmem>>, vector<8x32xf32>
    %c536 = arith.constant 536 : index
    %c0_273 = arith.constant 0 : index
    %830 = vector.load %arg4[%c536, %c0_273] : memref<576x128xf32, #tpu.memory_space<vmem>>, vector<32x3xf32>
    %cst_274 = arith.constant dense<0.000000e+00> : vector<8x3xf32>
    %831 = tpu.matmul %829, %830, %cst_274 {dimension_numbers = #tpu.dot_dimension_numbers<[1], [0], [0], [1], [0, 0, 1, 1], [], []>} : vector<8x32xf32>, vector<32x3xf32>, vector<8x3xf32> -> vector<8x3xf32>
    %c568 = arith.constant 568 : index
    %c0_275 = arith.constant 0 : index
    %832 = vector.load %arg4[%c568, %c0_275] : memref<576x128xf32, #tpu.memory_space<vmem>>, vector<1x3xf32>
    %833 = vector.broadcast %832 : vector<1x3xf32> to vector<8x3xf32>
    %834 = arith.addf %831, %833 : vector<8x3xf32>
    %835 = tpu.iota {dimensions = array<i32: 1>} : vector<8x3xi32>
    %c0_i32 = arith.constant 0 : i32
    %836 = vector.broadcast %c0_i32 : i32 to vector<8x3xi32>
    %837 = arith.cmpi eq, %835, %836 : vector<8x3xi32>
    %c1_i32 = arith.constant 1 : i32
    %838 = vector.broadcast %c1_i32 : i32 to vector<8x3xi32>
    %839 = arith.cmpi eq, %835, %838 : vector<8x3xi32>
    %840 = arith.negf %834 : vector<8x3xf32>
    %841 = math.exp %840 : vector<8x3xf32>
    %cst_276 = arith.constant 1.000000e+00 : f32
    %842 = vector.broadcast %cst_276 : f32 to vector<8x3xf32>
    %843 = arith.addf %842, %841 : vector<8x3xf32>
    %844 = arith.divf %842, %843 : vector<8x3xf32>
    %cst_277 = arith.constant 0.000000e+00 : f32
    %845 = vector.broadcast %cst_277 : f32 to vector<8x3xf32>
    %846 = arith.maximumf %834, %845 : vector<8x3xf32>
    %847 = vector.broadcast %cst_277 : f32 to vector<8x3xf32>
    %848 = arith.subf %834, %847 : vector<8x3xf32>
    %849 = arith.cmpf one, %848, %848 : vector<8x3xf32>
    %850 = vector.broadcast %cst_277 : f32 to vector<8x3xf32>
    %851 = arith.addf %834, %850 : vector<8x3xf32>
    %852 = math.absf %848 : vector<8x3xf32>
    %cst_278 = arith.constant 0.000000e+00 : f32
    %853 = vector.broadcast %cst_278 : f32 to vector<8x3xf32>
    %854 = arith.subf %853, %852 : vector<8x3xf32>
    %855 = math.exp %854 : vector<8x3xf32>
    %856 = math.log1p %855 : vector<8x3xf32>
    %857 = arith.addf %846, %856 : vector<8x3xf32>
    %858 = arith.select %849, %851, %857 : vector<8x3xi1>, vector<8x3xf32>
    %859 = arith.select %839, %844, %858 : vector<8x3xi1>, vector<8x3xf32>
    %860 = arith.select %837, %834, %859 : vector<8x3xi1>, vector<8x3xf32>
    %c0_279 = arith.constant 0 : index
    %c0_280 = arith.constant 0 : index
    %861 = vector.load %arg5[%c0_279, %c0_280] : memref<8x3xf32, #tpu.memory_space<vmem>>, vector<8x3xf32>
    tpu.vector_store %arg5[%c0_279, %c0_280], %860 {strides = array<i32>} : memref<8x3xf32, #tpu.memory_space<vmem>>, vector<8x3xf32>,
    %862 = arith.cmpf one, %829, %829 : vector<8x32xf32>
    %cst_281 = arith.constant 1.000000e+00 : f32
    %cst_282 = arith.constant 0.000000e+00 : f32
    %863 = vector.broadcast %cst_281 : f32 to vector<8x32xf32>
    %864 = vector.broadcast %cst_282 : f32 to vector<8x32xf32>
    %865 = arith.select %862, %863, %864 : vector<8x32xi1>, vector<8x32xf32>
    %cst_283 = arith.constant dense<0xFF800000> : vector<8xf32>
    %866 = vector.multi_reduction <maximumf>, %865, %cst_283 [1] : vector<8x32xf32> to vector<8xf32>
    %867 = vector.shape_cast %866 : vector<8xf32> to vector<8x1xf32>
    %cst_284 = arith.constant dense<0xFF800000> : vector<1xf32>
    %868 = vector.multi_reduction <maximumf>, %867, %cst_284 [0] : vector<8x1xf32> to vector<1xf32>
    %869 = vector.shape_cast %868 : vector<1xf32> to vector<1x1xf32>
    %c0_285 = arith.constant 0 : index
    %c0_286 = arith.constant 0 : index
    %870 = vector.load %arg6[%c0_285, %c0_286] : memref<1x1xf32, #tpu.memory_space<vmem>>, vector<1x1xf32>
    tpu.vector_store %arg6[%c0_285, %c0_286], %869 {strides = array<i32>} : memref<1x1xf32, #tpu.memory_space<vmem>>, vector<1x1xf32>,
    return
  }
}

</mosaic_0001>

<llo_original>
// kernel: model_forward.1
$region0: #{model_forward.1}
  #allocation0 [shape = 'u32[]', space=smem, size = 0x4, offset = 0x4, fixed_abs, tag = 'smem constant byte address 0x4 - core index']
  #allocation1 [shape = 'u32[144,128]{1,0:T(1,128)}', space=vmem, size = 0x12000, scoped, tag = 'internal scratch']
  #allocation2 [shape = 'f32[16,32]{1,0:T(8,128)}', space=vmem, size = 0x2000, scoped, tag = 'scratch operand']
  #allocation3 [shape = 'f32[16,32]{1,0:T(8,128)}', space=vmem, size = 0x2000, scoped, tag = 'scratch operand']
  #allocation4 [shape = 'f32[8,32]{1,0:T(8,128)}', space=vmem, size = 0x1000, scoped, tag = 'scratch operand']
  %s0 = inlined_call_operand.vmem [shape: f32[2,8,5], index: 0, kind: input, shape index: {}]
  %s1 = inlined_call_operand.vmem [shape: f32[2,8,4], index: 1, kind: input, shape index: {}]
  %s2 = inlined_call_operand.vmem [shape: f32[4,2,4], index: 2, kind: input, shape index: {}]
  %s3 = inlined_call_operand.vmem [shape: f32[4,2,4], index: 3, kind: input, shape index: {}]
  %s4 = inlined_call_operand.hbm [shape: f32[576,128], index: 4, kind: input, shape index: {}]
  %s5 = inlined_call_operand.vmem [shape: f32[8,3], index: 5, kind: output, shape index: {0}]
  %s6 = inlined_call_operand.hbm [shape: f32[1,1], index: 6, kind: output, shape index: {1}]
  %7 = xla_tuple %s5, %s6
  %s8 = sld [smem:[#allocation0]]
  $region42: #{model_forward.1} parent=0
    _
  %s10 = ssub.s32 1, %s8
  %s11 = scalar_select 0, %s10, %s8
  $region1: #{model_forward.1} parent=0
    #allocation5 [shape = 'u8[294912]{0}', space=vmem, size = 0x48000, scoped, tag = 'input window, operand 4, single buffered']
    #allocation6 [shape = 's32[1]{0}', space=sflag, size = 0x4, scoped, tag = 'scoped memory for model_forward.1']
    #allocation7 [shape = 's32[1]{0}', space=sflag, size = 0x4, scoped, tag = 'scoped memory for model_forward.1']
    #allocation8 [shape = 'u8[512]{0}', space=vmem, size = 0x400, scoped, tag = 'output window, operand 1, single buffered']
    %12 = vsyncpa [#allocation6], 0
    %13 = vsyncpa [#allocation7], 0
    // Predicated region
    $region2: #{model_forward.1} parent=1 // pred_check
      _
    $region3: #{model_forward.1} parent=1 // pred_check_branch
      %15 = sbr.rel (0) target = $region5
    $region4: #{model_forward.1} parent=1 // pred_region
      _
    $region5: #{model_forward.1} parent=1 // pred_fallthru
      _
    // Predicated region
    $region6: #{model_forward.1} parent=1 // pred_check
      _
    $region7: #{model_forward.1} parent=1 // pred_check_branch
      %17 = sbr.rel (0) target = $region9
    $region8: #{model_forward.1} parent=1 // pred_region
      _
    $region9: #{model_forward.1} parent=1 // pred_fallthru
      _
    // Predicated region
    $region10: #{model_forward.1} parent=1 // pred_check
      _
    $region11: #{model_forward.1} parent=1 // pred_check_branch
      %19 = sbr.rel (0) target = $region13
    $region12: #{model_forward.1} parent=1 // pred_region
      _
    $region13: #{model_forward.1} parent=1 // pred_fallthru
      _
    // Predicated region
    $region14: #{model_forward.1} parent=1 // pred_check
      _
    $region15: #{model_forward.1} parent=1 // pred_check_branch
      %21 = sbr.rel (0) target = $region17
    $region16: #{model_forward.1} parent=1 // pred_region
      _
    $region17: #{model_forward.1} parent=1 // pred_fallthru
      _
    // Predicated region
    $region18: #{model_forward.1} parent=1 // pred_check
      _
    $region19: #{model_forward.1} parent=1 // pred_check_branch
      %23 = sbr.rel (0) target = $region21
    $region20: #{model_forward.1} parent=1 // pred_region
      %s25 = ssub.s32 9216, 9216
      %26 = vsyncadd [#allocation6], %s25
      %s27 = sshll.u32 [#allocation5], 4
      %s28 = int_to_ptr.vmem [resolvable:$true] %s27
      %33 = dma.hbm_to_vmem [thread:$0]  %s4, 9216, %s28, [#allocation6], 128, 128, 8
    $region21: #{model_forward.1} parent=1 // pred_fallthru
      _
    // Predicated region
    $region22: #{model_forward.1} parent=1 // pred_check
      _
    $region23: #{model_forward.1} parent=1 // pred_check_branch
      %35 = sbr.rel (0) target = $region25
    $region24: #{model_forward.1} parent=1 // pred_region
      %36 = dma.done [#allocation6], 9216
    $region25: #{model_forward.1} parent=1 // pred_fallthru
      _
    %v37 = vld [vmem:[%s0] sm:$0xff]
    %v38 = vld [vmem:[%s0 + $0x8] sm:$0xff]
    %v39 = vld [vmem:[#allocation5 + $0x130] sm:$0xff]
    %v40 = vld [vmem:[#allocation5 + $0x138] sm:$0xff]
    %v41 = vld [vmem:[#allocation5] sm:$0x1f]
    %vm42 = vcmask 39936
    %v44 = vsel %vm42, %v37, 0
    %v47 = vsel %vm42, %v38, 0
    %vm49 = vcmask 1044480
    %v51 = vsel %vm49, %v41, 0
    %53 = vmatprep.subr.mxu0 0.0
    %54 = vmatpush1.msra.mxu0 %v51
    %55 = vmatprep.subr.mxu0 0.0
    %56 = vmatpush1.msra.mxu0 0.0
    %57 = vmatprep.subr.mxu0 0.0
    %58 = vmatpush1.msra.mxu0 0.0
    %59 = vmatprep.subr.mxu0 0.0
    %60 = vmatpush1.msra.mxu0 0.0
    %61 = vmatprep.subr.mxu0 0.0
    %62 = vmatpush1.msra.mxu0 0.0
    %63 = vmatprep.subr.mxu0 0.0
    %64 = vmatpush1.msra.mxu0 0.0
    %65 = vmatprep.subr.mxu0 0.0
    %66 = vmatpush1.msra.mxu0 0.0
    %67 = vmatprep.subr.mxu0 0.0
    %68 = vmatpush1.msra.mxu0 0.0
    %69 = vmatprep.subr.mxu0 0.0
    %70 = vmatpush1.msra.mxu0 0.0
    %71 = vmatprep.subr.mxu0 0.0
    %72 = vmatpush1.msra.mxu0 0.0
    %73 = vmatprep.subr.mxu0 0.0
    %74 = vmatpush1.msra.mxu0 0.0
    %75 = vmatprep.subr.mxu0 0.0
    %76 = vmatpush1.msra.mxu0 0.0
    %77 = vmatprep.subr.mxu0 0.0
    %78 = vmatpush1.msra.mxu0 0.0
    %79 = vmatprep.subr.mxu0 0.0
    %80 = vmatpush1.msra.mxu0 0.0
    %81 = vmatprep.subr.mxu0 0.0
    %82 = vmatpush1.msra.mxu0 0.0
    %83 = vmatprep.subr.mxu0 0.0
    %84 = vmatpush1.msra.mxu0 0.0
    %85 = vmatprep.subr.mxu0 0.0
    %86 = vmatpush1.msra.mxu0 0.0
    %87 = vmatprep.subr.mxu0 0.0
    %88 = vmatpush1.msra.mxu0 0.0
    %89 = vmatprep.subr.mxu0 0.0
    %90 = vmatpush1.msra.mxu0 0.0
    %91 = vmatprep.subr.mxu0 0.0
    %92 = vmatpush1.msra.mxu0 0.0
    %93 = vmatprep.subr.mxu0 0.0
    %94 = vmatpush1.msra.mxu0 0.0
    %95 = vmatprep.subr.mxu0 0.0
    %96 = vmatpush1.msra.mxu0 0.0
    %97 = vmatprep.subr.mxu0 0.0
    %98 = vmatpush1.msra.mxu0 0.0
    %99 = vmatprep.subr.mxu0 0.0
    %100 = vmatpush1.msra.mxu0 0.0
    %101 = vmatprep.subr.mxu0 0.0
    %102 = vmatpush1.msra.mxu0 0.0
    %103 = vmatprep.subr.mxu0 0.0
    %104 = vmatpush1.msra.mxu0 0.0
    %105 = vmatprep.subr.mxu0 0.0
    %106 = vmatpush1.msra.mxu0 0.0
    %107 = vmatprep.subr.mxu0 0.0
    %108 = vmatpush1.msra.mxu0 0.0
    %109 = vmatprep.subr.mxu0 0.0
    %110 = vmatpush1.msra.mxu0 0.0
    %111 = vmatprep.subr.mxu0 0.0
    %112 = vmatpush1.msra.mxu0 0.0
    %113 = vmatprep.subr.mxu0 0.0
    %114 = vmatpush1.msra.mxu0 0.0
    %115 = vmatprep.subr.mxu0 0.0
    %116 = vmatpush1.msra.mxu0 0.0
    %117 = vmatprep.mubr.f32.mxu0 0.0
    %118 = vmatmul.mubr.f32.gmra.mrb[0].mxu0 %v44
    %v119 = vpop.f32.mrb[0].mxu0
    %v120 = vadd.f32 0.0, %v119
    %v121 = vpop.f32.mrb[0].mxu0
    %122 = vmatprep.mubr.f32.mxu0 0.0
    %123 = vmatmul.mubr.f32.gmra.mrb[0].mxu0 %v47
    %v124 = vpop.f32.mrb[0].mxu0
    %v125 = vadd.f32 0.0, %v124
    %v126 = vpop.f32.mrb[0].mxu0
    %127 = vdwg.mxu0
    %v128 = vld [vmem:[#allocation5 + $0x28] sm:$0x1]
    %v129 = vlaneseq
    %v130 = vshrl.u32 %v129, 7
    %v131 = vsub.s32 0, %v130
    %v132 = vrot.slane %v128, %v131
    %vm133 = vcmask 130048
    %v135 = vsel %vm133, %v39, 0
    %v138 = vsel %vm133, %v40, 0
    %140 = vmatprep.subr.mxu0 0.0
    %141 = vmatpush1.msra.mxu0 %v120
    %142 = vmatprep.subr.mxu0 0.0
    %143 = vmatpush1.msra.mxu0 %v125
    %144 = vmatprep.subr.mxu0 0.0
    %145 = vmatpush1.msra.mxu0 0.0
    %146 = vmatprep.subr.mxu0 0.0
    %147 = vmatpush1.msra.mxu0 0.0
    %148 = vmatprep.subr.mxu0 0.0
    %149 = vmatpush1.msra.mxu0 0.0
    %150 = vmatprep.subr.mxu0 0.0
    %151 = vmatpush1.msra.mxu0 0.0
    %152 = vmatprep.subr.mxu0 0.0
    %153 = vmatpush1.msra.mxu0 0.0
    %154 = vmatprep.subr.mxu0 0.0
    %155 = vmatpush1.msra.mxu0 0.0
    %156 = vmatprep.subr.mxu0 0.0
    %157 = vmatpush1.msra.mxu0 0.0
    %158 = vmatprep.subr.mxu0 0.0
    %159 = vmatpush1.msra.mxu0 0.0
    %160 = vmatprep.subr.mxu0 0.0
    %161 = vmatpush1.msra.mxu0 0.0
    %162 = vmatprep.subr.mxu0 0.0
    %163 = vmatpush1.msra.mxu0 0.0
    %164 = vmatprep.subr.mxu0 0.0
    %165 = vmatpush1.msra.mxu0 0.0
    %166 = vmatprep.subr.mxu0 0.0
    %167 = vmatpush1.msra.mxu0 0.0
    %168 = vmatprep.subr.mxu0 0.0
    %169 = vmatpush1.msra.mxu0 0.0
    %170 = vmatprep.subr.mxu0 0.0
    %171 = vmatpush1.msra.mxu0 0.0
    %172 = vmatprep.subr.mxu0 0.0
    %173 = vmatpush1.msra.mxu0 0.0
    %174 = vmatprep.subr.mxu0 0.0
    %175 = vmatpush1.msra.mxu0 0.0
    %176 = vmatprep.subr.mxu0 0.0
    %177 = vmatpush1.msra.mxu0 0.0
    %178 = vmatprep.subr.mxu0 0.0
    %179 = vmatpush1.msra.mxu0 0.0
    %180 = vmatprep.subr.mxu0 0.0
    %181 = vmatpush1.msra.mxu0 0.0
    %182 = vmatprep.subr.mxu0 0.0
    %183 = vmatpush1.msra.mxu0 0.0
    %184 = vmatprep.subr.mxu0 0.0
    %185 = vmatpush1.msra.mxu0 0.0
    %186 = vmatprep.subr.mxu0 0.0
    %187 = vmatpush1.msra.mxu0 0.0
    %188 = vmatprep.subr.mxu0 0.0
    %189 = vmatpush1.msra.mxu0 0.0
    %190 = vmatprep.subr.mxu0 0.0
    %191 = vmatpush1.msra.mxu0 0.0
    %192 = vmatprep.subr.mxu0 0.0
    %193 = vmatpush1.msra.mxu0 0.0
    %194 = vmatprep.subr.mxu0 0.0
    %195 = vmatpush1.msra.mxu0 0.0
    %196 = vmatprep.subr.mxu0 0.0
    %197 = vmatpush1.msra.mxu0 0.0
    %198 = vmatprep.subr.mxu0 0.0
    %199 = vmatpush1.msra.mxu0 0.0
    %200 = vmatprep.subr.mxu0 0.0
    %201 = vmatpush1.msra.mxu0 0.0
    %202 = vmatprep.subr.mxu0 0.0
    %203 = vmatpush1.msra.mxu0 0.0
    %204 = vmatprep.mubr.f32.mxu0 0.0
    %205 = vmatmul.mubr.f32.gmra.mrb[0].mxu0 %v135
    %v206 = vpop.f32.mrb[0].mxu0
    %v207 = vadd.f32 %v132, %v206
    %v208 = vpop.f32.mrb[0].mxu0
    %209 = vmatprep.mubr.f32.mxu0 0.0
    %210 = vmatmul.mubr.f32.gmra.mrb[0].mxu0 %v138
    %v211 = vpop.f32.mrb[0].mxu0
    %v212 = vadd.f32 %v132, %v211
    %v213 = vpop.f32.mrb[0].mxu0
    %214 = vdwg.mxu0
    %v215 = vld [vmem:[#allocation5 + $0x8] sm:$0xff]
    %v216 = vld [vmem:[#allocation5 + $0x10] sm:$0xff]
    %v217 = vld [vmem:[#allocation5 + $0x18] sm:$0xff]
    %v218 = vld [vmem:[#allocation5 + $0x20] sm:$0xff]
    %v219 = vld [vmem:[#allocation5 + $0x30] sm:$0xff]
    %v220 = vld [vmem:[#allocation5 + $0x38] sm:$0xff]
    %v221 = vld [vmem:[#allocation5 + $0x40] sm:$0xff]
    %v222 = vld [vmem:[#allocation5 + $0x48] sm:$0xff]
    %v223 = vld [vmem:[#allocation5 + $0x50] sm:$0xff]
    %v224 = vld [vmem:[#allocation5 + $0x58] sm:$0xff]
    %v225 = vld [vmem:[#allocation5 + $0x60] sm:$0xff]
    %v226 = vld [vmem:[#allocation5 + $0x68] sm:$0xff]
    %v227 = vld [vmem:[#allocation5 + $0x70] sm:$0x1]
    %vm228 = vcmask 261120
    %v230 = vsel %vm228, 0.0, 0
    %232 = vmatprep.subr.mxu0 0.0
    %233 = vmatpush1.msra.mxu0 %v215
    %234 = vmatprep.subr.mxu0 0.0
    %235 = vmatpush1.msra.mxu0 %v216
    %236 = vmatprep.subr.mxu0 0.0
    %237 = vmatpush1.msra.mxu0 %v217
    %238 = vmatprep.subr.mxu0 0.0
    %239 = vmatpush1.msra.mxu0 %v218
    %240 = vmatprep.subr.mxu0 0.0
    %241 = vmatpush1.msra.mxu0 0.0
    %242 = vmatprep.subr.mxu0 0.0
    %243 = vmatpush1.msra.mxu0 0.0
    %244 = vmatprep.subr.mxu0 0.0
    %245 = vmatpush1.msra.mxu0 0.0
    %246 = vmatprep.subr.mxu0 0.0
    %247 = vmatpush1.msra.mxu0 0.0
    %248 = vmatprep.subr.mxu0 0.0
    %249 = vmatpush1.msra.mxu0 0.0
    %250 = vmatprep.subr.mxu0 0.0
    %251 = vmatpush1.msra.mxu0 0.0
    %252 = vmatprep.subr.mxu0 0.0
    %253 = vmatpush1.msra.mxu0 0.0
    %254 = vmatprep.subr.mxu0 0.0
    %255 = vmatpush1.msra.mxu0 0.0
    %256 = vmatprep.subr.mxu0 0.0
    %257 = vmatpush1.msra.mxu0 0.0
    %258 = vmatprep.subr.mxu0 0.0
    %259 = vmatpush1.msra.mxu0 0.0
    %260 = vmatprep.subr.mxu0 0.0
    %261 = vmatpush1.msra.mxu0 0.0
    %262 = vmatprep.subr.mxu0 0.0
    %263 = vmatpush1.msra.mxu0 0.0
    %264 = vmatprep.subr.mxu0 0.0
    %265 = vmatpush1.msra.mxu0 0.0
    %266 = vmatprep.subr.mxu0 0.0
    %267 = vmatpush1.msra.mxu0 0.0
    %268 = vmatprep.subr.mxu0 0.0
    %269 = vmatpush1.msra.mxu0 0.0
    %270 = vmatprep.subr.mxu0 0.0
    %271 = vmatpush1.msra.mxu0 0.0
    %272 = vmatprep.subr.mxu0 0.0
    %273 = vmatpush1.msra.mxu0 0.0
    %274 = vmatprep.subr.mxu0 0.0
    %275 = vmatpush1.msra.mxu0 0.0
    %276 = vmatprep.subr.mxu0 0.0
    %277 = vmatpush1.msra.mxu0 0.0
    %278 = vmatprep.subr.mxu0 0.0
    %279 = vmatpush1.msra.mxu0 0.0
    %280 = vmatprep.subr.mxu0 0.0
    %281 = vmatpush1.msra.mxu0 0.0
    %282 = vmatprep.subr.mxu0 0.0
    %283 = vmatpush1.msra.mxu0 0.0
    %284 = vmatprep.subr.mxu0 0.0
    %285 = vmatpush1.msra.mxu0 0.0
    %286 = vmatprep.subr.mxu0 0.0
    %287 = vmatpush1.msra.mxu0 0.0
    %288 = vmatprep.subr.mxu0 0.0
    %289 = vmatpush1.msra.mxu0 0.0
    %290 = vmatprep.subr.mxu0 0.0
    %291 = vmatpush1.msra.mxu0 0.0
    %292 = vmatprep.subr.mxu0 0.0
    %293 = vmatpush1.msra.mxu0 0.0
    %294 = vmatprep.subr.mxu0 0.0
    %295 = vmatpush1.msra.mxu0 0.0
    %296 = vmatprep.mubr.f32.mxu0 0.0
    %297 = vmatmul.mubr.f32.gmra.mrb[0].mxu0 %v230
    %v298 = vpop.f32.mrb[0].mxu0
    %v299 = vadd.f32 %v207, %v298
    %v300 = vpop.f32.mrb[0].mxu0
    %301 = vdwg.mxu0
    %v302 = vxor.u32 %v299, 2147483648
    %v303 = vmul.f32 %v302, 1.442695
    %v304 = vpow.pop %v303
    %v305 = vadd.f32 %v304, 1.0
    %v306 = vrcp.pop %v305
    %v307 = vmul.f32 1.0, %v306
    %v308 = vtanh.pop %v299
    %v309 = vmul.f32 %v307, 0.0
    %311 = vrot.lane.b32.xlu0 %v308, 32
    %v312 = vpop.permute.xlu0 %311
    %v314 = vmul.f32 %v307, %v312
    %316 = vrot.lane.b32.xlu0 %v314, 32
    %v317 = vpop.permute.xlu0 %316
    %v319 = vadd.f32 %v309, %v317
    %v320 = vtanh.pop %v319
    %322 = vrot.lane.b32.xlu0 %v320, 32
    %v323 = vpop.permute.xlu0 %322
    %v325 = vmul.f32 %v307, %v323
    %327 = vrot.lane.b32.xlu0 %v325, 64
    %v328 = vpop.permute.xlu0 %327
    %v329 = vsel %vm228, %v328, 0
    %331 = vmatprep.subr.mxu0 0.0
    %332 = vmatpush1.msra.mxu0 %v219
    %333 = vmatprep.subr.mxu0 0.0
    %334 = vmatpush1.msra.mxu0 %v220
    %335 = vmatprep.subr.mxu0 0.0
    %336 = vmatpush1.msra.mxu0 %v221
    %337 = vmatprep.subr.mxu0 0.0
    %338 = vmatpush1.msra.mxu0 %v222
    %339 = vmatprep.subr.mxu0 0.0
    %340 = vmatpush1.msra.mxu0 0.0
    %341 = vmatprep.subr.mxu0 0.0
    %342 = vmatpush1.msra.mxu0 0.0
    %343 = vmatprep.subr.mxu0 0.0
    %344 = vmatpush1.msra.mxu0 0.0
    %345 = vmatprep.subr.mxu0 0.0
    %346 = vmatpush1.msra.mxu0 0.0
    %347 = vmatprep.subr.mxu0 0.0
    %348 = vmatpush1.msra.mxu0 0.0
    %349 = vmatprep.subr.mxu0 0.0
    %350 = vmatpush1.msra.mxu0 0.0
    %351 = vmatprep.subr.mxu0 0.0
    %352 = vmatpush1.msra.mxu0 0.0
    %353 = vmatprep.subr.mxu0 0.0
    %354 = vmatpush1.msra.mxu0 0.0
    %355 = vmatprep.subr.mxu0 0.0
    %356 = vmatpush1.msra.mxu0 0.0
    %357 = vmatprep.subr.mxu0 0.0
    %358 = vmatpush1.msra.mxu0 0.0
    %359 = vmatprep.subr.mxu0 0.0
    %360 = vmatpush1.msra.mxu0 0.0
    %361 = vmatprep.subr.mxu0 0.0
    %362 = vmatpush1.msra.mxu0 0.0
    %363 = vmatprep.subr.mxu0 0.0
    %364 = vmatpush1.msra.mxu0 0.0
    %365 = vmatprep.subr.mxu0 0.0
    %366 = vmatpush1.msra.mxu0 0.0
    %367 = vmatprep.subr.mxu0 0.0
    %368 = vmatpush1.msra.mxu0 0.0
    %369 = vmatprep.subr.mxu0 0.0
    %370 = vmatpush1.msra.mxu0 0.0
    %371 = vmatprep.subr.mxu0 0.0
    %372 = vmatpush1.msra.mxu0 0.0
    %373 = vmatprep.subr.mxu0 0.0
    %374 = vmatpush1.msra.mxu0 0.0
    %375 = vmatprep.subr.mxu0 0.0
    %376 = vmatpush1.msra.mxu0 0.0
    %377 = vmatprep.subr.mxu0 0.0
    %378 = vmatpush1.msra.mxu0 0.0
    %379 = vmatprep.subr.mxu0 0.0
    %380 = vmatpush1.msra.mxu0 0.0
    %381 = vmatprep.subr.mxu0 0.0
    %382 = vmatpush1.msra.mxu0 0.0
    %383 = vmatprep.subr.mxu0 0.0
    %384 = vmatpush1.msra.mxu0 0.0
    %385 = vmatprep.subr.mxu0 0.0
    %386 = vmatpush1.msra.mxu0 0.0
    %387 = vmatprep.subr.mxu0 0.0
    %388 = vmatpush1.msra.mxu0 0.0
    %389 = vmatprep.subr.mxu0 0.0
    %390 = vmatpush1.msra.mxu0 0.0
    %391 = vmatprep.subr.mxu0 0.0
    %392 = vmatpush1.msra.mxu0 0.0
    %393 = vmatprep.subr.mxu0 0.0
    %394 = vmatpush1.msra.mxu0 0.0
    %395 = vmatprep.mubr.f32.mxu0 0.0
    %396 = vmatmul.mubr.f32.gmra.mrb[0].mxu0 %v329
    %v397 = vpop.f32.mrb[0].mxu0
    %v398 = vadd.f32 0.0, %v397
    %v399 = vpop.f32.mrb[0].mxu0
    %400 = vdwg.mxu0
    %401 = vmatprep.subr.mxu0 0.0
    %402 = vmatpush1.msra.mxu0 %v223
    %403 = vmatprep.subr.mxu0 0.0
    %404 = vmatpush1.msra.mxu0 %v224
    %405 = vmatprep.subr.mxu0 0.0
    %406 = vmatpush1.msra.mxu0 %v225
    %407 = vmatprep.subr.mxu0 0.0
    %408 = vmatpush1.msra.mxu0 %v226
    %409 = vmatprep.subr.mxu0 0.0
    %410 = vmatpush1.msra.mxu0 0.0
    %411 = vmatprep.subr.mxu0 0.0
    %412 = vmatpush1.msra.mxu0 0.0
    %413 = vmatprep.subr.mxu0 0.0
    %414 = vmatpush1.msra.mxu0 0.0
    %415 = vmatprep.subr.mxu0 0.0
    %416 = vmatpush1.msra.mxu0 0.0
    %417 = vmatprep.subr.mxu0 0.0
    %418 = vmatpush1.msra.mxu0 0.0
    %419 = vmatprep.subr.mxu0 0.0
    %420 = vmatpush1.msra.mxu0 0.0
    %421 = vmatprep.subr.mxu0 0.0
    %422 = vmatpush1.msra.mxu0 0.0
    %423 = vmatprep.subr.mxu0 0.0
    %424 = vmatpush1.msra.mxu0 0.0
    %425 = vmatprep.subr.mxu0 0.0
    %426 = vmatpush1.msra.mxu0 0.0
    %427 = vmatprep.subr.mxu0 0.0
    %428 = vmatpush1.msra.mxu0 0.0
    %429 = vmatprep.subr.mxu0 0.0
    %430 = vmatpush1.msra.mxu0 0.0
    %431 = vmatprep.subr.mxu0 0.0
    %432 = vmatpush1.msra.mxu0 0.0
    %433 = vmatprep.subr.mxu0 0.0
    %434 = vmatpush1.msra.mxu0 0.0
    %435 = vmatprep.subr.mxu0 0.0
    %436 = vmatpush1.msra.mxu0 0.0
    %437 = vmatprep.subr.mxu0 0.0
    %438 = vmatpush1.msra.mxu0 0.0
    %439 = vmatprep.subr.mxu0 0.0
    %440 = vmatpush1.msra.mxu0 0.0
    %441 = vmatprep.subr.mxu0 0.0
    %442 = vmatpush1.msra.mxu0 0.0
    %443 = vmatprep.subr.mxu0 0.0
    %444 = vmatpush1.msra.mxu0 0.0
    %445 = vmatprep.subr.mxu0 0.0
    %446 = vmatpush1.msra.mxu0 0.0
    %447 = vmatprep.subr.mxu0 0.0
    %448 = vmatpush1.msra.mxu0 0.0
    %449 = vmatprep.subr.mxu0 0.0
    %450 = vmatpush1.msra.mxu0 0.0
    %451 = vmatprep.subr.mxu0 0.0
    %452 = vmatpush1.msra.mxu0 0.0
    %453 = vmatprep.subr.mxu0 0.0
    %454 = vmatpush1.msra.mxu0 0.0
    %455 = vmatprep.subr.mxu0 0.0
    %456 = vmatpush1.msra.mxu0 0.0
    %457 = vmatprep.subr.mxu0 0.0
    %458 = vmatpush1.msra.mxu0 0.0
    %459 = vmatprep.subr.mxu0 0.0
    %460 = vmatpush1.msra.mxu0 0.0
    %461 = vmatprep.subr.mxu0 0.0
    %462 = vmatpush1.msra.mxu0 0.0
    %463 = vmatprep.subr.mxu0 0.0
    %464 = vmatpush1.msra.mxu0 0.0
    %465 = vmatprep.mubr.f32.mxu0 0.0
    %466 = vmatmul.mubr.f32.gmra.mrb[0].mxu0 %v230
    %v467 = vpop.f32.mrb[0].mxu0
    %v468 = vadd.f32 %v398, %v467
    %v469 = vpop.f32.mrb[0].mxu0
    %470 = vdwg.mxu0
    %v471 = vlaneseq
    %v472 = vshrl.u32 %v471, 7
    %v473 = vsub.s32 0, %v472
    %v474 = vrot.slane %v227, %v473
    %v475 = vadd.f32 %v468, %v474
    %v476 = vxor.u32 %v475, 2147483648
    %v477 = vmul.f32 %v476, 1.442695
    %v478 = vpow.pop %v477
    %v479 = vadd.f32 %v478, 1.0
    %v480 = vrcp.pop %v479
    %v481 = vmul.f32 1.0, %v480
    %v482 = vtanh.pop %v475
    %v483 = vmul.f32 %v481, 0.0
    %485 = vrot.lane.b32.xlu0 %v482, 32
    %v486 = vpop.permute.xlu0 %485
    %v488 = vmul.f32 %v481, %v486
    %490 = vrot.lane.b32.xlu0 %v488, 32
    %v491 = vpop.permute.xlu0 %490
    %v493 = vadd.f32 %v483, %v491
    %v494 = vtanh.pop %v493
    %496 = vrot.lane.b32.xlu0 %v494, 32
    %v497 = vpop.permute.xlu0 %496
    %v499 = vmul.f32 %v481, %v497
    %vm501 = vcmask 253952
    %502 = vst.msk [vmem:[#allocation2] sm:$0x1] %vm501, %v328
    %vm503 = vcmask 254977
    %504 = vst.msk [vmem:[#allocation3 - $0x1] sm:$0x2] %vm503, %v328
    %506 = vrot.lane.b32.xlu0 %v499, 64
    %v507 = vpop.permute.xlu0 %506
    %509 = vst.msk [vmem:[#allocation2 + $0x1] sm:$0x1] %vm501, %v507
    %510 = vst.msk [vmem:[#allocation3] sm:$0x2] %vm503, %v507
    %v512 = vrot.slane %v207, 2
    %514 = vmatprep.subr.mxu0 0.0
    %515 = vmatpush1.msra.mxu0 %v215
    %516 = vmatprep.subr.mxu0 0.0
    %517 = vmatpush1.msra.mxu0 %v216
    %518 = vmatprep.subr.mxu0 0.0
    %519 = vmatpush1.msra.mxu0 %v217
    %520 = vmatprep.subr.mxu0 0.0
    %521 = vmatpush1.msra.mxu0 %v218
    %522 = vmatprep.subr.mxu0 0.0
    %523 = vmatpush1.msra.mxu0 0.0
    %524 = vmatprep.subr.mxu0 0.0
    %525 = vmatpush1.msra.mxu0 0.0
    %526 = vmatprep.subr.mxu0 0.0
    %527 = vmatpush1.msra.mxu0 0.0
    %528 = vmatprep.subr.mxu0 0.0
    %529 = vmatpush1.msra.mxu0 0.0
    %530 = vmatprep.subr.mxu0 0.0
    %531 = vmatpush1.msra.mxu0 0.0
    %532 = vmatprep.subr.mxu0 0.0
    %533 = vmatpush1.msra.mxu0 0.0
    %534 = vmatprep.subr.mxu0 0.0
    %535 = vmatpush1.msra.mxu0 0.0
    %536 = vmatprep.subr.mxu0 0.0
    %537 = vmatpush1.msra.mxu0 0.0
    %538 = vmatprep.subr.mxu0 0.0
    %539 = vmatpush1.msra.mxu0 0.0
    %540 = vmatprep.subr.mxu0 0.0
    %541 = vmatpush1.msra.mxu0 0.0
    %542 = vmatprep.subr.mxu0 0.0
    %543 = vmatpush1.msra.mxu0 0.0
    %544 = vmatprep.subr.mxu0 0.0
    %545 = vmatpush1.msra.mxu0 0.0
    %546 = vmatprep.subr.mxu0 0.0
    %547 = vmatpush1.msra.mxu0 0.0
    %548 = vmatprep.subr.mxu0 0.0
    %549 = vmatpush1.msra.mxu0 0.0
    %550 = vmatprep.subr.mxu0 0.0
    %551 = vmatpush1.msra.mxu0 0.0
    %552 = vmatprep.subr.mxu0 0.0
    %553 = vmatpush1.msra.mxu0 0.0
    %554 = vmatprep.subr.mxu0 0.0
    %555 = vmatpush1.msra.mxu0 0.0
    %556 = vmatprep.subr.mxu0 0.0
    %557 = vmatpush1.msra.mxu0 0.0
    %558 = vmatprep.subr.mxu0 0.0
    %559 = vmatpush1.msra.mxu0 0.0
    %560 = vmatprep.subr.mxu0 0.0
    %561 = vmatpush1.msra.mxu0 0.0
    %562 = vmatprep.subr.mxu0 0.0
    %563 = vmatpush1.msra.mxu0 0.0
    %564 = vmatprep.subr.mxu0 0.0
    %565 = vmatpush1.msra.mxu0 0.0
    %566 = vmatprep.subr.mxu0 0.0
    %567 = vmatpush1.msra.mxu0 0.0
    %568 = vmatprep.subr.mxu0 0.0
    %569 = vmatpush1.msra.mxu0 0.0
    %570 = vmatprep.subr.mxu0 0.0
    %571 = vmatpush1.msra.mxu0 0.0
    %572 = vmatprep.subr.mxu0 0.0
    %573 = vmatpush1.msra.mxu0 0.0
    %574 = vmatprep.subr.mxu0 0.0
    %575 = vmatpush1.msra.mxu0 0.0
    %576 = vmatprep.subr.mxu0 0.0
    %577 = vmatpush1.msra.mxu0 0.0
    %578 = vmatprep.mubr.f32.mxu0 0.0
    %579 = vmatmul.mubr.f32.gmra.mrb[0].mxu0 %v329
    %v580 = vpop.f32.mrb[0].mxu0
    %v581 = vadd.f32 %v512, %v580
    %v582 = vpop.f32.mrb[0].mxu0
    %583 = vdwg.mxu0
    %v584 = vxor.u32 %v581, 2147483648
    %v585 = vmul.f32 %v584, 1.442695
    %v586 = vpow.pop %v585
    %v587 = vadd.f32 %v586, 1.0
    %v588 = vrcp.pop %v587
    %v589 = vmul.f32 1.0, %v588
    %v590 = vtanh.pop %v581
    %v591 = vmul.f32 %v589, %v319
    %593 = vrot.lane.b32.xlu0 %v590, 32
    %v594 = vpop.permute.xlu0 %593
    %v596 = vmul.f32 %v589, %v594
    %598 = vrot.lane.b32.xlu0 %v596, 32
    %v599 = vpop.permute.xlu0 %598
    %v601 = vadd.f32 %v591, %v599
    %v602 = vtanh.pop %v601
    %604 = vrot.lane.b32.xlu0 %v602, 32
    %v605 = vpop.permute.xlu0 %604
    %v607 = vmul.f32 %v589, %v605
    %609 = vrot.lane.b32.xlu0 %v607, 64
    %v610 = vpop.permute.xlu0 %609
    %v611 = vsel %vm228, %v610, 0
    %613 = vmatprep.subr.mxu0 0.0
    %614 = vmatpush1.msra.mxu0 %v219
    %615 = vmatprep.subr.mxu0 0.0
    %616 = vmatpush1.msra.mxu0 %v220
    %617 = vmatprep.subr.mxu0 0.0
    %618 = vmatpush1.msra.mxu0 %v221
    %619 = vmatprep.subr.mxu0 0.0
    %620 = vmatpush1.msra.mxu0 %v222
    %621 = vmatprep.subr.mxu0 0.0
    %622 = vmatpush1.msra.mxu0 0.0
    %623 = vmatprep.subr.mxu0 0.0
    %624 = vmatpush1.msra.mxu0 0.0
    %625 = vmatprep.subr.mxu0 0.0
    %626 = vmatpush1.msra.mxu0 0.0
    %627 = vmatprep.subr.mxu0 0.0
    %628 = vmatpush1.msra.mxu0 0.0
    %629 = vmatprep.subr.mxu0 0.0
    %630 = vmatpush1.msra.mxu0 0.0
    %631 = vmatprep.subr.mxu0 0.0
    %632 = vmatpush1.msra.mxu0 0.0
    %633 = vmatprep.subr.mxu0 0.0
    %634 = vmatpush1.msra.mxu0 0.0
    %635 = vmatprep.subr.mxu0 0.0
    %636 = vmatpush1.msra.mxu0 0.0
    %637 = vmatprep.subr.mxu0 0.0
    %638 = vmatpush1.msra.mxu0 0.0
    %639 = vmatprep.subr.mxu0 0.0
    %640 = vmatpush1.msra.mxu0 0.0
    %641 = vmatprep.subr.mxu0 0.0
    %642 = vmatpush1.msra.mxu0 0.0
    %643 = vmatprep.subr.mxu0 0.0
    %644 = vmatpush1.msra.mxu0 0.0
    %645 = vmatprep.subr.mxu0 0.0
    %646 = vmatpush1.msra.mxu0 0.0
    %647 = vmatprep.subr.mxu0 0.0
    %648 = vmatpush1.msra.mxu0 0.0
    %649 = vmatprep.subr.mxu0 0.0
    %650 = vmatpush1.msra.mxu0 0.0
    %651 = vmatprep.subr.mxu0 0.0
    %652 = vmatpush1.msra.mxu0 0.0
    %653 = vmatprep.subr.mxu0 0.0
    %654 = vmatpush1.msra.mxu0 0.0
    %655 = vmatprep.subr.mxu0 0.0
    %656 = vmatpush1.msra.mxu0 0.0
    %657 = vmatprep.subr.mxu0 0.0
    %658 = vmatpush1.msra.mxu0 0.0
    %659 = vmatprep.subr.mxu0 0.0
    %660 = vmatpush1.msra.mxu0 0.0
    %661 = vmatprep.subr.mxu0 0.0
    %662 = vmatpush1.msra.mxu0 0.0
    %663 = vmatprep.subr.mxu0 0.0
    %664 = vmatpush1.msra.mxu0 0.0
    %665 = vmatprep.subr.mxu0 0.0
    %666 = vmatpush1.msra.mxu0 0.0
    %667 = vmatprep.subr.mxu0 0.0
    %668 = vmatpush1.msra.mxu0 0.0
    %669 = vmatprep.subr.mxu0 0.0
    %670 = vmatpush1.msra.mxu0 0.0
    %671 = vmatprep.subr.mxu0 0.0
    %672 = vmatpush1.msra.mxu0 0.0
    %673 = vmatprep.subr.mxu0 0.0
    %674 = vmatpush1.msra.mxu0 0.0
    %675 = vmatprep.subr.mxu0 0.0
    %676 = vmatpush1.msra.mxu0 0.0
    %677 = vmatprep.mubr.f32.mxu0 0.0
    %678 = vmatmul.mubr.f32.gmra.mrb[0].mxu0 %v611
    %v679 = vpop.f32.mrb[0].mxu0
    %v680 = vadd.f32 0.0, %v679
    %v681 = vpop.f32.mrb[0].mxu0
    %682 = vdwg.mxu0
    %v683 = vsel %vm228, %v507, 0
    %685 = vmatprep.subr.mxu0 0.0
    %686 = vmatpush1.msra.mxu0 %v223
    %687 = vmatprep.subr.mxu0 0.0
    %688 = vmatpush1.msra.mxu0 %v224
    %689 = vmatprep.subr.mxu0 0.0
    %690 = vmatpush1.msra.mxu0 %v225
    %691 = vmatprep.subr.mxu0 0.0
    %692 = vmatpush1.msra.mxu0 %v226
    %693 = vmatprep.subr.mxu0 0.0
    %694 = vmatpush1.msra.mxu0 0.0
    %695 = vmatprep.subr.mxu0 0.0
    %696 = vmatpush1.msra.mxu0 0.0
    %697 = vmatprep.subr.mxu0 0.0
    %698 = vmatpush1.msra.mxu0 0.0
    %699 = vmatprep.subr.mxu0 0.0
    %700 = vmatpush1.msra.mxu0 0.0
    %701 = vmatprep.subr.mxu0 0.0
    %702 = vmatpush1.msra.mxu0 0.0
    %703 = vmatprep.subr.mxu0 0.0
    %704 = vmatpush1.msra.mxu0 0.0
    %705 = vmatprep.subr.mxu0 0.0
    %706 = vmatpush1.msra.mxu0 0.0
    %707 = vmatprep.subr.mxu0 0.0
    %708 = vmatpush1.msra.mxu0 0.0
    %709 = vmatprep.subr.mxu0 0.0
    %710 = vmatpush1.msra.mxu0 0.0
    %711 = vmatprep.subr.mxu0 0.0
    %712 = vmatpush1.msra.mxu0 0.0
    %713 = vmatprep.subr.mxu0 0.0
    %714 = vmatpush1.msra.mxu0 0.0
    %715 = vmatprep.subr.mxu0 0.0
    %716 = vmatpush1.msra.mxu0 0.0
    %717 = vmatprep.subr.mxu0 0.0
    %718 = vmatpush1.msra.mxu0 0.0
    %719 = vmatprep.subr.mxu0 0.0
    %720 = vmatpush1.msra.mxu0 0.0
    %721 = vmatprep.subr.mxu0 0.0
    %722 = vmatpush1.msra.mxu0 0.0
    %723 = vmatprep.subr.mxu0 0.0
    %724 = vmatpush1.msra.mxu0 0.0
    %725 = vmatprep.subr.mxu0 0.0
    %726 = vmatpush1.msra.mxu0 0.0
    %727 = vmatprep.subr.mxu0 0.0
    %728 = vmatpush1.msra.mxu0 0.0
    %729 = vmatprep.subr.mxu0 0.0
    %730 = vmatpush1.msra.mxu0 0.0
    %731 = vmatprep.subr.mxu0 0.0
    %732 = vmatpush1.msra.mxu0 0.0
    %733 = vmatprep.subr.mxu0 0.0
    %734 = vmatpush1.msra.mxu0 0.0
    %735 = vmatprep.subr.mxu0 0.0
    %736 = vmatpush1.msra.mxu0 0.0
    %737 = vmatprep.subr.mxu0 0.0
    %738 = vmatpush1.msra.mxu0 0.0
    %739 = vmatprep.subr.mxu0 0.0
    %740 = vmatpush1.msra.mxu0 0.0
    %741 = vmatprep.subr.mxu0 0.0
    %742 = vmatpush1.msra.mxu0 0.0
    %743 = vmatprep.subr.mxu0 0.0
    %744 = vmatpush1.msra.mxu0 0.0
    %745 = vmatprep.subr.mxu0 0.0
    %746 = vmatpush1.msra.mxu0 0.0
    %747 = vmatprep.subr.mxu0 0.0
    %748 = vmatpush1.msra.mxu0 0.0
    %749 = vmatprep.mubr.f32.mxu0 0.0
    %750 = vmatmul.mubr.f32.gmra.mrb[0].mxu0 %v683
    %v751 = vpop.f32.mrb[0].mxu0
    %v752 = vadd.f32 %v680, %v751
    %v753 = vpop.f32.mrb[0].mxu0
    %754 = vdwg.mxu0
    %v755 = vadd.f32 %v752, %v474
    %v756 = vxor.u32 %v755, 2147483648
    %v757 = vmul.f32 %v756, 1.442695
    %v758 = vpow.pop %v757
    %v759 = vadd.f32 %v758, 1.0
    %v760 = vrcp.pop %v759
    %v761 = vmul.f32 1.0, %v760
    %v762 = vtanh.pop %v755
    %v763 = vmul.f32 %v761, %v493
    %765 = vrot.lane.b32.xlu0 %v762, 32
    %v766 = vpop.permute.xlu0 %765
    %v768 = vmul.f32 %v761, %v766
    %770 = vrot.lane.b32.xlu0 %v768, 32
    %v771 = vpop.permute.xlu0 %770
    %v773 = vadd.f32 %v763, %v771
    %v774 = vtanh.pop %v773
    %776 = vrot.lane.b32.xlu0 %v774, 32
    %v777 = vpop.permute.xlu0 %776
    %v779 = vmul.f32 %v761, %v777
    %781 = vst.msk [vmem:[#allocation2 + $0x2] sm:$0x1] %vm501, %v610
    %782 = vst.msk [vmem:[#allocation3 + $0x1] sm:$0x2] %vm503, %v610
    %784 = vrot.lane.b32.xlu0 %v779, 64
    %v785 = vpop.permute.xlu0 %784
    %787 = vst.msk [vmem:[#allocation2 + $0x3] sm:$0x1] %vm501, %v785
    %788 = vst.msk [vmem:[#allocation3 + $0x2] sm:$0x2] %vm503, %v785
    %v789 = vrot.slane %v207, 4
    %791 = vmatprep.subr.mxu0 0.0
    %792 = vmatpush1.msra.mxu0 %v215
    %793 = vmatprep.subr.mxu0 0.0
    %794 = vmatpush1.msra.mxu0 %v216
    %795 = vmatprep.subr.mxu0 0.0
    %796 = vmatpush1.msra.mxu0 %v217
    %797 = vmatprep.subr.mxu0 0.0
    %798 = vmatpush1.msra.mxu0 %v218
    %799 = vmatprep.subr.mxu0 0.0
    %800 = vmatpush1.msra.mxu0 0.0
    %801 = vmatprep.subr.mxu0 0.0
    %802 = vmatpush1.msra.mxu0 0.0
    %803 = vmatprep.subr.mxu0 0.0
    %804 = vmatpush1.msra.mxu0 0.0
    %805 = vmatprep.subr.mxu0 0.0
    %806 = vmatpush1.msra.mxu0 0.0
    %807 = vmatprep.subr.mxu0 0.0
    %808 = vmatpush1.msra.mxu0 0.0
    %809 = vmatprep.subr.mxu0 0.0
    %810 = vmatpush1.msra.mxu0 0.0
    %811 = vmatprep.subr.mxu0 0.0
    %812 = vmatpush1.msra.mxu0 0.0
    %813 = vmatprep.subr.mxu0 0.0
    %814 = vmatpush1.msra.mxu0 0.0
    %815 = vmatprep.subr.mxu0 0.0
    %816 = vmatpush1.msra.mxu0 0.0
    %817 = vmatprep.subr.mxu0 0.0
    %818 = vmatpush1.msra.mxu0 0.0
    %819 = vmatprep.subr.mxu0 0.0
    %820 = vmatpush1.msra.mxu0 0.0
    %821 = vmatprep.subr.mxu0 0.0
    %822 = vmatpush1.msra.mxu0 0.0
    %823 = vmatprep.subr.mxu0 0.0
    %824 = vmatpush1.msra.mxu0 0.0
    %825 = vmatprep.subr.mxu0 0.0
    %826 = vmatpush1.msra.mxu0 0.0
    %827 = vmatprep.subr.mxu0 0.0
    %828 = vmatpush1.msra.mxu0 0.0
    %829 = vmatprep.subr.mxu0 0.0
    %830 = vmatpush1.msra.mxu0 0.0
    %831 = vmatprep.subr.mxu0 0.0
    %832 = vmatpush1.msra.mxu0 0.0
    %833 = vmatprep.subr.mxu0 0.0
    %834 = vmatpush1.msra.mxu0 0.0
    %835 = vmatprep.subr.mxu0 0.0
    %836 = vmatpush1.msra.mxu0 0.0
    %837 = vmatprep.subr.mxu0 0.0
    %838 = vmatpush1.msra.mxu0 0.0
    %839 = vmatprep.subr.mxu0 0.0
    %840 = vmatpush1.msra.mxu0 0.0
    %841 = vmatprep.subr.mxu0 0.0
    %842 = vmatpush1.msra.mxu0 0.0
    %843 = vmatprep.subr.mxu0 0.0
    %844 = vmatpush1.msra.mxu0 0.0
    %845 = vmatprep.subr.mxu0 0.0
    %846 = vmatpush1.msra.mxu0 0.0
    %847 = vmatprep.subr.mxu0 0.0
    %848 = vmatpush1.msra.mxu0 0.0
    %849 = vmatprep.subr.mxu0 0.0
    %850 = vmatpush1.msra.mxu0 0.0
    %851 = vmatprep.subr.mxu0 0.0
    %852 = vmatpush1.msra.mxu0 0.0
    %853 = vmatprep.subr.mxu0 0.0
    %854 = vmatpush1.msra.mxu0 0.0
    %855 = vmatprep.mubr.f32.mxu0 0.0
    %856 = vmatmul.mubr.f32.gmra.mrb[0].mxu0 %v611
    %v857 = vpop.f32.mrb[0].mxu0
    %v858 = vadd.f32 %v789, %v857
    %v859 = vpop.f32.mrb[0].mxu0
    %860 = vdwg.mxu0
    %v861 = vxor.u32 %v858, 2147483648
    %v862 = vmul.f32 %v861, 1.442695
    %v863 = vpow.pop %v862
    %v864 = vadd.f32 %v863, 1.0
    %v865 = vrcp.pop %v864
    %v866 = vmul.f32 1.0, %v865
    %v867 = vtanh.pop %v858
    %v868 = vmul.f32 %v866, %v601
    %870 = vrot.lane.b32.xlu0 %v867, 32
    %v871 = vpop.permute.xlu0 %870
    %v873 = vmul.f32 %v866, %v871
    %875 = vrot.lane.b32.xlu0 %v873, 32
    %v876 = vpop.permute.xlu0 %875
    %v878 = vadd.f32 %v868, %v876
    %v879 = vtanh.pop %v878
    %881 = vrot.lane.b32.xlu0 %v879, 32
    %v882 = vpop.permute.xlu0 %881
    %v884 = vmul.f32 %v866, %v882
    %886 = vrot.lane.b32.xlu0 %v884, 64
    %v887 = vpop.permute.xlu0 %886
    %v888 = vsel %vm228, %v887, 0
    %890 = vmatprep.subr.mxu0 0.0
    %891 = vmatpush1.msra.mxu0 %v219
    %892 = vmatprep.subr.mxu0 0.0
    %893 = vmatpush1.msra.mxu0 %v220
    %894 = vmatprep.subr.mxu0 0.0
    %895 = vmatpush1.msra.mxu0 %v221
    %896 = vmatprep.subr.mxu0 0.0
    %897 = vmatpush1.msra.mxu0 %v222
    %898 = vmatprep.subr.mxu0 0.0
    %899 = vmatpush1.msra.mxu0 0.0
    %900 = vmatprep.subr.mxu0 0.0
    %901 = vmatpush1.msra.mxu0 0.0
    %902 = vmatprep.subr.mxu0 0.0
    %903 = vmatpush1.msra.mxu0 0.0
    %904 = vmatprep.subr.mxu0 0.0
    %905 = vmatpush1.msra.mxu0 0.0
    %906 = vmatprep.subr.mxu0 0.0
    %907 = vmatpush1.msra.mxu0 0.0
    %908 = vmatprep.subr.mxu0 0.0
    %909 = vmatpush1.msra.mxu0 0.0
    %910 = vmatprep.subr.mxu0 0.0
    %911 = vmatpush1.msra.mxu0 0.0
    %912 = vmatprep.subr.mxu0 0.0
    %913 = vmatpush1.msra.mxu0 0.0
    %914 = vmatprep.subr.mxu0 0.0
    %915 = vmatpush1.msra.mxu0 0.0
    %916 = vmatprep.subr.mxu0 0.0
    %917 = vmatpush1.msra.mxu0 0.0
    %918 = vmatprep.subr.mxu0 0.0
    %919 = vmatpush1.msra.mxu0 0.0
    %920 = vmatprep.subr.mxu0 0.0
    %921 = vmatpush1.msra.mxu0 0.0
    %922 = vmatprep.subr.mxu0 0.0
    %923 = vmatpush1.msra.mxu0 0.0
    %924 = vmatprep.subr.mxu0 0.0
    %925 = vmatpush1.msra.mxu0 0.0
    %926 = vmatprep.subr.mxu0 0.0
    %927 = vmatpush1.msra.mxu0 0.0
    %928 = vmatprep.subr.mxu0 0.0
    %929 = vmatpush1.msra.mxu0 0.0
    %930 = vmatprep.subr.mxu0 0.0
    %931 = vmatpush1.msra.mxu0 0.0
    %932 = vmatprep.subr.mxu0 0.0
    %933 = vmatpush1.msra.mxu0 0.0
    %934 = vmatprep.subr.mxu0 0.0
    %935 = vmatpush1.msra.mxu0 0.0
    %936 = vmatprep.subr.mxu0 0.0
    %937 = vmatpush1.msra.mxu0 0.0
    %938 = vmatprep.subr.mxu0 0.0
    %939 = vmatpush1.msra.mxu0 0.0
    %940 = vmatprep.subr.mxu0 0.0
    %941 = vmatpush1.msra.mxu0 0.0
    %942 = vmatprep.subr.mxu0 0.0
    %943 = vmatpush1.msra.mxu0 0.0
    %944 = vmatprep.subr.mxu0 0.0
    %945 = vmatpush1.msra.mxu0 0.0
    %946 = vmatprep.subr.mxu0 0.0
    %947 = vmatpush1.msra.mxu0 0.0
    %948 = vmatprep.subr.mxu0 0.0
    %949 = vmatpush1.msra.mxu0 0.0
    %950 = vmatprep.subr.mxu0 0.0
    %951 = vmatpush1.msra.mxu0 0.0
    %952 = vmatprep.subr.mxu0 0.0
    %953 = vmatpush1.msra.mxu0 0.0
    %954 = vmatprep.mubr.f32.mxu0 0.0
    %955 = vmatmul.mubr.f32.gmra.mrb[0].mxu0 %v888
    %v956 = vpop.f32.mrb[0].mxu0
    %v957 = vadd.f32 0.0, %v956
    %v958 = vpop.f32.mrb[0].mxu0
    %959 = vdwg.mxu0
    %v960 = vsel %vm228, %v785, 0
    %962 = vmatprep.subr.mxu0 0.0
    %963 = vmatpush1.msra.mxu0 %v223
    %964 = vmatprep.subr.mxu0 0.0
    %965 = vmatpush1.msra.mxu0 %v224
    %966 = vmatprep.subr.mxu0 0.0
    %967 = vmatpush1.msra.mxu0 %v225
    %968 = vmatprep.subr.mxu0 0.0
    %969 = vmatpush1.msra.mxu0 %v226
    %970 = vmatprep.subr.mxu0 0.0
    %971 = vmatpush1.msra.mxu0 0.0
    %972 = vmatprep.subr.mxu0 0.0
    %973 = vmatpush1.msra.mxu0 0.0
    %974 = vmatprep.subr.mxu0 0.0
    %975 = vmatpush1.msra.mxu0 0.0
    %976 = vmatprep.subr.mxu0 0.0
    %977 = vmatpush1.msra.mxu0 0.0
    %978 = vmatprep.subr.mxu0 0.0
    %979 = vmatpush1.msra.mxu0 0.0
    %980 = vmatprep.subr.mxu0 0.0
    %981 = vmatpush1.msra.mxu0 0.0
    %982 = vmatprep.subr.mxu0 0.0
    %983 = vmatpush1.msra.mxu0 0.0
    %984 = vmatprep.subr.mxu0 0.0
    %985 = vmatpush1.msra.mxu0 0.0
    %986 = vmatprep.subr.mxu0 0.0
    %987 = vmatpush1.msra.mxu0 0.0
    %988 = vmatprep.subr.mxu0 0.0
    %989 = vmatpush1.msra.mxu0 0.0
    %990 = vmatprep.subr.mxu0 0.0
    %991 = vmatpush1.msra.mxu0 0.0
    %992 = vmatprep.subr.mxu0 0.0
    %993 = vmatpush1.msra.mxu0 0.0
    %994 = vmatprep.subr.mxu0 0.0
    %995 = vmatpush1.msra.mxu0 0.0
    %996 = vmatprep.subr.mxu0 0.0
    %997 = vmatpush1.msra.mxu0 0.0
    %998 = vmatprep.subr.mxu0 0.0
    %999 = vmatpush1.msra.mxu0 0.0
    %1000 = vmatprep.subr.mxu0 0.0
    %1001 = vmatpush1.msra.mxu0 0.0
    %1002 = vmatprep.subr.mxu0 0.0
    %1003 = vmatpush1.msra.mxu0 0.0
    %1004 = vmatprep.subr.mxu0 0.0
    %1005 = vmatpush1.msra.mxu0 0.0
    %1006 = vmatprep.subr.mxu0 0.0
    %1007 = vmatpush1.msra.mxu0 0.0
    %1008 = vmatprep.subr.mxu0 0.0
    %1009 = vmatpush1.msra.mxu0 0.0
    %1010 = vmatprep.subr.mxu0 0.0
    %1011 = vmatpush1.msra.mxu0 0.0
    %1012 = vmatprep.subr.mxu0 0.0
    %1013 = vmatpush1.msra.mxu0 0.0
    %1014 = vmatprep.subr.mxu0 0.0
    %1015 = vmatpush1.msra.mxu0 0.0
    %1016 = vmatprep.subr.mxu0 0.0
    %1017 = vmatpush1.msra.mxu0 0.0
    %1018 = vmatprep.subr.mxu0 0.0
    %1019 = vmatpush1.msra.mxu0 0.0
    %1020 = vmatprep.subr.mxu0 0.0
    %1021 = vmatpush1.msra.mxu0 0.0
    %1022 = vmatprep.subr.mxu0 0.0
    %1023 = vmatpush1.msra.mxu0 0.0
    %1024 = vmatprep.subr.mxu0 0.0
    %1025 = vmatpush1.msra.mxu0 0.0
    %1026 = vmatprep.mubr.f32.mxu0 0.0
    %1027 = vmatmul.mubr.f32.gmra.mrb[0].mxu0 %v960
    %v1028 = vpop.f32.mrb[0].mxu0
    %v1029 = vadd.f32 %v957, %v1028
    %v1030 = vpop.f32.mrb[0].mxu0
    %1031 = vdwg.mxu0
    %v1032 = vadd.f32 %v1029, %v474
    %v1033 = vxor.u32 %v1032, 2147483648
    %v1034 = vmul.f32 %v1033, 1.442695
    %v1035 = vpow.pop %v1034
    %v1036 = vadd.f32 %v1035, 1.0
    %v1037 = vrcp.pop %v1036
    %v1038 = vmul.f32 1.0, %v1037
    %v1039 = vtanh.pop %v1032
    %v1040 = vmul.f32 %v1038, %v773
    %1042 = vrot.lane.b32.xlu0 %v1039, 32
    %v1043 = vpop.permute.xlu0 %1042
    %v1045 = vmul.f32 %v1038, %v1043
    %1047 = vrot.lane.b32.xlu0 %v1045, 32
    %v1048 = vpop.permute.xlu0 %1047
    %v1050 = vadd.f32 %v1040, %v1048
    %v1051 = vtanh.pop %v1050
    %1053 = vrot.lane.b32.xlu0 %v1051, 32
    %v1054 = vpop.permute.xlu0 %1053
    %v1056 = vmul.f32 %v1038, %v1054
    %1058 = vst.msk [vmem:[#allocation2 + $0x4] sm:$0x1] %vm501, %v887
    %1059 = vst.msk [vmem:[#allocation3 + $0x3] sm:$0x2] %vm503, %v887
    %1061 = vrot.lane.b32.xlu0 %v1056, 64
    %v1062 = vpop.permute.xlu0 %1061
    %1064 = vst.msk [vmem:[#allocation2 + $0x5] sm:$0x1] %vm501, %v1062
    %1065 = vst.msk [vmem:[#allocation3 + $0x4] sm:$0x2] %vm503, %v1062
    %v1066 = vrot.slane %v207, 6
    %1068 = vmatprep.subr.mxu0 0.0
    %1069 = vmatpush1.msra.mxu0 %v215
    %1070 = vmatprep.subr.mxu0 0.0
    %1071 = vmatpush1.msra.mxu0 %v216
    %1072 = vmatprep.subr.mxu0 0.0
    %1073 = vmatpush1.msra.mxu0 %v217
    %1074 = vmatprep.subr.mxu0 0.0
    %1075 = vmatpush1.msra.mxu0 %v218
    %1076 = vmatprep.subr.mxu0 0.0
    %1077 = vmatpush1.msra.mxu0 0.0
    %1078 = vmatprep.subr.mxu0 0.0
    %1079 = vmatpush1.msra.mxu0 0.0
    %1080 = vmatprep.subr.mxu0 0.0
    %1081 = vmatpush1.msra.mxu0 0.0
    %1082 = vmatprep.subr.mxu0 0.0
    %1083 = vmatpush1.msra.mxu0 0.0
    %1084 = vmatprep.subr.mxu0 0.0
    %1085 = vmatpush1.msra.mxu0 0.0
    %1086 = vmatprep.subr.mxu0 0.0
    %1087 = vmatpush1.msra.mxu0 0.0
    %1088 = vmatprep.subr.mxu0 0.0
    %1089 = vmatpush1.msra.mxu0 0.0
    %1090 = vmatprep.subr.mxu0 0.0
    %1091 = vmatpush1.msra.mxu0 0.0
    %1092 = vmatprep.subr.mxu0 0.0
    %1093 = vmatpush1.msra.mxu0 0.0
    %1094 = vmatprep.subr.mxu0 0.0
    %1095 = vmatpush1.msra.mxu0 0.0
    %1096 = vmatprep.subr.mxu0 0.0
    %1097 = vmatpush1.msra.mxu0 0.0
    %1098 = vmatprep.subr.mxu0 0.0
    %1099 = vmatpush1.msra.mxu0 0.0
    %1100 = vmatprep.subr.mxu0 0.0
    %1101 = vmatpush1.msra.mxu0 0.0
    %1102 = vmatprep.subr.mxu0 0.0
    %1103 = vmatpush1.msra.mxu0 0.0
    %1104 = vmatprep.subr.mxu0 0.0
    %1105 = vmatpush1.msra.mxu0 0.0
    %1106 = vmatprep.subr.mxu0 0.0
    %1107 = vmatpush1.msra.mxu0 0.0
    %1108 = vmatprep.subr.mxu0 0.0
    %1109 = vmatpush1.msra.mxu0 0.0
    %1110 = vmatprep.subr.mxu0 0.0
    %1111 = vmatpush1.msra.mxu0 0.0
    %1112 = vmatprep.subr.mxu0 0.0
    %1113 = vmatpush1.msra.mxu0 0.0
    %1114 = vmatprep.subr.mxu0 0.0
    %1115 = vmatpush1.msra.mxu0 0.0
    %1116 = vmatprep.subr.mxu0 0.0
    %1117 = vmatpush1.msra.mxu0 0.0
    %1118 = vmatprep.subr.mxu0 0.0
    %1119 = vmatpush1.msra.mxu0 0.0
    %1120 = vmatprep.subr.mxu0 0.0
    %1121 = vmatpush1.msra.mxu0 0.0
    %1122 = vmatprep.subr.mxu0 0.0
    %1123 = vmatpush1.msra.mxu0 0.0
    %1124 = vmatprep.subr.mxu0 0.0
    %1125 = vmatpush1.msra.mxu0 0.0
    %1126 = vmatprep.subr.mxu0 0.0
    %1127 = vmatpush1.msra.mxu0 0.0
    %1128 = vmatprep.subr.mxu0 0.0
    %1129 = vmatpush1.msra.mxu0 0.0
    %1130 = vmatprep.subr.mxu0 0.0
    %1131 = vmatpush1.msra.mxu0 0.0
    %1132 = vmatprep.mubr.f32.mxu0 0.0
    %1133 = vmatmul.mubr.f32.gmra.mrb[0].mxu0 %v888
    %v1134 = vpop.f32.mrb[0].mxu0
    %v1135 = vadd.f32 %v1066, %v1134
    %v1136 = vpop.f32.mrb[0].mxu0
    %1137 = vdwg.mxu0
    %v1138 = vxor.u32 %v1135, 2147483648
    %v1139 = vmul.f32 %v1138, 1.442695
    %v1140 = vpow.pop %v1139
    %v1141 = vadd.f32 %v1140, 1.0
    %v1142 = vrcp.pop %v1141
    %v1143 = vmul.f32 1.0, %v1142
    %v1144 = vtanh.pop %v1135
    %v1145 = vmul.f32 %v1143, %v878
    %1147 = vrot.lane.b32.xlu0 %v1144, 32
    %v1148 = vpop.permute.xlu0 %1147
    %v1150 = vmul.f32 %v1143, %v1148
    %1152 = vrot.lane.b32.xlu0 %v1150, 32
    %v1153 = vpop.permute.xlu0 %1152
    %v1155 = vadd.f32 %v1145, %v1153
    %v1156 = vtanh.pop %v1155
    %1158 = vrot.lane.b32.xlu0 %v1156, 32
    %v1159 = vpop.permute.xlu0 %1158
    %v1161 = vmul.f32 %v1143, %v1159
    %1163 = vrot.lane.b32.xlu0 %v1161, 64
    %v1164 = vpop.permute.xlu0 %1163
    %v1165 = vsel %vm228, %v1164, 0
    %1167 = vmatprep.subr.mxu0 0.0
    %1168 = vmatpush1.msra.mxu0 %v219
    %1169 = vmatprep.subr.mxu0 0.0
    %1170 = vmatpush1.msra.mxu0 %v220
    %1171 = vmatprep.subr.mxu0 0.0
    %1172 = vmatpush1.msra.mxu0 %v221
    %1173 = vmatprep.subr.mxu0 0.0
    %1174 = vmatpush1.msra.mxu0 %v222
    %1175 = vmatprep.subr.mxu0 0.0
    %1176 = vmatpush1.msra.mxu0 0.0
    %1177 = vmatprep.subr.mxu0 0.0
    %1178 = vmatpush1.msra.mxu0 0.0
    %1179 = vmatprep.subr.mxu0 0.0
    %1180 = vmatpush1.msra.mxu0 0.0
    %1181 = vmatprep.subr.mxu0 0.0
    %1182 = vmatpush1.msra.mxu0 0.0
    %1183 = vmatprep.subr.mxu0 0.0
    %1184 = vmatpush1.msra.mxu0 0.0
    %1185 = vmatprep.subr.mxu0 0.0
    %1186 = vmatpush1.msra.mxu0 0.0
    %1187 = vmatprep.subr.mxu0 0.0
    %1188 = vmatpush1.msra.mxu0 0.0
    %1189 = vmatprep.subr.mxu0 0.0
    %1190 = vmatpush1.msra.mxu0 0.0
    %1191 = vmatprep.subr.mxu0 0.0
    %1192 = vmatpush1.msra.mxu0 0.0
    %1193 = vmatprep.subr.mxu0 0.0
    %1194 = vmatpush1.msra.mxu0 0.0
    %1195 = vmatprep.subr.mxu0 0.0
    %1196 = vmatpush1.msra.mxu0 0.0
    %1197 = vmatprep.subr.mxu0 0.0
    %1198 = vmatpush1.msra.mxu0 0.0
    %1199 = vmatprep.subr.mxu0 0.0
    %1200 = vmatpush1.msra.mxu0 0.0
    %1201 = vmatprep.subr.mxu0 0.0
    %1202 = vmatpush1.msra.mxu0 0.0
    %1203 = vmatprep.subr.mxu0 0.0
    %1204 = vmatpush1.msra.mxu0 0.0
    %1205 = vmatprep.subr.mxu0 0.0
    %1206 = vmatpush1.msra.mxu0 0.0
    %1207 = vmatprep.subr.mxu0 0.0
    %1208 = vmatpush1.msra.mxu0 0.0
    %1209 = vmatprep.subr.mxu0 0.0
    %1210 = vmatpush1.msra.mxu0 0.0
    %1211 = vmatprep.subr.mxu0 0.0
    %1212 = vmatpush1.msra.mxu0 0.0
    %1213 = vmatprep.subr.mxu0 0.0
    %1214 = vmatpush1.msra.mxu0 0.0
    %1215 = vmatprep.subr.mxu0 0.0
    %1216 = vmatpush1.msra.mxu0 0.0
    %1217 = vmatprep.subr.mxu0 0.0
    %1218 = vmatpush1.msra.mxu0 0.0
    %1219 = vmatprep.subr.mxu0 0.0
    %1220 = vmatpush1.msra.mxu0 0.0
    %1221 = vmatprep.subr.mxu0 0.0
    %1222 = vmatpush1.msra.mxu0 0.0
    %1223 = vmatprep.subr.mxu0 0.0
    %1224 = vmatpush1.msra.mxu0 0.0
    %1225 = vmatprep.subr.mxu0 0.0
    %1226 = vmatpush1.msra.mxu0 0.0
    %1227 = vmatprep.subr.mxu0 0.0
    %1228 = vmatpush1.msra.mxu0 0.0
    %1229 = vmatprep.subr.mxu0 0.0
    %1230 = vmatpush1.msra.mxu0 0.0
    %1231 = vmatprep.mubr.f32.mxu0 0.0
    %1232 = vmatmul.mubr.f32.gmra.mrb[0].mxu0 %v1165
    %v1233 = vpop.f32.mrb[0].mxu0
    %v1234 = vadd.f32 0.0, %v1233
    %v1235 = vpop.f32.mrb[0].mxu0
    %1236 = vdwg.mxu0
    %v1237 = vsel %vm228, %v1062, 0
    %1239 = vmatprep.subr.mxu0 0.0
    %1240 = vmatpush1.msra.mxu0 %v223
    %1241 = vmatprep.subr.mxu0 0.0
    %1242 = vmatpush1.msra.mxu0 %v224
    %1243 = vmatprep.subr.mxu0 0.0
    %1244 = vmatpush1.msra.mxu0 %v225
    %1245 = vmatprep.subr.mxu0 0.0
    %1246 = vmatpush1.msra.mxu0 %v226
    %1247 = vmatprep.subr.mxu0 0.0
    %1248 = vmatpush1.msra.mxu0 0.0
    %1249 = vmatprep.subr.mxu0 0.0
    %1250 = vmatpush1.msra.mxu0 0.0
    %1251 = vmatprep.subr.mxu0 0.0
    %1252 = vmatpush1.msra.mxu0 0.0
    %1253 = vmatprep.subr.mxu0 0.0
    %1254 = vmatpush1.msra.mxu0 0.0
    %1255 = vmatprep.subr.mxu0 0.0
    %1256 = vmatpush1.msra.mxu0 0.0
    %1257 = vmatprep.subr.mxu0 0.0
    %1258 = vmatpush1.msra.mxu0 0.0
    %1259 = vmatprep.subr.mxu0 0.0
    %1260 = vmatpush1.msra.mxu0 0.0
    %1261 = vmatprep.subr.mxu0 0.0
    %1262 = vmatpush1.msra.mxu0 0.0
    %1263 = vmatprep.subr.mxu0 0.0
    %1264 = vmatpush1.msra.mxu0 0.0
    %1265 = vmatprep.subr.mxu0 0.0
    %1266 = vmatpush1.msra.mxu0 0.0
    %1267 = vmatprep.subr.mxu0 0.0
    %1268 = vmatpush1.msra.mxu0 0.0
    %1269 = vmatprep.subr.mxu0 0.0
    %1270 = vmatpush1.msra.mxu0 0.0
    %1271 = vmatprep.subr.mxu0 0.0
    %1272 = vmatpush1.msra.mxu0 0.0
    %1273 = vmatprep.subr.mxu0 0.0
    %1274 = vmatpush1.msra.mxu0 0.0
    %1275 = vmatprep.subr.mxu0 0.0
    %1276 = vmatpush1.msra.mxu0 0.0
    %1277 = vmatprep.subr.mxu0 0.0
    %1278 = vmatpush1.msra.mxu0 0.0
    %1279 = vmatprep.subr.mxu0 0.0
    %1280 = vmatpush1.msra.mxu0 0.0
    %1281 = vmatprep.subr.mxu0 0.0
    %1282 = vmatpush1.msra.mxu0 0.0
    %1283 = vmatprep.subr.mxu0 0.0
    %1284 = vmatpush1.msra.mxu0 0.0
    %1285 = vmatprep.subr.mxu0 0.0
    %1286 = vmatpush1.msra.mxu0 0.0
    %1287 = vmatprep.subr.mxu0 0.0
    %1288 = vmatpush1.msra.mxu0 0.0
    %1289 = vmatprep.subr.mxu0 0.0
    %1290 = vmatpush1.msra.mxu0 0.0
    %1291 = vmatprep.subr.mxu0 0.0
    %1292 = vmatpush1.msra.mxu0 0.0
    %1293 = vmatprep.subr.mxu0 0.0
    %1294 = vmatpush1.msra.mxu0 0.0
    %1295 = vmatprep.subr.mxu0 0.0
    %1296 = vmatpush1.msra.mxu0 0.0
    %1297 = vmatprep.subr.mxu0 0.0
    %1298 = vmatpush1.msra.mxu0 0.0
    %1299 = vmatprep.subr.mxu0 0.0
    %1300 = vmatpush1.msra.mxu0 0.0
    %1301 = vmatprep.subr.mxu0 0.0
    %1302 = vmatpush1.msra.mxu0 0.0
    %1303 = vmatprep.mubr.f32.mxu0 0.0
    %1304 = vmatmul.mubr.f32.gmra.mrb[0].mxu0 %v1237
    %v1305 = vpop.f32.mrb[0].mxu0
    %v1306 = vadd.f32 %v1234, %v1305
    %v1307 = vpop.f32.mrb[0].mxu0
    %1308 = vdwg.mxu0
    %v1309 = vadd.f32 %v1306, %v474
    %v1310 = vxor.u32 %v1309, 2147483648
    %v1311 = vmul.f32 %v1310, 1.442695
    %v1312 = vpow.pop %v1311
    %v1313 = vadd.f32 %v1312, 1.0
    %v1314 = vrcp.pop %v1313
    %v1315 = vmul.f32 1.0, %v1314
    %v1316 = vtanh.pop %v1309
    %v1317 = vmul.f32 %v1315, %v1050
    %1319 = vrot.lane.b32.xlu0 %v1316, 32
    %v1320 = vpop.permute.xlu0 %1319
    %v1322 = vmul.f32 %v1315, %v1320
    %1324 = vrot.lane.b32.xlu0 %v1322, 32
    %v1325 = vpop.permute.xlu0 %1324
    %v1327 = vadd.f32 %v1317, %v1325
    %v1328 = vtanh.pop %v1327
    %1330 = vrot.lane.b32.xlu0 %v1328, 32
    %v1331 = vpop.permute.xlu0 %1330
    %v1333 = vmul.f32 %v1315, %v1331
    %1335 = vst.msk [vmem:[#allocation2 + $0x6] sm:$0x1] %vm501, %v1164
    %1336 = vst.msk [vmem:[#allocation3 + $0x5] sm:$0x2] %vm503, %v1164
    %1338 = vrot.lane.b32.xlu0 %v1333, 64
    %v1339 = vpop.permute.xlu0 %1338
    %1341 = vst.msk [vmem:[#allocation2 + $0x7] sm:$0x1] %vm501, %v1339
    %1342 = vst.msk [vmem:[#allocation3 + $0x6] sm:$0x2] %vm503, %v1339
    %1343 = vmatprep.subr.mxu0 0.0
    %1344 = vmatpush1.msra.mxu0 %v215
    %1345 = vmatprep.subr.mxu0 0.0
    %1346 = vmatpush1.msra.mxu0 %v216
    %1347 = vmatprep.subr.mxu0 0.0
    %1348 = vmatpush1.msra.mxu0 %v217
    %1349 = vmatprep.subr.mxu0 0.0
    %1350 = vmatpush1.msra.mxu0 %v218
    %1351 = vmatprep.subr.mxu0 0.0
    %1352 = vmatpush1.msra.mxu0 0.0
    %1353 = vmatprep.subr.mxu0 0.0
    %1354 = vmatpush1.msra.mxu0 0.0
    %1355 = vmatprep.subr.mxu0 0.0
    %1356 = vmatpush1.msra.mxu0 0.0
    %1357 = vmatprep.subr.mxu0 0.0
    %1358 = vmatpush1.msra.mxu0 0.0
    %1359 = vmatprep.subr.mxu0 0.0
    %1360 = vmatpush1.msra.mxu0 0.0
    %1361 = vmatprep.subr.mxu0 0.0
    %1362 = vmatpush1.msra.mxu0 0.0
    %1363 = vmatprep.subr.mxu0 0.0
    %1364 = vmatpush1.msra.mxu0 0.0
    %1365 = vmatprep.subr.mxu0 0.0
    %1366 = vmatpush1.msra.mxu0 0.0
    %1367 = vmatprep.subr.mxu0 0.0
    %1368 = vmatpush1.msra.mxu0 0.0
    %1369 = vmatprep.subr.mxu0 0.0
    %1370 = vmatpush1.msra.mxu0 0.0
    %1371 = vmatprep.subr.mxu0 0.0
    %1372 = vmatpush1.msra.mxu0 0.0
    %1373 = vmatprep.subr.mxu0 0.0
    %1374 = vmatpush1.msra.mxu0 0.0
    %1375 = vmatprep.subr.mxu0 0.0
    %1376 = vmatpush1.msra.mxu0 0.0
    %1377 = vmatprep.subr.mxu0 0.0
    %1378 = vmatpush1.msra.mxu0 0.0
    %1379 = vmatprep.subr.mxu0 0.0
    %1380 = vmatpush1.msra.mxu0 0.0
    %1381 = vmatprep.subr.mxu0 0.0
    %1382 = vmatpush1.msra.mxu0 0.0
    %1383 = vmatprep.subr.mxu0 0.0
    %1384 = vmatpush1.msra.mxu0 0.0
    %1385 = vmatprep.subr.mxu0 0.0
    %1386 = vmatpush1.msra.mxu0 0.0
    %1387 = vmatprep.subr.mxu0 0.0
    %1388 = vmatpush1.msra.mxu0 0.0
    %1389 = vmatprep.subr.mxu0 0.0
    %1390 = vmatpush1.msra.mxu0 0.0
    %1391 = vmatprep.subr.mxu0 0.0
    %1392 = vmatpush1.msra.mxu0 0.0
    %1393 = vmatprep.subr.mxu0 0.0
    %1394 = vmatpush1.msra.mxu0 0.0
    %1395 = vmatprep.subr.mxu0 0.0
    %1396 = vmatpush1.msra.mxu0 0.0
    %1397 = vmatprep.subr.mxu0 0.0
    %1398 = vmatpush1.msra.mxu0 0.0
    %1399 = vmatprep.subr.mxu0 0.0
    %1400 = vmatpush1.msra.mxu0 0.0
    %1401 = vmatprep.subr.mxu0 0.0
    %1402 = vmatpush1.msra.mxu0 0.0
    %1403 = vmatprep.subr.mxu0 0.0
    %1404 = vmatpush1.msra.mxu0 0.0
    %1405 = vmatprep.subr.mxu0 0.0
    %1406 = vmatpush1.msra.mxu0 0.0
    %1407 = vmatprep.mubr.f32.mxu0 0.0
    %1408 = vmatmul.mubr.f32.gmra.mrb[0].mxu0 %v1165
    %v1409 = vpop.f32.mrb[0].mxu0
    %v1410 = vadd.f32 %v212, %v1409
    %v1411 = vpop.f32.mrb[0].mxu0
    %1412 = vdwg.mxu0
    %v1413 = vxor.u32 %v1410, 2147483648
    %v1414 = vmul.f32 %v1413, 1.442695
    %v1415 = vpow.pop %v1414
    %v1416 = vadd.f32 %v1415, 1.0
    %v1417 = vrcp.pop %v1416
    %v1418 = vmul.f32 1.0, %v1417
    %v1419 = vtanh.pop %v1410
    %v1420 = vmul.f32 %v1418, %v1155
    %1422 = vrot.lane.b32.xlu0 %v1419, 32
    %v1423 = vpop.permute.xlu0 %1422
    %v1425 = vmul.f32 %v1418, %v1423
    %1427 = vrot.lane.b32.xlu0 %v1425, 32
    %v1428 = vpop.permute.xlu0 %1427
    %v1430 = vadd.f32 %v1420, %v1428
    %v1431 = vtanh.pop %v1430
    %1433 = vrot.lane.b32.xlu0 %v1431, 32
    %v1434 = vpop.permute.xlu0 %1433
    %v1436 = vmul.f32 %v1418, %v1434
    %1438 = vrot.lane.b32.xlu0 %v1436, 64
    %v1439 = vpop.permute.xlu0 %1438
    %v1440 = vsel %vm228, %v1439, 0
    %1442 = vmatprep.subr.mxu0 0.0
    %1443 = vmatpush1.msra.mxu0 %v219
    %1444 = vmatprep.subr.mxu0 0.0
    %1445 = vmatpush1.msra.mxu0 %v220
    %1446 = vmatprep.subr.mxu0 0.0
    %1447 = vmatpush1.msra.mxu0 %v221
    %1448 = vmatprep.subr.mxu0 0.0
    %1449 = vmatpush1.msra.mxu0 %v222
    %1450 = vmatprep.subr.mxu0 0.0
    %1451 = vmatpush1.msra.mxu0 0.0
    %1452 = vmatprep.subr.mxu0 0.0
    %1453 = vmatpush1.msra.mxu0 0.0
    %1454 = vmatprep.subr.mxu0 0.0
    %1455 = vmatpush1.msra.mxu0 0.0
    %1456 = vmatprep.subr.mxu0 0.0
    %1457 = vmatpush1.msra.mxu0 0.0
    %1458 = vmatprep.subr.mxu0 0.0
    %1459 = vmatpush1.msra.mxu0 0.0
    %1460 = vmatprep.subr.mxu0 0.0
    %1461 = vmatpush1.msra.mxu0 0.0
    %1462 = vmatprep.subr.mxu0 0.0
    %1463 = vmatpush1.msra.mxu0 0.0
    %1464 = vmatprep.subr.mxu0 0.0
    %1465 = vmatpush1.msra.mxu0 0.0
    %1466 = vmatprep.subr.mxu0 0.0
    %1467 = vmatpush1.msra.mxu0 0.0
    %1468 = vmatprep.subr.mxu0 0.0
    %1469 = vmatpush1.msra.mxu0 0.0
    %1470 = vmatprep.subr.mxu0 0.0
    %1471 = vmatpush1.msra.mxu0 0.0
    %1472 = vmatprep.subr.mxu0 0.0
    %1473 = vmatpush1.msra.mxu0 0.0
    %1474 = vmatprep.subr.mxu0 0.0
    %1475 = vmatpush1.msra.mxu0 0.0
    %1476 = vmatprep.subr.mxu0 0.0
    %1477 = vmatpush1.msra.mxu0 0.0
    %1478 = vmatprep.subr.mxu0 0.0
    %1479 = vmatpush1.msra.mxu0 0.0
    %1480 = vmatprep.subr.mxu0 0.0
    %1481 = vmatpush1.msra.mxu0 0.0
    %1482 = vmatprep.subr.mxu0 0.0
    %1483 = vmatpush1.msra.mxu0 0.0
    %1484 = vmatprep.subr.mxu0 0.0
    %1485 = vmatpush1.msra.mxu0 0.0
    %1486 = vmatprep.subr.mxu0 0.0
    %1487 = vmatpush1.msra.mxu0 0.0
    %1488 = vmatprep.subr.mxu0 0.0
    %1489 = vmatpush1.msra.mxu0 0.0
    %1490 = vmatprep.subr.mxu0 0.0
    %1491 = vmatpush1.msra.mxu0 0.0
    %1492 = vmatprep.subr.mxu0 0.0
    %1493 = vmatpush1.msra.mxu0 0.0
    %1494 = vmatprep.subr.mxu0 0.0
    %1495 = vmatpush1.msra.mxu0 0.0
    %1496 = vmatprep.subr.mxu0 0.0
    %1497 = vmatpush1.msra.mxu0 0.0
    %1498 = vmatprep.subr.mxu0 0.0
    %1499 = vmatpush1.msra.mxu0 0.0
    %1500 = vmatprep.subr.mxu0 0.0
    %1501 = vmatpush1.msra.mxu0 0.0
    %1502 = vmatprep.subr.mxu0 0.0
    %1503 = vmatpush1.msra.mxu0 0.0
    %1504 = vmatprep.subr.mxu0 0.0
    %1505 = vmatpush1.msra.mxu0 0.0
    %1506 = vmatprep.mubr.f32.mxu0 0.0
    %1507 = vmatmul.mubr.f32.gmra.mrb[0].mxu0 %v1440
    %v1508 = vpop.f32.mrb[0].mxu0
    %v1509 = vadd.f32 0.0, %v1508
    %v1510 = vpop.f32.mrb[0].mxu0
    %1511 = vdwg.mxu0
    %v1512 = vsel %vm228, %v1339, 0
    %1514 = vmatprep.subr.mxu0 0.0
    %1515 = vmatpush1.msra.mxu0 %v223
    %1516 = vmatprep.subr.mxu0 0.0
    %1517 = vmatpush1.msra.mxu0 %v224
    %1518 = vmatprep.subr.mxu0 0.0
    %1519 = vmatpush1.msra.mxu0 %v225
    %1520 = vmatprep.subr.mxu0 0.0
    %1521 = vmatpush1.msra.mxu0 %v226
    %1522 = vmatprep.subr.mxu0 0.0
    %1523 = vmatpush1.msra.mxu0 0.0
    %1524 = vmatprep.subr.mxu0 0.0
    %1525 = vmatpush1.msra.mxu0 0.0
    %1526 = vmatprep.subr.mxu0 0.0
    %1527 = vmatpush1.msra.mxu0 0.0
    %1528 = vmatprep.subr.mxu0 0.0
    %1529 = vmatpush1.msra.mxu0 0.0
    %1530 = vmatprep.subr.mxu0 0.0
    %1531 = vmatpush1.msra.mxu0 0.0
    %1532 = vmatprep.subr.mxu0 0.0
    %1533 = vmatpush1.msra.mxu0 0.0
    %1534 = vmatprep.subr.mxu0 0.0
    %1535 = vmatpush1.msra.mxu0 0.0
    %1536 = vmatprep.subr.mxu0 0.0
    %1537 = vmatpush1.msra.mxu0 0.0
    %1538 = vmatprep.subr.mxu0 0.0
    %1539 = vmatpush1.msra.mxu0 0.0
    %1540 = vmatprep.subr.mxu0 0.0
    %1541 = vmatpush1.msra.mxu0 0.0
    %1542 = vmatprep.subr.mxu0 0.0
    %1543 = vmatpush1.msra.mxu0 0.0
    %1544 = vmatprep.subr.mxu0 0.0
    %1545 = vmatpush1.msra.mxu0 0.0
    %1546 = vmatprep.subr.mxu0 0.0
    %1547 = vmatpush1.msra.mxu0 0.0
    %1548 = vmatprep.subr.mxu0 0.0
    %1549 = vmatpush1.msra.mxu0 0.0
    %1550 = vmatprep.subr.mxu0 0.0
    %1551 = vmatpush1.msra.mxu0 0.0
    %1552 = vmatprep.subr.mxu0 0.0
    %1553 = vmatpush1.msra.mxu0 0.0
    %1554 = vmatprep.subr.mxu0 0.0
    %1555 = vmatpush1.msra.mxu0 0.0
    %1556 = vmatprep.subr.mxu0 0.0
    %1557 = vmatpush1.msra.mxu0 0.0
    %1558 = vmatprep.subr.mxu0 0.0
    %1559 = vmatpush1.msra.mxu0 0.0
    %1560 = vmatprep.subr.mxu0 0.0
    %1561 = vmatpush1.msra.mxu0 0.0
    %1562 = vmatprep.subr.mxu0 0.0
    %1563 = vmatpush1.msra.mxu0 0.0
    %1564 = vmatprep.subr.mxu0 0.0
    %1565 = vmatpush1.msra.mxu0 0.0
    %1566 = vmatprep.subr.mxu0 0.0
    %1567 = vmatpush1.msra.mxu0 0.0
    %1568 = vmatprep.subr.mxu0 0.0
    %1569 = vmatpush1.msra.mxu0 0.0
    %1570 = vmatprep.subr.mxu0 0.0
    %1571 = vmatpush1.msra.mxu0 0.0
    %1572 = vmatprep.subr.mxu0 0.0
    %1573 = vmatpush1.msra.mxu0 0.0
    %1574 = vmatprep.subr.mxu0 0.0
    %1575 = vmatpush1.msra.mxu0 0.0
    %1576 = vmatprep.subr.mxu0 0.0
    %1577 = vmatpush1.msra.mxu0 0.0
    %1578 = vmatprep.mubr.f32.mxu0 0.0
    %1579 = vmatmul.mubr.f32.gmra.mrb[0].mxu0 %v1512
    %v1580 = vpop.f32.mrb[0].mxu0
    %v1581 = vadd.f32 %v1509, %v1580
    %v1582 = vpop.f32.mrb[0].mxu0
    %1583 = vdwg.mxu0
    %v1584 = vadd.f32 %v1581, %v474
    %v1585 = vxor.u32 %v1584, 2147483648
    %v1586 = vmul.f32 %v1585, 1.442695
    %v1587 = vpow.pop %v1586
    %v1588 = vadd.f32 %v1587, 1.0
    %v1589 = vrcp.pop %v1588
    %v1590 = vmul.f32 1.0, %v1589
    %v1591 = vtanh.pop %v1584
    %v1592 = vmul.f32 %v1590, %v1327
    %1594 = vrot.lane.b32.xlu0 %v1591, 32
    %v1595 = vpop.permute.xlu0 %1594
    %v1597 = vmul.f32 %v1590, %v1595
    %1599 = vrot.lane.b32.xlu0 %v1597, 32
    %v1600 = vpop.permute.xlu0 %1599
    %v1602 = vadd.f32 %v1592, %v1600
    %v1603 = vtanh.pop %v1602
    %1605 = vrot.lane.b32.xlu0 %v1603, 32
    %v1606 = vpop.permute.xlu0 %1605
    %v1608 = vmul.f32 %v1590, %v1606
    %1610 = vst.msk [vmem:[#allocation2 + $0x8] sm:$0x1] %vm501, %v1439
    %1611 = vst.msk [vmem:[#allocation3 + $0x7] sm:$0x2] %vm503, %v1439
    %1613 = vrot.lane.b32.xlu0 %v1608, 64
    %v1614 = vpop.permute.xlu0 %1613
    %1616 = vst.msk [vmem:[#allocation2 + $0x9] sm:$0x1] %vm501, %v1614
    %1617 = vst.msk [vmem:[#allocation3 + $0x8] sm:$0x2] %vm503, %v1614
    %v1619 = vrot.slane %v212, 2
    %1621 = vmatprep.subr.mxu0 0.0
    %1622 = vmatpush1.msra.mxu0 %v215
    %1623 = vmatprep.subr.mxu0 0.0
    %1624 = vmatpush1.msra.mxu0 %v216
    %1625 = vmatprep.subr.mxu0 0.0
    %1626 = vmatpush1.msra.mxu0 %v217
    %1627 = vmatprep.subr.mxu0 0.0
    %1628 = vmatpush1.msra.mxu0 %v218
    %1629 = vmatprep.subr.mxu0 0.0
    %1630 = vmatpush1.msra.mxu0 0.0
    %1631 = vmatprep.subr.mxu0 0.0
    %1632 = vmatpush1.msra.mxu0 0.0
    %1633 = vmatprep.subr.mxu0 0.0
    %1634 = vmatpush1.msra.mxu0 0.0
    %1635 = vmatprep.subr.mxu0 0.0
    %1636 = vmatpush1.msra.mxu0 0.0
    %1637 = vmatprep.subr.mxu0 0.0
    %1638 = vmatpush1.msra.mxu0 0.0
    %1639 = vmatprep.subr.mxu0 0.0
    %1640 = vmatpush1.msra.mxu0 0.0
    %1641 = vmatprep.subr.mxu0 0.0
    %1642 = vmatpush1.msra.mxu0 0.0
    %1643 = vmatprep.subr.mxu0 0.0
    %1644 = vmatpush1.msra.mxu0 0.0
    %1645 = vmatprep.subr.mxu0 0.0
    %1646 = vmatpush1.msra.mxu0 0.0
    %1647 = vmatprep.subr.mxu0 0.0
    %1648 = vmatpush1.msra.mxu0 0.0
    %1649 = vmatprep.subr.mxu0 0.0
    %1650 = vmatpush1.msra.mxu0 0.0
    %1651 = vmatprep.subr.mxu0 0.0
    %1652 = vmatpush1.msra.mxu0 0.0
    %1653 = vmatprep.subr.mxu0 0.0
    %1654 = vmatpush1.msra.mxu0 0.0
    %1655 = vmatprep.subr.mxu0 0.0
    %1656 = vmatpush1.msra.mxu0 0.0
    %1657 = vmatprep.subr.mxu0 0.0
    %1658 = vmatpush1.msra.mxu0 0.0
    %1659 = vmatprep.subr.mxu0 0.0
    %1660 = vmatpush1.msra.mxu0 0.0
    %1661 = vmatprep.subr.mxu0 0.0
    %1662 = vmatpush1.msra.mxu0 0.0
    %1663 = vmatprep.subr.mxu0 0.0
    %1664 = vmatpush1.msra.mxu0 0.0
    %1665 = vmatprep.subr.mxu0 0.0
    %1666 = vmatpush1.msra.mxu0 0.0
    %1667 = vmatprep.subr.mxu0 0.0
    %1668 = vmatpush1.msra.mxu0 0.0
    %1669 = vmatprep.subr.mxu0 0.0
    %1670 = vmatpush1.msra.mxu0 0.0
    %1671 = vmatprep.subr.mxu0 0.0
    %1672 = vmatpush1.msra.mxu0 0.0
    %1673 = vmatprep.subr.mxu0 0.0
    %1674 = vmatpush1.msra.mxu0 0.0
    %1675 = vmatprep.subr.mxu0 0.0
    %1676 = vmatpush1.msra.mxu0 0.0
    %1677 = vmatprep.subr.mxu0 0.0
    %1678 = vmatpush1.msra.mxu0 0.0
    %1679 = vmatprep.subr.mxu0 0.0
    %1680 = vmatpush1.msra.mxu0 0.0
    %1681 = vmatprep.subr.mxu0 0.0
    %1682 = vmatpush1.msra.mxu0 0.0
    %1683 = vmatprep.subr.mxu0 0.0
    %1684 = vmatpush1.msra.mxu0 0.0
    %1685 = vmatprep.mubr.f32.mxu0 0.0
    %1686 = vmatmul.mubr.f32.gmra.mrb[0].mxu0 %v1440
    %v1687 = vpop.f32.mrb[0].mxu0
    %v1688 = vadd.f32 %v1619, %v1687
    %v1689 = vpop.f32.mrb[0].mxu0
    %1690 = vdwg.mxu0
    %v1691 = vxor.u32 %v1688, 2147483648
    %v1692 = vmul.f32 %v1691, 1.442695
    %v1693 = vpow.pop %v1692
    %v1694 = vadd.f32 %v1693, 1.0
    %v1695 = vrcp.pop %v1694
    %v1696 = vmul.f32 1.0, %v1695
    %v1697 = vtanh.pop %v1688
    %v1698 = vmul.f32 %v1696, %v1430
    %1700 = vrot.lane.b32.xlu0 %v1697, 32
    %v1701 = vpop.permute.xlu0 %1700
    %v1703 = vmul.f32 %v1696, %v1701
    %1705 = vrot.lane.b32.xlu0 %v1703, 32
    %v1706 = vpop.permute.xlu0 %1705
    %v1708 = vadd.f32 %v1698, %v1706
    %v1709 = vtanh.pop %v1708
    %1711 = vrot.lane.b32.xlu0 %v1709, 32
    %v1712 = vpop.permute.xlu0 %1711
    %v1714 = vmul.f32 %v1696, %v1712
    %1716 = vrot.lane.b32.xlu0 %v1714, 64
    %v1717 = vpop.permute.xlu0 %1716
    %v1718 = vsel %vm228, %v1717, 0
    %1720 = vmatprep.subr.mxu0 0.0
    %1721 = vmatpush1.msra.mxu0 %v219
    %1722 = vmatprep.subr.mxu0 0.0
    %1723 = vmatpush1.msra.mxu0 %v220
    %1724 = vmatprep.subr.mxu0 0.0
    %1725 = vmatpush1.msra.mxu0 %v221
    %1726 = vmatprep.subr.mxu0 0.0
    %1727 = vmatpush1.msra.mxu0 %v222
    %1728 = vmatprep.subr.mxu0 0.0
    %1729 = vmatpush1.msra.mxu0 0.0
    %1730 = vmatprep.subr.mxu0 0.0
    %1731 = vmatpush1.msra.mxu0 0.0
    %1732 = vmatprep.subr.mxu0 0.0
    %1733 = vmatpush1.msra.mxu0 0.0
    %1734 = vmatprep.subr.mxu0 0.0
    %1735 = vmatpush1.msra.mxu0 0.0
    %1736 = vmatprep.subr.mxu0 0.0
    %1737 = vmatpush1.msra.mxu0 0.0
    %1738 = vmatprep.subr.mxu0 0.0
    %1739 = vmatpush1.msra.mxu0 0.0
    %1740 = vmatprep.subr.mxu0 0.0
    %1741 = vmatpush1.msra.mxu0 0.0
    %1742 = vmatprep.subr.mxu0 0.0
    %1743 = vmatpush1.msra.mxu0 0.0
    %1744 = vmatprep.subr.mxu0 0.0
    %1745 = vmatpush1.msra.mxu0 0.0
    %1746 = vmatprep.subr.mxu0 0.0
    %1747 = vmatpush1.msra.mxu0 0.0
    %1748 = vmatprep.subr.mxu0 0.0
    %1749 = vmatpush1.msra.mxu0 0.0
    %1750 = vmatprep.subr.mxu0 0.0
    %1751 = vmatpush1.msra.mxu0 0.0
    %1752 = vmatprep.subr.mxu0 0.0
    %1753 = vmatpush1.msra.mxu0 0.0
    %1754 = vmatprep.subr.mxu0 0.0
    %1755 = vmatpush1.msra.mxu0 0.0
    %1756 = vmatprep.subr.mxu0 0.0
    %1757 = vmatpush1.msra.mxu0 0.0
    %1758 = vmatprep.subr.mxu0 0.0
    %1759 = vmatpush1.msra.mxu0 0.0
    %1760 = vmatprep.subr.mxu0 0.0
    %1761 = vmatpush1.msra.mxu0 0.0
    %1762 = vmatprep.subr.mxu0 0.0
    %1763 = vmatpush1.msra.mxu0 0.0
    %1764 = vmatprep.subr.mxu0 0.0
    %1765 = vmatpush1.msra.mxu0 0.0
    %1766 = vmatprep.subr.mxu0 0.0
    %1767 = vmatpush1.msra.mxu0 0.0
    %1768 = vmatprep.subr.mxu0 0.0
    %1769 = vmatpush1.msra.mxu0 0.0
    %1770 = vmatprep.subr.mxu0 0.0
    %1771 = vmatpush1.msra.mxu0 0.0
    %1772 = vmatprep.subr.mxu0 0.0
    %1773 = vmatpush1.msra.mxu0 0.0
    %1774 = vmatprep.subr.mxu0 0.0
    %1775 = vmatpush1.msra.mxu0 0.0
    %1776 = vmatprep.subr.mxu0 0.0
    %1777 = vmatpush1.msra.mxu0 0.0
    %1778 = vmatprep.subr.mxu0 0.0
    %1779 = vmatpush1.msra.mxu0 0.0
    %1780 = vmatprep.subr.mxu0 0.0
    %1781 = vmatpush1.msra.mxu0 0.0
    %1782 = vmatprep.subr.mxu0 0.0
    %1783 = vmatpush1.msra.mxu0 0.0
    %1784 = vmatprep.mubr.f32.mxu0 0.0
    %1785 = vmatmul.mubr.f32.gmra.mrb[0].mxu0 %v1718
    %v1786 = vpop.f32.mrb[0].mxu0
    %v1787 = vadd.f32 0.0, %v1786
    %v1788 = vpop.f32.mrb[0].mxu0
    %1789 = vdwg.mxu0
    %v1790 = vsel %vm228, %v1614, 0
    %1792 = vmatprep.subr.mxu0 0.0
    %1793 = vmatpush1.msra.mxu0 %v223
    %1794 = vmatprep.subr.mxu0 0.0
    %1795 = vmatpush1.msra.mxu0 %v224
    %1796 = vmatprep.subr.mxu0 0.0
    %1797 = vmatpush1.msra.mxu0 %v225
    %1798 = vmatprep.subr.mxu0 0.0
    %1799 = vmatpush1.msra.mxu0 %v226
    %1800 = vmatprep.subr.mxu0 0.0
    %1801 = vmatpush1.msra.mxu0 0.0
    %1802 = vmatprep.subr.mxu0 0.0
    %1803 = vmatpush1.msra.mxu0 0.0
    %1804 = vmatprep.subr.mxu0 0.0
    %1805 = vmatpush1.msra.mxu0 0.0
    %1806 = vmatprep.subr.mxu0 0.0
    %1807 = vmatpush1.msra.mxu0 0.0
    %1808 = vmatprep.subr.mxu0 0.0
    %1809 = vmatpush1.msra.mxu0 0.0
    %1810 = vmatprep.subr.mxu0 0.0
    %1811 = vmatpush1.msra.mxu0 0.0
    %1812 = vmatprep.subr.mxu0 0.0
    %1813 = vmatpush1.msra.mxu0 0.0
    %1814 = vmatprep.subr.mxu0 0.0
    %1815 = vmatpush1.msra.mxu0 0.0
    %1816 = vmatprep.subr.mxu0 0.0
    %1817 = vmatpush1.msra.mxu0 0.0
    %1818 = vmatprep.subr.mxu0 0.0
    %1819 = vmatpush1.msra.mxu0 0.0
    %1820 = vmatprep.subr.mxu0 0.0
    %1821 = vmatpush1.msra.mxu0 0.0
    %1822 = vmatprep.subr.mxu0 0.0
    %1823 = vmatpush1.msra.mxu0 0.0
    %1824 = vmatprep.subr.mxu0 0.0
    %1825 = vmatpush1.msra.mxu0 0.0
    %1826 = vmatprep.subr.mxu0 0.0
    %1827 = vmatpush1.msra.mxu0 0.0
    %1828 = vmatprep.subr.mxu0 0.0
    %1829 = vmatpush1.msra.mxu0 0.0
    %1830 = vmatprep.subr.mxu0 0.0
    %1831 = vmatpush1.msra.mxu0 0.0
    %1832 = vmatprep.subr.mxu0 0.0
    %1833 = vmatpush1.msra.mxu0 0.0
    %1834 = vmatprep.subr.mxu0 0.0
    %1835 = vmatpush1.msra.mxu0 0.0
    %1836 = vmatprep.subr.mxu0 0.0
    %1837 = vmatpush1.msra.mxu0 0.0
    %1838 = vmatprep.subr.mxu0 0.0
    %1839 = vmatpush1.msra.mxu0 0.0
    %1840 = vmatprep.subr.mxu0 0.0
    %1841 = vmatpush1.msra.mxu0 0.0
    %1842 = vmatprep.subr.mxu0 0.0
    %1843 = vmatpush1.msra.mxu0 0.0
    %1844 = vmatprep.subr.mxu0 0.0
    %1845 = vmatpush1.msra.mxu0 0.0
    %1846 = vmatprep.subr.mxu0 0.0
    %1847 = vmatpush1.msra.mxu0 0.0
    %1848 = vmatprep.subr.mxu0 0.0
    %1849 = vmatpush1.msra.mxu0 0.0
    %1850 = vmatprep.subr.mxu0 0.0
    %1851 = vmatpush1.msra.mxu0 0.0
    %1852 = vmatprep.subr.mxu0 0.0
    %1853 = vmatpush1.msra.mxu0 0.0
    %1854 = vmatprep.subr.mxu0 0.0
    %1855 = vmatpush1.msra.mxu0 0.0
    %1856 = vmatprep.mubr.f32.mxu0 0.0
    %1857 = vmatmul.mubr.f32.gmra.mrb[0].mxu0 %v1790
    %v1858 = vpop.f32.mrb[0].mxu0
    %v1859 = vadd.f32 %v1787, %v1858
    %v1860 = vpop.f32.mrb[0].mxu0
    %1861 = vdwg.mxu0
    %v1862 = vadd.f32 %v1859, %v474
    %v1863 = vxor.u32 %v1862, 2147483648
    %v1864 = vmul.f32 %v1863, 1.442695
    %v1865 = vpow.pop %v1864
    %v1866 = vadd.f32 %v1865, 1.0
    %v1867 = vrcp.pop %v1866
    %v1868 = vmul.f32 1.0, %v1867
    %v1869 = vtanh.pop %v1862
    %v1870 = vmul.f32 %v1868, %v1602
    %1872 = vrot.lane.b32.xlu0 %v1869, 32
    %v1873 = vpop.permute.xlu0 %1872
    %v1875 = vmul.f32 %v1868, %v1873
    %1877 = vrot.lane.b32.xlu0 %v1875, 32
    %v1878 = vpop.permute.xlu0 %1877
    %v1880 = vadd.f32 %v1870, %v1878
    %v1881 = vtanh.pop %v1880
    %1883 = vrot.lane.b32.xlu0 %v1881, 32
    %v1884 = vpop.permute.xlu0 %1883
    %v1886 = vmul.f32 %v1868, %v1884
    %1888 = vst.msk [vmem:[#allocation2 + $0xa] sm:$0x1] %vm501, %v1717
    %1889 = vst.msk [vmem:[#allocation3 + $0x9] sm:$0x2] %vm503, %v1717
    %1891 = vrot.lane.b32.xlu0 %v1886, 64
    %v1892 = vpop.permute.xlu0 %1891
    %1894 = vst.msk [vmem:[#allocation2 + $0xb] sm:$0x1] %vm501, %v1892
    %1895 = vst.msk [vmem:[#allocation3 + $0xa] sm:$0x2] %vm503, %v1892
    %v1896 = vrot.slane %v212, 4
    %1898 = vmatprep.subr.mxu0 0.0
    %1899 = vmatpush1.msra.mxu0 %v215
    %1900 = vmatprep.subr.mxu0 0.0
    %1901 = vmatpush1.msra.mxu0 %v216
    %1902 = vmatprep.subr.mxu0 0.0
    %1903 = vmatpush1.msra.mxu0 %v217
    %1904 = vmatprep.subr.mxu0 0.0
    %1905 = vmatpush1.msra.mxu0 %v218
    %1906 = vmatprep.subr.mxu0 0.0
    %1907 = vmatpush1.msra.mxu0 0.0
    %1908 = vmatprep.subr.mxu0 0.0
    %1909 = vmatpush1.msra.mxu0 0.0
    %1910 = vmatprep.subr.mxu0 0.0
    %1911 = vmatpush1.msra.mxu0 0.0
    %1912 = vmatprep.subr.mxu0 0.0
    %1913 = vmatpush1.msra.mxu0 0.0
    %1914 = vmatprep.subr.mxu0 0.0
    %1915 = vmatpush1.msra.mxu0 0.0
    %1916 = vmatprep.subr.mxu0 0.0
    %1917 = vmatpush1.msra.mxu0 0.0
    %1918 = vmatprep.subr.mxu0 0.0
    %1919 = vmatpush1.msra.mxu0 0.0
    %1920 = vmatprep.subr.mxu0 0.0
    %1921 = vmatpush1.msra.mxu0 0.0
    %1922 = vmatprep.subr.mxu0 0.0
    %1923 = vmatpush1.msra.mxu0 0.0
    %1924 = vmatprep.subr.mxu0 0.0
    %1925 = vmatpush1.msra.mxu0 0.0
    %1926 = vmatprep.subr.mxu0 0.0
    %1927 = vmatpush1.msra.mxu0 0.0
    %1928 = vmatprep.subr.mxu0 0.0
    %1929 = vmatpush1.msra.mxu0 0.0
    %1930 = vmatprep.subr.mxu0 0.0
    %1931 = vmatpush1.msra.mxu0 0.0
    %1932 = vmatprep.subr.mxu0 0.0
    %1933 = vmatpush1.msra.mxu0 0.0
    %1934 = vmatprep.subr.mxu0 0.0
    %1935 = vmatpush1.msra.mxu0 0.0
    %1936 = vmatprep.subr.mxu0 0.0
    %1937 = vmatpush1.msra.mxu0 0.0
    %1938 = vmatprep.subr.mxu0 0.0
    %1939 = vmatpush1.msra.mxu0 0.0
    %1940 = vmatprep.subr.mxu0 0.0
    %1941 = vmatpush1.msra.mxu0 0.0
    %1942 = vmatprep.subr.mxu0 0.0
    %1943 = vmatpush1.msra.mxu0 0.0
    %1944 = vmatprep.subr.mxu0 0.0
    %1945 = vmatpush1.msra.mxu0 0.0
    %1946 = vmatprep.subr.mxu0 0.0
    %1947 = vmatpush1.msra.mxu0 0.0
    %1948 = vmatprep.subr.mxu0 0.0
    %1949 = vmatpush1.msra.mxu0 0.0
    %1950 = vmatprep.subr.mxu0 0.0
    %1951 = vmatpush1.msra.mxu0 0.0
    %1952 = vmatprep.subr.mxu0 0.0
    %1953 = vmatpush1.msra.mxu0 0.0
    %1954 = vmatprep.subr.mxu0 0.0
    %1955 = vmatpush1.msra.mxu0 0.0
    %1956 = vmatprep.subr.mxu0 0.0
    %1957 = vmatpush1.msra.mxu0 0.0
    %1958 = vmatprep.subr.mxu0 0.0
    %1959 = vmatpush1.msra.mxu0 0.0
    %1960 = vmatprep.subr.mxu0 0.0
    %1961 = vmatpush1.msra.mxu0 0.0
    %1962 = vmatprep.mubr.f32.mxu0 0.0
    %1963 = vmatmul.mubr.f32.gmra.mrb[0].mxu0 %v1718
    %v1964 = vpop.f32.mrb[0].mxu0
    %v1965 = vadd.f32 %v1896, %v1964
    %v1966 = vpop.f32.mrb[0].mxu0
    %1967 = vdwg.mxu0
    %v1968 = vxor.u32 %v1965, 2147483648
    %v1969 = vmul.f32 %v1968, 1.442695
    %v1970 = vpow.pop %v1969
    %v1971 = vadd.f32 %v1970, 1.0
    %v1972 = vrcp.pop %v1971
    %v1973 = vmul.f32 1.0, %v1972
    %v1974 = vtanh.pop %v1965
    %v1975 = vmul.f32 %v1973, %v1708
    %1977 = vrot.lane.b32.xlu0 %v1974, 32
    %v1978 = vpop.permute.xlu0 %1977
    %v1980 = vmul.f32 %v1973, %v1978
    %1982 = vrot.lane.b32.xlu0 %v1980, 32
    %v1983 = vpop.permute.xlu0 %1982
    %v1985 = vadd.f32 %v1975, %v1983
    %v1986 = vtanh.pop %v1985
    %1988 = vrot.lane.b32.xlu0 %v1986, 32
    %v1989 = vpop.permute.xlu0 %1988
    %v1991 = vmul.f32 %v1973, %v1989
    %1993 = vrot.lane.b32.xlu0 %v1991, 64
    %v1994 = vpop.permute.xlu0 %1993
    %v1995 = vsel %vm228, %v1994, 0
    %1997 = vmatprep.subr.mxu0 0.0
    %1998 = vmatpush1.msra.mxu0 %v219
    %1999 = vmatprep.subr.mxu0 0.0
    %2000 = vmatpush1.msra.mxu0 %v220
    %2001 = vmatprep.subr.mxu0 0.0
    %2002 = vmatpush1.msra.mxu0 %v221
    %2003 = vmatprep.subr.mxu0 0.0
    %2004 = vmatpush1.msra.mxu0 %v222
    %2005 = vmatprep.subr.mxu0 0.0
    %2006 = vmatpush1.msra.mxu0 0.0
    %2007 = vmatprep.subr.mxu0 0.0
    %2008 = vmatpush1.msra.mxu0 0.0
    %2009 = vmatprep.subr.mxu0 0.0
    %2010 = vmatpush1.msra.mxu0 0.0
    %2011 = vmatprep.subr.mxu0 0.0
    %2012 = vmatpush1.msra.mxu0 0.0
    %2013 = vmatprep.subr.mxu0 0.0
    %2014 = vmatpush1.msra.mxu0 0.0
    %2015 = vmatprep.subr.mxu0 0.0
    %2016 = vmatpush1.msra.mxu0 0.0
    %2017 = vmatprep.subr.mxu0 0.0
    %2018 = vmatpush1.msra.mxu0 0.0
    %2019 = vmatprep.subr.mxu0 0.0
    %2020 = vmatpush1.msra.mxu0 0.0
    %2021 = vmatprep.subr.mxu0 0.0
    %2022 = vmatpush1.msra.mxu0 0.0
    %2023 = vmatprep.subr.mxu0 0.0
    %2024 = vmatpush1.msra.mxu0 0.0
    %2025 = vmatprep.subr.mxu0 0.0
    %2026 = vmatpush1.msra.mxu0 0.0
    %2027 = vmatprep.subr.mxu0 0.0
    %2028 = vmatpush1.msra.mxu0 0.0
    %2029 = vmatprep.subr.mxu0 0.0
    %2030 = vmatpush1.msra.mxu0 0.0
    %2031 = vmatprep.subr.mxu0 0.0
    %2032 = vmatpush1.msra.mxu0 0.0
    %2033 = vmatprep.subr.mxu0 0.0
    %2034 = vmatpush1.msra.mxu0 0.0
    %2035 = vmatprep.subr.mxu0 0.0
    %2036 = vmatpush1.msra.mxu0 0.0
    %2037 = vmatprep.subr.mxu0 0.0
    %2038 = vmatpush1.msra.mxu0 0.0
    %2039 = vmatprep.subr.mxu0 0.0
    %2040 = vmatpush1.msra.mxu0 0.0
    %2041 = vmatprep.subr.mxu0 0.0
    %2042 = vmatpush1.msra.mxu0 0.0
    %2043 = vmatprep.subr.mxu0 0.0
    %2044 = vmatpush1.msra.mxu0 0.0
    %2045 = vmatprep.subr.mxu0 0.0
    %2046 = vmatpush1.msra.mxu0 0.0
    %2047 = vmatprep.subr.mxu0 0.0
    %2048 = vmatpush1.msra.mxu0 0.0
    %2049 = vmatprep.subr.mxu0 0.0
    %2050 = vmatpush1.msra.mxu0 0.0
    %2051 = vmatprep.subr.mxu0 0.0
    %2052 = vmatpush1.msra.mxu0 0.0
    %2053 = vmatprep.subr.mxu0 0.0
    %2054 = vmatpush1.msra.mxu0 0.0
    %2055 = vmatprep.subr.mxu0 0.0
    %2056 = vmatpush1.msra.mxu0 0.0
    %2057 = vmatprep.subr.mxu0 0.0
    %2058 = vmatpush1.msra.mxu0 0.0
    %2059 = vmatprep.subr.mxu0 0.0
    %2060 = vmatpush1.msra.mxu0 0.0
    %2061 = vmatprep.mubr.f32.mxu0 0.0
    %2062 = vmatmul.mubr.f32.gmra.mrb[0].mxu0 %v1995
    %v2063 = vpop.f32.mrb[0].mxu0
    %v2064 = vadd.f32 0.0, %v2063
    %v2065 = vpop.f32.mrb[0].mxu0
    %2066 = vdwg.mxu0
    %v2067 = vsel %vm228, %v1892, 0
    %2069 = vmatprep.subr.mxu0 0.0
    %2070 = vmatpush1.msra.mxu0 %v223
    %2071 = vmatprep.subr.mxu0 0.0
    %2072 = vmatpush1.msra.mxu0 %v224
    %2073 = vmatprep.subr.mxu0 0.0
    %2074 = vmatpush1.msra.mxu0 %v225
    %2075 = vmatprep.subr.mxu0 0.0
    %2076 = vmatpush1.msra.mxu0 %v226
    %2077 = vmatprep.subr.mxu0 0.0
    %2078 = vmatpush1.msra.mxu0 0.0
    %2079 = vmatprep.subr.mxu0 0.0
    %2080 = vmatpush1.msra.mxu0 0.0
    %2081 = vmatprep.subr.mxu0 0.0
    %2082 = vmatpush1.msra.mxu0 0.0
    %2083 = vmatprep.subr.mxu0 0.0
    %2084 = vmatpush1.msra.mxu0 0.0
    %2085 = vmatprep.subr.mxu0 0.0
    %2086 = vmatpush1.msra.mxu0 0.0
    %2087 = vmatprep.subr.mxu0 0.0
    %2088 = vmatpush1.msra.mxu0 0.0
    %2089 = vmatprep.subr.mxu0 0.0
    %2090 = vmatpush1.msra.mxu0 0.0
    %2091 = vmatprep.subr.mxu0 0.0
    %2092 = vmatpush1.msra.mxu0 0.0
    %2093 = vmatprep.subr.mxu0 0.0
    %2094 = vmatpush1.msra.mxu0 0.0
    %2095 = vmatprep.subr.mxu0 0.0
    %2096 = vmatpush1.msra.mxu0 0.0
    %2097 = vmatprep.subr.mxu0 0.0
    %2098 = vmatpush1.msra.mxu0 0.0
    %2099 = vmatprep.subr.mxu0 0.0
    %2100 = vmatpush1.msra.mxu0 0.0
    %2101 = vmatprep.subr.mxu0 0.0
    %2102 = vmatpush1.msra.mxu0 0.0
    %2103 = vmatprep.subr.mxu0 0.0
    %2104 = vmatpush1.msra.mxu0 0.0
    %2105 = vmatprep.subr.mxu0 0.0
    %2106 = vmatpush1.msra.mxu0 0.0
    %2107 = vmatprep.subr.mxu0 0.0
    %2108 = vmatpush1.msra.mxu0 0.0
    %2109 = vmatprep.subr.mxu0 0.0
    %2110 = vmatpush1.msra.mxu0 0.0
    %2111 = vmatprep.subr.mxu0 0.0
    %2112 = vmatpush1.msra.mxu0 0.0
    %2113 = vmatprep.subr.mxu0 0.0
    %2114 = vmatpush1.msra.mxu0 0.0
    %2115 = vmatprep.subr.mxu0 0.0
    %2116 = vmatpush1.msra.mxu0 0.0
    %2117 = vmatprep.subr.mxu0 0.0
    %2118 = vmatpush1.msra.mxu0 0.0
    %2119 = vmatprep.subr.mxu0 0.0
    %2120 = vmatpush1.msra.mxu0 0.0
    %2121 = vmatprep.subr.mxu0 0.0
    %2122 = vmatpush1.msra.mxu0 0.0
    %2123 = vmatprep.subr.mxu0 0.0
    %2124 = vmatpush1.msra.mxu0 0.0
    %2125 = vmatprep.subr.mxu0 0.0
    %2126 = vmatpush1.msra.mxu0 0.0
    %2127 = vmatprep.subr.mxu0 0.0
    %2128 = vmatpush1.msra.mxu0 0.0
    %2129 = vmatprep.subr.mxu0 0.0
    %2130 = vmatpush1.msra.mxu0 0.0
    %2131 = vmatprep.subr.mxu0 0.0
    %2132 = vmatpush1.msra.mxu0 0.0
    %2133 = vmatprep.mubr.f32.mxu0 0.0
    %2134 = vmatmul.mubr.f32.gmra.mrb[0].mxu0 %v2067
    %v2135 = vpop.f32.mrb[0].mxu0
    %v2136 = vadd.f32 %v2064, %v2135
    %v2137 = vpop.f32.mrb[0].mxu0
    %2138 = vdwg.mxu0
    %v2139 = vadd.f32 %v2136, %v474
    %v2140 = vxor.u32 %v2139, 2147483648
    %v2141 = vmul.f32 %v2140, 1.442695
    %v2142 = vpow.pop %v2141
    %v2143 = vadd.f32 %v2142, 1.0
    %v2144 = vrcp.pop %v2143
    %v2145 = vmul.f32 1.0, %v2144
    %v2146 = vtanh.pop %v2139
    %v2147 = vmul.f32 %v2145, %v1880
    %2149 = vrot.lane.b32.xlu0 %v2146, 32
    %v2150 = vpop.permute.xlu0 %2149
    %v2152 = vmul.f32 %v2145, %v2150
    %2154 = vrot.lane.b32.xlu0 %v2152, 32
    %v2155 = vpop.permute.xlu0 %2154
    %v2157 = vadd.f32 %v2147, %v2155
    %v2158 = vtanh.pop %v2157
    %2160 = vrot.lane.b32.xlu0 %v2158, 32
    %v2161 = vpop.permute.xlu0 %2160
    %v2163 = vmul.f32 %v2145, %v2161
    %2165 = vst.msk [vmem:[#allocation2 + $0xc] sm:$0x1] %vm501, %v1994
    %2166 = vst.msk [vmem:[#allocation3 + $0xb] sm:$0x2] %vm503, %v1994
    %2168 = vrot.lane.b32.xlu0 %v2163, 64
    %v2169 = vpop.permute.xlu0 %2168
    %2171 = vst.msk [vmem:[#allocation2 + $0xd] sm:$0x1] %vm501, %v2169
    %2172 = vst.msk [vmem:[#allocation3 + $0xc] sm:$0x2] %vm503, %v2169
    %v2173 = vrot.slane %v212, 6
    %2175 = vmatprep.subr.mxu0 0.0
    %2176 = vmatpush1.msra.mxu0 %v215
    %2177 = vmatprep.subr.mxu0 0.0
    %2178 = vmatpush1.msra.mxu0 %v216
    %2179 = vmatprep.subr.mxu0 0.0
    %2180 = vmatpush1.msra.mxu0 %v217
    %2181 = vmatprep.subr.mxu0 0.0
    %2182 = vmatpush1.msra.mxu0 %v218
    %2183 = vmatprep.subr.mxu0 0.0
    %2184 = vmatpush1.msra.mxu0 0.0
    %2185 = vmatprep.subr.mxu0 0.0
    %2186 = vmatpush1.msra.mxu0 0.0
    %2187 = vmatprep.subr.mxu0 0.0
    %2188 = vmatpush1.msra.mxu0 0.0
    %2189 = vmatprep.subr.mxu0 0.0
    %2190 = vmatpush1.msra.mxu0 0.0
    %2191 = vmatprep.subr.mxu0 0.0
    %2192 = vmatpush1.msra.mxu0 0.0
    %2193 = vmatprep.subr.mxu0 0.0
    %2194 = vmatpush1.msra.mxu0 0.0
    %2195 = vmatprep.subr.mxu0 0.0
    %2196 = vmatpush1.msra.mxu0 0.0
    %2197 = vmatprep.subr.mxu0 0.0
    %2198 = vmatpush1.msra.mxu0 0.0
    %2199 = vmatprep.subr.mxu0 0.0
    %2200 = vmatpush1.msra.mxu0 0.0
    %2201 = vmatprep.subr.mxu0 0.0
    %2202 = vmatpush1.msra.mxu0 0.0
    %2203 = vmatprep.subr.mxu0 0.0
    %2204 = vmatpush1.msra.mxu0 0.0
    %2205 = vmatprep.subr.mxu0 0.0
    %2206 = vmatpush1.msra.mxu0 0.0
    %2207 = vmatprep.subr.mxu0 0.0
    %2208 = vmatpush1.msra.mxu0 0.0
    %2209 = vmatprep.subr.mxu0 0.0
    %2210 = vmatpush1.msra.mxu0 0.0
    %2211 = vmatprep.subr.mxu0 0.0
    %2212 = vmatpush1.msra.mxu0 0.0
    %2213 = vmatprep.subr.mxu0 0.0
    %2214 = vmatpush1.msra.mxu0 0.0
    %2215 = vmatprep.subr.mxu0 0.0
    %2216 = vmatpush1.msra.mxu0 0.0
    %2217 = vmatprep.subr.mxu0 0.0
    %2218 = vmatpush1.msra.mxu0 0.0
    %2219 = vmatprep.subr.mxu0 0.0
    %2220 = vmatpush1.msra.mxu0 0.0
    %2221 = vmatprep.subr.mxu0 0.0
    %2222 = vmatpush1.msra.mxu0 0.0
    %2223 = vmatprep.subr.mxu0 0.0
    %2224 = vmatpush1.msra.mxu0 0.0
    %2225 = vmatprep.subr.mxu0 0.0
    %2226 = vmatpush1.msra.mxu0 0.0
    %2227 = vmatprep.subr.mxu0 0.0
    %2228 = vmatpush1.msra.mxu0 0.0
    %2229 = vmatprep.subr.mxu0 0.0
    %2230 = vmatpush1.msra.mxu0 0.0
    %2231 = vmatprep.subr.mxu0 0.0
    %2232 = vmatpush1.msra.mxu0 0.0
    %2233 = vmatprep.subr.mxu0 0.0
    %2234 = vmatpush1.msra.mxu0 0.0
    %2235 = vmatprep.subr.mxu0 0.0
    %2236 = vmatpush1.msra.mxu0 0.0
    %2237 = vmatprep.subr.mxu0 0.0
    %2238 = vmatpush1.msra.mxu0 0.0
    %2239 = vmatprep.mubr.f32.mxu0 0.0
    %2240 = vmatmul.mubr.f32.gmra.mrb[0].mxu0 %v1995
    %v2241 = vpop.f32.mrb[0].mxu0
    %v2242 = vadd.f32 %v2173, %v2241
    %v2243 = vpop.f32.mrb[0].mxu0
    %2244 = vdwg.mxu0
    %v2245 = vxor.u32 %v2242, 2147483648
    %v2246 = vmul.f32 %v2245, 1.442695
    %v2247 = vpow.pop %v2246
    %v2248 = vadd.f32 %v2247, 1.0
    %v2249 = vrcp.pop %v2248
    %v2250 = vmul.f32 1.0, %v2249
    %v2251 = vtanh.pop %v2242
    %v2252 = vmul.f32 %v2250, %v1985
    %2254 = vrot.lane.b32.xlu0 %v2251, 32
    %v2255 = vpop.permute.xlu0 %2254
    %v2257 = vmul.f32 %v2250, %v2255
    %2259 = vrot.lane.b32.xlu0 %v2257, 32
    %v2260 = vpop.permute.xlu0 %2259
    %v2262 = vadd.f32 %v2252, %v2260
    %v2263 = vtanh.pop %v2262
    %2265 = vrot.lane.b32.xlu0 %v2263, 32
    %v2266 = vpop.permute.xlu0 %2265
    %v2268 = vmul.f32 %v2250, %v2266
    %2270 = vrot.lane.b32.xlu0 %v2268, 64
    %v2271 = vpop.permute.xlu0 %2270
    %v2272 = vsel %vm228, %v2271, 0
    %2274 = vmatprep.subr.mxu0 0.0
    %2275 = vmatpush1.msra.mxu0 %v219
    %2276 = vmatprep.subr.mxu0 0.0
    %2277 = vmatpush1.msra.mxu0 %v220
    %2278 = vmatprep.subr.mxu0 0.0
    %2279 = vmatpush1.msra.mxu0 %v221
    %2280 = vmatprep.subr.mxu0 0.0
    %2281 = vmatpush1.msra.mxu0 %v222
    %2282 = vmatprep.subr.mxu0 0.0
    %2283 = vmatpush1.msra.mxu0 0.0
    %2284 = vmatprep.subr.mxu0 0.0
    %2285 = vmatpush1.msra.mxu0 0.0
    %2286 = vmatprep.subr.mxu0 0.0
    %2287 = vmatpush1.msra.mxu0 0.0
    %2288 = vmatprep.subr.mxu0 0.0
    %2289 = vmatpush1.msra.mxu0 0.0
    %2290 = vmatprep.subr.mxu0 0.0
    %2291 = vmatpush1.msra.mxu0 0.0
    %2292 = vmatprep.subr.mxu0 0.0
    %2293 = vmatpush1.msra.mxu0 0.0
    %2294 = vmatprep.subr.mxu0 0.0
    %2295 = vmatpush1.msra.mxu0 0.0
    %2296 = vmatprep.subr.mxu0 0.0
    %2297 = vmatpush1.msra.mxu0 0.0
    %2298 = vmatprep.subr.mxu0 0.0
    %2299 = vmatpush1.msra.mxu0 0.0
    %2300 = vmatprep.subr.mxu0 0.0
    %2301 = vmatpush1.msra.mxu0 0.0
    %2302 = vmatprep.subr.mxu0 0.0
    %2303 = vmatpush1.msra.mxu0 0.0
    %2304 = vmatprep.subr.mxu0 0.0
    %2305 = vmatpush1.msra.mxu0 0.0
    %2306 = vmatprep.subr.mxu0 0.0
    %2307 = vmatpush1.msra.mxu0 0.0
    %2308 = vmatprep.subr.mxu0 0.0
    %2309 = vmatpush1.msra.mxu0 0.0
    %2310 = vmatprep.subr.mxu0 0.0
    %2311 = vmatpush1.msra.mxu0 0.0
    %2312 = vmatprep.subr.mxu0 0.0
    %2313 = vmatpush1.msra.mxu0 0.0
    %2314 = vmatprep.subr.mxu0 0.0
    %2315 = vmatpush1.msra.mxu0 0.0
    %2316 = vmatprep.subr.mxu0 0.0
    %2317 = vmatpush1.msra.mxu0 0.0
    %2318 = vmatprep.subr.mxu0 0.0
    %2319 = vmatpush1.msra.mxu0 0.0
    %2320 = vmatprep.subr.mxu0 0.0
    %2321 = vmatpush1.msra.mxu0 0.0
    %2322 = vmatprep.subr.mxu0 0.0
    %2323 = vmatpush1.msra.mxu0 0.0
    %2324 = vmatprep.subr.mxu0 0.0
    %2325 = vmatpush1.msra.mxu0 0.0
    %2326 = vmatprep.subr.mxu0 0.0
    %2327 = vmatpush1.msra.mxu0 0.0
    %2328 = vmatprep.subr.mxu0 0.0
    %2329 = vmatpush1.msra.mxu0 0.0
    %2330 = vmatprep.subr.mxu0 0.0
    %2331 = vmatpush1.msra.mxu0 0.0
    %2332 = vmatprep.subr.mxu0 0.0
    %2333 = vmatpush1.msra.mxu0 0.0
    %2334 = vmatprep.subr.mxu0 0.0
    %2335 = vmatpush1.msra.mxu0 0.0
    %2336 = vmatprep.subr.mxu0 0.0
    %2337 = vmatpush1.msra.mxu0 0.0
    %2338 = vmatprep.mubr.f32.mxu0 0.0
    %2339 = vmatmul.mubr.f32.gmra.mrb[0].mxu0 %v2272
    %v2340 = vpop.f32.mrb[0].mxu0
    %v2341 = vadd.f32 0.0, %v2340
    %v2342 = vpop.f32.mrb[0].mxu0
    %2343 = vdwg.mxu0
    %v2344 = vsel %vm228, %v2169, 0
    %2346 = vmatprep.subr.mxu0 0.0
    %2347 = vmatpush1.msra.mxu0 %v223
    %2348 = vmatprep.subr.mxu0 0.0
    %2349 = vmatpush1.msra.mxu0 %v224
    %2350 = vmatprep.subr.mxu0 0.0
    %2351 = vmatpush1.msra.mxu0 %v225
    %2352 = vmatprep.subr.mxu0 0.0
    %2353 = vmatpush1.msra.mxu0 %v226
    %2354 = vmatprep.subr.mxu0 0.0
    %2355 = vmatpush1.msra.mxu0 0.0
    %2356 = vmatprep.subr.mxu0 0.0
    %2357 = vmatpush1.msra.mxu0 0.0
    %2358 = vmatprep.subr.mxu0 0.0
    %2359 = vmatpush1.msra.mxu0 0.0
    %2360 = vmatprep.subr.mxu0 0.0
    %2361 = vmatpush1.msra.mxu0 0.0
    %2362 = vmatprep.subr.mxu0 0.0
    %2363 = vmatpush1.msra.mxu0 0.0
    %2364 = vmatprep.subr.mxu0 0.0
    %2365 = vmatpush1.msra.mxu0 0.0
    %2366 = vmatprep.subr.mxu0 0.0
    %2367 = vmatpush1.msra.mxu0 0.0
    %2368 = vmatprep.subr.mxu0 0.0
    %2369 = vmatpush1.msra.mxu0 0.0
    %2370 = vmatprep.subr.mxu0 0.0
    %2371 = vmatpush1.msra.mxu0 0.0
    %2372 = vmatprep.subr.mxu0 0.0
    %2373 = vmatpush1.msra.mxu0 0.0
    %2374 = vmatprep.subr.mxu0 0.0
    %2375 = vmatpush1.msra.mxu0 0.0
    %2376 = vmatprep.subr.mxu0 0.0
    %2377 = vmatpush1.msra.mxu0 0.0
    %2378 = vmatprep.subr.mxu0 0.0
    %2379 = vmatpush1.msra.mxu0 0.0
    %2380 = vmatprep.subr.mxu0 0.0
    %2381 = vmatpush1.msra.mxu0 0.0
    %2382 = vmatprep.subr.mxu0 0.0
    %2383 = vmatpush1.msra.mxu0 0.0
    %2384 = vmatprep.subr.mxu0 0.0
    %2385 = vmatpush1.msra.mxu0 0.0
    %2386 = vmatprep.subr.mxu0 0.0
    %2387 = vmatpush1.msra.mxu0 0.0
    %2388 = vmatprep.subr.mxu0 0.0
    %2389 = vmatpush1.msra.mxu0 0.0
    %2390 = vmatprep.subr.mxu0 0.0
    %2391 = vmatpush1.msra.mxu0 0.0
    %2392 = vmatprep.subr.mxu0 0.0
    %2393 = vmatpush1.msra.mxu0 0.0
    %2394 = vmatprep.subr.mxu0 0.0
    %2395 = vmatpush1.msra.mxu0 0.0
    %2396 = vmatprep.subr.mxu0 0.0
    %2397 = vmatpush1.msra.mxu0 0.0
    %2398 = vmatprep.subr.mxu0 0.0
    %2399 = vmatpush1.msra.mxu0 0.0
    %2400 = vmatprep.subr.mxu0 0.0
    %2401 = vmatpush1.msra.mxu0 0.0
    %2402 = vmatprep.subr.mxu0 0.0
    %2403 = vmatpush1.msra.mxu0 0.0
    %2404 = vmatprep.subr.mxu0 0.0
    %2405 = vmatpush1.msra.mxu0 0.0
    %2406 = vmatprep.subr.mxu0 0.0
    %2407 = vmatpush1.msra.mxu0 0.0
    %2408 = vmatprep.subr.mxu0 0.0
    %2409 = vmatpush1.msra.mxu0 0.0
    %2410 = vmatprep.mubr.f32.mxu0 0.0
    %2411 = vmatmul.mubr.f32.gmra.mrb[0].mxu0 %v2344
    %v2412 = vpop.f32.mrb[0].mxu0
    %v2413 = vadd.f32 %v2341, %v2412
    %v2414 = vpop.f32.mrb[0].mxu0
    %2415 = vdwg.mxu0
    %v2416 = vadd.f32 %v2413, %v474
    %v2417 = vxor.u32 %v2416, 2147483648
    %v2418 = vmul.f32 %v2417, 1.442695
    %v2419 = vpow.pop %v2418
    %v2420 = vadd.f32 %v2419, 1.0
    %v2421 = vrcp.pop %v2420
    %v2422 = vmul.f32 1.0, %v2421
    %v2423 = vtanh.pop %v2416
    %v2424 = vmul.f32 %v2422, %v2157
    %2426 = vrot.lane.b32.xlu0 %v2423, 32
    %v2427 = vpop.permute.xlu0 %2426
    %v2429 = vmul.f32 %v2422, %v2427
    %2431 = vrot.lane.b32.xlu0 %v2429, 32
    %v2432 = vpop.permute.xlu0 %2431
    %v2434 = vadd.f32 %v2424, %v2432
    %v2435 = vtanh.pop %v2434
    %2437 = vrot.lane.b32.xlu0 %v2435, 32
    %v2438 = vpop.permute.xlu0 %2437
    %v2440 = vmul.f32 %v2422, %v2438
    %2442 = vst.msk [vmem:[#allocation2 + $0xe] sm:$0x1] %vm501, %v2271
    %2443 = vst.msk [vmem:[#allocation3 + $0xd] sm:$0x2] %vm503, %v2271
    %2445 = vrot.lane.b32.xlu0 %v2440, 64
    %v2446 = vpop.permute.xlu0 %2445
    %2448 = vst.msk [vmem:[#allocation2 + $0xf] sm:$0x1] %vm501, %v2446
    %2449 = vst.msk [vmem:[#allocation3 + $0xe] sm:$0x2] %vm503, %v2446
    %v2450 = vld [vmem:[#allocation2] sm:$0xff]
    %v2451 = vld [vmem:[#allocation2 + $0x8] sm:$0xff]
    %v2452 = vld [vmem:[#allocation3] sm:$0xff]
    %v2453 = vld [vmem:[#allocation3 + $0x8] sm:$0xff]
    %v2454 = vld [vmem:[#allocation5 + $0xa8] sm:$0xff]
    %v2455 = vld [vmem:[#allocation5 + $0xb0] sm:$0xff]
    %v2456 = vld [vmem:[#allocation5 + $0xb8] sm:$0xff]
    %v2457 = vld [vmem:[#allocation5 + $0xc0] sm:$0xff]
    %v2458 = vld [vmem:[#allocation5 + $0xc8] sm:$0xff]
    %v2459 = vld [vmem:[#allocation5 + $0xd0] sm:$0xff]
    %v2460 = vld [vmem:[#allocation5 + $0xd8] sm:$0xff]
    %v2461 = vld [vmem:[#allocation5 + $0xe0] sm:$0xff]
    %v2463 = vsel %vm228, %v2452, 0
    %v2466 = vsel %vm228, %v2453, 0
    %2468 = vmatprep.subr.mxu0 0.0
    %2469 = vmatpush1.msra.mxu0 %v2458
    %2470 = vmatprep.subr.mxu0 0.0
    %2471 = vmatpush1.msra.mxu0 %v2459
    %2472 = vmatprep.subr.mxu0 0.0
    %2473 = vmatpush1.msra.mxu0 %v2460
    %2474 = vmatprep.subr.mxu0 0.0
    %2475 = vmatpush1.msra.mxu0 %v2461
    %2476 = vmatprep.subr.mxu0 0.0
    %2477 = vmatpush1.msra.mxu0 0.0
    %2478 = vmatprep.subr.mxu0 0.0
    %2479 = vmatpush1.msra.mxu0 0.0
    %2480 = vmatprep.subr.mxu0 0.0
    %2481 = vmatpush1.msra.mxu0 0.0
    %2482 = vmatprep.subr.mxu0 0.0
    %2483 = vmatpush1.msra.mxu0 0.0
    %2484 = vmatprep.subr.mxu0 0.0
    %2485 = vmatpush1.msra.mxu0 0.0
    %2486 = vmatprep.subr.mxu0 0.0
    %2487 = vmatpush1.msra.mxu0 0.0
    %2488 = vmatprep.subr.mxu0 0.0
    %2489 = vmatpush1.msra.mxu0 0.0
    %2490 = vmatprep.subr.mxu0 0.0
    %2491 = vmatpush1.msra.mxu0 0.0
    %2492 = vmatprep.subr.mxu0 0.0
    %2493 = vmatpush1.msra.mxu0 0.0
    %2494 = vmatprep.subr.mxu0 0.0
    %2495 = vmatpush1.msra.mxu0 0.0
    %2496 = vmatprep.subr.mxu0 0.0
    %2497 = vmatpush1.msra.mxu0 0.0
    %2498 = vmatprep.subr.mxu0 0.0
    %2499 = vmatpush1.msra.mxu0 0.0
    %2500 = vmatprep.subr.mxu0 0.0
    %2501 = vmatpush1.msra.mxu0 0.0
    %2502 = vmatprep.subr.mxu0 0.0
    %2503 = vmatpush1.msra.mxu0 0.0
    %2504 = vmatprep.subr.mxu0 0.0
    %2505 = vmatpush1.msra.mxu0 0.0
    %2506 = vmatprep.subr.mxu0 0.0
    %2507 = vmatpush1.msra.mxu0 0.0
    %2508 = vmatprep.subr.mxu0 0.0
    %2509 = vmatpush1.msra.mxu0 0.0
    %2510 = vmatprep.subr.mxu0 0.0
    %2511 = vmatpush1.msra.mxu0 0.0
    %2512 = vmatprep.subr.mxu0 0.0
    %2513 = vmatpush1.msra.mxu0 0.0
    %2514 = vmatprep.subr.mxu0 0.0
    %2515 = vmatpush1.msra.mxu0 0.0
    %2516 = vmatprep.subr.mxu0 0.0
    %2517 = vmatpush1.msra.mxu0 0.0
    %2518 = vmatprep.subr.mxu0 0.0
    %2519 = vmatpush1.msra.mxu0 0.0
    %2520 = vmatprep.subr.mxu0 0.0
    %2521 = vmatpush1.msra.mxu0 0.0
    %2522 = vmatprep.subr.mxu0 0.0
    %2523 = vmatpush1.msra.mxu0 0.0
    %2524 = vmatprep.subr.mxu0 0.0
    %2525 = vmatpush1.msra.mxu0 0.0
    %2526 = vmatprep.subr.mxu0 0.0
    %2527 = vmatpush1.msra.mxu0 0.0
    %2528 = vmatprep.subr.mxu0 0.0
    %2529 = vmatpush1.msra.mxu0 0.0
    %2530 = vmatprep.subr.mxu0 0.0
    %2531 = vmatpush1.msra.mxu0 0.0
    %2532 = vmatprep.mubr.f32.mxu0 0.0
    %2533 = vmatmul.mubr.f32.gmra.mrb[0].mxu0 %v2463
    %v2534 = vpop.f32.mrb[0].mxu0
    %v2535 = vadd.f32 0.0, %v2534
    %v2536 = vpop.f32.mrb[0].mxu0
    %2537 = vmatprep.mubr.f32.mxu0 0.0
    %2538 = vmatmul.mubr.f32.gmra.mrb[0].mxu0 %v2466
    %v2539 = vpop.f32.mrb[0].mxu0
    %v2540 = vadd.f32 0.0, %v2539
    %v2541 = vpop.f32.mrb[0].mxu0
    %2542 = vdwg.mxu0
    %v2544 = vsel %vm228, %v2450, 0
    %v2547 = vsel %vm228, %v2451, 0
    %2549 = vmatprep.subr.mxu0 0.0
    %2550 = vmatpush1.msra.mxu0 %v2454
    %2551 = vmatprep.subr.mxu0 0.0
    %2552 = vmatpush1.msra.mxu0 %v2455
    %2553 = vmatprep.subr.mxu0 0.0
    %2554 = vmatpush1.msra.mxu0 %v2456
    %2555 = vmatprep.subr.mxu0 0.0
    %2556 = vmatpush1.msra.mxu0 %v2457
    %2557 = vmatprep.subr.mxu0 0.0
    %2558 = vmatpush1.msra.mxu0 0.0
    %2559 = vmatprep.subr.mxu0 0.0
    %2560 = vmatpush1.msra.mxu0 0.0
    %2561 = vmatprep.subr.mxu0 0.0
    %2562 = vmatpush1.msra.mxu0 0.0
    %2563 = vmatprep.subr.mxu0 0.0
    %2564 = vmatpush1.msra.mxu0 0.0
    %2565 = vmatprep.subr.mxu0 0.0
    %2566 = vmatpush1.msra.mxu0 0.0
    %2567 = vmatprep.subr.mxu0 0.0
    %2568 = vmatpush1.msra.mxu0 0.0
    %2569 = vmatprep.subr.mxu0 0.0
    %2570 = vmatpush1.msra.mxu0 0.0
    %2571 = vmatprep.subr.mxu0 0.0
    %2572 = vmatpush1.msra.mxu0 0.0
    %2573 = vmatprep.subr.mxu0 0.0
    %2574 = vmatpush1.msra.mxu0 0.0
    %2575 = vmatprep.subr.mxu0 0.0
    %2576 = vmatpush1.msra.mxu0 0.0
    %2577 = vmatprep.subr.mxu0 0.0
    %2578 = vmatpush1.msra.mxu0 0.0
    %2579 = vmatprep.subr.mxu0 0.0
    %2580 = vmatpush1.msra.mxu0 0.0
    %2581 = vmatprep.subr.mxu0 0.0
    %2582 = vmatpush1.msra.mxu0 0.0
    %2583 = vmatprep.subr.mxu0 0.0
    %2584 = vmatpush1.msra.mxu0 0.0
    %2585 = vmatprep.subr.mxu0 0.0
    %2586 = vmatpush1.msra.mxu0 0.0
    %2587 = vmatprep.subr.mxu0 0.0
    %2588 = vmatpush1.msra.mxu0 0.0
    %2589 = vmatprep.subr.mxu0 0.0
    %2590 = vmatpush1.msra.mxu0 0.0
    %2591 = vmatprep.subr.mxu0 0.0
    %2592 = vmatpush1.msra.mxu0 0.0
    %2593 = vmatprep.subr.mxu0 0.0
    %2594 = vmatpush1.msra.mxu0 0.0
    %2595 = vmatprep.subr.mxu0 0.0
    %2596 = vmatpush1.msra.mxu0 0.0
    %2597 = vmatprep.subr.mxu0 0.0
    %2598 = vmatpush1.msra.mxu0 0.0
    %2599 = vmatprep.subr.mxu0 0.0
    %2600 = vmatpush1.msra.mxu0 0.0
    %2601 = vmatprep.subr.mxu0 0.0
    %2602 = vmatpush1.msra.mxu0 0.0
    %2603 = vmatprep.subr.mxu0 0.0
    %2604 = vmatpush1.msra.mxu0 0.0
    %2605 = vmatprep.subr.mxu0 0.0
    %2606 = vmatpush1.msra.mxu0 0.0
    %2607 = vmatprep.subr.mxu0 0.0
    %2608 = vmatpush1.msra.mxu0 0.0
    %2609 = vmatprep.subr.mxu0 0.0
    %2610 = vmatpush1.msra.mxu0 0.0
    %2611 = vmatprep.subr.mxu0 0.0
    %2612 = vmatpush1.msra.mxu0 0.0
    %2613 = vmatprep.mubr.f32.mxu0 0.0
    %2614 = vmatmul.mubr.f32.gmra.mrb[0].mxu0 %v2544
    %v2615 = vpop.f32.mrb[0].mxu0
    %v2616 = vadd.f32 %v2535, %v2615
    %v2617 = vpop.f32.mrb[0].mxu0
    %2618 = vmatprep.mubr.f32.mxu0 0.0
    %2619 = vmatmul.mubr.f32.gmra.mrb[0].mxu0 %v2547
    %v2620 = vpop.f32.mrb[0].mxu0
    %v2621 = vadd.f32 %v2540, %v2620
    %v2622 = vpop.f32.mrb[0].mxu0
    %2623 = vdwg.mxu0
    %v2624 = vld [vmem:[#allocation5 + $0xe8] sm:$0xff]
    %v2625 = vld [vmem:[#allocation5 + $0xf0] sm:$0xff]
    %v2627 = vsel %vm133, %v2624, 0
    %v2630 = vsel %vm133, %v2625, 0
    %2632 = vmatprep.subr.mxu0 0.0
    %2633 = vmatpush1.msra.mxu0 %v2616
    %2634 = vmatprep.subr.mxu0 0.0
    %2635 = vmatpush1.msra.mxu0 %v2621
    %2636 = vmatprep.subr.mxu0 0.0
    %2637 = vmatpush1.msra.mxu0 0.0
    %2638 = vmatprep.subr.mxu0 0.0
    %2639 = vmatpush1.msra.mxu0 0.0
    %2640 = vmatprep.subr.mxu0 0.0
    %2641 = vmatpush1.msra.mxu0 0.0
    %2642 = vmatprep.subr.mxu0 0.0
    %2643 = vmatpush1.msra.mxu0 0.0
    %2644 = vmatprep.subr.mxu0 0.0
    %2645 = vmatpush1.msra.mxu0 0.0
    %2646 = vmatprep.subr.mxu0 0.0
    %2647 = vmatpush1.msra.mxu0 0.0
    %2648 = vmatprep.subr.mxu0 0.0
    %2649 = vmatpush1.msra.mxu0 0.0
    %2650 = vmatprep.subr.mxu0 0.0
    %2651 = vmatpush1.msra.mxu0 0.0
    %2652 = vmatprep.subr.mxu0 0.0
    %2653 = vmatpush1.msra.mxu0 0.0
    %2654 = vmatprep.subr.mxu0 0.0
    %2655 = vmatpush1.msra.mxu0 0.0
    %2656 = vmatprep.subr.mxu0 0.0
    %2657 = vmatpush1.msra.mxu0 0.0
    %2658 = vmatprep.subr.mxu0 0.0
    %2659 = vmatpush1.msra.mxu0 0.0
    %2660 = vmatprep.subr.mxu0 0.0
    %2661 = vmatpush1.msra.mxu0 0.0
    %2662 = vmatprep.subr.mxu0 0.0
    %2663 = vmatpush1.msra.mxu0 0.0
    %2664 = vmatprep.subr.mxu0 0.0
    %2665 = vmatpush1.msra.mxu0 0.0
    %2666 = vmatprep.subr.mxu0 0.0
    %2667 = vmatpush1.msra.mxu0 0.0
    %2668 = vmatprep.subr.mxu0 0.0
    %2669 = vmatpush1.msra.mxu0 0.0
    %2670 = vmatprep.subr.mxu0 0.0
    %2671 = vmatpush1.msra.mxu0 0.0
    %2672 = vmatprep.subr.mxu0 0.0
    %2673 = vmatpush1.msra.mxu0 0.0
    %2674 = vmatprep.subr.mxu0 0.0
    %2675 = vmatpush1.msra.mxu0 0.0
    %2676 = vmatprep.subr.mxu0 0.0
    %2677 = vmatpush1.msra.mxu0 0.0
    %2678 = vmatprep.subr.mxu0 0.0
    %2679 = vmatpush1.msra.mxu0 0.0
    %2680 = vmatprep.subr.mxu0 0.0
    %2681 = vmatpush1.msra.mxu0 0.0
    %2682 = vmatprep.subr.mxu0 0.0
    %2683 = vmatpush1.msra.mxu0 0.0
    %2684 = vmatprep.subr.mxu0 0.0
    %2685 = vmatpush1.msra.mxu0 0.0
    %2686 = vmatprep.subr.mxu0 0.0
    %2687 = vmatpush1.msra.mxu0 0.0
    %2688 = vmatprep.subr.mxu0 0.0
    %2689 = vmatpush1.msra.mxu0 0.0
    %2690 = vmatprep.subr.mxu0 0.0
    %2691 = vmatpush1.msra.mxu0 0.0
    %2692 = vmatprep.subr.mxu0 0.0
    %2693 = vmatpush1.msra.mxu0 0.0
    %2694 = vmatprep.subr.mxu0 0.0
    %2695 = vmatpush1.msra.mxu0 0.0
    %2696 = vmatprep.mubr.f32.mxu0 0.0
    %2697 = vmatmul.mubr.f32.gmra.mrb[0].mxu0 %v2627
    %v2698 = vpop.f32.mrb[0].mxu0
    %v2699 = vadd.f32 0.0, %v2698
    %v2700 = vpop.f32.mrb[0].mxu0
    %2701 = vmatprep.mubr.f32.mxu0 0.0
    %2702 = vmatmul.mubr.f32.gmra.mrb[0].mxu0 %v2630
    %v2703 = vpop.f32.mrb[0].mxu0
    %v2704 = vadd.f32 0.0, %v2703
    %v2705 = vpop.f32.mrb[0].mxu0
    %2706 = vdwg.mxu0
    %2709 = vrot.lane.b32.xlu0 %v2699, 32
    %v2710 = vpop.permute.xlu0 %2709
    %2711 = vrot.lane.b32.xlu0 %v2704, 32
    %v2712 = vpop.permute.xlu0 %2711
    %v2715 = vadd.f32 %v2616, %v2710
    %v2716 = vadd.f32 %v2621, %v2712
    %v2717 = vld [vmem:[#allocation5 + $0xf8] sm:$0xff]
    %v2718 = vld [vmem:[#allocation5 + $0x100] sm:$0xff]
    %2721 = vrot.lane.b32.xlu0 %v2616, 64
    %v2722 = vpop.permute.xlu0 %2721
    %2723 = vrot.lane.b32.xlu0 %v2621, 64
    %v2724 = vpop.permute.xlu0 %2723
    %v2728 = vsel %vm133, %v2717, 0
    %v2731 = vsel %vm133, %v2718, 0
    %2733 = vmatprep.subr.mxu0 0.0
    %2734 = vmatpush1.msra.mxu0 %v2722
    %2735 = vmatprep.subr.mxu0 0.0
    %2736 = vmatpush1.msra.mxu0 %v2724
    %2737 = vmatprep.subr.mxu0 0.0
    %2738 = vmatpush1.msra.mxu0 0.0
    %2739 = vmatprep.subr.mxu0 0.0
    %2740 = vmatpush1.msra.mxu0 0.0
    %2741 = vmatprep.subr.mxu0 0.0
    %2742 = vmatpush1.msra.mxu0 0.0
    %2743 = vmatprep.subr.mxu0 0.0
    %2744 = vmatpush1.msra.mxu0 0.0
    %2745 = vmatprep.subr.mxu0 0.0
    %2746 = vmatpush1.msra.mxu0 0.0
    %2747 = vmatprep.subr.mxu0 0.0
    %2748 = vmatpush1.msra.mxu0 0.0
    %2749 = vmatprep.subr.mxu0 0.0
    %2750 = vmatpush1.msra.mxu0 0.0
    %2751 = vmatprep.subr.mxu0 0.0
    %2752 = vmatpush1.msra.mxu0 0.0
    %2753 = vmatprep.subr.mxu0 0.0
    %2754 = vmatpush1.msra.mxu0 0.0
    %2755 = vmatprep.subr.mxu0 0.0
    %2756 = vmatpush1.msra.mxu0 0.0
    %2757 = vmatprep.subr.mxu0 0.0
    %2758 = vmatpush1.msra.mxu0 0.0
    %2759 = vmatprep.subr.mxu0 0.0
    %2760 = vmatpush1.msra.mxu0 0.0
    %2761 = vmatprep.subr.mxu0 0.0
    %2762 = vmatpush1.msra.mxu0 0.0
    %2763 = vmatprep.subr.mxu0 0.0
    %2764 = vmatpush1.msra.mxu0 0.0
    %2765 = vmatprep.subr.mxu0 0.0
    %2766 = vmatpush1.msra.mxu0 0.0
    %2767 = vmatprep.subr.mxu0 0.0
    %2768 = vmatpush1.msra.mxu0 0.0
    %2769 = vmatprep.subr.mxu0 0.0
    %2770 = vmatpush1.msra.mxu0 0.0
    %2771 = vmatprep.subr.mxu0 0.0
    %2772 = vmatpush1.msra.mxu0 0.0
    %2773 = vmatprep.subr.mxu0 0.0
    %2774 = vmatpush1.msra.mxu0 0.0
    %2775 = vmatprep.subr.mxu0 0.0
    %2776 = vmatpush1.msra.mxu0 0.0
    %2777 = vmatprep.subr.mxu0 0.0
    %2778 = vmatpush1.msra.mxu0 0.0
    %2779 = vmatprep.subr.mxu0 0.0
    %2780 = vmatpush1.msra.mxu0 0.0
    %2781 = vmatprep.subr.mxu0 0.0
    %2782 = vmatpush1.msra.mxu0 0.0
    %2783 = vmatprep.subr.mxu0 0.0
    %2784 = vmatpush1.msra.mxu0 0.0
    %2785 = vmatprep.subr.mxu0 0.0
    %2786 = vmatpush1.msra.mxu0 0.0
    %2787 = vmatprep.subr.mxu0 0.0
    %2788 = vmatpush1.msra.mxu0 0.0
    %2789 = vmatprep.subr.mxu0 0.0
    %2790 = vmatpush1.msra.mxu0 0.0
    %2791 = vmatprep.subr.mxu0 0.0
    %2792 = vmatpush1.msra.mxu0 0.0
    %2793 = vmatprep.subr.mxu0 0.0
    %2794 = vmatpush1.msra.mxu0 0.0
    %2795 = vmatprep.subr.mxu0 0.0
    %2796 = vmatpush1.msra.mxu0 0.0
    %2797 = vmatprep.mubr.f32.mxu0 0.0
    %2798 = vmatmul.mubr.f32.gmra.mrb[0].mxu0 %v2728
    %v2799 = vpop.f32.mrb[0].mxu0
    %v2800 = vadd.f32 0.0, %v2799
    %v2801 = vpop.f32.mrb[0].mxu0
    %2802 = vmatprep.mubr.f32.mxu0 0.0
    %2803 = vmatmul.mubr.f32.gmra.mrb[0].mxu0 %v2731
    %v2804 = vpop.f32.mrb[0].mxu0
    %v2805 = vadd.f32 0.0, %v2804
    %v2806 = vpop.f32.mrb[0].mxu0
    %2807 = vdwg.mxu0
    %2810 = vrot.lane.b32.xlu0 %v2800, 32
    %v2811 = vpop.permute.xlu0 %2810
    %2812 = vrot.lane.b32.xlu0 %v2805, 32
    %v2813 = vpop.permute.xlu0 %2812
    %v2816 = vadd.f32 %v2715, %v2811
    %v2817 = vadd.f32 %v2716, %v2813
    %v2818 = vld [vmem:[%s1] sm:$0xff]
    %v2819 = vld [vmem:[%s1 + $0x8] sm:$0xff]
    %v2820 = vld [vmem:[#allocation5 + $0x140] sm:$0xf]
    %vm2821 = vcmask 31744
    %v2823 = vsel %vm2821, %v2818, 0
    %v2826 = vsel %vm2821, %v2819, 0
    %vm2828 = vcmask 1043456
    %v2830 = vsel %vm2828, %v2820, 0
    %2832 = vmatprep.subr.mxu0 0.0
    %2833 = vmatpush1.msra.mxu0 %v2830
    %2834 = vmatprep.subr.mxu0 0.0
    %2835 = vmatpush1.msra.mxu0 0.0
    %2836 = vmatprep.subr.mxu0 0.0
    %2837 = vmatpush1.msra.mxu0 0.0
    %2838 = vmatprep.subr.mxu0 0.0
    %2839 = vmatpush1.msra.mxu0 0.0
    %2840 = vmatprep.subr.mxu0 0.0
    %2841 = vmatpush1.msra.mxu0 0.0
    %2842 = vmatprep.subr.mxu0 0.0
    %2843 = vmatpush1.msra.mxu0 0.0
    %2844 = vmatprep.subr.mxu0 0.0
    %2845 = vmatpush1.msra.mxu0 0.0
    %2846 = vmatprep.subr.mxu0 0.0
    %2847 = vmatpush1.msra.mxu0 0.0
    %2848 = vmatprep.subr.mxu0 0.0
    %2849 = vmatpush1.msra.mxu0 0.0
    %2850 = vmatprep.subr.mxu0 0.0
    %2851 = vmatpush1.msra.mxu0 0.0
    %2852 = vmatprep.subr.mxu0 0.0
    %2853 = vmatpush1.msra.mxu0 0.0
    %2854 = vmatprep.subr.mxu0 0.0
    %2855 = vmatpush1.msra.mxu0 0.0
    %2856 = vmatprep.subr.mxu0 0.0
    %2857 = vmatpush1.msra.mxu0 0.0
    %2858 = vmatprep.subr.mxu0 0.0
    %2859 = vmatpush1.msra.mxu0 0.0
    %2860 = vmatprep.subr.mxu0 0.0
    %2861 = vmatpush1.msra.mxu0 0.0
    %2862 = vmatprep.subr.mxu0 0.0
    %2863 = vmatpush1.msra.mxu0 0.0
    %2864 = vmatprep.subr.mxu0 0.0
    %2865 = vmatpush1.msra.mxu0 0.0
    %2866 = vmatprep.subr.mxu0 0.0
    %2867 = vmatpush1.msra.mxu0 0.0
    %2868 = vmatprep.subr.mxu0 0.0
    %2869 = vmatpush1.msra.mxu0 0.0
    %2870 = vmatprep.subr.mxu0 0.0
    %2871 = vmatpush1.msra.mxu0 0.0
    %2872 = vmatprep.subr.mxu0 0.0
    %2873 = vmatpush1.msra.mxu0 0.0
    %2874 = vmatprep.subr.mxu0 0.0
    %2875 = vmatpush1.msra.mxu0 0.0
    %2876 = vmatprep.subr.mxu0 0.0
    %2877 = vmatpush1.msra.mxu0 0.0
    %2878 = vmatprep.subr.mxu0 0.0
    %2879 = vmatpush1.msra.mxu0 0.0
    %2880 = vmatprep.subr.mxu0 0.0
    %2881 = vmatpush1.msra.mxu0 0.0
    %2882 = vmatprep.subr.mxu0 0.0
    %2883 = vmatpush1.msra.mxu0 0.0
    %2884 = vmatprep.subr.mxu0 0.0
    %2885 = vmatpush1.msra.mxu0 0.0
    %2886 = vmatprep.subr.mxu0 0.0
    %2887 = vmatpush1.msra.mxu0 0.0
    %2888 = vmatprep.subr.mxu0 0.0
    %2889 = vmatpush1.msra.mxu0 0.0
    %2890 = vmatprep.subr.mxu0 0.0
    %2891 = vmatpush1.msra.mxu0 0.0
    %2892 = vmatprep.subr.mxu0 0.0
    %2893 = vmatpush1.msra.mxu0 0.0
    %2894 = vmatprep.subr.mxu0 0.0
    %2895 = vmatpush1.msra.mxu0 0.0
    %2896 = vmatprep.mubr.f32.mxu0 0.0
    %2897 = vmatmul.mubr.f32.gmra.mrb[0].mxu0 %v2823
    %v2898 = vpop.f32.mrb[0].mxu0
    %v2899 = vadd.f32 0.0, %v2898
    %v2900 = vpop.f32.mrb[0].mxu0
    %2901 = vmatprep.mubr.f32.mxu0 0.0
    %2902 = vmatmul.mubr.f32.gmra.mrb[0].mxu0 %v2826
    %v2903 = vpop.f32.mrb[0].mxu0
    %v2904 = vadd.f32 0.0, %v2903
    %v2905 = vpop.f32.mrb[0].mxu0
    %2906 = vdwg.mxu0
    %2909 = vrot.lane.b32.xlu0 %v2899, 32
    %v2910 = vpop.permute.xlu0 %2909
    %2911 = vrot.lane.b32.xlu0 %v2904, 32
    %v2912 = vpop.permute.xlu0 %2911
    %v2915 = vadd.f32 %v2816, %v2910
    %v2916 = vadd.f32 %v2817, %v2912
    %v2917 = vld [vmem:[#allocation5 + $0x148] sm:$0xff]
    %v2918 = vld [vmem:[#allocation5 + $0x150] sm:$0xff]
    %2921 = vrot.lane.b32.xlu0 %v2917, 32
    %v2922 = vpop.permute.xlu0 %2921
    %2923 = vrot.lane.b32.xlu0 %v2918, 32
    %v2924 = vpop.permute.xlu0 %2923
    %v2927 = vadd.f32 %v2915, %v2922
    %v2928 = vadd.f32 %v2916, %v2924
    %v2929 = vld [vmem:[#allocation5 + $0x108] sm:$0xff]
    %v2930 = vld [vmem:[#allocation5 + $0x110] sm:$0xff]
    %2933 = vrot.lane.b32.xlu0 %v2927, 96
    %v2934 = vpop.permute.xlu0 %2933
    %2935 = vrot.lane.b32.xlu0 %v2928, 96
    %v2936 = vpop.permute.xlu0 %2935
    %v2940 = vsel %vm133, %v2929, 0
    %v2943 = vsel %vm133, %v2930, 0
    %2945 = vmatprep.subr.mxu0 0.0
    %2946 = vmatpush1.msra.mxu0 %v2934
    %2947 = vmatprep.subr.mxu0 0.0
    %2948 = vmatpush1.msra.mxu0 %v2936
    %2949 = vmatprep.subr.mxu0 0.0
    %2950 = vmatpush1.msra.mxu0 0.0
    %2951 = vmatprep.subr.mxu0 0.0
    %2952 = vmatpush1.msra.mxu0 0.0
    %2953 = vmatprep.subr.mxu0 0.0
    %2954 = vmatpush1.msra.mxu0 0.0
    %2955 = vmatprep.subr.mxu0 0.0
    %2956 = vmatpush1.msra.mxu0 0.0
    %2957 = vmatprep.subr.mxu0 0.0
    %2958 = vmatpush1.msra.mxu0 0.0
    %2959 = vmatprep.subr.mxu0 0.0
    %2960 = vmatpush1.msra.mxu0 0.0
    %2961 = vmatprep.subr.mxu0 0.0
    %2962 = vmatpush1.msra.mxu0 0.0
    %2963 = vmatprep.subr.mxu0 0.0
    %2964 = vmatpush1.msra.mxu0 0.0
    %2965 = vmatprep.subr.mxu0 0.0
    %2966 = vmatpush1.msra.mxu0 0.0
    %2967 = vmatprep.subr.mxu0 0.0
    %2968 = vmatpush1.msra.mxu0 0.0
    %2969 = vmatprep.subr.mxu0 0.0
    %2970 = vmatpush1.msra.mxu0 0.0
    %2971 = vmatprep.subr.mxu0 0.0
    %2972 = vmatpush1.msra.mxu0 0.0
    %2973 = vmatprep.subr.mxu0 0.0
    %2974 = vmatpush1.msra.mxu0 0.0
    %2975 = vmatprep.subr.mxu0 0.0
    %2976 = vmatpush1.msra.mxu0 0.0
    %2977 = vmatprep.subr.mxu0 0.0
    %2978 = vmatpush1.msra.mxu0 0.0
    %2979 = vmatprep.subr.mxu0 0.0
    %2980 = vmatpush1.msra.mxu0 0.0
    %2981 = vmatprep.subr.mxu0 0.0
    %2982 = vmatpush1.msra.mxu0 0.0
    %2983 = vmatprep.subr.mxu0 0.0
    %2984 = vmatpush1.msra.mxu0 0.0
    %2985 = vmatprep.subr.mxu0 0.0
    %2986 = vmatpush1.msra.mxu0 0.0
    %2987 = vmatprep.subr.mxu0 0.0
    %2988 = vmatpush1.msra.mxu0 0.0
    %2989 = vmatprep.subr.mxu0 0.0
    %2990 = vmatpush1.msra.mxu0 0.0
    %2991 = vmatprep.subr.mxu0 0.0
    %2992 = vmatpush1.msra.mxu0 0.0
    %2993 = vmatprep.subr.mxu0 0.0
    %2994 = vmatpush1.msra.mxu0 0.0
    %2995 = vmatprep.subr.mxu0 0.0
    %2996 = vmatpush1.msra.mxu0 0.0
    %2997 = vmatprep.subr.mxu0 0.0
    %2998 = vmatpush1.msra.mxu0 0.0
    %2999 = vmatprep.subr.mxu0 0.0
    %3000 = vmatpush1.msra.mxu0 0.0
    %3001 = vmatprep.subr.mxu0 0.0
    %3002 = vmatpush1.msra.mxu0 0.0
    %3003 = vmatprep.subr.mxu0 0.0
    %3004 = vmatpush1.msra.mxu0 0.0
    %3005 = vmatprep.subr.mxu0 0.0
    %3006 = vmatpush1.msra.mxu0 0.0
    %3007 = vmatprep.subr.mxu0 0.0
    %3008 = vmatpush1.msra.mxu0 0.0
    %3009 = vmatprep.mubr.f32.mxu0 0.0
    %3010 = vmatmul.mubr.f32.gmra.mrb[0].mxu0 %v2940
    %v3011 = vpop.f32.mrb[0].mxu0
    %v3012 = vadd.f32 0.0, %v3011
    %v3013 = vpop.f32.mrb[0].mxu0
    %3014 = vmatprep.mubr.f32.mxu0 0.0
    %3015 = vmatmul.mubr.f32.gmra.mrb[0].mxu0 %v2943
    %v3016 = vpop.f32.mrb[0].mxu0
    %v3017 = vadd.f32 0.0, %v3016
    %v3018 = vpop.f32.mrb[0].mxu0
    %3019 = vdwg.mxu0
    %v3020 = vsel %vm228, %v3012, 0.0
    %3021 = vadd.xlane.f32.xlu0 %v3020
    %v3022 = vpop.xlane.xlu0 %3021
    %v3023 = vsel %vm228, %v3017, 0.0
    %3024 = vadd.xlane.f32.xlu0 %v3023
    %v3025 = vpop.xlane.xlu0 %3024
    %v3026 = vmul.f32 %v3022, 0.00390625
    %v3027 = vmul.f32 %v3025, 0.00390625
    %v3028 = vsub.f32 %v2927, %v3026
    %v3029 = vsub.f32 %v2928, %v3027
    %v3030 = vmul.f32 %v3028, %v3028
    %v3031 = vmul.f32 %v3029, %v3029
    %3034 = vrot.lane.b32.xlu0 %v3030, 96
    %v3035 = vpop.permute.xlu0 %3034
    %3036 = vrot.lane.b32.xlu0 %v3031, 96
    %v3037 = vpop.permute.xlu0 %3036
    %3040 = vmatprep.subr.mxu0 0.0
    %3041 = vmatpush1.msra.mxu0 %v3035
    %3042 = vmatprep.subr.mxu0 0.0
    %3043 = vmatpush1.msra.mxu0 %v3037
    %3044 = vmatprep.subr.mxu0 0.0
    %3045 = vmatpush1.msra.mxu0 0.0
    %3046 = vmatprep.subr.mxu0 0.0
    %3047 = vmatpush1.msra.mxu0 0.0
    %3048 = vmatprep.subr.mxu0 0.0
    %3049 = vmatpush1.msra.mxu0 0.0
    %3050 = vmatprep.subr.mxu0 0.0
    %3051 = vmatpush1.msra.mxu0 0.0
    %3052 = vmatprep.subr.mxu0 0.0
    %3053 = vmatpush1.msra.mxu0 0.0
    %3054 = vmatprep.subr.mxu0 0.0
    %3055 = vmatpush1.msra.mxu0 0.0
    %3056 = vmatprep.subr.mxu0 0.0
    %3057 = vmatpush1.msra.mxu0 0.0
    %3058 = vmatprep.subr.mxu0 0.0
    %3059 = vmatpush1.msra.mxu0 0.0
    %3060 = vmatprep.subr.mxu0 0.0
    %3061 = vmatpush1.msra.mxu0 0.0
    %3062 = vmatprep.subr.mxu0 0.0
    %3063 = vmatpush1.msra.mxu0 0.0
    %3064 = vmatprep.subr.mxu0 0.0
    %3065 = vmatpush1.msra.mxu0 0.0
    %3066 = vmatprep.subr.mxu0 0.0
    %3067 = vmatpush1.msra.mxu0 0.0
    %3068 = vmatprep.subr.mxu0 0.0
    %3069 = vmatpush1.msra.mxu0 0.0
    %3070 = vmatprep.subr.mxu0 0.0
    %3071 = vmatpush1.msra.mxu0 0.0
    %3072 = vmatprep.subr.mxu0 0.0
    %3073 = vmatpush1.msra.mxu0 0.0
    %3074 = vmatprep.subr.mxu0 0.0
    %3075 = vmatpush1.msra.mxu0 0.0
    %3076 = vmatprep.subr.mxu0 0.0
    %3077 = vmatpush1.msra.mxu0 0.0
    %3078 = vmatprep.subr.mxu0 0.0
    %3079 = vmatpush1.msra.mxu0 0.0
    %3080 = vmatprep.subr.mxu0 0.0
    %3081 = vmatpush1.msra.mxu0 0.0
    %3082 = vmatprep.subr.mxu0 0.0
    %3083 = vmatpush1.msra.mxu0 0.0
    %3084 = vmatprep.subr.mxu0 0.0
    %3085 = vmatpush1.msra.mxu0 0.0
    %3086 = vmatprep.subr.mxu0 0.0
    %3087 = vmatpush1.msra.mxu0 0.0
    %3088 = vmatprep.subr.mxu0 0.0
    %3089 = vmatpush1.msra.mxu0 0.0
    %3090 = vmatprep.subr.mxu0 0.0
    %3091 = vmatpush1.msra.mxu0 0.0
    %3092 = vmatprep.subr.mxu0 0.0
    %3093 = vmatpush1.msra.mxu0 0.0
    %3094 = vmatprep.subr.mxu0 0.0
    %3095 = vmatpush1.msra.mxu0 0.0
    %3096 = vmatprep.subr.mxu0 0.0
    %3097 = vmatpush1.msra.mxu0 0.0
    %3098 = vmatprep.subr.mxu0 0.0
    %3099 = vmatpush1.msra.mxu0 0.0
    %3100 = vmatprep.subr.mxu0 0.0
    %3101 = vmatpush1.msra.mxu0 0.0
    %3102 = vmatprep.subr.mxu0 0.0
    %3103 = vmatpush1.msra.mxu0 0.0
    %3104 = vmatprep.mubr.f32.mxu0 0.0
    %3105 = vmatmul.mubr.f32.gmra.mrb[0].mxu0 %v2940
    %v3106 = vpop.f32.mrb[0].mxu0
    %v3107 = vadd.f32 0.0, %v3106
    %v3108 = vpop.f32.mrb[0].mxu0
    %3109 = vmatprep.mubr.f32.mxu0 0.0
    %3110 = vmatmul.mubr.f32.gmra.mrb[0].mxu0 %v2943
    %v3111 = vpop.f32.mrb[0].mxu0
    %v3112 = vadd.f32 0.0, %v3111
    %v3113 = vpop.f32.mrb[0].mxu0
    %3114 = vdwg.mxu0
    %v3115 = vsel %vm228, %v3107, 0.0
    %3116 = vadd.xlane.f32.xlu0 %v3115
    %v3117 = vpop.xlane.xlu0 %3116
    %v3118 = vsel %vm228, %v3112, 0.0
    %3119 = vadd.xlane.f32.xlu0 %v3118
    %v3120 = vpop.xlane.xlu0 %3119
    %v3121 = vmul.f32 %v3117, 0.00390625
    %v3122 = vmul.f32 %v3120, 0.00390625
    %v3123 = vadd.f32 %v3121, 1e-05
    %v3124 = vadd.f32 %v3122, 1e-05
    %v3125 = vrsqrt.pop %v3123
    %v3126 = vrsqrt.pop %v3124
    %v3127 = vmul.f32 %v3028, %v3125
    %v3128 = vmul.f32 %v3029, %v3126
    %v3129 = vld [vmem:[#allocation5 + $0x158] sm:$0xff]
    %v3130 = vld [vmem:[#allocation5 + $0x160] sm:$0xff]
    %3133 = vrot.lane.b32.xlu0 %v3129, 32
    %v3134 = vpop.permute.xlu0 %3133
    %3135 = vrot.lane.b32.xlu0 %v3130, 32
    %v3136 = vpop.permute.xlu0 %3135
    %v3139 = vmul.f32 %v3127, %v3134
    %v3140 = vmul.f32 %v3128, %v3136
    %v3141 = vld [vmem:[#allocation5 + $0x168] sm:$0xff]
    %v3142 = vld [vmem:[#allocation5 + $0x170] sm:$0xff]
    %3145 = vrot.lane.b32.xlu0 %v3141, 32
    %v3146 = vpop.permute.xlu0 %3145
    %3147 = vrot.lane.b32.xlu0 %v3142, 32
    %v3148 = vpop.permute.xlu0 %3147
    %v3151 = vadd.f32 %v3139, %v3146
    %v3152 = vadd.f32 %v3140, %v3148
    %v3153 = vld [vmem:[#allocation5 + $0x78] sm:$0xf]
    %v3154 = vld [vmem:[#allocation5 + $0x80] sm:$0xff]
    %v3155 = vld [vmem:[#allocation5 + $0x88] sm:$0xff]
    %v3156 = vld [vmem:[#allocation5 + $0x90] sm:$0xff]
    %v3157 = vld [vmem:[#allocation5 + $0x98] sm:$0xff]
    %v3158 = vld [vmem:[#allocation5 + $0xa0] sm:$0x1]
    %v3159 = vld [vmem:[#allocation5 + $0x178] sm:$0xff]
    %v3160 = vld [vmem:[#allocation5 + $0x180] sm:$0xff]
    %v3161 = vld [vmem:[#allocation5 + $0x188] sm:$0xff]
    %v3162 = vld [vmem:[#allocation5 + $0x190] sm:$0xff]
    %v3163 = vld [vmem:[#allocation5 + $0x198] sm:$0xf]
    %v3164 = vld [vmem:[#allocation5 + $0x1a0] sm:$0x1]
    %v3165 = vld [vmem:[#allocation5 + $0x1a8] sm:$0x1]
    %v3166 = vld [vmem:[#allocation5 + $0x1b0] sm:$0x1]
    %v3167 = vld [vmem:[#allocation5 + $0x208] sm:$0x1]
    %v3168 = vld [vmem:[#allocation5 + $0x210] sm:$0x1]
    %v3169 = vld [vmem:[#allocation5 + $0x1b8] sm:$0xff]
    %v3170 = vld [vmem:[#allocation5 + $0x1c0] sm:$0xff]
    %v3171 = vld [vmem:[#allocation5 + $0x1c8] sm:$0xff]
    %v3172 = vld [vmem:[#allocation5 + $0x1d0] sm:$0xff]
    %v3173 = vld [vmem:[#allocation5 + $0x1d8] sm:$0xf]
    %v3174 = vld [vmem:[#allocation5 + $0x1e0] sm:$0xff]
    %v3175 = vld [vmem:[#allocation5 + $0x1e8] sm:$0xff]
    %v3176 = vld [vmem:[#allocation5 + $0x1f0] sm:$0xff]
    %v3177 = vld [vmem:[#allocation5 + $0x1f8] sm:$0xff]
    %v3178 = vld [vmem:[#allocation5 + $0x200] sm:$0x1]
    %v3179 = vld [vmem:[#allocation5 + $0x118] sm:$0xff]
    %v3180 = vld [vmem:[#allocation5 + $0x120] sm:$0xff]
    %v3181 = vld [vmem:[#allocation5 + $0x128] sm:$0x3]
    %v3182 = vld [vmem:[%s2] sm:$0x3]
    %v3184 = vsel %vm2821, %v3182, 0
    %v3187 = vsel %vm2828, %v3153, 0
    %3189 = vmatprep.subr.mxu0 0.0
    %3190 = vmatpush1.msra.mxu0 %v3187
    %3191 = vmatprep.subr.mxu0 0.0
    %3192 = vmatpush1.msra.mxu0 0.0
    %3193 = vmatprep.subr.mxu0 0.0
    %3194 = vmatpush1.msra.mxu0 0.0
    %3195 = vmatprep.subr.mxu0 0.0
    %3196 = vmatpush1.msra.mxu0 0.0
    %3197 = vmatprep.subr.mxu0 0.0
    %3198 = vmatpush1.msra.mxu0 0.0
    %3199 = vmatprep.subr.mxu0 0.0
    %3200 = vmatpush1.msra.mxu0 0.0
    %3201 = vmatprep.subr.mxu0 0.0
    %3202 = vmatpush1.msra.mxu0 0.0
    %3203 = vmatprep.subr.mxu0 0.0
    %3204 = vmatpush1.msra.mxu0 0.0
    %3205 = vmatprep.subr.mxu0 0.0
    %3206 = vmatpush1.msra.mxu0 0.0
    %3207 = vmatprep.subr.mxu0 0.0
    %3208 = vmatpush1.msra.mxu0 0.0
    %3209 = vmatprep.subr.mxu0 0.0
    %3210 = vmatpush1.msra.mxu0 0.0
    %3211 = vmatprep.subr.mxu0 0.0
    %3212 = vmatpush1.msra.mxu0 0.0
    %3213 = vmatprep.subr.mxu0 0.0
    %3214 = vmatpush1.msra.mxu0 0.0
    %3215 = vmatprep.subr.mxu0 0.0
    %3216 = vmatpush1.msra.mxu0 0.0
    %3217 = vmatprep.subr.mxu0 0.0
    %3218 = vmatpush1.msra.mxu0 0.0
    %3219 = vmatprep.subr.mxu0 0.0
    %3220 = vmatpush1.msra.mxu0 0.0
    %3221 = vmatprep.subr.mxu0 0.0
    %3222 = vmatpush1.msra.mxu0 0.0
    %3223 = vmatprep.subr.mxu0 0.0
    %3224 = vmatpush1.msra.mxu0 0.0
    %3225 = vmatprep.subr.mxu0 0.0
    %3226 = vmatpush1.msra.mxu0 0.0
    %3227 = vmatprep.subr.mxu0 0.0
    %3228 = vmatpush1.msra.mxu0 0.0
    %3229 = vmatprep.subr.mxu0 0.0
    %3230 = vmatpush1.msra.mxu0 0.0
    %3231 = vmatprep.subr.mxu0 0.0
    %3232 = vmatpush1.msra.mxu0 0.0
    %3233 = vmatprep.subr.mxu0 0.0
    %3234 = vmatpush1.msra.mxu0 0.0
    %3235 = vmatprep.subr.mxu0 0.0
    %3236 = vmatpush1.msra.mxu0 0.0
    %3237 = vmatprep.subr.mxu0 0.0
    %3238 = vmatpush1.msra.mxu0 0.0
    %3239 = vmatprep.subr.mxu0 0.0
    %3240 = vmatpush1.msra.mxu0 0.0
    %3241 = vmatprep.subr.mxu0 0.0
    %3242 = vmatpush1.msra.mxu0 0.0
    %3243 = vmatprep.subr.mxu0 0.0
    %3244 = vmatpush1.msra.mxu0 0.0
    %3245 = vmatprep.subr.mxu0 0.0
    %3246 = vmatpush1.msra.mxu0 0.0
    %3247 = vmatprep.subr.mxu0 0.0
    %3248 = vmatpush1.msra.mxu0 0.0
    %3249 = vmatprep.subr.mxu0 0.0
    %3250 = vmatpush1.msra.mxu0 0.0
    %3251 = vmatprep.subr.mxu0 0.0
    %3252 = vmatpush1.msra.mxu0 0.0
    %3253 = vmatprep.mubr.f32.mxu0 0.0
    %3254 = vmatmul.mubr.f32.gmra.mrb[0].mxu0 %v3184
    %v3255 = vpop.f32.mrb[0].mxu0
    %v3256 = vadd.f32 0.0, %v3255
    %v3257 = vpop.f32.mrb[0].mxu0
    %3258 = vdwg.mxu0
    %3259 = vmatprep.subr.mxu0 0.0
    %3260 = vmatpush1.msra.mxu0 %v3154
    %3261 = vmatprep.subr.mxu0 0.0
    %3262 = vmatpush1.msra.mxu0 %v3155
    %3263 = vmatprep.subr.mxu0 0.0
    %3264 = vmatpush1.msra.mxu0 %v3156
    %3265 = vmatprep.subr.mxu0 0.0
    %3266 = vmatpush1.msra.mxu0 %v3157
    %3267 = vmatprep.subr.mxu0 0.0
    %3268 = vmatpush1.msra.mxu0 0.0
    %3269 = vmatprep.subr.mxu0 0.0
    %3270 = vmatpush1.msra.mxu0 0.0
    %3271 = vmatprep.subr.mxu0 0.0
    %3272 = vmatpush1.msra.mxu0 0.0
    %3273 = vmatprep.subr.mxu0 0.0
    %3274 = vmatpush1.msra.mxu0 0.0
    %3275 = vmatprep.subr.mxu0 0.0
    %3276 = vmatpush1.msra.mxu0 0.0
    %3277 = vmatprep.subr.mxu0 0.0
    %3278 = vmatpush1.msra.mxu0 0.0
    %3279 = vmatprep.subr.mxu0 0.0
    %3280 = vmatpush1.msra.mxu0 0.0
    %3281 = vmatprep.subr.mxu0 0.0
    %3282 = vmatpush1.msra.mxu0 0.0
    %3283 = vmatprep.subr.mxu0 0.0
    %3284 = vmatpush1.msra.mxu0 0.0
    %3285 = vmatprep.subr.mxu0 0.0
    %3286 = vmatpush1.msra.mxu0 0.0
    %3287 = vmatprep.subr.mxu0 0.0
    %3288 = vmatpush1.msra.mxu0 0.0
    %3289 = vmatprep.subr.mxu0 0.0
    %3290 = vmatpush1.msra.mxu0 0.0
    %3291 = vmatprep.subr.mxu0 0.0
    %3292 = vmatpush1.msra.mxu0 0.0
    %3293 = vmatprep.subr.mxu0 0.0
    %3294 = vmatpush1.msra.mxu0 0.0
    %3295 = vmatprep.subr.mxu0 0.0
    %3296 = vmatpush1.msra.mxu0 0.0
    %3297 = vmatprep.subr.mxu0 0.0
    %3298 = vmatpush1.msra.mxu0 0.0
    %3299 = vmatprep.subr.mxu0 0.0
    %3300 = vmatpush1.msra.mxu0 0.0
    %3301 = vmatprep.subr.mxu0 0.0
    %3302 = vmatpush1.msra.mxu0 0.0
    %3303 = vmatprep.subr.mxu0 0.0
    %3304 = vmatpush1.msra.mxu0 0.0
    %3305 = vmatprep.subr.mxu0 0.0
    %3306 = vmatpush1.msra.mxu0 0.0
    %3307 = vmatprep.subr.mxu0 0.0
    %3308 = vmatpush1.msra.mxu0 0.0
    %3309 = vmatprep.subr.mxu0 0.0
    %3310 = vmatpush1.msra.mxu0 0.0
    %3311 = vmatprep.subr.mxu0 0.0
    %3312 = vmatpush1.msra.mxu0 0.0
    %3313 = vmatprep.subr.mxu0 0.0
    %3314 = vmatpush1.msra.mxu0 0.0
    %3315 = vmatprep.subr.mxu0 0.0
    %3316 = vmatpush1.msra.mxu0 0.0
    %3317 = vmatprep.subr.mxu0 0.0
    %3318 = vmatpush1.msra.mxu0 0.0
    %3319 = vmatprep.subr.mxu0 0.0
    %3320 = vmatpush1.msra.mxu0 0.0
    %3321 = vmatprep.subr.mxu0 0.0
    %3322 = vmatpush1.msra.mxu0 0.0
    %3323 = vmatprep.mubr.f32.mxu0 0.0
    %3324 = vmatmul.mubr.f32.gmra.mrb[0].mxu0 %v230
    %v3325 = vpop.f32.mrb[0].mxu0
    %v3326 = vadd.f32 %v3256, %v3325
    %v3327 = vpop.f32.mrb[0].mxu0
    %3328 = vdwg.mxu0
    %v3329 = vlaneseq
    %v3330 = vshrl.u32 %v3329, 7
    %v3331 = vsub.s32 0, %v3330
    %v3332 = vrot.slane %v3158, %v3331
    %v3333 = vadd.f32 %v3326, %v3332
    %v3334 = vxor.u32 %v3333, 2147483648
    %v3335 = vmul.f32 %v3334, 1.442695
    %v3336 = vpow.pop %v3335
    %v3337 = vadd.f32 %v3336, 1.0
    %v3338 = vrcp.pop %v3337
    %v3339 = vmul.f32 1.0, %v3338
    %v3340 = vtanh.pop %v3333
    %v3341 = vmul.f32 %v3339, 0.0
    %3343 = vrot.lane.b32.xlu0 %v3340, 32
    %v3344 = vpop.permute.xlu0 %3343
    %v3346 = vmul.f32 %v3339, %v3344
    %3348 = vrot.lane.b32.xlu0 %v3346, 32
    %v3349 = vpop.permute.xlu0 %3348
    %v3351 = vadd.f32 %v3341, %v3349
    %v3352 = vtanh.pop %v3351
    %3354 = vrot.lane.b32.xlu0 %v3352, 32
    %v3355 = vpop.permute.xlu0 %3354
    %v3357 = vmul.f32 %v3339, %v3355
    %v3358 = vld [vmem:[%s3] sm:$0x3]
    %v3360 = vsel %vm2821, %v3358, 0
    %v3363 = vsel %vm2828, %v3163, 0
    %3365 = vmatprep.subr.mxu0 0.0
    %3366 = vmatpush1.msra.mxu0 %v3363
    %3367 = vmatprep.subr.mxu0 0.0
    %3368 = vmatpush1.msra.mxu0 0.0
    %3369 = vmatprep.subr.mxu0 0.0
    %3370 = vmatpush1.msra.mxu0 0.0
    %3371 = vmatprep.subr.mxu0 0.0
    %3372 = vmatpush1.msra.mxu0 0.0
    %3373 = vmatprep.subr.mxu0 0.0
    %3374 = vmatpush1.msra.mxu0 0.0
    %3375 = vmatprep.subr.mxu0 0.0
    %3376 = vmatpush1.msra.mxu0 0.0
    %3377 = vmatprep.subr.mxu0 0.0
    %3378 = vmatpush1.msra.mxu0 0.0
    %3379 = vmatprep.subr.mxu0 0.0
    %3380 = vmatpush1.msra.mxu0 0.0
    %3381 = vmatprep.subr.mxu0 0.0
    %3382 = vmatpush1.msra.mxu0 0.0
    %3383 = vmatprep.subr.mxu0 0.0
    %3384 = vmatpush1.msra.mxu0 0.0
    %3385 = vmatprep.subr.mxu0 0.0
    %3386 = vmatpush1.msra.mxu0 0.0
    %3387 = vmatprep.subr.mxu0 0.0
    %3388 = vmatpush1.msra.mxu0 0.0
    %3389 = vmatprep.subr.mxu0 0.0
    %3390 = vmatpush1.msra.mxu0 0.0
    %3391 = vmatprep.subr.mxu0 0.0
    %3392 = vmatpush1.msra.mxu0 0.0
    %3393 = vmatprep.subr.mxu0 0.0
    %3394 = vmatpush1.msra.mxu0 0.0
    %3395 = vmatprep.subr.mxu0 0.0
    %3396 = vmatpush1.msra.mxu0 0.0
    %3397 = vmatprep.subr.mxu0 0.0
    %3398 = vmatpush1.msra.mxu0 0.0
    %3399 = vmatprep.subr.mxu0 0.0
    %3400 = vmatpush1.msra.mxu0 0.0
    %3401 = vmatprep.subr.mxu0 0.0
    %3402 = vmatpush1.msra.mxu0 0.0
    %3403 = vmatprep.subr.mxu0 0.0
    %3404 = vmatpush1.msra.mxu0 0.0
    %3405 = vmatprep.subr.mxu0 0.0
    %3406 = vmatpush1.msra.mxu0 0.0
    %3407 = vmatprep.subr.mxu0 0.0
    %3408 = vmatpush1.msra.mxu0 0.0
    %3409 = vmatprep.subr.mxu0 0.0
    %3410 = vmatpush1.msra.mxu0 0.0
    %3411 = vmatprep.subr.mxu0 0.0
    %3412 = vmatpush1.msra.mxu0 0.0
    %3413 = vmatprep.subr.mxu0 0.0
    %3414 = vmatpush1.msra.mxu0 0.0
    %3415 = vmatprep.subr.mxu0 0.0
    %3416 = vmatpush1.msra.mxu0 0.0
    %3417 = vmatprep.subr.mxu0 0.0
    %3418 = vmatpush1.msra.mxu0 0.0
    %3419 = vmatprep.subr.mxu0 0.0
    %3420 = vmatpush1.msra.mxu0 0.0
    %3421 = vmatprep.subr.mxu0 0.0
    %3422 = vmatpush1.msra.mxu0 0.0
    %3423 = vmatprep.subr.mxu0 0.0
    %3424 = vmatpush1.msra.mxu0 0.0
    %3425 = vmatprep.subr.mxu0 0.0
    %3426 = vmatpush1.msra.mxu0 0.0
    %3427 = vmatprep.subr.mxu0 0.0
    %3428 = vmatpush1.msra.mxu0 0.0
    %3429 = vmatprep.mubr.f32.mxu0 0.0
    %3430 = vmatmul.mubr.f32.gmra.mrb[0].mxu0 %v3360
    %v3431 = vpop.f32.mrb[0].mxu0
    %v3432 = vadd.f32 0.0, %v3431
    %v3433 = vpop.f32.mrb[0].mxu0
    %3434 = vdwg.mxu0
    %3436 = vrot.lane.b32.xlu0 %v3357, 64
    %v3437 = vpop.permute.xlu0 %3436
    %v3438 = vsel %vm228, %v3437, 0
    %3440 = vmatprep.subr.mxu0 0.0
    %3441 = vmatpush1.msra.mxu0 %v3159
    %3442 = vmatprep.subr.mxu0 0.0
    %3443 = vmatpush1.msra.mxu0 %v3160
    %3444 = vmatprep.subr.mxu0 0.0
    %3445 = vmatpush1.msra.mxu0 %v3161
    %3446 = vmatprep.subr.mxu0 0.0
    %3447 = vmatpush1.msra.mxu0 %v3162
    %3448 = vmatprep.subr.mxu0 0.0
    %3449 = vmatpush1.msra.mxu0 0.0
    %3450 = vmatprep.subr.mxu0 0.0
    %3451 = vmatpush1.msra.mxu0 0.0
    %3452 = vmatprep.subr.mxu0 0.0
    %3453 = vmatpush1.msra.mxu0 0.0
    %3454 = vmatprep.subr.mxu0 0.0
    %3455 = vmatpush1.msra.mxu0 0.0
    %3456 = vmatprep.subr.mxu0 0.0
    %3457 = vmatpush1.msra.mxu0 0.0
    %3458 = vmatprep.subr.mxu0 0.0
    %3459 = vmatpush1.msra.mxu0 0.0
    %3460 = vmatprep.subr.mxu0 0.0
    %3461 = vmatpush1.msra.mxu0 0.0
    %3462 = vmatprep.subr.mxu0 0.0
    %3463 = vmatpush1.msra.mxu0 0.0
    %3464 = vmatprep.subr.mxu0 0.0
    %3465 = vmatpush1.msra.mxu0 0.0
    %3466 = vmatprep.subr.mxu0 0.0
    %3467 = vmatpush1.msra.mxu0 0.0
    %3468 = vmatprep.subr.mxu0 0.0
    %3469 = vmatpush1.msra.mxu0 0.0
    %3470 = vmatprep.subr.mxu0 0.0
    %3471 = vmatpush1.msra.mxu0 0.0
    %3472 = vmatprep.subr.mxu0 0.0
    %3473 = vmatpush1.msra.mxu0 0.0
    %3474 = vmatprep.subr.mxu0 0.0
    %3475 = vmatpush1.msra.mxu0 0.0
    %3476 = vmatprep.subr.mxu0 0.0
    %3477 = vmatpush1.msra.mxu0 0.0
    %3478 = vmatprep.subr.mxu0 0.0
    %3479 = vmatpush1.msra.mxu0 0.0
    %3480 = vmatprep.subr.mxu0 0.0
    %3481 = vmatpush1.msra.mxu0 0.0
    %3482 = vmatprep.subr.mxu0 0.0
    %3483 = vmatpush1.msra.mxu0 0.0
    %3484 = vmatprep.subr.mxu0 0.0
    %3485 = vmatpush1.msra.mxu0 0.0
    %3486 = vmatprep.subr.mxu0 0.0
    %3487 = vmatpush1.msra.mxu0 0.0
    %3488 = vmatprep.subr.mxu0 0.0
    %3489 = vmatpush1.msra.mxu0 0.0
    %3490 = vmatprep.subr.mxu0 0.0
    %3491 = vmatpush1.msra.mxu0 0.0
    %3492 = vmatprep.subr.mxu0 0.0
    %3493 = vmatpush1.msra.mxu0 0.0
    %3494 = vmatprep.subr.mxu0 0.0
    %3495 = vmatpush1.msra.mxu0 0.0
    %3496 = vmatprep.subr.mxu0 0.0
    %3497 = vmatpush1.msra.mxu0 0.0
    %3498 = vmatprep.subr.mxu0 0.0
    %3499 = vmatpush1.msra.mxu0 0.0
    %3500 = vmatprep.subr.mxu0 0.0
    %3501 = vmatpush1.msra.mxu0 0.0
    %3502 = vmatprep.subr.mxu0 0.0
    %3503 = vmatpush1.msra.mxu0 0.0
    %3504 = vmatprep.mubr.f32.mxu0 0.0
    %3505 = vmatmul.mubr.f32.gmra.mrb[0].mxu0 %v3438
    %v3506 = vpop.f32.mrb[0].mxu0
    %v3507 = vadd.f32 %v3432, %v3506
    %v3508 = vpop.f32.mrb[0].mxu0
    %3509 = vdwg.mxu0
    %v3510 = vlaneseq
    %v3511 = vshrl.u32 %v3510, 7
    %v3512 = vsub.s32 0, %v3511
    %v3513 = vrot.slane %v3164, %v3512
    %v3514 = vadd.f32 %v3507, %v3513
    %vm3515 = vcmask 254976
    %v3516 = vsel %vm3515, %v3514, 0.0
    %3517 = vadd.xlane.f32.xlu0 %v3516
    %v3518 = vpop.xlane.xlu0 %3517
    %v3519 = vrcp.pop 32.0
    %v3520 = vmul.f32 %v3518, %v3519
    %v3521 = vsub.f32 %v3514, %v3520
    %v3522 = vmul.f32 %v3521, %v3521
    %v3523 = vsel %vm3515, %v3522, 0.0
    %3524 = vadd.xlane.f32.xlu0 %v3523
    %v3525 = vpop.xlane.xlu0 %3524
    %v3526 = vmul.f32 %v3525, %v3519
    %v3527 = vadd.f32 %v3526, 1e-05
    %v3528 = vrsqrt.pop %v3527
    %v3529 = vmul.f32 %v3521, %v3528
    %v3530 = vlaneseq
    %v3531 = vshrl.u32 %v3530, 7
    %v3532 = vsub.s32 0, %v3531
    %v3533 = vrot.slane %v3165, %v3532
    %v3534 = vmul.f32 %v3529, %v3533
    %v3535 = vlaneseq
    %v3536 = vshrl.u32 %v3535, 7
    %v3537 = vsub.s32 0, %v3536
    %v3538 = vrot.slane %v3166, %v3537
    %v3539 = vadd.f32 %v3534, %v3538
    %vm3540 = vcmask 15360
    %v3542 = vsel %vm3540, %v3179, 0
    %v3545 = vsel %vm3540, %v3180, 0
    %vm3547 = vcmask 1041408
    %v3549 = vsel %vm3547, %v3539, 0
    %3551 = vmatprep.subr.mxu0 0.0
    %3552 = vmatpush1.msra.mxu0 %v3549
    %3553 = vmatprep.subr.mxu0 0.0
    %3554 = vmatpush1.msra.mxu0 0.0
    %3555 = vmatprep.subr.mxu0 0.0
    %3556 = vmatpush1.msra.mxu0 0.0
    %3557 = vmatprep.subr.mxu0 0.0
    %3558 = vmatpush1.msra.mxu0 0.0
    %3559 = vmatprep.subr.mxu0 0.0
    %3560 = vmatpush1.msra.mxu0 0.0
    %3561 = vmatprep.subr.mxu0 0.0
    %3562 = vmatpush1.msra.mxu0 0.0
    %3563 = vmatprep.subr.mxu0 0.0
    %3564 = vmatpush1.msra.mxu0 0.0
    %3565 = vmatprep.subr.mxu0 0.0
    %3566 = vmatpush1.msra.mxu0 0.0
    %3567 = vmatprep.subr.mxu0 0.0
    %3568 = vmatpush1.msra.mxu0 0.0
    %3569 = vmatprep.subr.mxu0 0.0
    %3570 = vmatpush1.msra.mxu0 0.0
    %3571 = vmatprep.subr.mxu0 0.0
    %3572 = vmatpush1.msra.mxu0 0.0
    %3573 = vmatprep.subr.mxu0 0.0
    %3574 = vmatpush1.msra.mxu0 0.0
    %3575 = vmatprep.subr.mxu0 0.0
    %3576 = vmatpush1.msra.mxu0 0.0
    %3577 = vmatprep.subr.mxu0 0.0
    %3578 = vmatpush1.msra.mxu0 0.0
    %3579 = vmatprep.subr.mxu0 0.0
    %3580 = vmatpush1.msra.mxu0 0.0
    %3581 = vmatprep.subr.mxu0 0.0
    %3582 = vmatpush1.msra.mxu0 0.0
    %3583 = vmatprep.subr.mxu0 0.0
    %3584 = vmatpush1.msra.mxu0 0.0
    %3585 = vmatprep.subr.mxu0 0.0
    %3586 = vmatpush1.msra.mxu0 0.0
    %3587 = vmatprep.subr.mxu0 0.0
    %3588 = vmatpush1.msra.mxu0 0.0
    %3589 = vmatprep.subr.mxu0 0.0
    %3590 = vmatpush1.msra.mxu0 0.0
    %3591 = vmatprep.subr.mxu0 0.0
    %3592 = vmatpush1.msra.mxu0 0.0
    %3593 = vmatprep.subr.mxu0 0.0
    %3594 = vmatpush1.msra.mxu0 0.0
    %3595 = vmatprep.subr.mxu0 0.0
    %3596 = vmatpush1.msra.mxu0 0.0
    %3597 = vmatprep.subr.mxu0 0.0
    %3598 = vmatpush1.msra.mxu0 0.0
    %3599 = vmatprep.subr.mxu0 0.0
    %3600 = vmatpush1.msra.mxu0 0.0
    %3601 = vmatprep.subr.mxu0 0.0
    %3602 = vmatpush1.msra.mxu0 0.0
    %3603 = vmatprep.subr.mxu0 0.0
    %3604 = vmatpush1.msra.mxu0 0.0
    %3605 = vmatprep.subr.mxu0 0.0
    %3606 = vmatpush1.msra.mxu0 0.0
    %3607 = vmatprep.subr.mxu0 0.0
    %3608 = vmatpush1.msra.mxu0 0.0
    %3609 = vmatprep.subr.mxu0 0.0
    %3610 = vmatpush1.msra.mxu0 0.0
    %3611 = vmatprep.subr.mxu0 0.0
    %3612 = vmatpush1.msra.mxu0 0.0
    %3613 = vmatprep.subr.mxu0 0.0
    %3614 = vmatpush1.msra.mxu0 0.0
    %3615 = vmatprep.mubr.f32.mxu0 0.0
    %3616 = vmatmul.mubr.f32.gmra.mrb[0].mxu0 %v3542
    %v3617 = vpop.f32.mrb[0].mxu0
    %v3618 = vadd.f32 0.0, %v3617
    %v3619 = vpop.f32.mrb[0].mxu0
    %3620 = vmatprep.mubr.f32.mxu0 0.0
    %3621 = vmatmul.mubr.f32.gmra.mrb[0].mxu0 %v3545
    %v3622 = vpop.f32.mrb[0].mxu0
    %v3623 = vadd.f32 0.0, %v3622
    %v3624 = vpop.f32.mrb[0].mxu0
    %3625 = vdwg.mxu0
    %3628 = vrot.lane.b32.xlu0 %v3151, 96
    %v3629 = vpop.permute.xlu0 %3628
    %3630 = vrot.lane.b32.xlu0 %v3152, 96
    %v3631 = vpop.permute.xlu0 %3630
    %v3634 = vmul.f32 %v3618, %v3629
    %v3635 = vmul.f32 %v3623, %v3631
    %v3637 = vsel %vm228, %v3634, 0
    %v3640 = vsel %vm228, %v3635, 0
    %3642 = vmatprep.subr.mxu0 0.0
    %3643 = vmatpush1.msra.mxu0 %v3169
    %3644 = vmatprep.subr.mxu0 0.0
    %3645 = vmatpush1.msra.mxu0 %v3170
    %3646 = vmatprep.subr.mxu0 0.0
    %3647 = vmatpush1.msra.mxu0 %v3171
    %3648 = vmatprep.subr.mxu0 0.0
    %3649 = vmatpush1.msra.mxu0 %v3172
    %3650 = vmatprep.subr.mxu0 0.0
    %3651 = vmatpush1.msra.mxu0 0.0
    %3652 = vmatprep.subr.mxu0 0.0
    %3653 = vmatpush1.msra.mxu0 0.0
    %3654 = vmatprep.subr.mxu0 0.0
    %3655 = vmatpush1.msra.mxu0 0.0
    %3656 = vmatprep.subr.mxu0 0.0
    %3657 = vmatpush1.msra.mxu0 0.0
    %3658 = vmatprep.subr.mxu0 0.0
    %3659 = vmatpush1.msra.mxu0 0.0
    %3660 = vmatprep.subr.mxu0 0.0
    %3661 = vmatpush1.msra.mxu0 0.0
    %3662 = vmatprep.subr.mxu0 0.0
    %3663 = vmatpush1.msra.mxu0 0.0
    %3664 = vmatprep.subr.mxu0 0.0
    %3665 = vmatpush1.msra.mxu0 0.0
    %3666 = vmatprep.subr.mxu0 0.0
    %3667 = vmatpush1.msra.mxu0 0.0
    %3668 = vmatprep.subr.mxu0 0.0
    %3669 = vmatpush1.msra.mxu0 0.0
    %3670 = vmatprep.subr.mxu0 0.0
    %3671 = vmatpush1.msra.mxu0 0.0
    %3672 = vmatprep.subr.mxu0 0.0
    %3673 = vmatpush1.msra.mxu0 0.0
    %3674 = vmatprep.subr.mxu0 0.0
    %3675 = vmatpush1.msra.mxu0 0.0
    %3676 = vmatprep.subr.mxu0 0.0
    %3677 = vmatpush1.msra.mxu0 0.0
    %3678 = vmatprep.subr.mxu0 0.0
    %3679 = vmatpush1.msra.mxu0 0.0
    %3680 = vmatprep.subr.mxu0 0.0
    %3681 = vmatpush1.msra.mxu0 0.0
    %3682 = vmatprep.subr.mxu0 0.0
    %3683 = vmatpush1.msra.mxu0 0.0
    %3684 = vmatprep.subr.mxu0 0.0
    %3685 = vmatpush1.msra.mxu0 0.0
    %3686 = vmatprep.subr.mxu0 0.0
    %3687 = vmatpush1.msra.mxu0 0.0
    %3688 = vmatprep.subr.mxu0 0.0
    %3689 = vmatpush1.msra.mxu0 0.0
    %3690 = vmatprep.subr.mxu0 0.0
    %3691 = vmatpush1.msra.mxu0 0.0
    %3692 = vmatprep.subr.mxu0 0.0
    %3693 = vmatpush1.msra.mxu0 0.0
    %3694 = vmatprep.subr.mxu0 0.0
    %3695 = vmatpush1.msra.mxu0 0.0
    %3696 = vmatprep.subr.mxu0 0.0
    %3697 = vmatpush1.msra.mxu0 0.0
    %3698 = vmatprep.subr.mxu0 0.0
    %3699 = vmatpush1.msra.mxu0 0.0
    %3700 = vmatprep.subr.mxu0 0.0
    %3701 = vmatpush1.msra.mxu0 0.0
    %3702 = vmatprep.subr.mxu0 0.0
    %3703 = vmatpush1.msra.mxu0 0.0
    %3704 = vmatprep.subr.mxu0 0.0
    %3705 = vmatpush1.msra.mxu0 0.0
    %3706 = vmatprep.mubr.f32.mxu0 0.0
    %3707 = vmatmul.mubr.f32.gmra.mrb[0].mxu0 %v3637
    %v3708 = vpop.f32.mrb[0].mxu0
    %v3709 = vadd.f32 0.0, %v3708
    %v3710 = vpop.f32.mrb[0].mxu0
    %3711 = vmatprep.mubr.f32.mxu0 0.0
    %3712 = vmatmul.mubr.f32.gmra.mrb[0].mxu0 %v3640
    %v3713 = vpop.f32.mrb[0].mxu0
    %v3714 = vadd.f32 0.0, %v3713
    %v3715 = vpop.f32.mrb[0].mxu0
    %3716 = vdwg.mxu0
    %v3717 = vsel %vm2821, %v3709, -inf
    %v3718 = vsel %vm2821, %v3714, -inf
    %v3719 = vmax.f32 %v3717, %v3718
    %v3720 = vrot.slane %v3719, 4
    %v3721 = vmax.f32 %v3719, %v3720
    %v3722 = vrot.slane %v3721, 2
    %v3723 = vmax.f32 %v3721, %v3722
    %v3724 = vrot.slane %v3723, 1
    %v3725 = vmax.f32 %v3723, %v3724
    %v3726 = vsub.f32 %v3709, %v3725
    %v3727 = vsub.f32 %v3714, %v3725
    %v3728 = vmul.f32 %v3726, 1.442695
    %v3729 = vpow.pop %v3728
    %v3730 = vmul.f32 %v3727, 1.442695
    %v3731 = vpow.pop %v3730
    %3732 = vmatprep.subr.mxu0 0.0
    %3733 = vmatpush1.msra.mxu0 %v3729
    %3734 = vmatprep.subr.mxu0 0.0
    %3735 = vmatpush1.msra.mxu0 %v3731
    %3736 = vmatprep.subr.mxu0 0.0
    %3737 = vmatpush1.msra.mxu0 0.0
    %3738 = vmatprep.subr.mxu0 0.0
    %3739 = vmatpush1.msra.mxu0 0.0
    %3740 = vmatprep.subr.mxu0 0.0
    %3741 = vmatpush1.msra.mxu0 0.0
    %3742 = vmatprep.subr.mxu0 0.0
    %3743 = vmatpush1.msra.mxu0 0.0
    %3744 = vmatprep.subr.mxu0 0.0
    %3745 = vmatpush1.msra.mxu0 0.0
    %3746 = vmatprep.subr.mxu0 0.0
    %3747 = vmatpush1.msra.mxu0 0.0
    %3748 = vmatprep.subr.mxu0 0.0
    %3749 = vmatpush1.msra.mxu0 0.0
    %3750 = vmatprep.subr.mxu0 0.0
    %3751 = vmatpush1.msra.mxu0 0.0
    %3752 = vmatprep.subr.mxu0 0.0
    %3753 = vmatpush1.msra.mxu0 0.0
    %3754 = vmatprep.subr.mxu0 0.0
    %3755 = vmatpush1.msra.mxu0 0.0
    %3756 = vmatprep.subr.mxu0 0.0
    %3757 = vmatpush1.msra.mxu0 0.0
    %3758 = vmatprep.subr.mxu0 0.0
    %3759 = vmatpush1.msra.mxu0 0.0
    %3760 = vmatprep.subr.mxu0 0.0
    %3761 = vmatpush1.msra.mxu0 0.0
    %3762 = vmatprep.subr.mxu0 0.0
    %3763 = vmatpush1.msra.mxu0 0.0
    %3764 = vmatprep.subr.mxu0 0.0
    %3765 = vmatpush1.msra.mxu0 0.0
    %3766 = vmatprep.subr.mxu0 0.0
    %3767 = vmatpush1.msra.mxu0 0.0
    %3768 = vmatprep.subr.mxu0 0.0
    %3769 = vmatpush1.msra.mxu0 0.0
    %3770 = vmatprep.subr.mxu0 0.0
    %3771 = vmatpush1.msra.mxu0 0.0
    %3772 = vmatprep.subr.mxu0 0.0
    %3773 = vmatpush1.msra.mxu0 0.0
    %3774 = vmatprep.subr.mxu0 0.0
    %3775 = vmatpush1.msra.mxu0 0.0
    %3776 = vmatprep.subr.mxu0 0.0
    %3777 = vmatpush1.msra.mxu0 0.0
    %3778 = vmatprep.subr.mxu0 0.0
    %3779 = vmatpush1.msra.mxu0 0.0
    %3780 = vmatprep.subr.mxu0 0.0
    %3781 = vmatpush1.msra.mxu0 0.0
    %3782 = vmatprep.subr.mxu0 0.0
    %3783 = vmatpush1.msra.mxu0 0.0
    %3784 = vmatprep.subr.mxu0 0.0
    %3785 = vmatpush1.msra.mxu0 0.0
    %3786 = vmatprep.subr.mxu0 0.0
    %3787 = vmatpush1.msra.mxu0 0.0
    %3788 = vmatprep.subr.mxu0 0.0
    %3789 = vmatpush1.msra.mxu0 0.0
    %3790 = vmatprep.subr.mxu0 0.0
    %3791 = vmatpush1.msra.mxu0 0.0
    %3792 = vmatprep.subr.mxu0 0.0
    %3793 = vmatpush1.msra.mxu0 0.0
    %3794 = vmatprep.subr.mxu0 0.0
    %3795 = vmatpush1.msra.mxu0 0.0
    %3796 = vmatprep.mubr.f32.mxu0 0.0
    %3797 = vmatmul.mubr.f32.gmra.mrb[0].mxu0 %v2940
    %v3798 = vpop.f32.mrb[0].mxu0
    %v3799 = vadd.f32 0.0, %v3798
    %v3800 = vpop.f32.mrb[0].mxu0
    %3801 = vmatprep.mubr.f32.mxu0 0.0
    %3802 = vmatmul.mubr.f32.gmra.mrb[0].mxu0 %v2943
    %v3803 = vpop.f32.mrb[0].mxu0
    %v3804 = vadd.f32 0.0, %v3803
    %v3805 = vpop.f32.mrb[0].mxu0
    %3806 = vdwg.mxu0
    %v3807 = vrcp.pop %v3799
    %v3808 = vmul.f32 %v3729, %v3807
    %v3809 = vrcp.pop %v3804
    %v3810 = vmul.f32 %v3731, %v3809
    %v3812 = vsel %vm2821, %v3808, 0
    %v3815 = vsel %vm2821, %v3810, 0
    %v3818 = vsel %vm2828, %v3173, 0
    %3820 = vmatprep.subr.mxu0 0.0
    %3821 = vmatpush1.msra.mxu0 %v3818
    %3822 = vmatprep.subr.mxu0 0.0
    %3823 = vmatpush1.msra.mxu0 0.0
    %3824 = vmatprep.subr.mxu0 0.0
    %3825 = vmatpush1.msra.mxu0 0.0
    %3826 = vmatprep.subr.mxu0 0.0
    %3827 = vmatpush1.msra.mxu0 0.0
    %3828 = vmatprep.subr.mxu0 0.0
    %3829 = vmatpush1.msra.mxu0 0.0
    %3830 = vmatprep.subr.mxu0 0.0
    %3831 = vmatpush1.msra.mxu0 0.0
    %3832 = vmatprep.subr.mxu0 0.0
    %3833 = vmatpush1.msra.mxu0 0.0
    %3834 = vmatprep.subr.mxu0 0.0
    %3835 = vmatpush1.msra.mxu0 0.0
    %3836 = vmatprep.subr.mxu0 0.0
    %3837 = vmatpush1.msra.mxu0 0.0
    %3838 = vmatprep.subr.mxu0 0.0
    %3839 = vmatpush1.msra.mxu0 0.0
    %3840 = vmatprep.subr.mxu0 0.0
    %3841 = vmatpush1.msra.mxu0 0.0
    %3842 = vmatprep.subr.mxu0 0.0
    %3843 = vmatpush1.msra.mxu0 0.0
    %3844 = vmatprep.subr.mxu0 0.0
    %3845 = vmatpush1.msra.mxu0 0.0
    %3846 = vmatprep.subr.mxu0 0.0
    %3847 = vmatpush1.msra.mxu0 0.0
    %3848 = vmatprep.subr.mxu0 0.0
    %3849 = vmatpush1.msra.mxu0 0.0
    %3850 = vmatprep.subr.mxu0 0.0
    %3851 = vmatpush1.msra.mxu0 0.0
    %3852 = vmatprep.subr.mxu0 0.0
    %3853 = vmatpush1.msra.mxu0 0.0
    %3854 = vmatprep.subr.mxu0 0.0
    %3855 = vmatpush1.msra.mxu0 0.0
    %3856 = vmatprep.subr.mxu0 0.0
    %3857 = vmatpush1.msra.mxu0 0.0
    %3858 = vmatprep.subr.mxu0 0.0
    %3859 = vmatpush1.msra.mxu0 0.0
    %3860 = vmatprep.subr.mxu0 0.0
    %3861 = vmatpush1.msra.mxu0 0.0
    %3862 = vmatprep.subr.mxu0 0.0
    %3863 = vmatpush1.msra.mxu0 0.0
    %3864 = vmatprep.subr.mxu0 0.0
    %3865 = vmatpush1.msra.mxu0 0.0
    %3866 = vmatprep.subr.mxu0 0.0
    %3867 = vmatpush1.msra.mxu0 0.0
    %3868 = vmatprep.subr.mxu0 0.0
    %3869 = vmatpush1.msra.mxu0 0.0
    %3870 = vmatprep.subr.mxu0 0.0
    %3871 = vmatpush1.msra.mxu0 0.0
    %3872 = vmatprep.subr.mxu0 0.0
    %3873 = vmatpush1.msra.mxu0 0.0
    %3874 = vmatprep.subr.mxu0 0.0
    %3875 = vmatpush1.msra.mxu0 0.0
    %3876 = vmatprep.subr.mxu0 0.0
    %3877 = vmatpush1.msra.mxu0 0.0
    %3878 = vmatprep.subr.mxu0 0.0
    %3879 = vmatpush1.msra.mxu0 0.0
    %3880 = vmatprep.subr.mxu0 0.0
    %3881 = vmatpush1.msra.mxu0 0.0
    %3882 = vmatprep.subr.mxu0 0.0
    %3883 = vmatpush1.msra.mxu0 0.0
    %3884 = vmatprep.mubr.f32.mxu0 0.0
    %3885 = vmatmul.mubr.f32.gmra.mrb[0].mxu0 %v3812
    %v3886 = vpop.f32.mrb[0].mxu0
    %v3887 = vadd.f32 0.0, %v3886
    %v3888 = vpop.f32.mrb[0].mxu0
    %3889 = vmatprep.mubr.f32.mxu0 0.0
    %3890 = vmatmul.mubr.f32.gmra.mrb[0].mxu0 %v3815
    %v3891 = vpop.f32.mrb[0].mxu0
    %v3892 = vadd.f32 0.0, %v3891
    %v3893 = vpop.f32.mrb[0].mxu0
    %3894 = vdwg.mxu0
    %v3895 = vmul.f32 %v3887, %v3629
    %v3896 = vmul.f32 %v3892, %v3631
    %v3898 = vsel %vm133, %v3181, 0
    %3900 = vmatprep.subr.mxu0 0.0
    %3901 = vmatpush1.msra.mxu0 %v3895
    %3902 = vmatprep.subr.mxu0 0.0
    %3903 = vmatpush1.msra.mxu0 %v3896
    %3904 = vmatprep.subr.mxu0 0.0
    %3905 = vmatpush1.msra.mxu0 0.0
    %3906 = vmatprep.subr.mxu0 0.0
    %3907 = vmatpush1.msra.mxu0 0.0
    %3908 = vmatprep.subr.mxu0 0.0
    %3909 = vmatpush1.msra.mxu0 0.0
    %3910 = vmatprep.subr.mxu0 0.0
    %3911 = vmatpush1.msra.mxu0 0.0
    %3912 = vmatprep.subr.mxu0 0.0
    %3913 = vmatpush1.msra.mxu0 0.0
    %3914 = vmatprep.subr.mxu0 0.0
    %3915 = vmatpush1.msra.mxu0 0.0
    %3916 = vmatprep.subr.mxu0 0.0
    %3917 = vmatpush1.msra.mxu0 0.0
    %3918 = vmatprep.subr.mxu0 0.0
    %3919 = vmatpush1.msra.mxu0 0.0
    %3920 = vmatprep.subr.mxu0 0.0
    %3921 = vmatpush1.msra.mxu0 0.0
    %3922 = vmatprep.subr.mxu0 0.0
    %3923 = vmatpush1.msra.mxu0 0.0
    %3924 = vmatprep.subr.mxu0 0.0
    %3925 = vmatpush1.msra.mxu0 0.0
    %3926 = vmatprep.subr.mxu0 0.0
    %3927 = vmatpush1.msra.mxu0 0.0
    %3928 = vmatprep.subr.mxu0 0.0
    %3929 = vmatpush1.msra.mxu0 0.0
    %3930 = vmatprep.subr.mxu0 0.0
    %3931 = vmatpush1.msra.mxu0 0.0
    %3932 = vmatprep.subr.mxu0 0.0
    %3933 = vmatpush1.msra.mxu0 0.0
    %3934 = vmatprep.subr.mxu0 0.0
    %3935 = vmatpush1.msra.mxu0 0.0
    %3936 = vmatprep.subr.mxu0 0.0
    %3937 = vmatpush1.msra.mxu0 0.0
    %3938 = vmatprep.subr.mxu0 0.0
    %3939 = vmatpush1.msra.mxu0 0.0
    %3940 = vmatprep.subr.mxu0 0.0
    %3941 = vmatpush1.msra.mxu0 0.0
    %3942 = vmatprep.subr.mxu0 0.0
    %3943 = vmatpush1.msra.mxu0 0.0
    %3944 = vmatprep.subr.mxu0 0.0
    %3945 = vmatpush1.msra.mxu0 0.0
    %3946 = vmatprep.subr.mxu0 0.0
    %3947 = vmatpush1.msra.mxu0 0.0
    %3948 = vmatprep.subr.mxu0 0.0
    %3949 = vmatpush1.msra.mxu0 0.0
    %3950 = vmatprep.subr.mxu0 0.0
    %3951 = vmatpush1.msra.mxu0 0.0
    %3952 = vmatprep.subr.mxu0 0.0
    %3953 = vmatpush1.msra.mxu0 0.0
    %3954 = vmatprep.subr.mxu0 0.0
    %3955 = vmatpush1.msra.mxu0 0.0
    %3956 = vmatprep.subr.mxu0 0.0
    %3957 = vmatpush1.msra.mxu0 0.0
    %3958 = vmatprep.subr.mxu0 0.0
    %3959 = vmatpush1.msra.mxu0 0.0
    %3960 = vmatprep.subr.mxu0 0.0
    %3961 = vmatpush1.msra.mxu0 0.0
    %3962 = vmatprep.subr.mxu0 0.0
    %3963 = vmatpush1.msra.mxu0 0.0
    %3964 = vmatprep.mubr.f32.mxu0 0.0
    %3965 = vmatmul.mubr.f32.gmra.mrb[0].mxu0 %v3898
    %v3966 = vpop.f32.mrb[0].mxu0
    %v3967 = vadd.f32 0.0, %v3966
    %v3968 = vpop.f32.mrb[0].mxu0
    %3969 = vdwg.mxu0
    %v3970 = vlaneseq
    %v3971 = vshrl.u32 %v3970, 7
    %v3972 = vsub.s32 0, %v3971
    %v3973 = vrot.slane %v3178, %v3972
    %v3975 = vsel %vm228, %v3967, 0
    %3977 = vmatprep.subr.mxu0 0.0
    %3978 = vmatpush1.msra.mxu0 %v3174
    %3979 = vmatprep.subr.mxu0 0.0
    %3980 = vmatpush1.msra.mxu0 %v3175
    %3981 = vmatprep.subr.mxu0 0.0
    %3982 = vmatpush1.msra.mxu0 %v3176
    %3983 = vmatprep.subr.mxu0 0.0
    %3984 = vmatpush1.msra.mxu0 %v3177
    %3985 = vmatprep.subr.mxu0 0.0
    %3986 = vmatpush1.msra.mxu0 0.0
    %3987 = vmatprep.subr.mxu0 0.0
    %3988 = vmatpush1.msra.mxu0 0.0
    %3989 = vmatprep.subr.mxu0 0.0
    %3990 = vmatpush1.msra.mxu0 0.0
    %3991 = vmatprep.subr.mxu0 0.0
    %3992 = vmatpush1.msra.mxu0 0.0
    %3993 = vmatprep.subr.mxu0 0.0
    %3994 = vmatpush1.msra.mxu0 0.0
    %3995 = vmatprep.subr.mxu0 0.0
    %3996 = vmatpush1.msra.mxu0 0.0
    %3997 = vmatprep.subr.mxu0 0.0
    %3998 = vmatpush1.msra.mxu0 0.0
    %3999 = vmatprep.subr.mxu0 0.0
    %4000 = vmatpush1.msra.mxu0 0.0
    %4001 = vmatprep.subr.mxu0 0.0
    %4002 = vmatpush1.msra.mxu0 0.0
    %4003 = vmatprep.subr.mxu0 0.0
    %4004 = vmatpush1.msra.mxu0 0.0
    %4005 = vmatprep.subr.mxu0 0.0
    %4006 = vmatpush1.msra.mxu0 0.0
    %4007 = vmatprep.subr.mxu0 0.0
    %4008 = vmatpush1.msra.mxu0 0.0
    %4009 = vmatprep.subr.mxu0 0.0
    %4010 = vmatpush1.msra.mxu0 0.0
    %4011 = vmatprep.subr.mxu0 0.0
    %4012 = vmatpush1.msra.mxu0 0.0
    %4013 = vmatprep.subr.mxu0 0.0
    %4014 = vmatpush1.msra.mxu0 0.0
    %4015 = vmatprep.subr.mxu0 0.0
    %4016 = vmatpush1.msra.mxu0 0.0
    %4017 = vmatprep.subr.mxu0 0.0
    %4018 = vmatpush1.msra.mxu0 0.0
    %4019 = vmatprep.subr.mxu0 0.0
    %4020 = vmatpush1.msra.mxu0 0.0
    %4021 = vmatprep.subr.mxu0 0.0
    %4022 = vmatpush1.msra.mxu0 0.0
    %4023 = vmatprep.subr.mxu0 0.0
    %4024 = vmatpush1.msra.mxu0 0.0
    %4025 = vmatprep.subr.mxu0 0.0
    %4026 = vmatpush1.msra.mxu0 0.0
    %4027 = vmatprep.subr.mxu0 0.0
    %4028 = vmatpush1.msra.mxu0 0.0
    %4029 = vmatprep.subr.mxu0 0.0
    %4030 = vmatpush1.msra.mxu0 0.0
    %4031 = vmatprep.subr.mxu0 0.0
    %4032 = vmatpush1.msra.mxu0 0.0
    %4033 = vmatprep.subr.mxu0 0.0
    %4034 = vmatpush1.msra.mxu0 0.0
    %4035 = vmatprep.subr.mxu0 0.0
    %4036 = vmatpush1.msra.mxu0 0.0
    %4037 = vmatprep.subr.mxu0 0.0
    %4038 = vmatpush1.msra.mxu0 0.0
    %4039 = vmatprep.subr.mxu0 0.0
    %4040 = vmatpush1.msra.mxu0 0.0
    %4041 = vmatprep.mubr.f32.mxu0 0.0
    %4042 = vmatmul.mubr.f32.gmra.mrb[0].mxu0 %v3975
    %v4043 = vpop.f32.mrb[0].mxu0
    %v4044 = vadd.f32 %v3973, %v4043
    %v4045 = vpop.f32.mrb[0].mxu0
    %4046 = vdwg.mxu0
    %v4047 = vsel %vm3515, %v4044, 0.0
    %4048 = vadd.xlane.f32.xlu0 %v4047
    %v4049 = vpop.xlane.xlu0 %4048
    %v4050 = vmul.f32 %v4049, %v3519
    %v4051 = vsub.f32 %v4044, %v4050
    %v4052 = vmul.f32 %v4051, %v4051
    %v4053 = vsel %vm3515, %v4052, 0.0
    %4054 = vadd.xlane.f32.xlu0 %v4053
    %v4055 = vpop.xlane.xlu0 %4054
    %v4056 = vmul.f32 %v4055, %v3519
    %v4057 = vadd.f32 %v4056, 1e-05
    %v4058 = vrsqrt.pop %v4057
    %v4059 = vmul.f32 %v4051, %v4058
    %v4060 = vlaneseq
    %v4061 = vshrl.u32 %v4060, 7
    %v4062 = vsub.s32 0, %v4061
    %v4063 = vrot.slane %v3167, %v4062
    %v4064 = vmul.f32 %v4059, %v4063
    %v4065 = vlaneseq
    %v4066 = vshrl.u32 %v4065, 7
    %v4067 = vsub.s32 0, %v4066
    %v4068 = vrot.slane %v3168, %v4067
    %v4069 = vadd.f32 %v4064, %v4068
    %4070 = vst.msk [vmem:[#allocation4] sm:$0x3] %vm3515, %v4069
    %s4071 = scalar_lea.vmem %s2, 2
    %v4072 = vld [vmem:[%s4071] sm:$0x3]
    %v4074 = vsel %vm2821, %v4072, 0
    %4076 = vmatprep.subr.mxu0 0.0
    %4077 = vmatpush1.msra.mxu0 %v3187
    %4078 = vmatprep.subr.mxu0 0.0
    %4079 = vmatpush1.msra.mxu0 0.0
    %4080 = vmatprep.subr.mxu0 0.0
    %4081 = vmatpush1.msra.mxu0 0.0
    %4082 = vmatprep.subr.mxu0 0.0
    %4083 = vmatpush1.msra.mxu0 0.0
    %4084 = vmatprep.subr.mxu0 0.0
    %4085 = vmatpush1.msra.mxu0 0.0
    %4086 = vmatprep.subr.mxu0 0.0
    %4087 = vmatpush1.msra.mxu0 0.0
    %4088 = vmatprep.subr.mxu0 0.0
    %4089 = vmatpush1.msra.mxu0 0.0
    %4090 = vmatprep.subr.mxu0 0.0
    %4091 = vmatpush1.msra.mxu0 0.0
    %4092 = vmatprep.subr.mxu0 0.0
    %4093 = vmatpush1.msra.mxu0 0.0
    %4094 = vmatprep.subr.mxu0 0.0
    %4095 = vmatpush1.msra.mxu0 0.0
    %4096 = vmatprep.subr.mxu0 0.0
    %4097 = vmatpush1.msra.mxu0 0.0
    %4098 = vmatprep.subr.mxu0 0.0
    %4099 = vmatpush1.msra.mxu0 0.0
    %4100 = vmatprep.subr.mxu0 0.0
    %4101 = vmatpush1.msra.mxu0 0.0
    %4102 = vmatprep.subr.mxu0 0.0
    %4103 = vmatpush1.msra.mxu0 0.0
    %4104 = vmatprep.subr.mxu0 0.0
    %4105 = vmatpush1.msra.mxu0 0.0
    %4106 = vmatprep.subr.mxu0 0.0
    %4107 = vmatpush1.msra.mxu0 0.0
    %4108 = vmatprep.subr.mxu0 0.0
    %4109 = vmatpush1.msra.mxu0 0.0
    %4110 = vmatprep.subr.mxu0 0.0
    %4111 = vmatpush1.msra.mxu0 0.0
    %4112 = vmatprep.subr.mxu0 0.0
    %4113 = vmatpush1.msra.mxu0 0.0
    %4114 = vmatprep.subr.mxu0 0.0
    %4115 = vmatpush1.msra.mxu0 0.0
    %4116 = vmatprep.subr.mxu0 0.0
    %4117 = vmatpush1.msra.mxu0 0.0
    %4118 = vmatprep.subr.mxu0 0.0
    %4119 = vmatpush1.msra.mxu0 0.0
    %4120 = vmatprep.subr.mxu0 0.0
    %4121 = vmatpush1.msra.mxu0 0.0
    %4122 = vmatprep.subr.mxu0 0.0
    %4123 = vmatpush1.msra.mxu0 0.0
    %4124 = vmatprep.subr.mxu0 0.0
    %4125 = vmatpush1.msra.mxu0 0.0
    %4126 = vmatprep.subr.mxu0 0.0
    %4127 = vmatpush1.msra.mxu0 0.0
    %4128 = vmatprep.subr.mxu0 0.0
    %4129 = vmatpush1.msra.mxu0 0.0
    %4130 = vmatprep.subr.mxu0 0.0
    %4131 = vmatpush1.msra.mxu0 0.0
    %4132 = vmatprep.subr.mxu0 0.0
    %4133 = vmatpush1.msra.mxu0 0.0
    %4134 = vmatprep.subr.mxu0 0.0
    %4135 = vmatpush1.msra.mxu0 0.0
    %4136 = vmatprep.subr.mxu0 0.0
    %4137 = vmatpush1.msra.mxu0 0.0
    %4138 = vmatprep.subr.mxu0 0.0
    %4139 = vmatpush1.msra.mxu0 0.0
    %4140 = vmatprep.mubr.f32.mxu0 0.0
    %4141 = vmatmul.mubr.f32.gmra.mrb[0].mxu0 %v4074
    %v4142 = vpop.f32.mrb[0].mxu0
    %v4143 = vadd.f32 0.0, %v4142
    %v4144 = vpop.f32.mrb[0].mxu0
    %4145 = vdwg.mxu0
    %v4147 = vsel %vm228, %v4069, 0
    %4149 = vmatprep.subr.mxu0 0.0
    %4150 = vmatpush1.msra.mxu0 %v3154
    %4151 = vmatprep.subr.mxu0 0.0
    %4152 = vmatpush1.msra.mxu0 %v3155
    %4153 = vmatprep.subr.mxu0 0.0
    %4154 = vmatpush1.msra.mxu0 %v3156
    %4155 = vmatprep.subr.mxu0 0.0
    %4156 = vmatpush1.msra.mxu0 %v3157
    %4157 = vmatprep.subr.mxu0 0.0
    %4158 = vmatpush1.msra.mxu0 0.0
    %4159 = vmatprep.subr.mxu0 0.0
    %4160 = vmatpush1.msra.mxu0 0.0
    %4161 = vmatprep.subr.mxu0 0.0
    %4162 = vmatpush1.msra.mxu0 0.0
    %4163 = vmatprep.subr.mxu0 0.0
    %4164 = vmatpush1.msra.mxu0 0.0
    %4165 = vmatprep.subr.mxu0 0.0
    %4166 = vmatpush1.msra.mxu0 0.0
    %4167 = vmatprep.subr.mxu0 0.0
    %4168 = vmatpush1.msra.mxu0 0.0
    %4169 = vmatprep.subr.mxu0 0.0
    %4170 = vmatpush1.msra.mxu0 0.0
    %4171 = vmatprep.subr.mxu0 0.0
    %4172 = vmatpush1.msra.mxu0 0.0
    %4173 = vmatprep.subr.mxu0 0.0
    %4174 = vmatpush1.msra.mxu0 0.0
    %4175 = vmatprep.subr.mxu0 0.0
    %4176 = vmatpush1.msra.mxu0 0.0
    %4177 = vmatprep.subr.mxu0 0.0
    %4178 = vmatpush1.msra.mxu0 0.0
    %4179 = vmatprep.subr.mxu0 0.0
    %4180 = vmatpush1.msra.mxu0 0.0
    %4181 = vmatprep.subr.mxu0 0.0
    %4182 = vmatpush1.msra.mxu0 0.0
    %4183 = vmatprep.subr.mxu0 0.0
    %4184 = vmatpush1.msra.mxu0 0.0
    %4185 = vmatprep.subr.mxu0 0.0
    %4186 = vmatpush1.msra.mxu0 0.0
    %4187 = vmatprep.subr.mxu0 0.0
    %4188 = vmatpush1.msra.mxu0 0.0
    %4189 = vmatprep.subr.mxu0 0.0
    %4190 = vmatpush1.msra.mxu0 0.0
    %4191 = vmatprep.subr.mxu0 0.0
    %4192 = vmatpush1.msra.mxu0 0.0
    %4193 = vmatprep.subr.mxu0 0.0
    %4194 = vmatpush1.msra.mxu0 0.0
    %4195 = vmatprep.subr.mxu0 0.0
    %4196 = vmatpush1.msra.mxu0 0.0
    %4197 = vmatprep.subr.mxu0 0.0
    %4198 = vmatpush1.msra.mxu0 0.0
    %4199 = vmatprep.subr.mxu0 0.0
    %4200 = vmatpush1.msra.mxu0 0.0
    %4201 = vmatprep.subr.mxu0 0.0
    %4202 = vmatpush1.msra.mxu0 0.0
    %4203 = vmatprep.subr.mxu0 0.0
    %4204 = vmatpush1.msra.mxu0 0.0
    %4205 = vmatprep.subr.mxu0 0.0
    %4206 = vmatpush1.msra.mxu0 0.0
    %4207 = vmatprep.subr.mxu0 0.0
    %4208 = vmatpush1.msra.mxu0 0.0
    %4209 = vmatprep.subr.mxu0 0.0
    %4210 = vmatpush1.msra.mxu0 0.0
    %4211 = vmatprep.subr.mxu0 0.0
    %4212 = vmatpush1.msra.mxu0 0.0
    %4213 = vmatprep.mubr.f32.mxu0 0.0
    %4214 = vmatmul.mubr.f32.gmra.mrb[0].mxu0 %v4147
    %v4215 = vpop.f32.mrb[0].mxu0
    %v4216 = vadd.f32 %v4143, %v4215
    %v4217 = vpop.f32.mrb[0].mxu0
    %4218 = vdwg.mxu0
    %v4219 = vadd.f32 %v4216, %v3332
    %v4220 = vxor.u32 %v4219, 2147483648
    %v4221 = vmul.f32 %v4220, 1.442695
    %v4222 = vpow.pop %v4221
    %v4223 = vadd.f32 %v4222, 1.0
    %v4224 = vrcp.pop %v4223
    %v4225 = vmul.f32 1.0, %v4224
    %v4226 = vtanh.pop %v4219
    %v4227 = vmul.f32 %v4225, %v3351
    %4229 = vrot.lane.b32.xlu0 %v4226, 32
    %v4230 = vpop.permute.xlu0 %4229
    %v4232 = vmul.f32 %v4225, %v4230
    %4234 = vrot.lane.b32.xlu0 %v4232, 32
    %v4235 = vpop.permute.xlu0 %4234
    %v4237 = vadd.f32 %v4227, %v4235
    %v4238 = vtanh.pop %v4237
    %4240 = vrot.lane.b32.xlu0 %v4238, 32
    %v4241 = vpop.permute.xlu0 %4240
    %v4243 = vmul.f32 %v4225, %v4241
    %s4244 = scalar_lea.vmem %s3, 2
    %v4245 = vld [vmem:[%s4244] sm:$0x3]
    %v4247 = vsel %vm2821, %v4245, 0
    %4249 = vmatprep.subr.mxu0 0.0
    %4250 = vmatpush1.msra.mxu0 %v3363
    %4251 = vmatprep.subr.mxu0 0.0
    %4252 = vmatpush1.msra.mxu0 0.0
    %4253 = vmatprep.subr.mxu0 0.0
    %4254 = vmatpush1.msra.mxu0 0.0
    %4255 = vmatprep.subr.mxu0 0.0
    %4256 = vmatpush1.msra.mxu0 0.0
    %4257 = vmatprep.subr.mxu0 0.0
    %4258 = vmatpush1.msra.mxu0 0.0
    %4259 = vmatprep.subr.mxu0 0.0
    %4260 = vmatpush1.msra.mxu0 0.0
    %4261 = vmatprep.subr.mxu0 0.0
    %4262 = vmatpush1.msra.mxu0 0.0
    %4263 = vmatprep.subr.mxu0 0.0
    %4264 = vmatpush1.msra.mxu0 0.0
    %4265 = vmatprep.subr.mxu0 0.0
    %4266 = vmatpush1.msra.mxu0 0.0
    %4267 = vmatprep.subr.mxu0 0.0
    %4268 = vmatpush1.msra.mxu0 0.0
    %4269 = vmatprep.subr.mxu0 0.0
    %4270 = vmatpush1.msra.mxu0 0.0
    %4271 = vmatprep.subr.mxu0 0.0
    %4272 = vmatpush1.msra.mxu0 0.0
    %4273 = vmatprep.subr.mxu0 0.0
    %4274 = vmatpush1.msra.mxu0 0.0
    %4275 = vmatprep.subr.mxu0 0.0
    %4276 = vmatpush1.msra.mxu0 0.0
    %4277 = vmatprep.subr.mxu0 0.0
    %4278 = vmatpush1.msra.mxu0 0.0
    %4279 = vmatprep.subr.mxu0 0.0
    %4280 = vmatpush1.msra.mxu0 0.0
    %4281 = vmatprep.subr.mxu0 0.0
    %4282 = vmatpush1.msra.mxu0 0.0
    %4283 = vmatprep.subr.mxu0 0.0
    %4284 = vmatpush1.msra.mxu0 0.0
    %4285 = vmatprep.subr.mxu0 0.0
    %4286 = vmatpush1.msra.mxu0 0.0
    %4287 = vmatprep.subr.mxu0 0.0
    %4288 = vmatpush1.msra.mxu0 0.0
    %4289 = vmatprep.subr.mxu0 0.0
    %4290 = vmatpush1.msra.mxu0 0.0
    %4291 = vmatprep.subr.mxu0 0.0
    %4292 = vmatpush1.msra.mxu0 0.0
    %4293 = vmatprep.subr.mxu0 0.0
    %4294 = vmatpush1.msra.mxu0 0.0
    %4295 = vmatprep.subr.mxu0 0.0
    %4296 = vmatpush1.msra.mxu0 0.0
    %4297 = vmatprep.subr.mxu0 0.0
    %4298 = vmatpush1.msra.mxu0 0.0
    %4299 = vmatprep.subr.mxu0 0.0
    %4300 = vmatpush1.msra.mxu0 0.0
    %4301 = vmatprep.subr.mxu0 0.0
    %4302 = vmatpush1.msra.mxu0 0.0
    %4303 = vmatprep.subr.mxu0 0.0
    %4304 = vmatpush1.msra.mxu0 0.0
    %4305 = vmatprep.subr.mxu0 0.0
    %4306 = vmatpush1.msra.mxu0 0.0
    %4307 = vmatprep.subr.mxu0 0.0
    %4308 = vmatpush1.msra.mxu0 0.0
    %4309 = vmatprep.subr.mxu0 0.0
    %4310 = vmatpush1.msra.mxu0 0.0
    %4311 = vmatprep.subr.mxu0 0.0
    %4312 = vmatpush1.msra.mxu0 0.0
    %4313 = vmatprep.mubr.f32.mxu0 0.0
    %4314 = vmatmul.mubr.f32.gmra.mrb[0].mxu0 %v4247
    %v4315 = vpop.f32.mrb[0].mxu0
    %v4316 = vadd.f32 0.0, %v4315
    %v4317 = vpop.f32.mrb[0].mxu0
    %4318 = vdwg.mxu0
    %4320 = vrot.lane.b32.xlu0 %v4243, 64
    %v4321 = vpop.permute.xlu0 %4320
    %v4322 = vsel %vm228, %v4321, 0
    %4324 = vmatprep.subr.mxu0 0.0
    %4325 = vmatpush1.msra.mxu0 %v3159
    %4326 = vmatprep.subr.mxu0 0.0
    %4327 = vmatpush1.msra.mxu0 %v3160
    %4328 = vmatprep.subr.mxu0 0.0
    %4329 = vmatpush1.msra.mxu0 %v3161
    %4330 = vmatprep.subr.mxu0 0.0
    %4331 = vmatpush1.msra.mxu0 %v3162
    %4332 = vmatprep.subr.mxu0 0.0
    %4333 = vmatpush1.msra.mxu0 0.0
    %4334 = vmatprep.subr.mxu0 0.0
    %4335 = vmatpush1.msra.mxu0 0.0
    %4336 = vmatprep.subr.mxu0 0.0
    %4337 = vmatpush1.msra.mxu0 0.0
    %4338 = vmatprep.subr.mxu0 0.0
    %4339 = vmatpush1.msra.mxu0 0.0
    %4340 = vmatprep.subr.mxu0 0.0
    %4341 = vmatpush1.msra.mxu0 0.0
    %4342 = vmatprep.subr.mxu0 0.0
    %4343 = vmatpush1.msra.mxu0 0.0
    %4344 = vmatprep.subr.mxu0 0.0
    %4345 = vmatpush1.msra.mxu0 0.0
    %4346 = vmatprep.subr.mxu0 0.0
    %4347 = vmatpush1.msra.mxu0 0.0
    %4348 = vmatprep.subr.mxu0 0.0
    %4349 = vmatpush1.msra.mxu0 0.0
    %4350 = vmatprep.subr.mxu0 0.0
    %4351 = vmatpush1.msra.mxu0 0.0
    %4352 = vmatprep.subr.mxu0 0.0
    %4353 = vmatpush1.msra.mxu0 0.0
    %4354 = vmatprep.subr.mxu0 0.0
    %4355 = vmatpush1.msra.mxu0 0.0
    %4356 = vmatprep.subr.mxu0 0.0
    %4357 = vmatpush1.msra.mxu0 0.0
    %4358 = vmatprep.subr.mxu0 0.0
    %4359 = vmatpush1.msra.mxu0 0.0
    %4360 = vmatprep.subr.mxu0 0.0
    %4361 = vmatpush1.msra.mxu0 0.0
    %4362 = vmatprep.subr.mxu0 0.0
    %4363 = vmatpush1.msra.mxu0 0.0
    %4364 = vmatprep.subr.mxu0 0.0
    %4365 = vmatpush1.msra.mxu0 0.0
    %4366 = vmatprep.subr.mxu0 0.0
    %4367 = vmatpush1.msra.mxu0 0.0
    %4368 = vmatprep.subr.mxu0 0.0
    %4369 = vmatpush1.msra.mxu0 0.0
    %4370 = vmatprep.subr.mxu0 0.0
    %4371 = vmatpush1.msra.mxu0 0.0
    %4372 = vmatprep.subr.mxu0 0.0
    %4373 = vmatpush1.msra.mxu0 0.0
    %4374 = vmatprep.subr.mxu0 0.0
    %4375 = vmatpush1.msra.mxu0 0.0
    %4376 = vmatprep.subr.mxu0 0.0
    %4377 = vmatpush1.msra.mxu0 0.0
    %4378 = vmatprep.subr.mxu0 0.0
    %4379 = vmatpush1.msra.mxu0 0.0
    %4380 = vmatprep.subr.mxu0 0.0
    %4381 = vmatpush1.msra.mxu0 0.0
    %4382 = vmatprep.subr.mxu0 0.0
    %4383 = vmatpush1.msra.mxu0 0.0
    %4384 = vmatprep.subr.mxu0 0.0
    %4385 = vmatpush1.msra.mxu0 0.0
    %4386 = vmatprep.subr.mxu0 0.0
    %4387 = vmatpush1.msra.mxu0 0.0
    %4388 = vmatprep.mubr.f32.mxu0 0.0
    %4389 = vmatmul.mubr.f32.gmra.mrb[0].mxu0 %v4322
    %v4390 = vpop.f32.mrb[0].mxu0
    %v4391 = vadd.f32 %v4316, %v4390
    %v4392 = vpop.f32.mrb[0].mxu0
    %4393 = vdwg.mxu0
    %v4394 = vadd.f32 %v4391, %v3513
    %v4395 = vsel %vm3515, %v4394, 0.0
    %4396 = vadd.xlane.f32.xlu0 %v4395
    %v4397 = vpop.xlane.xlu0 %4396
    %v4398 = vmul.f32 %v4397, %v3519
    %v4399 = vsub.f32 %v4394, %v4398
    %v4400 = vmul.f32 %v4399, %v4399
    %v4401 = vsel %vm3515, %v4400, 0.0
    %4402 = vadd.xlane.f32.xlu0 %v4401
    %v4403 = vpop.xlane.xlu0 %4402
    %v4404 = vmul.f32 %v4403, %v3519
    %v4405 = vadd.f32 %v4404, 1e-05
    %v4406 = vrsqrt.pop %v4405
    %v4407 = vmul.f32 %v4399, %v4406
    %v4408 = vmul.f32 %v4407, %v3533
    %v4409 = vadd.f32 %v4408, %v3538
    %v4411 = vsel %vm3547, %v4409, 0
    %4413 = vmatprep.subr.mxu0 0.0
    %4414 = vmatpush1.msra.mxu0 %v4411
    %4415 = vmatprep.subr.mxu0 0.0
    %4416 = vmatpush1.msra.mxu0 0.0
    %4417 = vmatprep.subr.mxu0 0.0
    %4418 = vmatpush1.msra.mxu0 0.0
    %4419 = vmatprep.subr.mxu0 0.0
    %4420 = vmatpush1.msra.mxu0 0.0
    %4421 = vmatprep.subr.mxu0 0.0
    %4422 = vmatpush1.msra.mxu0 0.0
    %4423 = vmatprep.subr.mxu0 0.0
    %4424 = vmatpush1.msra.mxu0 0.0
    %4425 = vmatprep.subr.mxu0 0.0
    %4426 = vmatpush1.msra.mxu0 0.0
    %4427 = vmatprep.subr.mxu0 0.0
    %4428 = vmatpush1.msra.mxu0 0.0
    %4429 = vmatprep.subr.mxu0 0.0
    %4430 = vmatpush1.msra.mxu0 0.0
    %4431 = vmatprep.subr.mxu0 0.0
    %4432 = vmatpush1.msra.mxu0 0.0
    %4433 = vmatprep.subr.mxu0 0.0
    %4434 = vmatpush1.msra.mxu0 0.0
    %4435 = vmatprep.subr.mxu0 0.0
    %4436 = vmatpush1.msra.mxu0 0.0
    %4437 = vmatprep.subr.mxu0 0.0
    %4438 = vmatpush1.msra.mxu0 0.0
    %4439 = vmatprep.subr.mxu0 0.0
    %4440 = vmatpush1.msra.mxu0 0.0
    %4441 = vmatprep.subr.mxu0 0.0
    %4442 = vmatpush1.msra.mxu0 0.0
    %4443 = vmatprep.subr.mxu0 0.0
    %4444 = vmatpush1.msra.mxu0 0.0
    %4445 = vmatprep.subr.mxu0 0.0
    %4446 = vmatpush1.msra.mxu0 0.0
    %4447 = vmatprep.subr.mxu0 0.0
    %4448 = vmatpush1.msra.mxu0 0.0
    %4449 = vmatprep.subr.mxu0 0.0
    %4450 = vmatpush1.msra.mxu0 0.0
    %4451 = vmatprep.subr.mxu0 0.0
    %4452 = vmatpush1.msra.mxu0 0.0
    %4453 = vmatprep.subr.mxu0 0.0
    %4454 = vmatpush1.msra.mxu0 0.0
    %4455 = vmatprep.subr.mxu0 0.0
    %4456 = vmatpush1.msra.mxu0 0.0
    %4457 = vmatprep.subr.mxu0 0.0
    %4458 = vmatpush1.msra.mxu0 0.0
    %4459 = vmatprep.subr.mxu0 0.0
    %4460 = vmatpush1.msra.mxu0 0.0
    %4461 = vmatprep.subr.mxu0 0.0
    %4462 = vmatpush1.msra.mxu0 0.0
    %4463 = vmatprep.subr.mxu0 0.0
    %4464 = vmatpush1.msra.mxu0 0.0
    %4465 = vmatprep.subr.mxu0 0.0
    %4466 = vmatpush1.msra.mxu0 0.0
    %4467 = vmatprep.subr.mxu0 0.0
    %4468 = vmatpush1.msra.mxu0 0.0
    %4469 = vmatprep.subr.mxu0 0.0
    %4470 = vmatpush1.msra.mxu0 0.0
    %4471 = vmatprep.subr.mxu0 0.0
    %4472 = vmatpush1.msra.mxu0 0.0
    %4473 = vmatprep.subr.mxu0 0.0
    %4474 = vmatpush1.msra.mxu0 0.0
    %4475 = vmatprep.subr.mxu0 0.0
    %4476 = vmatpush1.msra.mxu0 0.0
    %4477 = vmatprep.mubr.f32.mxu0 0.0
    %4478 = vmatmul.mubr.f32.gmra.mrb[0].mxu0 %v3542
    %v4479 = vpop.f32.mrb[0].mxu0
    %v4480 = vadd.f32 0.0, %v4479
    %v4481 = vpop.f32.mrb[0].mxu0
    %4482 = vmatprep.mubr.f32.mxu0 0.0
    %4483 = vmatmul.mubr.f32.gmra.mrb[0].mxu0 %v3545
    %v4484 = vpop.f32.mrb[0].mxu0
    %v4485 = vadd.f32 0.0, %v4484
    %v4486 = vpop.f32.mrb[0].mxu0
    %4487 = vdwg.mxu0
    %v4488 = vmul.f32 %v4480, %v3629
    %v4489 = vmul.f32 %v4485, %v3631
    %v4491 = vsel %vm228, %v4488, 0
    %v4494 = vsel %vm228, %v4489, 0
    %4496 = vmatprep.subr.mxu0 0.0
    %4497 = vmatpush1.msra.mxu0 %v3169
    %4498 = vmatprep.subr.mxu0 0.0
    %4499 = vmatpush1.msra.mxu0 %v3170
    %4500 = vmatprep.subr.mxu0 0.0
    %4501 = vmatpush1.msra.mxu0 %v3171
    %4502 = vmatprep.subr.mxu0 0.0
    %4503 = vmatpush1.msra.mxu0 %v3172
    %4504 = vmatprep.subr.mxu0 0.0
    %4505 = vmatpush1.msra.mxu0 0.0
    %4506 = vmatprep.subr.mxu0 0.0
    %4507 = vmatpush1.msra.mxu0 0.0
    %4508 = vmatprep.subr.mxu0 0.0
    %4509 = vmatpush1.msra.mxu0 0.0
    %4510 = vmatprep.subr.mxu0 0.0
    %4511 = vmatpush1.msra.mxu0 0.0
    %4512 = vmatprep.subr.mxu0 0.0
    %4513 = vmatpush1.msra.mxu0 0.0
    %4514 = vmatprep.subr.mxu0 0.0
    %4515 = vmatpush1.msra.mxu0 0.0
    %4516 = vmatprep.subr.mxu0 0.0
    %4517 = vmatpush1.msra.mxu0 0.0
    %4518 = vmatprep.subr.mxu0 0.0
    %4519 = vmatpush1.msra.mxu0 0.0
    %4520 = vmatprep.subr.mxu0 0.0
    %4521 = vmatpush1.msra.mxu0 0.0
    %4522 = vmatprep.subr.mxu0 0.0
    %4523 = vmatpush1.msra.mxu0 0.0
    %4524 = vmatprep.subr.mxu0 0.0
    %4525 = vmatpush1.msra.mxu0 0.0
    %4526 = vmatprep.subr.mxu0 0.0
    %4527 = vmatpush1.msra.mxu0 0.0
    %4528 = vmatprep.subr.mxu0 0.0
    %4529 = vmatpush1.msra.mxu0 0.0
    %4530 = vmatprep.subr.mxu0 0.0
    %4531 = vmatpush1.msra.mxu0 0.0
    %4532 = vmatprep.subr.mxu0 0.0
    %4533 = vmatpush1.msra.mxu0 0.0
    %4534 = vmatprep.subr.mxu0 0.0
    %4535 = vmatpush1.msra.mxu0 0.0
    %4536 = vmatprep.subr.mxu0 0.0
    %4537 = vmatpush1.msra.mxu0 0.0
    %4538 = vmatprep.subr.mxu0 0.0
    %4539 = vmatpush1.msra.mxu0 0.0
    %4540 = vmatprep.subr.mxu0 0.0
    %4541 = vmatpush1.msra.mxu0 0.0
    %4542 = vmatprep.subr.mxu0 0.0
    %4543 = vmatpush1.msra.mxu0 0.0
    %4544 = vmatprep.subr.mxu0 0.0
    %4545 = vmatpush1.msra.mxu0 0.0
    %4546 = vmatprep.subr.mxu0 0.0
    %4547 = vmatpush1.msra.mxu0 0.0
    %4548 = vmatprep.subr.mxu0 0.0
    %4549 = vmatpush1.msra.mxu0 0.0
    %4550 = vmatprep.subr.mxu0 0.0
    %4551 = vmatpush1.msra.mxu0 0.0
    %4552 = vmatprep.subr.mxu0 0.0
    %4553 = vmatpush1.msra.mxu0 0.0
    %4554 = vmatprep.subr.mxu0 0.0
    %4555 = vmatpush1.msra.mxu0 0.0
    %4556 = vmatprep.subr.mxu0 0.0
    %4557 = vmatpush1.msra.mxu0 0.0
    %4558 = vmatprep.subr.mxu0 0.0
    %4559 = vmatpush1.msra.mxu0 0.0
    %4560 = vmatprep.mubr.f32.mxu0 0.0
    %4561 = vmatmul.mubr.f32.gmra.mrb[0].mxu0 %v4491
    %v4562 = vpop.f32.mrb[0].mxu0
    %v4563 = vadd.f32 0.0, %v4562
    %v4564 = vpop.f32.mrb[0].mxu0
    %4565 = vmatprep.mubr.f32.mxu0 0.0
    %4566 = vmatmul.mubr.f32.gmra.mrb[0].mxu0 %v4494
    %v4567 = vpop.f32.mrb[0].mxu0
    %v4568 = vadd.f32 0.0, %v4567
    %v4569 = vpop.f32.mrb[0].mxu0
    %4570 = vdwg.mxu0
    %v4571 = vsel %vm2821, %v4563, -inf
    %v4572 = vsel %vm2821, %v4568, -inf
    %v4573 = vmax.f32 %v4571, %v4572
    %v4574 = vrot.slane %v4573, 4
    %v4575 = vmax.f32 %v4573, %v4574
    %v4576 = vrot.slane %v4575, 2
    %v4577 = vmax.f32 %v4575, %v4576
    %v4578 = vrot.slane %v4577, 1
    %v4579 = vmax.f32 %v4577, %v4578
    %v4580 = vsub.f32 %v4563, %v4579
    %v4581 = vsub.f32 %v4568, %v4579
    %v4582 = vmul.f32 %v4580, 1.442695
    %v4583 = vpow.pop %v4582
    %v4584 = vmul.f32 %v4581, 1.442695
    %v4585 = vpow.pop %v4584
    %4586 = vmatprep.subr.mxu0 0.0
    %4587 = vmatpush1.msra.mxu0 %v4583
    %4588 = vmatprep.subr.mxu0 0.0
    %4589 = vmatpush1.msra.mxu0 %v4585
    %4590 = vmatprep.subr.mxu0 0.0
    %4591 = vmatpush1.msra.mxu0 0.0
    %4592 = vmatprep.subr.mxu0 0.0
    %4593 = vmatpush1.msra.mxu0 0.0
    %4594 = vmatprep.subr.mxu0 0.0
    %4595 = vmatpush1.msra.mxu0 0.0
    %4596 = vmatprep.subr.mxu0 0.0
    %4597 = vmatpush1.msra.mxu0 0.0
    %4598 = vmatprep.subr.mxu0 0.0
    %4599 = vmatpush1.msra.mxu0 0.0
    %4600 = vmatprep.subr.mxu0 0.0
    %4601 = vmatpush1.msra.mxu0 0.0
    %4602 = vmatprep.subr.mxu0 0.0
    %4603 = vmatpush1.msra.mxu0 0.0
    %4604 = vmatprep.subr.mxu0 0.0
    %4605 = vmatpush1.msra.mxu0 0.0
    %4606 = vmatprep.subr.mxu0 0.0
    %4607 = vmatpush1.msra.mxu0 0.0
    %4608 = vmatprep.subr.mxu0 0.0
    %4609 = vmatpush1.msra.mxu0 0.0
    %4610 = vmatprep.subr.mxu0 0.0
    %4611 = vmatpush1.msra.mxu0 0.0
    %4612 = vmatprep.subr.mxu0 0.0
    %4613 = vmatpush1.msra.mxu0 0.0
    %4614 = vmatprep.subr.mxu0 0.0
    %4615 = vmatpush1.msra.mxu0 0.0
    %4616 = vmatprep.subr.mxu0 0.0
    %4617 = vmatpush1.msra.mxu0 0.0
    %4618 = vmatprep.subr.mxu0 0.0
    %4619 = vmatpush1.msra.mxu0 0.0
    %4620 = vmatprep.subr.mxu0 0.0
    %4621 = vmatpush1.msra.mxu0 0.0
    %4622 = vmatprep.subr.mxu0 0.0
    %4623 = vmatpush1.msra.mxu0 0.0
    %4624 = vmatprep.subr.mxu0 0.0
    %4625 = vmatpush1.msra.mxu0 0.0
    %4626 = vmatprep.subr.mxu0 0.0
    %4627 = vmatpush1.msra.mxu0 0.0
    %4628 = vmatprep.subr.mxu0 0.0
    %4629 = vmatpush1.msra.mxu0 0.0
    %4630 = vmatprep.subr.mxu0 0.0
    %4631 = vmatpush1.msra.mxu0 0.0
    %4632 = vmatprep.subr.mxu0 0.0
    %4633 = vmatpush1.msra.mxu0 0.0
    %4634 = vmatprep.subr.mxu0 0.0
    %4635 = vmatpush1.msra.mxu0 0.0
    %4636 = vmatprep.subr.mxu0 0.0
    %4637 = vmatpush1.msra.mxu0 0.0
    %4638 = vmatprep.subr.mxu0 0.0
    %4639 = vmatpush1.msra.mxu0 0.0
    %4640 = vmatprep.subr.mxu0 0.0
    %4641 = vmatpush1.msra.mxu0 0.0
    %4642 = vmatprep.subr.mxu0 0.0
    %4643 = vmatpush1.msra.mxu0 0.0
    %4644 = vmatprep.subr.mxu0 0.0
    %4645 = vmatpush1.msra.mxu0 0.0
    %4646 = vmatprep.subr.mxu0 0.0
    %4647 = vmatpush1.msra.mxu0 0.0
    %4648 = vmatprep.subr.mxu0 0.0
    %4649 = vmatpush1.msra.mxu0 0.0
    %4650 = vmatprep.mubr.f32.mxu0 0.0
    %4651 = vmatmul.mubr.f32.gmra.mrb[0].mxu0 %v2940
    %v4652 = vpop.f32.mrb[0].mxu0
    %v4653 = vadd.f32 0.0, %v4652
    %v4654 = vpop.f32.mrb[0].mxu0
    %4655 = vmatprep.mubr.f32.mxu0 0.0
    %4656 = vmatmul.mubr.f32.gmra.mrb[0].mxu0 %v2943
    %v4657 = vpop.f32.mrb[0].mxu0
    %v4658 = vadd.f32 0.0, %v4657
    %v4659 = vpop.f32.mrb[0].mxu0
    %4660 = vdwg.mxu0
    %v4661 = vrcp.pop %v4653
    %v4662 = vmul.f32 %v4583, %v4661
    %v4663 = vrcp.pop %v4658
    %v4664 = vmul.f32 %v4585, %v4663
    %v4666 = vsel %vm2821, %v4662, 0
    %v4669 = vsel %vm2821, %v4664, 0
    %4671 = vmatprep.subr.mxu0 0.0
    %4672 = vmatpush1.msra.mxu0 %v3818
    %4673 = vmatprep.subr.mxu0 0.0
    %4674 = vmatpush1.msra.mxu0 0.0
    %4675 = vmatprep.subr.mxu0 0.0
    %4676 = vmatpush1.msra.mxu0 0.0
    %4677 = vmatprep.subr.mxu0 0.0
    %4678 = vmatpush1.msra.mxu0 0.0
    %4679 = vmatprep.subr.mxu0 0.0
    %4680 = vmatpush1.msra.mxu0 0.0
    %4681 = vmatprep.subr.mxu0 0.0
    %4682 = vmatpush1.msra.mxu0 0.0
    %4683 = vmatprep.subr.mxu0 0.0
    %4684 = vmatpush1.msra.mxu0 0.0
    %4685 = vmatprep.subr.mxu0 0.0
    %4686 = vmatpush1.msra.mxu0 0.0
    %4687 = vmatprep.subr.mxu0 0.0
    %4688 = vmatpush1.msra.mxu0 0.0
    %4689 = vmatprep.subr.mxu0 0.0
    %4690 = vmatpush1.msra.mxu0 0.0
    %4691 = vmatprep.subr.mxu0 0.0
    %4692 = vmatpush1.msra.mxu0 0.0
    %4693 = vmatprep.subr.mxu0 0.0
    %4694 = vmatpush1.msra.mxu0 0.0
    %4695 = vmatprep.subr.mxu0 0.0
    %4696 = vmatpush1.msra.mxu0 0.0
    %4697 = vmatprep.subr.mxu0 0.0
    %4698 = vmatpush1.msra.mxu0 0.0
    %4699 = vmatprep.subr.mxu0 0.0
    %4700 = vmatpush1.msra.mxu0 0.0
    %4701 = vmatprep.subr.mxu0 0.0
    %4702 = vmatpush1.msra.mxu0 0.0
    %4703 = vmatprep.subr.mxu0 0.0
    %4704 = vmatpush1.msra.mxu0 0.0
    %4705 = vmatprep.subr.mxu0 0.0
    %4706 = vmatpush1.msra.mxu0 0.0
    %4707 = vmatprep.subr.mxu0 0.0
    %4708 = vmatpush1.msra.mxu0 0.0
    %4709 = vmatprep.subr.mxu0 0.0
    %4710 = vmatpush1.msra.mxu0 0.0
    %4711 = vmatprep.subr.mxu0 0.0
    %4712 = vmatpush1.msra.mxu0 0.0
    %4713 = vmatprep.subr.mxu0 0.0
    %4714 = vmatpush1.msra.mxu0 0.0
    %4715 = vmatprep.subr.mxu0 0.0
    %4716 = vmatpush1.msra.mxu0 0.0
    %4717 = vmatprep.subr.mxu0 0.0
    %4718 = vmatpush1.msra.mxu0 0.0
    %4719 = vmatprep.subr.mxu0 0.0
    %4720 = vmatpush1.msra.mxu0 0.0
    %4721 = vmatprep.subr.mxu0 0.0
    %4722 = vmatpush1.msra.mxu0 0.0
    %4723 = vmatprep.subr.mxu0 0.0
    %4724 = vmatpush1.msra.mxu0 0.0
    %4725 = vmatprep.subr.mxu0 0.0
    %4726 = vmatpush1.msra.mxu0 0.0
    %4727 = vmatprep.subr.mxu0 0.0
    %4728 = vmatpush1.msra.mxu0 0.0
    %4729 = vmatprep.subr.mxu0 0.0
    %4730 = vmatpush1.msra.mxu0 0.0
    %4731 = vmatprep.subr.mxu0 0.0
    %4732 = vmatpush1.msra.mxu0 0.0
    %4733 = vmatprep.subr.mxu0 0.0
    %4734 = vmatpush1.msra.mxu0 0.0
    %4735 = vmatprep.mubr.f32.mxu0 0.0
    %4736 = vmatmul.mubr.f32.gmra.mrb[0].mxu0 %v4666
    %v4737 = vpop.f32.mrb[0].mxu0
    %v4738 = vadd.f32 0.0, %v4737
    %v4739 = vpop.f32.mrb[0].mxu0
    %4740 = vmatprep.mubr.f32.mxu0 0.0
    %4741 = vmatmul.mubr.f32.gmra.mrb[0].mxu0 %v4669
    %v4742 = vpop.f32.mrb[0].mxu0
    %v4743 = vadd.f32 0.0, %v4742
    %v4744 = vpop.f32.mrb[0].mxu0
    %4745 = vdwg.mxu0
    %v4746 = vmul.f32 %v4738, %v3629
    %v4747 = vmul.f32 %v4743, %v3631
    %4748 = vmatprep.subr.mxu0 0.0
    %4749 = vmatpush1.msra.mxu0 %v4746
    %4750 = vmatprep.subr.mxu0 0.0
    %4751 = vmatpush1.msra.mxu0 %v4747
    %4752 = vmatprep.subr.mxu0 0.0
    %4753 = vmatpush1.msra.mxu0 0.0
    %4754 = vmatprep.subr.mxu0 0.0
    %4755 = vmatpush1.msra.mxu0 0.0
    %4756 = vmatprep.subr.mxu0 0.0
    %4757 = vmatpush1.msra.mxu0 0.0
    %4758 = vmatprep.subr.mxu0 0.0
    %4759 = vmatpush1.msra.mxu0 0.0
    %4760 = vmatprep.subr.mxu0 0.0
    %4761 = vmatpush1.msra.mxu0 0.0
    %4762 = vmatprep.subr.mxu0 0.0
    %4763 = vmatpush1.msra.mxu0 0.0
    %4764 = vmatprep.subr.mxu0 0.0
    %4765 = vmatpush1.msra.mxu0 0.0
    %4766 = vmatprep.subr.mxu0 0.0
    %4767 = vmatpush1.msra.mxu0 0.0
    %4768 = vmatprep.subr.mxu0 0.0
    %4769 = vmatpush1.msra.mxu0 0.0
    %4770 = vmatprep.subr.mxu0 0.0
    %4771 = vmatpush1.msra.mxu0 0.0
    %4772 = vmatprep.subr.mxu0 0.0
    %4773 = vmatpush1.msra.mxu0 0.0
    %4774 = vmatprep.subr.mxu0 0.0
    %4775 = vmatpush1.msra.mxu0 0.0
    %4776 = vmatprep.subr.mxu0 0.0
    %4777 = vmatpush1.msra.mxu0 0.0
    %4778 = vmatprep.subr.mxu0 0.0
    %4779 = vmatpush1.msra.mxu0 0.0
    %4780 = vmatprep.subr.mxu0 0.0
    %4781 = vmatpush1.msra.mxu0 0.0
    %4782 = vmatprep.subr.mxu0 0.0
    %4783 = vmatpush1.msra.mxu0 0.0
    %4784 = vmatprep.subr.mxu0 0.0
    %4785 = vmatpush1.msra.mxu0 0.0
    %4786 = vmatprep.subr.mxu0 0.0
    %4787 = vmatpush1.msra.mxu0 0.0
    %4788 = vmatprep.subr.mxu0 0.0
    %4789 = vmatpush1.msra.mxu0 0.0
    %4790 = vmatprep.subr.mxu0 0.0
    %4791 = vmatpush1.msra.mxu0 0.0
    %4792 = vmatprep.subr.mxu0 0.0
    %4793 = vmatpush1.msra.mxu0 0.0
    %4794 = vmatprep.subr.mxu0 0.0
    %4795 = vmatpush1.msra.mxu0 0.0
    %4796 = vmatprep.subr.mxu0 0.0
    %4797 = vmatpush1.msra.mxu0 0.0
    %4798 = vmatprep.subr.mxu0 0.0
    %4799 = vmatpush1.msra.mxu0 0.0
    %4800 = vmatprep.subr.mxu0 0.0
    %4801 = vmatpush1.msra.mxu0 0.0
    %4802 = vmatprep.subr.mxu0 0.0
    %4803 = vmatpush1.msra.mxu0 0.0
    %4804 = vmatprep.subr.mxu0 0.0
    %4805 = vmatpush1.msra.mxu0 0.0
    %4806 = vmatprep.subr.mxu0 0.0
    %4807 = vmatpush1.msra.mxu0 0.0
    %4808 = vmatprep.subr.mxu0 0.0
    %4809 = vmatpush1.msra.mxu0 0.0
    %4810 = vmatprep.subr.mxu0 0.0
    %4811 = vmatpush1.msra.mxu0 0.0
    %4812 = vmatprep.mubr.f32.mxu0 0.0
    %4813 = vmatmul.mubr.f32.gmra.mrb[0].mxu0 %v3898
    %v4814 = vpop.f32.mrb[0].mxu0
    %v4815 = vadd.f32 0.0, %v4814
    %v4816 = vpop.f32.mrb[0].mxu0
    %4817 = vdwg.mxu0
    %v4819 = vsel %vm228, %v4815, 0
    %4821 = vmatprep.subr.mxu0 0.0
    %4822 = vmatpush1.msra.mxu0 %v3174
    %4823 = vmatprep.subr.mxu0 0.0
    %4824 = vmatpush1.msra.mxu0 %v3175
    %4825 = vmatprep.subr.mxu0 0.0
    %4826 = vmatpush1.msra.mxu0 %v3176
    %4827 = vmatprep.subr.mxu0 0.0
    %4828 = vmatpush1.msra.mxu0 %v3177
    %4829 = vmatprep.subr.mxu0 0.0
    %4830 = vmatpush1.msra.mxu0 0.0
    %4831 = vmatprep.subr.mxu0 0.0
    %4832 = vmatpush1.msra.mxu0 0.0
    %4833 = vmatprep.subr.mxu0 0.0
    %4834 = vmatpush1.msra.mxu0 0.0
    %4835 = vmatprep.subr.mxu0 0.0
    %4836 = vmatpush1.msra.mxu0 0.0
    %4837 = vmatprep.subr.mxu0 0.0
    %4838 = vmatpush1.msra.mxu0 0.0
    %4839 = vmatprep.subr.mxu0 0.0
    %4840 = vmatpush1.msra.mxu0 0.0
    %4841 = vmatprep.subr.mxu0 0.0
    %4842 = vmatpush1.msra.mxu0 0.0
    %4843 = vmatprep.subr.mxu0 0.0
    %4844 = vmatpush1.msra.mxu0 0.0
    %4845 = vmatprep.subr.mxu0 0.0
    %4846 = vmatpush1.msra.mxu0 0.0
    %4847 = vmatprep.subr.mxu0 0.0
    %4848 = vmatpush1.msra.mxu0 0.0
    %4849 = vmatprep.subr.mxu0 0.0
    %4850 = vmatpush1.msra.mxu0 0.0
    %4851 = vmatprep.subr.mxu0 0.0
    %4852 = vmatpush1.msra.mxu0 0.0
    %4853 = vmatprep.subr.mxu0 0.0
    %4854 = vmatpush1.msra.mxu0 0.0
    %4855 = vmatprep.subr.mxu0 0.0
    %4856 = vmatpush1.msra.mxu0 0.0
    %4857 = vmatprep.subr.mxu0 0.0
    %4858 = vmatpush1.msra.mxu0 0.0
    %4859 = vmatprep.subr.mxu0 0.0
    %4860 = vmatpush1.msra.mxu0 0.0
    %4861 = vmatprep.subr.mxu0 0.0
    %4862 = vmatpush1.msra.mxu0 0.0
    %4863 = vmatprep.subr.mxu0 0.0
    %4864 = vmatpush1.msra.mxu0 0.0
    %4865 = vmatprep.subr.mxu0 0.0
    %4866 = vmatpush1.msra.mxu0 0.0
    %4867 = vmatprep.subr.mxu0 0.0
    %4868 = vmatpush1.msra.mxu0 0.0
    %4869 = vmatprep.subr.mxu0 0.0
    %4870 = vmatpush1.msra.mxu0 0.0
    %4871 = vmatprep.subr.mxu0 0.0
    %4872 = vmatpush1.msra.mxu0 0.0
    %4873 = vmatprep.subr.mxu0 0.0
    %4874 = vmatpush1.msra.mxu0 0.0
    %4875 = vmatprep.subr.mxu0 0.0
    %4876 = vmatpush1.msra.mxu0 0.0
    %4877 = vmatprep.subr.mxu0 0.0
    %4878 = vmatpush1.msra.mxu0 0.0
    %4879 = vmatprep.subr.mxu0 0.0
    %4880 = vmatpush1.msra.mxu0 0.0
    %4881 = vmatprep.subr.mxu0 0.0
    %4882 = vmatpush1.msra.mxu0 0.0
    %4883 = vmatprep.subr.mxu0 0.0
    %4884 = vmatpush1.msra.mxu0 0.0
    %4885 = vmatprep.mubr.f32.mxu0 0.0
    %4886 = vmatmul.mubr.f32.gmra.mrb[0].mxu0 %v4819
    %v4887 = vpop.f32.mrb[0].mxu0
    %v4888 = vadd.f32 %v3973, %v4887
    %v4889 = vpop.f32.mrb[0].mxu0
    %4890 = vdwg.mxu0
    %v4891 = vsel %vm3515, %v4888, 0.0
    %4892 = vadd.xlane.f32.xlu0 %v4891
    %v4893 = vpop.xlane.xlu0 %4892
    %v4894 = vmul.f32 %v4893, %v3519
    %v4895 = vsub.f32 %v4888, %v4894
    %v4896 = vmul.f32 %v4895, %v4895
    %v4897 = vsel %vm3515, %v4896, 0.0
    %4898 = vadd.xlane.f32.xlu0 %v4897
    %v4899 = vpop.xlane.xlu0 %4898
    %v4900 = vmul.f32 %v4899, %v3519
    %v4901 = vadd.f32 %v4900, 1e-05
    %v4902 = vrsqrt.pop %v4901
    %v4903 = vmul.f32 %v4895, %v4902
    %v4904 = vmul.f32 %v4903, %v4063
    %v4905 = vadd.f32 %v4904, %v4068
    %4906 = vst.msk [vmem:[#allocation4 + $0x2] sm:$0x3] %vm3515, %v4905
    %s4907 = scalar_lea.vmem %s2, 4
    %v4908 = vld [vmem:[%s4907] sm:$0x3]
    %v4910 = vsel %vm2821, %v4908, 0
    %4912 = vmatprep.subr.mxu0 0.0
    %4913 = vmatpush1.msra.mxu0 %v3187
    %4914 = vmatprep.subr.mxu0 0.0
    %4915 = vmatpush1.msra.mxu0 0.0
    %4916 = vmatprep.subr.mxu0 0.0
    %4917 = vmatpush1.msra.mxu0 0.0
    %4918 = vmatprep.subr.mxu0 0.0
    %4919 = vmatpush1.msra.mxu0 0.0
    %4920 = vmatprep.subr.mxu0 0.0
    %4921 = vmatpush1.msra.mxu0 0.0
    %4922 = vmatprep.subr.mxu0 0.0
    %4923 = vmatpush1.msra.mxu0 0.0
    %4924 = vmatprep.subr.mxu0 0.0
    %4925 = vmatpush1.msra.mxu0 0.0
    %4926 = vmatprep.subr.mxu0 0.0
    %4927 = vmatpush1.msra.mxu0 0.0
    %4928 = vmatprep.subr.mxu0 0.0
    %4929 = vmatpush1.msra.mxu0 0.0
    %4930 = vmatprep.subr.mxu0 0.0
    %4931 = vmatpush1.msra.mxu0 0.0
    %4932 = vmatprep.subr.mxu0 0.0
    %4933 = vmatpush1.msra.mxu0 0.0
    %4934 = vmatprep.subr.mxu0 0.0
    %4935 = vmatpush1.msra.mxu0 0.0
    %4936 = vmatprep.subr.mxu0 0.0
    %4937 = vmatpush1.msra.mxu0 0.0
    %4938 = vmatprep.subr.mxu0 0.0
    %4939 = vmatpush1.msra.mxu0 0.0
    %4940 = vmatprep.subr.mxu0 0.0
    %4941 = vmatpush1.msra.mxu0 0.0
    %4942 = vmatprep.subr.mxu0 0.0
    %4943 = vmatpush1.msra.mxu0 0.0
    %4944 = vmatprep.subr.mxu0 0.0
    %4945 = vmatpush1.msra.mxu0 0.0
    %4946 = vmatprep.subr.mxu0 0.0
    %4947 = vmatpush1.msra.mxu0 0.0
    %4948 = vmatprep.subr.mxu0 0.0
    %4949 = vmatpush1.msra.mxu0 0.0
    %4950 = vmatprep.subr.mxu0 0.0
    %4951 = vmatpush1.msra.mxu0 0.0
    %4952 = vmatprep.subr.mxu0 0.0
    %4953 = vmatpush1.msra.mxu0 0.0
    %4954 = vmatprep.subr.mxu0 0.0
    %4955 = vmatpush1.msra.mxu0 0.0
    %4956 = vmatprep.subr.mxu0 0.0
    %4957 = vmatpush1.msra.mxu0 0.0
    %4958 = vmatprep.subr.mxu0 0.0
    %4959 = vmatpush1.msra.mxu0 0.0
    %4960 = vmatprep.subr.mxu0 0.0
    %4961 = vmatpush1.msra.mxu0 0.0
    %4962 = vmatprep.subr.mxu0 0.0
    %4963 = vmatpush1.msra.mxu0 0.0
    %4964 = vmatprep.subr.mxu0 0.0
    %4965 = vmatpush1.msra.mxu0 0.0
    %4966 = vmatprep.subr.mxu0 0.0
    %4967 = vmatpush1.msra.mxu0 0.0
    %4968 = vmatprep.subr.mxu0 0.0
    %4969 = vmatpush1.msra.mxu0 0.0
    %4970 = vmatprep.subr.mxu0 0.0
    %4971 = vmatpush1.msra.mxu0 0.0
    %4972 = vmatprep.subr.mxu0 0.0
    %4973 = vmatpush1.msra.mxu0 0.0
    %4974 = vmatprep.subr.mxu0 0.0
    %4975 = vmatpush1.msra.mxu0 0.0
    %4976 = vmatprep.mubr.f32.mxu0 0.0
    %4977 = vmatmul.mubr.f32.gmra.mrb[0].mxu0 %v4910
    %v4978 = vpop.f32.mrb[0].mxu0
    %v4979 = vadd.f32 0.0, %v4978
    %v4980 = vpop.f32.mrb[0].mxu0
    %4981 = vdwg.mxu0
    %v4983 = vsel %vm228, %v4905, 0
    %4985 = vmatprep.subr.mxu0 0.0
    %4986 = vmatpush1.msra.mxu0 %v3154
    %4987 = vmatprep.subr.mxu0 0.0
    %4988 = vmatpush1.msra.mxu0 %v3155
    %4989 = vmatprep.subr.mxu0 0.0
    %4990 = vmatpush1.msra.mxu0 %v3156
    %4991 = vmatprep.subr.mxu0 0.0
    %4992 = vmatpush1.msra.mxu0 %v3157
    %4993 = vmatprep.subr.mxu0 0.0
    %4994 = vmatpush1.msra.mxu0 0.0
    %4995 = vmatprep.subr.mxu0 0.0
    %4996 = vmatpush1.msra.mxu0 0.0
    %4997 = vmatprep.subr.mxu0 0.0
    %4998 = vmatpush1.msra.mxu0 0.0
    %4999 = vmatprep.subr.mxu0 0.0
    %5000 = vmatpush1.msra.mxu0 0.0
    %5001 = vmatprep.subr.mxu0 0.0
    %5002 = vmatpush1.msra.mxu0 0.0
    %5003 = vmatprep.subr.mxu0 0.0
    %5004 = vmatpush1.msra.mxu0 0.0
    %5005 = vmatprep.subr.mxu0 0.0
    %5006 = vmatpush1.msra.mxu0 0.0
    %5007 = vmatprep.subr.mxu0 0.0
    %5008 = vmatpush1.msra.mxu0 0.0
    %5009 = vmatprep.subr.mxu0 0.0
    %5010 = vmatpush1.msra.mxu0 0.0
    %5011 = vmatprep.subr.mxu0 0.0
    %5012 = vmatpush1.msra.mxu0 0.0
    %5013 = vmatprep.subr.mxu0 0.0
    %5014 = vmatpush1.msra.mxu0 0.0
    %5015 = vmatprep.subr.mxu0 0.0
    %5016 = vmatpush1.msra.mxu0 0.0
    %5017 = vmatprep.subr.mxu0 0.0
    %5018 = vmatpush1.msra.mxu0 0.0
    %5019 = vmatprep.subr.mxu0 0.0
    %5020 = vmatpush1.msra.mxu0 0.0
    %5021 = vmatprep.subr.mxu0 0.0
    %5022 = vmatpush1.msra.mxu0 0.0
    %5023 = vmatprep.subr.mxu0 0.0
    %5024 = vmatpush1.msra.mxu0 0.0
    %5025 = vmatprep.subr.mxu0 0.0
    %5026 = vmatpush1.msra.mxu0 0.0
    %5027 = vmatprep.subr.mxu0 0.0
    %5028 = vmatpush1.msra.mxu0 0.0
    %5029 = vmatprep.subr.mxu0 0.0
    %5030 = vmatpush1.msra.mxu0 0.0
    %5031 = vmatprep.subr.mxu0 0.0
    %5032 = vmatpush1.msra.mxu0 0.0
    %5033 = vmatprep.subr.mxu0 0.0
    %5034 = vmatpush1.msra.mxu0 0.0
    %5035 = vmatprep.subr.mxu0 0.0
    %5036 = vmatpush1.msra.mxu0 0.0
    %5037 = vmatprep.subr.mxu0 0.0
    %5038 = vmatpush1.msra.mxu0 0.0
    %5039 = vmatprep.subr.mxu0 0.0
    %5040 = vmatpush1.msra.mxu0 0.0
    %5041 = vmatprep.subr.mxu0 0.0
    %5042 = vmatpush1.msra.mxu0 0.0
    %5043 = vmatprep.subr.mxu0 0.0
    %5044 = vmatpush1.msra.mxu0 0.0
    %5045 = vmatprep.subr.mxu0 0.0
    %5046 = vmatpush1.msra.mxu0 0.0
    %5047 = vmatprep.subr.mxu0 0.0
    %5048 = vmatpush1.msra.mxu0 0.0
    %5049 = vmatprep.mubr.f32.mxu0 0.0
    %5050 = vmatmul.mubr.f32.gmra.mrb[0].mxu0 %v4983
    %v5051 = vpop.f32.mrb[0].mxu0
    %v5052 = vadd.f32 %v4979, %v5051
    %v5053 = vpop.f32.mrb[0].mxu0
    %5054 = vdwg.mxu0
    %v5055 = vadd.f32 %v5052, %v3332
    %v5056 = vxor.u32 %v5055, 2147483648
    %v5057 = vmul.f32 %v5056, 1.442695
    %v5058 = vpow.pop %v5057
    %v5059 = vadd.f32 %v5058, 1.0
    %v5060 = vrcp.pop %v5059
    %v5061 = vmul.f32 1.0, %v5060
    %v5062 = vtanh.pop %v5055
    %v5063 = vmul.f32 %v5061, %v4237
    %5065 = vrot.lane.b32.xlu0 %v5062, 32
    %v5066 = vpop.permute.xlu0 %5065
    %v5068 = vmul.f32 %v5061, %v5066
    %5070 = vrot.lane.b32.xlu0 %v5068, 32
    %v5071 = vpop.permute.xlu0 %5070
    %v5073 = vadd.f32 %v5063, %v5071
    %v5074 = vtanh.pop %v5073
    %5076 = vrot.lane.b32.xlu0 %v5074, 32
    %v5077 = vpop.permute.xlu0 %5076
    %v5079 = vmul.f32 %v5061, %v5077
    %s5080 = scalar_lea.vmem %s3, 4
    %v5081 = vld [vmem:[%s5080] sm:$0x3]
    %v5083 = vsel %vm2821, %v5081, 0
    %5085 = vmatprep.subr.mxu0 0.0
    %5086 = vmatpush1.msra.mxu0 %v3363
    %5087 = vmatprep.subr.mxu0 0.0
    %5088 = vmatpush1.msra.mxu0 0.0
    %5089 = vmatprep.subr.mxu0 0.0
    %5090 = vmatpush1.msra.mxu0 0.0
    %5091 = vmatprep.subr.mxu0 0.0
    %5092 = vmatpush1.msra.mxu0 0.0
    %5093 = vmatprep.subr.mxu0 0.0
    %5094 = vmatpush1.msra.mxu0 0.0
    %5095 = vmatprep.subr.mxu0 0.0
    %5096 = vmatpush1.msra.mxu0 0.0
    %5097 = vmatprep.subr.mxu0 0.0
    %5098 = vmatpush1.msra.mxu0 0.0
    %5099 = vmatprep.subr.mxu0 0.0
    %5100 = vmatpush1.msra.mxu0 0.0
    %5101 = vmatprep.subr.mxu0 0.0
    %5102 = vmatpush1.msra.mxu0 0.0
    %5103 = vmatprep.subr.mxu0 0.0
    %5104 = vmatpush1.msra.mxu0 0.0
    %5105 = vmatprep.subr.mxu0 0.0
    %5106 = vmatpush1.msra.mxu0 0.0
    %5107 = vmatprep.subr.mxu0 0.0
    %5108 = vmatpush1.msra.mxu0 0.0
    %5109 = vmatprep.subr.mxu0 0.0
    %5110 = vmatpush1.msra.mxu0 0.0
    %5111 = vmatprep.subr.mxu0 0.0
    %5112 = vmatpush1.msra.mxu0 0.0
    %5113 = vmatprep.subr.mxu0 0.0
    %5114 = vmatpush1.msra.mxu0 0.0
    %5115 = vmatprep.subr.mxu0 0.0
    %5116 = vmatpush1.msra.mxu0 0.0
    %5117 = vmatprep.subr.mxu0 0.0
    %5118 = vmatpush1.msra.mxu0 0.0
    %5119 = vmatprep.subr.mxu0 0.0
    %5120 = vmatpush1.msra.mxu0 0.0
    %5121 = vmatprep.subr.mxu0 0.0
    %5122 = vmatpush1.msra.mxu0 0.0
    %5123 = vmatprep.subr.mxu0 0.0
    %5124 = vmatpush1.msra.mxu0 0.0
    %5125 = vmatprep.subr.mxu0 0.0
    %5126 = vmatpush1.msra.mxu0 0.0
    %5127 = vmatprep.subr.mxu0 0.0
    %5128 = vmatpush1.msra.mxu0 0.0
    %5129 = vmatprep.subr.mxu0 0.0
    %5130 = vmatpush1.msra.mxu0 0.0
    %5131 = vmatprep.subr.mxu0 0.0
    %5132 = vmatpush1.msra.mxu0 0.0
    %5133 = vmatprep.subr.mxu0 0.0
    %5134 = vmatpush1.msra.mxu0 0.0
    %5135 = vmatprep.subr.mxu0 0.0
    %5136 = vmatpush1.msra.mxu0 0.0
    %5137 = vmatprep.subr.mxu0 0.0
    %5138 = vmatpush1.msra.mxu0 0.0
    %5139 = vmatprep.subr.mxu0 0.0
    %5140 = vmatpush1.msra.mxu0 0.0
    %5141 = vmatprep.subr.mxu0 0.0
    %5142 = vmatpush1.msra.mxu0 0.0
    %5143 = vmatprep.subr.mxu0 0.0
    %5144 = vmatpush1.msra.mxu0 0.0
    %5145 = vmatprep.subr.mxu0 0.0
    %5146 = vmatpush1.msra.mxu0 0.0
    %5147 = vmatprep.subr.mxu0 0.0
    %5148 = vmatpush1.msra.mxu0 0.0
    %5149 = vmatprep.mubr.f32.mxu0 0.0
    %5150 = vmatmul.mubr.f32.gmra.mrb[0].mxu0 %v5083
    %v5151 = vpop.f32.mrb[0].mxu0
    %v5152 = vadd.f32 0.0, %v5151
    %v5153 = vpop.f32.mrb[0].mxu0
    %5154 = vdwg.mxu0
    %5156 = vrot.lane.b32.xlu0 %v5079, 64
    %v5157 = vpop.permute.xlu0 %5156
    %v5158 = vsel %vm228, %v5157, 0
    %5160 = vmatprep.subr.mxu0 0.0
    %5161 = vmatpush1.msra.mxu0 %v3159
    %5162 = vmatprep.subr.mxu0 0.0
    %5163 = vmatpush1.msra.mxu0 %v3160
    %5164 = vmatprep.subr.mxu0 0.0
    %5165 = vmatpush1.msra.mxu0 %v3161
    %5166 = vmatprep.subr.mxu0 0.0
    %5167 = vmatpush1.msra.mxu0 %v3162
    %5168 = vmatprep.subr.mxu0 0.0
    %5169 = vmatpush1.msra.mxu0 0.0
    %5170 = vmatprep.subr.mxu0 0.0
    %5171 = vmatpush1.msra.mxu0 0.0
    %5172 = vmatprep.subr.mxu0 0.0
    %5173 = vmatpush1.msra.mxu0 0.0
    %5174 = vmatprep.subr.mxu0 0.0
    %5175 = vmatpush1.msra.mxu0 0.0
    %5176 = vmatprep.subr.mxu0 0.0
    %5177 = vmatpush1.msra.mxu0 0.0
    %5178 = vmatprep.subr.mxu0 0.0
    %5179 = vmatpush1.msra.mxu0 0.0
    %5180 = vmatprep.subr.mxu0 0.0
    %5181 = vmatpush1.msra.mxu0 0.0
    %5182 = vmatprep.subr.mxu0 0.0
    %5183 = vmatpush1.msra.mxu0 0.0
    %5184 = vmatprep.subr.mxu0 0.0
    %5185 = vmatpush1.msra.mxu0 0.0
    %5186 = vmatprep.subr.mxu0 0.0
    %5187 = vmatpush1.msra.mxu0 0.0
    %5188 = vmatprep.subr.mxu0 0.0
    %5189 = vmatpush1.msra.mxu0 0.0
    %5190 = vmatprep.subr.mxu0 0.0
    %5191 = vmatpush1.msra.mxu0 0.0
    %5192 = vmatprep.subr.mxu0 0.0
    %5193 = vmatpush1.msra.mxu0 0.0
    %5194 = vmatprep.subr.mxu0 0.0
    %5195 = vmatpush1.msra.mxu0 0.0
    %5196 = vmatprep.subr.mxu0 0.0
    %5197 = vmatpush1.msra.mxu0 0.0
    %5198 = vmatprep.subr.mxu0 0.0
    %5199 = vmatpush1.msra.mxu0 0.0
    %5200 = vmatprep.subr.mxu0 0.0
    %5201 = vmatpush1.msra.mxu0 0.0
    %5202 = vmatprep.subr.mxu0 0.0
    %5203 = vmatpush1.msra.mxu0 0.0
    %5204 = vmatprep.subr.mxu0 0.0
    %5205 = vmatpush1.msra.mxu0 0.0
    %5206 = vmatprep.subr.mxu0 0.0
    %5207 = vmatpush1.msra.mxu0 0.0
    %5208 = vmatprep.subr.mxu0 0.0
    %5209 = vmatpush1.msra.mxu0 0.0
    %5210 = vmatprep.subr.mxu0 0.0
    %5211 = vmatpush1.msra.mxu0 0.0
    %5212 = vmatprep.subr.mxu0 0.0
    %5213 = vmatpush1.msra.mxu0 0.0
    %5214 = vmatprep.subr.mxu0 0.0
    %5215 = vmatpush1.msra.mxu0 0.0
    %5216 = vmatprep.subr.mxu0 0.0
    %5217 = vmatpush1.msra.mxu0 0.0
    %5218 = vmatprep.subr.mxu0 0.0
    %5219 = vmatpush1.msra.mxu0 0.0
    %5220 = vmatprep.subr.mxu0 0.0
    %5221 = vmatpush1.msra.mxu0 0.0
    %5222 = vmatprep.subr.mxu0 0.0
    %5223 = vmatpush1.msra.mxu0 0.0
    %5224 = vmatprep.mubr.f32.mxu0 0.0
    %5225 = vmatmul.mubr.f32.gmra.mrb[0].mxu0 %v5158
    %v5226 = vpop.f32.mrb[0].mxu0
    %v5227 = vadd.f32 %v5152, %v5226
    %v5228 = vpop.f32.mrb[0].mxu0
    %5229 = vdwg.mxu0
    %v5230 = vadd.f32 %v5227, %v3513
    %v5231 = vsel %vm3515, %v5230, 0.0
    %5232 = vadd.xlane.f32.xlu0 %v5231
    %v5233 = vpop.xlane.xlu0 %5232
    %v5234 = vmul.f32 %v5233, %v3519
    %v5235 = vsub.f32 %v5230, %v5234
    %v5236 = vmul.f32 %v5235, %v5235
    %v5237 = vsel %vm3515, %v5236, 0.0
    %5238 = vadd.xlane.f32.xlu0 %v5237
    %v5239 = vpop.xlane.xlu0 %5238
    %v5240 = vmul.f32 %v5239, %v3519
    %v5241 = vadd.f32 %v5240, 1e-05
    %v5242 = vrsqrt.pop %v5241
    %v5243 = vmul.f32 %v5235, %v5242
    %v5244 = vmul.f32 %v5243, %v3533
    %v5245 = vadd.f32 %v5244, %v3538
    %v5247 = vsel %vm3547, %v5245, 0
    %5249 = vmatprep.subr.mxu0 0.0
    %5250 = vmatpush1.msra.mxu0 %v5247
    %5251 = vmatprep.subr.mxu0 0.0
    %5252 = vmatpush1.msra.mxu0 0.0
    %5253 = vmatprep.subr.mxu0 0.0
    %5254 = vmatpush1.msra.mxu0 0.0
    %5255 = vmatprep.subr.mxu0 0.0
    %5256 = vmatpush1.msra.mxu0 0.0
    %5257 = vmatprep.subr.mxu0 0.0
    %5258 = vmatpush1.msra.mxu0 0.0
    %5259 = vmatprep.subr.mxu0 0.0
    %5260 = vmatpush1.msra.mxu0 0.0
    %5261 = vmatprep.subr.mxu0 0.0
    %5262 = vmatpush1.msra.mxu0 0.0
    %5263 = vmatprep.subr.mxu0 0.0
    %5264 = vmatpush1.msra.mxu0 0.0
    %5265 = vmatprep.subr.mxu0 0.0
    %5266 = vmatpush1.msra.mxu0 0.0
    %5267 = vmatprep.subr.mxu0 0.0
    %5268 = vmatpush1.msra.mxu0 0.0
    %5269 = vmatprep.subr.mxu0 0.0
    %5270 = vmatpush1.msra.mxu0 0.0
    %5271 = vmatprep.subr.mxu0 0.0
    %5272 = vmatpush1.msra.mxu0 0.0
    %5273 = vmatprep.subr.mxu0 0.0
    %5274 = vmatpush1.msra.mxu0 0.0
    %5275 = vmatprep.subr.mxu0 0.0
    %5276 = vmatpush1.msra.mxu0 0.0
    %5277 = vmatprep.subr.mxu0 0.0
    %5278 = vmatpush1.msra.mxu0 0.0
    %5279 = vmatprep.subr.mxu0 0.0
    %5280 = vmatpush1.msra.mxu0 0.0
    %5281 = vmatprep.subr.mxu0 0.0
    %5282 = vmatpush1.msra.mxu0 0.0
    %5283 = vmatprep.subr.mxu0 0.0
    %5284 = vmatpush1.msra.mxu0 0.0
    %5285 = vmatprep.subr.mxu0 0.0
    %5286 = vmatpush1.msra.mxu0 0.0
    %5287 = vmatprep.subr.mxu0 0.0
    %5288 = vmatpush1.msra.mxu0 0.0
    %5289 = vmatprep.subr.mxu0 0.0
    %5290 = vmatpush1.msra.mxu0 0.0
    %5291 = vmatprep.subr.mxu0 0.0
    %5292 = vmatpush1.msra.mxu0 0.0
    %5293 = vmatprep.subr.mxu0 0.0
    %5294 = vmatpush1.msra.mxu0 0.0
    %5295 = vmatprep.subr.mxu0 0.0
    %5296 = vmatpush1.msra.mxu0 0.0
    %5297 = vmatprep.subr.mxu0 0.0
    %5298 = vmatpush1.msra.mxu0 0.0
    %5299 = vmatprep.subr.mxu0 0.0
    %5300 = vmatpush1.msra.mxu0 0.0
    %5301 = vmatprep.subr.mxu0 0.0
    %5302 = vmatpush1.msra.mxu0 0.0
    %5303 = vmatprep.subr.mxu0 0.0
    %5304 = vmatpush1.msra.mxu0 0.0
    %5305 = vmatprep.subr.mxu0 0.0
    %5306 = vmatpush1.msra.mxu0 0.0
    %5307 = vmatprep.subr.mxu0 0.0
    %5308 = vmatpush1.msra.mxu0 0.0
    %5309 = vmatprep.subr.mxu0 0.0
    %5310 = vmatpush1.msra.mxu0 0.0
    %5311 = vmatprep.subr.mxu0 0.0
    %5312 = vmatpush1.msra.mxu0 0.0
    %5313 = vmatprep.mubr.f32.mxu0 0.0
    %5314 = vmatmul.mubr.f32.gmra.mrb[0].mxu0 %v3542
    %v5315 = vpop.f32.mrb[0].mxu0
    %v5316 = vadd.f32 0.0, %v5315
    %v5317 = vpop.f32.mrb[0].mxu0
    %5318 = vmatprep.mubr.f32.mxu0 0.0
    %5319 = vmatmul.mubr.f32.gmra.mrb[0].mxu0 %v3545
    %v5320 = vpop.f32.mrb[0].mxu0
    %v5321 = vadd.f32 0.0, %v5320
    %v5322 = vpop.f32.mrb[0].mxu0
    %5323 = vdwg.mxu0
    %v5324 = vmul.f32 %v5316, %v3629
    %v5325 = vmul.f32 %v5321, %v3631
    %v5327 = vsel %vm228, %v5324, 0
    %v5330 = vsel %vm228, %v5325, 0
    %5332 = vmatprep.subr.mxu0 0.0
    %5333 = vmatpush1.msra.mxu0 %v3169
    %5334 = vmatprep.subr.mxu0 0.0
    %5335 = vmatpush1.msra.mxu0 %v3170
    %5336 = vmatprep.subr.mxu0 0.0
    %5337 = vmatpush1.msra.mxu0 %v3171
    %5338 = vmatprep.subr.mxu0 0.0
    %5339 = vmatpush1.msra.mxu0 %v3172
    %5340 = vmatprep.subr.mxu0 0.0
    %5341 = vmatpush1.msra.mxu0 0.0
    %5342 = vmatprep.subr.mxu0 0.0
    %5343 = vmatpush1.msra.mxu0 0.0
    %5344 = vmatprep.subr.mxu0 0.0
    %5345 = vmatpush1.msra.mxu0 0.0
    %5346 = vmatprep.subr.mxu0 0.0
    %5347 = vmatpush1.msra.mxu0 0.0
    %5348 = vmatprep.subr.mxu0 0.0
    %5349 = vmatpush1.msra.mxu0 0.0
    %5350 = vmatprep.subr.mxu0 0.0
    %5351 = vmatpush1.msra.mxu0 0.0
    %5352 = vmatprep.subr.mxu0 0.0
    %5353 = vmatpush1.msra.mxu0 0.0
    %5354 = vmatprep.subr.mxu0 0.0
    %5355 = vmatpush1.msra.mxu0 0.0
    %5356 = vmatprep.subr.mxu0 0.0
    %5357 = vmatpush1.msra.mxu0 0.0
    %5358 = vmatprep.subr.mxu0 0.0
    %5359 = vmatpush1.msra.mxu0 0.0
    %5360 = vmatprep.subr.mxu0 0.0
    %5361 = vmatpush1.msra.mxu0 0.0
    %5362 = vmatprep.subr.mxu0 0.0
    %5363 = vmatpush1.msra.mxu0 0.0
    %5364 = vmatprep.subr.mxu0 0.0
    %5365 = vmatpush1.msra.mxu0 0.0
    %5366 = vmatprep.subr.mxu0 0.0
    %5367 = vmatpush1.msra.mxu0 0.0
    %5368 = vmatprep.subr.mxu0 0.0
    %5369 = vmatpush1.msra.mxu0 0.0
    %5370 = vmatprep.subr.mxu0 0.0
    %5371 = vmatpush1.msra.mxu0 0.0
    %5372 = vmatprep.subr.mxu0 0.0
    %5373 = vmatpush1.msra.mxu0 0.0
    %5374 = vmatprep.subr.mxu0 0.0
    %5375 = vmatpush1.msra.mxu0 0.0
    %5376 = vmatprep.subr.mxu0 0.0
    %5377 = vmatpush1.msra.mxu0 0.0
    %5378 = vmatprep.subr.mxu0 0.0
    %5379 = vmatpush1.msra.mxu0 0.0
    %5380 = vmatprep.subr.mxu0 0.0
    %5381 = vmatpush1.msra.mxu0 0.0
    %5382 = vmatprep.subr.mxu0 0.0
    %5383 = vmatpush1.msra.mxu0 0.0
    %5384 = vmatprep.subr.mxu0 0.0
    %5385 = vmatpush1.msra.mxu0 0.0
    %5386 = vmatprep.subr.mxu0 0.0
    %5387 = vmatpush1.msra.mxu0 0.0
    %5388 = vmatprep.subr.mxu0 0.0
    %5389 = vmatpush1.msra.mxu0 0.0
    %5390 = vmatprep.subr.mxu0 0.0
    %5391 = vmatpush1.msra.mxu0 0.0
    %5392 = vmatprep.subr.mxu0 0.0
    %5393 = vmatpush1.msra.mxu0 0.0
    %5394 = vmatprep.subr.mxu0 0.0
    %5395 = vmatpush1.msra.mxu0 0.0
    %5396 = vmatprep.mubr.f32.mxu0 0.0
    %5397 = vmatmul.mubr.f32.gmra.mrb[0].mxu0 %v5327
    %v5398 = vpop.f32.mrb[0].mxu0
    %v5399 = vadd.f32 0.0, %v5398
    %v5400 = vpop.f32.mrb[0].mxu0
    %5401 = vmatprep.mubr.f32.mxu0 0.0
    %5402 = vmatmul.mubr.f32.gmra.mrb[0].mxu0 %v5330
    %v5403 = vpop.f32.mrb[0].mxu0
    %v5404 = vadd.f32 0.0, %v5403
    %v5405 = vpop.f32.mrb[0].mxu0
    %5406 = vdwg.mxu0
    %v5407 = vsel %vm2821, %v5399, -inf
    %v5408 = vsel %vm2821, %v5404, -inf
    %v5409 = vmax.f32 %v5407, %v5408
    %v5410 = vrot.slane %v5409, 4
    %v5411 = vmax.f32 %v5409, %v5410
    %v5412 = vrot.slane %v5411, 2
    %v5413 = vmax.f32 %v5411, %v5412
    %v5414 = vrot.slane %v5413, 1
    %v5415 = vmax.f32 %v5413, %v5414
    %v5416 = vsub.f32 %v5399, %v5415
    %v5417 = vsub.f32 %v5404, %v5415
    %v5418 = vmul.f32 %v5416, 1.442695
    %v5419 = vpow.pop %v5418
    %v5420 = vmul.f32 %v5417, 1.442695
    %v5421 = vpow.pop %v5420
    %5422 = vmatprep.subr.mxu0 0.0
    %5423 = vmatpush1.msra.mxu0 %v5419
    %5424 = vmatprep.subr.mxu0 0.0
    %5425 = vmatpush1.msra.mxu0 %v5421
    %5426 = vmatprep.subr.mxu0 0.0
    %5427 = vmatpush1.msra.mxu0 0.0
    %5428 = vmatprep.subr.mxu0 0.0
    %5429 = vmatpush1.msra.mxu0 0.0
    %5430 = vmatprep.subr.mxu0 0.0
    %5431 = vmatpush1.msra.mxu0 0.0
    %5432 = vmatprep.subr.mxu0 0.0
    %5433 = vmatpush1.msra.mxu0 0.0
    %5434 = vmatprep.subr.mxu0 0.0
    %5435 = vmatpush1.msra.mxu0 0.0
    %5436 = vmatprep.subr.mxu0 0.0
    %5437 = vmatpush1.msra.mxu0 0.0
    %5438 = vmatprep.subr.mxu0 0.0
    %5439 = vmatpush1.msra.mxu0 0.0
    %5440 = vmatprep.subr.mxu0 0.0
    %5441 = vmatpush1.msra.mxu0 0.0
    %5442 = vmatprep.subr.mxu0 0.0
    %5443 = vmatpush1.msra.mxu0 0.0
    %5444 = vmatprep.subr.mxu0 0.0
    %5445 = vmatpush1.msra.mxu0 0.0
    %5446 = vmatprep.subr.mxu0 0.0
    %5447 = vmatpush1.msra.mxu0 0.0
    %5448 = vmatprep.subr.mxu0 0.0
    %5449 = vmatpush1.msra.mxu0 0.0
    %5450 = vmatprep.subr.mxu0 0.0
    %5451 = vmatpush1.msra.mxu0 0.0
    %5452 = vmatprep.subr.mxu0 0.0
    %5453 = vmatpush1.msra.mxu0 0.0
    %5454 = vmatprep.subr.mxu0 0.0
    %5455 = vmatpush1.msra.mxu0 0.0
    %5456 = vmatprep.subr.mxu0 0.0
    %5457 = vmatpush1.msra.mxu0 0.0
    %5458 = vmatprep.subr.mxu0 0.0
    %5459 = vmatpush1.msra.mxu0 0.0
    %5460 = vmatprep.subr.mxu0 0.0
    %5461 = vmatpush1.msra.mxu0 0.0
    %5462 = vmatprep.subr.mxu0 0.0
    %5463 = vmatpush1.msra.mxu0 0.0
    %5464 = vmatprep.subr.mxu0 0.0
    %5465 = vmatpush1.msra.mxu0 0.0
    %5466 = vmatprep.subr.mxu0 0.0
    %5467 = vmatpush1.msra.mxu0 0.0
    %5468 = vmatprep.subr.mxu0 0.0
    %5469 = vmatpush1.msra.mxu0 0.0
    %5470 = vmatprep.subr.mxu0 0.0
    %5471 = vmatpush1.msra.mxu0 0.0
    %5472 = vmatprep.subr.mxu0 0.0
    %5473 = vmatpush1.msra.mxu0 0.0
    %5474 = vmatprep.subr.mxu0 0.0
    %5475 = vmatpush1.msra.mxu0 0.0
    %5476 = vmatprep.subr.mxu0 0.0
    %5477 = vmatpush1.msra.mxu0 0.0
    %5478 = vmatprep.subr.mxu0 0.0
    %5479 = vmatpush1.msra.mxu0 0.0
    %5480 = vmatprep.subr.mxu0 0.0
    %5481 = vmatpush1.msra.mxu0 0.0
    %5482 = vmatprep.subr.mxu0 0.0
    %5483 = vmatpush1.msra.mxu0 0.0
    %5484 = vmatprep.subr.mxu0 0.0
    %5485 = vmatpush1.msra.mxu0 0.0
    %5486 = vmatprep.mubr.f32.mxu0 0.0
    %5487 = vmatmul.mubr.f32.gmra.mrb[0].mxu0 %v2940
    %v5488 = vpop.f32.mrb[0].mxu0
    %v5489 = vadd.f32 0.0, %v5488
    %v5490 = vpop.f32.mrb[0].mxu0
    %5491 = vmatprep.mubr.f32.mxu0 0.0
    %5492 = vmatmul.mubr.f32.gmra.mrb[0].mxu0 %v2943
    %v5493 = vpop.f32.mrb[0].mxu0
    %v5494 = vadd.f32 0.0, %v5493
    %v5495 = vpop.f32.mrb[0].mxu0
    %5496 = vdwg.mxu0
    %v5497 = vrcp.pop %v5489
    %v5498 = vmul.f32 %v5419, %v5497
    %v5499 = vrcp.pop %v5494
    %v5500 = vmul.f32 %v5421, %v5499
    %v5502 = vsel %vm2821, %v5498, 0
    %v5505 = vsel %vm2821, %v5500, 0
    %5507 = vmatprep.subr.mxu0 0.0
    %5508 = vmatpush1.msra.mxu0 %v3818
    %5509 = vmatprep.subr.mxu0 0.0
    %5510 = vmatpush1.msra.mxu0 0.0
    %5511 = vmatprep.subr.mxu0 0.0
    %5512 = vmatpush1.msra.mxu0 0.0
    %5513 = vmatprep.subr.mxu0 0.0
    %5514 = vmatpush1.msra.mxu0 0.0
    %5515 = vmatprep.subr.mxu0 0.0
    %5516 = vmatpush1.msra.mxu0 0.0
    %5517 = vmatprep.subr.mxu0 0.0
    %5518 = vmatpush1.msra.mxu0 0.0
    %5519 = vmatprep.subr.mxu0 0.0
    %5520 = vmatpush1.msra.mxu0 0.0
    %5521 = vmatprep.subr.mxu0 0.0
    %5522 = vmatpush1.msra.mxu0 0.0
    %5523 = vmatprep.subr.mxu0 0.0
    %5524 = vmatpush1.msra.mxu0 0.0
    %5525 = vmatprep.subr.mxu0 0.0
    %5526 = vmatpush1.msra.mxu0 0.0
    %5527 = vmatprep.subr.mxu0 0.0
    %5528 = vmatpush1.msra.mxu0 0.0
    %5529 = vmatprep.subr.mxu0 0.0
    %5530 = vmatpush1.msra.mxu0 0.0
    %5531 = vmatprep.subr.mxu0 0.0
    %5532 = vmatpush1.msra.mxu0 0.0
    %5533 = vmatprep.subr.mxu0 0.0
    %5534 = vmatpush1.msra.mxu0 0.0
    %5535 = vmatprep.subr.mxu0 0.0
    %5536 = vmatpush1.msra.mxu0 0.0
    %5537 = vmatprep.subr.mxu0 0.0
    %5538 = vmatpush1.msra.mxu0 0.0
    %5539 = vmatprep.subr.mxu0 0.0
    %5540 = vmatpush1.msra.mxu0 0.0
    %5541 = vmatprep.subr.mxu0 0.0
    %5542 = vmatpush1.msra.mxu0 0.0
    %5543 = vmatprep.subr.mxu0 0.0
    %5544 = vmatpush1.msra.mxu0 0.0
    %5545 = vmatprep.subr.mxu0 0.0
    %5546 = vmatpush1.msra.mxu0 0.0
    %5547 = vmatprep.subr.mxu0 0.0
    %5548 = vmatpush1.msra.mxu0 0.0
    %5549 = vmatprep.subr.mxu0 0.0
    %5550 = vmatpush1.msra.mxu0 0.0
    %5551 = vmatprep.subr.mxu0 0.0
    %5552 = vmatpush1.msra.mxu0 0.0
    %5553 = vmatprep.subr.mxu0 0.0
    %5554 = vmatpush1.msra.mxu0 0.0
    %5555 = vmatprep.subr.mxu0 0.0
    %5556 = vmatpush1.msra.mxu0 0.0
    %5557 = vmatprep.subr.mxu0 0.0
    %5558 = vmatpush1.msra.mxu0 0.0
    %5559 = vmatprep.subr.mxu0 0.0
    %5560 = vmatpush1.msra.mxu0 0.0
    %5561 = vmatprep.subr.mxu0 0.0
    %5562 = vmatpush1.msra.mxu0 0.0
    %5563 = vmatprep.subr.mxu0 0.0
    %5564 = vmatpush1.msra.mxu0 0.0
    %5565 = vmatprep.subr.mxu0 0.0
    %5566 = vmatpush1.msra.mxu0 0.0
    %5567 = vmatprep.subr.mxu0 0.0
    %5568 = vmatpush1.msra.mxu0 0.0
    %5569 = vmatprep.subr.mxu0 0.0
    %5570 = vmatpush1.msra.mxu0 0.0
    %5571 = vmatprep.mubr.f32.mxu0 0.0
    %5572 = vmatmul.mubr.f32.gmra.mrb[0].mxu0 %v5502
    %v5573 = vpop.f32.mrb[0].mxu0
    %v5574 = vadd.f32 0.0, %v5573
    %v5575 = vpop.f32.mrb[0].mxu0
    %5576 = vmatprep.mubr.f32.mxu0 0.0
    %5577 = vmatmul.mubr.f32.gmra.mrb[0].mxu0 %v5505
    %v5578 = vpop.f32.mrb[0].mxu0
    %v5579 = vadd.f32 0.0, %v5578
    %v5580 = vpop.f32.mrb[0].mxu0
    %5581 = vdwg.mxu0
    %v5582 = vmul.f32 %v5574, %v3629
    %v5583 = vmul.f32 %v5579, %v3631
    %5584 = vmatprep.subr.mxu0 0.0
    %5585 = vmatpush1.msra.mxu0 %v5582
    %5586 = vmatprep.subr.mxu0 0.0
    %5587 = vmatpush1.msra.mxu0 %v5583
    %5588 = vmatprep.subr.mxu0 0.0
    %5589 = vmatpush1.msra.mxu0 0.0
    %5590 = vmatprep.subr.mxu0 0.0
    %5591 = vmatpush1.msra.mxu0 0.0
    %5592 = vmatprep.subr.mxu0 0.0
    %5593 = vmatpush1.msra.mxu0 0.0
    %5594 = vmatprep.subr.mxu0 0.0
    %5595 = vmatpush1.msra.mxu0 0.0
    %5596 = vmatprep.subr.mxu0 0.0
    %5597 = vmatpush1.msra.mxu0 0.0
    %5598 = vmatprep.subr.mxu0 0.0
    %5599 = vmatpush1.msra.mxu0 0.0
    %5600 = vmatprep.subr.mxu0 0.0
    %5601 = vmatpush1.msra.mxu0 0.0
    %5602 = vmatprep.subr.mxu0 0.0
    %5603 = vmatpush1.msra.mxu0 0.0
    %5604 = vmatprep.subr.mxu0 0.0
    %5605 = vmatpush1.msra.mxu0 0.0
    %5606 = vmatprep.subr.mxu0 0.0
    %5607 = vmatpush1.msra.mxu0 0.0
    %5608 = vmatprep.subr.mxu0 0.0
    %5609 = vmatpush1.msra.mxu0 0.0
    %5610 = vmatprep.subr.mxu0 0.0
    %5611 = vmatpush1.msra.mxu0 0.0
    %5612 = vmatprep.subr.mxu0 0.0
    %5613 = vmatpush1.msra.mxu0 0.0
    %5614 = vmatprep.subr.mxu0 0.0
    %5615 = vmatpush1.msra.mxu0 0.0
    %5616 = vmatprep.subr.mxu0 0.0
    %5617 = vmatpush1.msra.mxu0 0.0
    %5618 = vmatprep.subr.mxu0 0.0
    %5619 = vmatpush1.msra.mxu0 0.0
    %5620 = vmatprep.subr.mxu0 0.0
    %5621 = vmatpush1.msra.mxu0 0.0
    %5622 = vmatprep.subr.mxu0 0.0
    %5623 = vmatpush1.msra.mxu0 0.0
    %5624 = vmatprep.subr.mxu0 0.0
    %5625 = vmatpush1.msra.mxu0 0.0
    %5626 = vmatprep.subr.mxu0 0.0
    %5627 = vmatpush1.msra.mxu0 0.0
    %5628 = vmatprep.subr.mxu0 0.0
    %5629 = vmatpush1.msra.mxu0 0.0
    %5630 = vmatprep.subr.mxu0 0.0
    %5631 = vmatpush1.msra.mxu0 0.0
    %5632 = vmatprep.subr.mxu0 0.0
    %5633 = vmatpush1.msra.mxu0 0.0
    %5634 = vmatprep.subr.mxu0 0.0
    %5635 = vmatpush1.msra.mxu0 0.0
    %5636 = vmatprep.subr.mxu0 0.0
    %5637 = vmatpush1.msra.mxu0 0.0
    %5638 = vmatprep.subr.mxu0 0.0
    %5639 = vmatpush1.msra.mxu0 0.0
    %5640 = vmatprep.subr.mxu0 0.0
    %5641 = vmatpush1.msra.mxu0 0.0
    %5642 = vmatprep.subr.mxu0 0.0
    %5643 = vmatpush1.msra.mxu0 0.0
    %5644 = vmatprep.subr.mxu0 0.0
    %5645 = vmatpush1.msra.mxu0 0.0
    %5646 = vmatprep.subr.mxu0 0.0
    %5647 = vmatpush1.msra.mxu0 0.0
    %5648 = vmatprep.mubr.f32.mxu0 0.0
    %5649 = vmatmul.mubr.f32.gmra.mrb[0].mxu0 %v3898
    %v5650 = vpop.f32.mrb[0].mxu0
    %v5651 = vadd.f32 0.0, %v5650
    %v5652 = vpop.f32.mrb[0].mxu0
    %5653 = vdwg.mxu0
    %v5655 = vsel %vm228, %v5651, 0
    %5657 = vmatprep.subr.mxu0 0.0
    %5658 = vmatpush1.msra.mxu0 %v3174
    %5659 = vmatprep.subr.mxu0 0.0
    %5660 = vmatpush1.msra.mxu0 %v3175
    %5661 = vmatprep.subr.mxu0 0.0
    %5662 = vmatpush1.msra.mxu0 %v3176
    %5663 = vmatprep.subr.mxu0 0.0
    %5664 = vmatpush1.msra.mxu0 %v3177
    %5665 = vmatprep.subr.mxu0 0.0
    %5666 = vmatpush1.msra.mxu0 0.0
    %5667 = vmatprep.subr.mxu0 0.0
    %5668 = vmatpush1.msra.mxu0 0.0
    %5669 = vmatprep.subr.mxu0 0.0
    %5670 = vmatpush1.msra.mxu0 0.0
    %5671 = vmatprep.subr.mxu0 0.0
    %5672 = vmatpush1.msra.mxu0 0.0
    %5673 = vmatprep.subr.mxu0 0.0
    %5674 = vmatpush1.msra.mxu0 0.0
    %5675 = vmatprep.subr.mxu0 0.0
    %5676 = vmatpush1.msra.mxu0 0.0
    %5677 = vmatprep.subr.mxu0 0.0
    %5678 = vmatpush1.msra.mxu0 0.0
    %5679 = vmatprep.subr.mxu0 0.0
    %5680 = vmatpush1.msra.mxu0 0.0
    %5681 = vmatprep.subr.mxu0 0.0
    %5682 = vmatpush1.msra.mxu0 0.0
    %5683 = vmatprep.subr.mxu0 0.0
    %5684 = vmatpush1.msra.mxu0 0.0
    %5685 = vmatprep.subr.mxu0 0.0
    %5686 = vmatpush1.msra.mxu0 0.0
    %5687 = vmatprep.subr.mxu0 0.0
    %5688 = vmatpush1.msra.mxu0 0.0
    %5689 = vmatprep.subr.mxu0 0.0
    %5690 = vmatpush1.msra.mxu0 0.0
    %5691 = vmatprep.subr.mxu0 0.0
    %5692 = vmatpush1.msra.mxu0 0.0
    %5693 = vmatprep.subr.mxu0 0.0
    %5694 = vmatpush1.msra.mxu0 0.0
    %5695 = vmatprep.subr.mxu0 0.0
    %5696 = vmatpush1.msra.mxu0 0.0
    %5697 = vmatprep.subr.mxu0 0.0
    %5698 = vmatpush1.msra.mxu0 0.0
    %5699 = vmatprep.subr.mxu0 0.0
    %5700 = vmatpush1.msra.mxu0 0.0
    %5701 = vmatprep.subr.mxu0 0.0
    %5702 = vmatpush1.msra.mxu0 0.0
    %5703 = vmatprep.subr.mxu0 0.0
    %5704 = vmatpush1.msra.mxu0 0.0
    %5705 = vmatprep.subr.mxu0 0.0
    %5706 = vmatpush1.msra.mxu0 0.0
    %5707 = vmatprep.subr.mxu0 0.0
    %5708 = vmatpush1.msra.mxu0 0.0
    %5709 = vmatprep.subr.mxu0 0.0
    %5710 = vmatpush1.msra.mxu0 0.0
    %5711 = vmatprep.subr.mxu0 0.0
    %5712 = vmatpush1.msra.mxu0 0.0
    %5713 = vmatprep.subr.mxu0 0.0
    %5714 = vmatpush1.msra.mxu0 0.0
    %5715 = vmatprep.subr.mxu0 0.0
    %5716 = vmatpush1.msra.mxu0 0.0
    %5717 = vmatprep.subr.mxu0 0.0
    %5718 = vmatpush1.msra.mxu0 0.0
    %5719 = vmatprep.subr.mxu0 0.0
    %5720 = vmatpush1.msra.mxu0 0.0
    %5721 = vmatprep.mubr.f32.mxu0 0.0
    %5722 = vmatmul.mubr.f32.gmra.mrb[0].mxu0 %v5655
    %v5723 = vpop.f32.mrb[0].mxu0
    %v5724 = vadd.f32 %v3973, %v5723
    %v5725 = vpop.f32.mrb[0].mxu0
    %5726 = vdwg.mxu0
    %v5727 = vsel %vm3515, %v5724, 0.0
    %5728 = vadd.xlane.f32.xlu0 %v5727
    %v5729 = vpop.xlane.xlu0 %5728
    %v5730 = vmul.f32 %v5729, %v3519
    %v5731 = vsub.f32 %v5724, %v5730
    %v5732 = vmul.f32 %v5731, %v5731
    %v5733 = vsel %vm3515, %v5732, 0.0
    %5734 = vadd.xlane.f32.xlu0 %v5733
    %v5735 = vpop.xlane.xlu0 %5734
    %v5736 = vmul.f32 %v5735, %v3519
    %v5737 = vadd.f32 %v5736, 1e-05
    %v5738 = vrsqrt.pop %v5737
    %v5739 = vmul.f32 %v5731, %v5738
    %v5740 = vmul.f32 %v5739, %v4063
    %v5741 = vadd.f32 %v5740, %v4068
    %5742 = vst.msk [vmem:[#allocation4 + $0x4] sm:$0x3] %vm3515, %v5741
    %s5743 = scalar_lea.vmem %s2, 6
    %v5744 = vld [vmem:[%s5743] sm:$0x3]
    %v5746 = vsel %vm2821, %v5744, 0
    %5748 = vmatprep.subr.mxu0 0.0
    %5749 = vmatpush1.msra.mxu0 %v3187
    %5750 = vmatprep.subr.mxu0 0.0
    %5751 = vmatpush1.msra.mxu0 0.0
    %5752 = vmatprep.subr.mxu0 0.0
    %5753 = vmatpush1.msra.mxu0 0.0
    %5754 = vmatprep.subr.mxu0 0.0
    %5755 = vmatpush1.msra.mxu0 0.0
    %5756 = vmatprep.subr.mxu0 0.0
    %5757 = vmatpush1.msra.mxu0 0.0
    %5758 = vmatprep.subr.mxu0 0.0
    %5759 = vmatpush1.msra.mxu0 0.0
    %5760 = vmatprep.subr.mxu0 0.0
    %5761 = vmatpush1.msra.mxu0 0.0
    %5762 = vmatprep.subr.mxu0 0.0
    %5763 = vmatpush1.msra.mxu0 0.0
    %5764 = vmatprep.subr.mxu0 0.0
    %5765 = vmatpush1.msra.mxu0 0.0
    %5766 = vmatprep.subr.mxu0 0.0
    %5767 = vmatpush1.msra.mxu0 0.0
    %5768 = vmatprep.subr.mxu0 0.0
    %5769 = vmatpush1.msra.mxu0 0.0
    %5770 = vmatprep.subr.mxu0 0.0
    %5771 = vmatpush1.msra.mxu0 0.0
    %5772 = vmatprep.subr.mxu0 0.0
    %5773 = vmatpush1.msra.mxu0 0.0
    %5774 = vmatprep.subr.mxu0 0.0
    %5775 = vmatpush1.msra.mxu0 0.0
    %5776 = vmatprep.subr.mxu0 0.0
    %5777 = vmatpush1.msra.mxu0 0.0
    %5778 = vmatprep.subr.mxu0 0.0
    %5779 = vmatpush1.msra.mxu0 0.0
    %5780 = vmatprep.subr.mxu0 0.0
    %5781 = vmatpush1.msra.mxu0 0.0
    %5782 = vmatprep.subr.mxu0 0.0
    %5783 = vmatpush1.msra.mxu0 0.0
    %5784 = vmatprep.subr.mxu0 0.0
    %5785 = vmatpush1.msra.mxu0 0.0
    %5786 = vmatprep.subr.mxu0 0.0
    %5787 = vmatpush1.msra.mxu0 0.0
    %5788 = vmatprep.subr.mxu0 0.0
    %5789 = vmatpush1.msra.mxu0 0.0
    %5790 = vmatprep.subr.mxu0 0.0
    %5791 = vmatpush1.msra.mxu0 0.0
    %5792 = vmatprep.subr.mxu0 0.0
    %5793 = vmatpush1.msra.mxu0 0.0
    %5794 = vmatprep.subr.mxu0 0.0
    %5795 = vmatpush1.msra.mxu0 0.0
    %5796 = vmatprep.subr.mxu0 0.0
    %5797 = vmatpush1.msra.mxu0 0.0
    %5798 = vmatprep.subr.mxu0 0.0
    %5799 = vmatpush1.msra.mxu0 0.0
    %5800 = vmatprep.subr.mxu0 0.0
    %5801 = vmatpush1.msra.mxu0 0.0
    %5802 = vmatprep.subr.mxu0 0.0
    %5803 = vmatpush1.msra.mxu0 0.0
    %5804 = vmatprep.subr.mxu0 0.0
    %5805 = vmatpush1.msra.mxu0 0.0
    %5806 = vmatprep.subr.mxu0 0.0
    %5807 = vmatpush1.msra.mxu0 0.0
    %5808 = vmatprep.subr.mxu0 0.0
    %5809 = vmatpush1.msra.mxu0 0.0
    %5810 = vmatprep.subr.mxu0 0.0
    %5811 = vmatpush1.msra.mxu0 0.0
    %5812 = vmatprep.mubr.f32.mxu0 0.0
    %5813 = vmatmul.mubr.f32.gmra.mrb[0].mxu0 %v5746
    %v5814 = vpop.f32.mrb[0].mxu0
    %v5815 = vadd.f32 0.0, %v5814
    %v5816 = vpop.f32.mrb[0].mxu0
    %5817 = vdwg.mxu0
    %v5819 = vsel %vm228, %v5741, 0
    %5821 = vmatprep.subr.mxu0 0.0
    %5822 = vmatpush1.msra.mxu0 %v3154
    %5823 = vmatprep.subr.mxu0 0.0
    %5824 = vmatpush1.msra.mxu0 %v3155
    %5825 = vmatprep.subr.mxu0 0.0
    %5826 = vmatpush1.msra.mxu0 %v3156
    %5827 = vmatprep.subr.mxu0 0.0
    %5828 = vmatpush1.msra.mxu0 %v3157
    %5829 = vmatprep.subr.mxu0 0.0
    %5830 = vmatpush1.msra.mxu0 0.0
    %5831 = vmatprep.subr.mxu0 0.0
    %5832 = vmatpush1.msra.mxu0 0.0
    %5833 = vmatprep.subr.mxu0 0.0
    %5834 = vmatpush1.msra.mxu0 0.0
    %5835 = vmatprep.subr.mxu0 0.0
    %5836 = vmatpush1.msra.mxu0 0.0
    %5837 = vmatprep.subr.mxu0 0.0
    %5838 = vmatpush1.msra.mxu0 0.0
    %5839 = vmatprep.subr.mxu0 0.0
    %5840 = vmatpush1.msra.mxu0 0.0
    %5841 = vmatprep.subr.mxu0 0.0
    %5842 = vmatpush1.msra.mxu0 0.0
    %5843 = vmatprep.subr.mxu0 0.0
    %5844 = vmatpush1.msra.mxu0 0.0
    %5845 = vmatprep.subr.mxu0 0.0
    %5846 = vmatpush1.msra.mxu0 0.0
    %5847 = vmatprep.subr.mxu0 0.0
    %5848 = vmatpush1.msra.mxu0 0.0
    %5849 = vmatprep.subr.mxu0 0.0
    %5850 = vmatpush1.msra.mxu0 0.0
    %5851 = vmatprep.subr.mxu0 0.0
    %5852 = vmatpush1.msra.mxu0 0.0
    %5853 = vmatprep.subr.mxu0 0.0
    %5854 = vmatpush1.msra.mxu0 0.0
    %5855 = vmatprep.subr.mxu0 0.0
    %5856 = vmatpush1.msra.mxu0 0.0
    %5857 = vmatprep.subr.mxu0 0.0
    %5858 = vmatpush1.msra.mxu0 0.0
    %5859 = vmatprep.subr.mxu0 0.0
    %5860 = vmatpush1.msra.mxu0 0.0
    %5861 = vmatprep.subr.mxu0 0.0
    %5862 = vmatpush1.msra.mxu0 0.0
    %5863 = vmatprep.subr.mxu0 0.0
    %5864 = vmatpush1.msra.mxu0 0.0
    %5865 = vmatprep.subr.mxu0 0.0
    %5866 = vmatpush1.msra.mxu0 0.0
    %5867 = vmatprep.subr.mxu0 0.0
    %5868 = vmatpush1.msra.mxu0 0.0
    %5869 = vmatprep.subr.mxu0 0.0
    %5870 = vmatpush1.msra.mxu0 0.0
    %5871 = vmatprep.subr.mxu0 0.0
    %5872 = vmatpush1.msra.mxu0 0.0
    %5873 = vmatprep.subr.mxu0 0.0
    %5874 = vmatpush1.msra.mxu0 0.0
    %5875 = vmatprep.subr.mxu0 0.0
    %5876 = vmatpush1.msra.mxu0 0.0
    %5877 = vmatprep.subr.mxu0 0.0
    %5878 = vmatpush1.msra.mxu0 0.0
    %5879 = vmatprep.subr.mxu0 0.0
    %5880 = vmatpush1.msra.mxu0 0.0
    %5881 = vmatprep.subr.mxu0 0.0
    %5882 = vmatpush1.msra.mxu0 0.0
    %5883 = vmatprep.subr.mxu0 0.0
    %5884 = vmatpush1.msra.mxu0 0.0
    %5885 = vmatprep.mubr.f32.mxu0 0.0
    %5886 = vmatmul.mubr.f32.gmra.mrb[0].mxu0 %v5819
    %v5887 = vpop.f32.mrb[0].mxu0
    %v5888 = vadd.f32 %v5815, %v5887
    %v5889 = vpop.f32.mrb[0].mxu0
    %5890 = vdwg.mxu0
    %v5891 = vadd.f32 %v5888, %v3332
    %v5892 = vxor.u32 %v5891, 2147483648
    %v5893 = vmul.f32 %v5892, 1.442695
    %v5894 = vpow.pop %v5893
    %v5895 = vadd.f32 %v5894, 1.0
    %v5896 = vrcp.pop %v5895
    %v5897 = vmul.f32 1.0, %v5896
    %v5898 = vtanh.pop %v5891
    %v5899 = vmul.f32 %v5897, %v5073
    %5901 = vrot.lane.b32.xlu0 %v5898, 32
    %v5902 = vpop.permute.xlu0 %5901
    %v5904 = vmul.f32 %v5897, %v5902
    %5906 = vrot.lane.b32.xlu0 %v5904, 32
    %v5907 = vpop.permute.xlu0 %5906
    %v5909 = vadd.f32 %v5899, %v5907
    %v5910 = vtanh.pop %v5909
    %5912 = vrot.lane.b32.xlu0 %v5910, 32
    %v5913 = vpop.permute.xlu0 %5912
    %v5915 = vmul.f32 %v5897, %v5913
    %s5916 = scalar_lea.vmem %s3, 6
    %v5917 = vld [vmem:[%s5916] sm:$0x3]
    %v5919 = vsel %vm2821, %v5917, 0
    %5921 = vmatprep.subr.mxu0 0.0
    %5922 = vmatpush1.msra.mxu0 %v3363
    %5923 = vmatprep.subr.mxu0 0.0
    %5924 = vmatpush1.msra.mxu0 0.0
    %5925 = vmatprep.subr.mxu0 0.0
    %5926 = vmatpush1.msra.mxu0 0.0
    %5927 = vmatprep.subr.mxu0 0.0
    %5928 = vmatpush1.msra.mxu0 0.0
    %5929 = vmatprep.subr.mxu0 0.0
    %5930 = vmatpush1.msra.mxu0 0.0
    %5931 = vmatprep.subr.mxu0 0.0
    %5932 = vmatpush1.msra.mxu0 0.0
    %5933 = vmatprep.subr.mxu0 0.0
    %5934 = vmatpush1.msra.mxu0 0.0
    %5935 = vmatprep.subr.mxu0 0.0
    %5936 = vmatpush1.msra.mxu0 0.0
    %5937 = vmatprep.subr.mxu0 0.0
    %5938 = vmatpush1.msra.mxu0 0.0
    %5939 = vmatprep.subr.mxu0 0.0
    %5940 = vmatpush1.msra.mxu0 0.0
    %5941 = vmatprep.subr.mxu0 0.0
    %5942 = vmatpush1.msra.mxu0 0.0
    %5943 = vmatprep.subr.mxu0 0.0
    %5944 = vmatpush1.msra.mxu0 0.0
    %5945 = vmatprep.subr.mxu0 0.0
    %5946 = vmatpush1.msra.mxu0 0.0
    %5947 = vmatprep.subr.mxu0 0.0
    %5948 = vmatpush1.msra.mxu0 0.0
    %5949 = vmatprep.subr.mxu0 0.0
    %5950 = vmatpush1.msra.mxu0 0.0
    %5951 = vmatprep.subr.mxu0 0.0
    %5952 = vmatpush1.msra.mxu0 0.0
    %5953 = vmatprep.subr.mxu0 0.0
    %5954 = vmatpush1.msra.mxu0 0.0
    %5955 = vmatprep.subr.mxu0 0.0
    %5956 = vmatpush1.msra.mxu0 0.0
    %5957 = vmatprep.subr.mxu0 0.0
    %5958 = vmatpush1.msra.mxu0 0.0
    %5959 = vmatprep.subr.mxu0 0.0
    %5960 = vmatpush1.msra.mxu0 0.0
    %5961 = vmatprep.subr.mxu0 0.0
    %5962 = vmatpush1.msra.mxu0 0.0
    %5963 = vmatprep.subr.mxu0 0.0
    %5964 = vmatpush1.msra.mxu0 0.0
    %5965 = vmatprep.subr.mxu0 0.0
    %5966 = vmatpush1.msra.mxu0 0.0
    %5967 = vmatprep.subr.mxu0 0.0
    %5968 = vmatpush1.msra.mxu0 0.0
    %5969 = vmatprep.subr.mxu0 0.0
    %5970 = vmatpush1.msra.mxu0 0.0
    %5971 = vmatprep.subr.mxu0 0.0
    %5972 = vmatpush1.msra.mxu0 0.0
    %5973 = vmatprep.subr.mxu0 0.0
    %5974 = vmatpush1.msra.mxu0 0.0
    %5975 = vmatprep.subr.mxu0 0.0
    %5976 = vmatpush1.msra.mxu0 0.0
    %5977 = vmatprep.subr.mxu0 0.0
    %5978 = vmatpush1.msra.mxu0 0.0
    %5979 = vmatprep.subr.mxu0 0.0
    %5980 = vmatpush1.msra.mxu0 0.0
    %5981 = vmatprep.subr.mxu0 0.0
    %5982 = vmatpush1.msra.mxu0 0.0
    %5983 = vmatprep.subr.mxu0 0.0
    %5984 = vmatpush1.msra.mxu0 0.0
    %5985 = vmatprep.mubr.f32.mxu0 0.0
    %5986 = vmatmul.mubr.f32.gmra.mrb[0].mxu0 %v5919
    %v5987 = vpop.f32.mrb[0].mxu0
    %v5988 = vadd.f32 0.0, %v5987
    %v5989 = vpop.f32.mrb[0].mxu0
    %5990 = vdwg.mxu0
    %5992 = vrot.lane.b32.xlu0 %v5915, 64
    %v5993 = vpop.permute.xlu0 %5992
    %v5994 = vsel %vm228, %v5993, 0
    %5996 = vmatprep.subr.mxu0 0.0
    %5997 = vmatpush1.msra.mxu0 %v3159
    %5998 = vmatprep.subr.mxu0 0.0
    %5999 = vmatpush1.msra.mxu0 %v3160
    %6000 = vmatprep.subr.mxu0 0.0
    %6001 = vmatpush1.msra.mxu0 %v3161
    %6002 = vmatprep.subr.mxu0 0.0
    %6003 = vmatpush1.msra.mxu0 %v3162
    %6004 = vmatprep.subr.mxu0 0.0
    %6005 = vmatpush1.msra.mxu0 0.0
    %6006 = vmatprep.subr.mxu0 0.0
    %6007 = vmatpush1.msra.mxu0 0.0
    %6008 = vmatprep.subr.mxu0 0.0
    %6009 = vmatpush1.msra.mxu0 0.0
    %6010 = vmatprep.subr.mxu0 0.0
    %6011 = vmatpush1.msra.mxu0 0.0
    %6012 = vmatprep.subr.mxu0 0.0
    %6013 = vmatpush1.msra.mxu0 0.0
    %6014 = vmatprep.subr.mxu0 0.0
    %6015 = vmatpush1.msra.mxu0 0.0
    %6016 = vmatprep.subr.mxu0 0.0
    %6017 = vmatpush1.msra.mxu0 0.0
    %6018 = vmatprep.subr.mxu0 0.0
    %6019 = vmatpush1.msra.mxu0 0.0
    %6020 = vmatprep.subr.mxu0 0.0
    %6021 = vmatpush1.msra.mxu0 0.0
    %6022 = vmatprep.subr.mxu0 0.0
    %6023 = vmatpush1.msra.mxu0 0.0
    %6024 = vmatprep.subr.mxu0 0.0
    %6025 = vmatpush1.msra.mxu0 0.0
    %6026 = vmatprep.subr.mxu0 0.0
    %6027 = vmatpush1.msra.mxu0 0.0
    %6028 = vmatprep.subr.mxu0 0.0
    %6029 = vmatpush1.msra.mxu0 0.0
    %6030 = vmatprep.subr.mxu0 0.0
    %6031 = vmatpush1.msra.mxu0 0.0
    %6032 = vmatprep.subr.mxu0 0.0
    %6033 = vmatpush1.msra.mxu0 0.0
    %6034 = vmatprep.subr.mxu0 0.0
    %6035 = vmatpush1.msra.mxu0 0.0
    %6036 = vmatprep.subr.mxu0 0.0
    %6037 = vmatpush1.msra.mxu0 0.0
    %6038 = vmatprep.subr.mxu0 0.0
    %6039 = vmatpush1.msra.mxu0 0.0
    %6040 = vmatprep.subr.mxu0 0.0
    %6041 = vmatpush1.msra.mxu0 0.0
    %6042 = vmatprep.subr.mxu0 0.0
    %6043 = vmatpush1.msra.mxu0 0.0
    %6044 = vmatprep.subr.mxu0 0.0
    %6045 = vmatpush1.msra.mxu0 0.0
    %6046 = vmatprep.subr.mxu0 0.0
    %6047 = vmatpush1.msra.mxu0 0.0
    %6048 = vmatprep.subr.mxu0 0.0
    %6049 = vmatpush1.msra.mxu0 0.0
    %6050 = vmatprep.subr.mxu0 0.0
    %6051 = vmatpush1.msra.mxu0 0.0
    %6052 = vmatprep.subr.mxu0 0.0
    %6053 = vmatpush1.msra.mxu0 0.0
    %6054 = vmatprep.subr.mxu0 0.0
    %6055 = vmatpush1.msra.mxu0 0.0
    %6056 = vmatprep.subr.mxu0 0.0
    %6057 = vmatpush1.msra.mxu0 0.0
    %6058 = vmatprep.subr.mxu0 0.0
    %6059 = vmatpush1.msra.mxu0 0.0
    %6060 = vmatprep.mubr.f32.mxu0 0.0
    %6061 = vmatmul.mubr.f32.gmra.mrb[0].mxu0 %v5994
    %v6062 = vpop.f32.mrb[0].mxu0
    %v6063 = vadd.f32 %v5988, %v6062
    %v6064 = vpop.f32.mrb[0].mxu0
    %6065 = vdwg.mxu0
    %v6066 = vadd.f32 %v6063, %v3513
    %v6067 = vsel %vm3515, %v6066, 0.0
    %6068 = vadd.xlane.f32.xlu0 %v6067
    %v6069 = vpop.xlane.xlu0 %6068
    %v6070 = vmul.f32 %v6069, %v3519
    %v6071 = vsub.f32 %v6066, %v6070
    %v6072 = vmul.f32 %v6071, %v6071
    %v6073 = vsel %vm3515, %v6072, 0.0
    %6074 = vadd.xlane.f32.xlu0 %v6073
    %v6075 = vpop.xlane.xlu0 %6074
    %v6076 = vmul.f32 %v6075, %v3519
    %v6077 = vadd.f32 %v6076, 1e-05
    %v6078 = vrsqrt.pop %v6077
    %v6079 = vmul.f32 %v6071, %v6078
    %v6080 = vmul.f32 %v6079, %v3533
    %v6081 = vadd.f32 %v6080, %v3538
    %v6083 = vsel %vm3547, %v6081, 0
    %6085 = vmatprep.subr.mxu0 0.0
    %6086 = vmatpush1.msra.mxu0 %v6083
    %6087 = vmatprep.subr.mxu0 0.0
    %6088 = vmatpush1.msra.mxu0 0.0
    %6089 = vmatprep.subr.mxu0 0.0
    %6090 = vmatpush1.msra.mxu0 0.0
    %6091 = vmatprep.subr.mxu0 0.0
    %6092 = vmatpush1.msra.mxu0 0.0
    %6093 = vmatprep.subr.mxu0 0.0
    %6094 = vmatpush1.msra.mxu0 0.0
    %6095 = vmatprep.subr.mxu0 0.0
    %6096 = vmatpush1.msra.mxu0 0.0
    %6097 = vmatprep.subr.mxu0 0.0
    %6098 = vmatpush1.msra.mxu0 0.0
    %6099 = vmatprep.subr.mxu0 0.0
    %6100 = vmatpush1.msra.mxu0 0.0
    %6101 = vmatprep.subr.mxu0 0.0
    %6102 = vmatpush1.msra.mxu0 0.0
    %6103 = vmatprep.subr.mxu0 0.0
    %6104 = vmatpush1.msra.mxu0 0.0
    %6105 = vmatprep.subr.mxu0 0.0
    %6106 = vmatpush1.msra.mxu0 0.0
    %6107 = vmatprep.subr.mxu0 0.0
    %6108 = vmatpush1.msra.mxu0 0.0
    %6109 = vmatprep.subr.mxu0 0.0
    %6110 = vmatpush1.msra.mxu0 0.0
    %6111 = vmatprep.subr.mxu0 0.0
    %6112 = vmatpush1.msra.mxu0 0.0
    %6113 = vmatprep.subr.mxu0 0.0
    %6114 = vmatpush1.msra.mxu0 0.0
    %6115 = vmatprep.subr.mxu0 0.0
    %6116 = vmatpush1.msra.mxu0 0.0
    %6117 = vmatprep.subr.mxu0 0.0
    %6118 = vmatpush1.msra.mxu0 0.0
    %6119 = vmatprep.subr.mxu0 0.0
    %6120 = vmatpush1.msra.mxu0 0.0
    %6121 = vmatprep.subr.mxu0 0.0
    %6122 = vmatpush1.msra.mxu0 0.0
    %6123 = vmatprep.subr.mxu0 0.0
    %6124 = vmatpush1.msra.mxu0 0.0
    %6125 = vmatprep.subr.mxu0 0.0
    %6126 = vmatpush1.msra.mxu0 0.0
    %6127 = vmatprep.subr.mxu0 0.0
    %6128 = vmatpush1.msra.mxu0 0.0
    %6129 = vmatprep.subr.mxu0 0.0
    %6130 = vmatpush1.msra.mxu0 0.0
    %6131 = vmatprep.subr.mxu0 0.0
    %6132 = vmatpush1.msra.mxu0 0.0
    %6133 = vmatprep.subr.mxu0 0.0
    %6134 = vmatpush1.msra.mxu0 0.0
    %6135 = vmatprep.subr.mxu0 0.0
    %6136 = vmatpush1.msra.mxu0 0.0
    %6137 = vmatprep.subr.mxu0 0.0
    %6138 = vmatpush1.msra.mxu0 0.0
    %6139 = vmatprep.subr.mxu0 0.0
    %6140 = vmatpush1.msra.mxu0 0.0
    %6141 = vmatprep.subr.mxu0 0.0
    %6142 = vmatpush1.msra.mxu0 0.0
    %6143 = vmatprep.subr.mxu0 0.0
    %6144 = vmatpush1.msra.mxu0 0.0
    %6145 = vmatprep.subr.mxu0 0.0
    %6146 = vmatpush1.msra.mxu0 0.0
    %6147 = vmatprep.subr.mxu0 0.0
    %6148 = vmatpush1.msra.mxu0 0.0
    %6149 = vmatprep.mubr.f32.mxu0 0.0
    %6150 = vmatmul.mubr.f32.gmra.mrb[0].mxu0 %v3542
    %v6151 = vpop.f32.mrb[0].mxu0
    %v6152 = vadd.f32 0.0, %v6151
    %v6153 = vpop.f32.mrb[0].mxu0
    %6154 = vmatprep.mubr.f32.mxu0 0.0
    %6155 = vmatmul.mubr.f32.gmra.mrb[0].mxu0 %v3545
    %v6156 = vpop.f32.mrb[0].mxu0
    %v6157 = vadd.f32 0.0, %v6156
    %v6158 = vpop.f32.mrb[0].mxu0
    %6159 = vdwg.mxu0
    %v6160 = vmul.f32 %v6152, %v3629
    %v6161 = vmul.f32 %v6157, %v3631
    %v6163 = vsel %vm228, %v6160, 0
    %v6166 = vsel %vm228, %v6161, 0
    %6168 = vmatprep.subr.mxu0 0.0
    %6169 = vmatpush1.msra.mxu0 %v3169
    %6170 = vmatprep.subr.mxu0 0.0
    %6171 = vmatpush1.msra.mxu0 %v3170
    %6172 = vmatprep.subr.mxu0 0.0
    %6173 = vmatpush1.msra.mxu0 %v3171
    %6174 = vmatprep.subr.mxu0 0.0
    %6175 = vmatpush1.msra.mxu0 %v3172
    %6176 = vmatprep.subr.mxu0 0.0
    %6177 = vmatpush1.msra.mxu0 0.0
    %6178 = vmatprep.subr.mxu0 0.0
    %6179 = vmatpush1.msra.mxu0 0.0
    %6180 = vmatprep.subr.mxu0 0.0
    %6181 = vmatpush1.msra.mxu0 0.0
    %6182 = vmatprep.subr.mxu0 0.0
    %6183 = vmatpush1.msra.mxu0 0.0
    %6184 = vmatprep.subr.mxu0 0.0
    %6185 = vmatpush1.msra.mxu0 0.0
    %6186 = vmatprep.subr.mxu0 0.0
    %6187 = vmatpush1.msra.mxu0 0.0
    %6188 = vmatprep.subr.mxu0 0.0
    %6189 = vmatpush1.msra.mxu0 0.0
    %6190 = vmatprep.subr.mxu0 0.0
    %6191 = vmatpush1.msra.mxu0 0.0
    %6192 = vmatprep.subr.mxu0 0.0
    %6193 = vmatpush1.msra.mxu0 0.0
    %6194 = vmatprep.subr.mxu0 0.0
    %6195 = vmatpush1.msra.mxu0 0.0
    %6196 = vmatprep.subr.mxu0 0.0
    %6197 = vmatpush1.msra.mxu0 0.0
    %6198 = vmatprep.subr.mxu0 0.0
    %6199 = vmatpush1.msra.mxu0 0.0
    %6200 = vmatprep.subr.mxu0 0.0
    %6201 = vmatpush1.msra.mxu0 0.0
    %6202 = vmatprep.subr.mxu0 0.0
    %6203 = vmatpush1.msra.mxu0 0.0
    %6204 = vmatprep.subr.mxu0 0.0
    %6205 = vmatpush1.msra.mxu0 0.0
    %6206 = vmatprep.subr.mxu0 0.0
    %6207 = vmatpush1.msra.mxu0 0.0
    %6208 = vmatprep.subr.mxu0 0.0
    %6209 = vmatpush1.msra.mxu0 0.0
    %6210 = vmatprep.subr.mxu0 0.0
    %6211 = vmatpush1.msra.mxu0 0.0
    %6212 = vmatprep.subr.mxu0 0.0
    %6213 = vmatpush1.msra.mxu0 0.0
    %6214 = vmatprep.subr.mxu0 0.0
    %6215 = vmatpush1.msra.mxu0 0.0
    %6216 = vmatprep.subr.mxu0 0.0
    %6217 = vmatpush1.msra.mxu0 0.0
    %6218 = vmatprep.subr.mxu0 0.0
    %6219 = vmatpush1.msra.mxu0 0.0
    %6220 = vmatprep.subr.mxu0 0.0
    %6221 = vmatpush1.msra.mxu0 0.0
    %6222 = vmatprep.subr.mxu0 0.0
    %6223 = vmatpush1.msra.mxu0 0.0
    %6224 = vmatprep.subr.mxu0 0.0
    %6225 = vmatpush1.msra.mxu0 0.0
    %6226 = vmatprep.subr.mxu0 0.0
    %6227 = vmatpush1.msra.mxu0 0.0
    %6228 = vmatprep.subr.mxu0 0.0
    %6229 = vmatpush1.msra.mxu0 0.0
    %6230 = vmatprep.subr.mxu0 0.0
    %6231 = vmatpush1.msra.mxu0 0.0
    %6232 = vmatprep.mubr.f32.mxu0 0.0
    %6233 = vmatmul.mubr.f32.gmra.mrb[0].mxu0 %v6163
    %v6234 = vpop.f32.mrb[0].mxu0
    %v6235 = vadd.f32 0.0, %v6234
    %v6236 = vpop.f32.mrb[0].mxu0
    %6237 = vmatprep.mubr.f32.mxu0 0.0
    %6238 = vmatmul.mubr.f32.gmra.mrb[0].mxu0 %v6166
    %v6239 = vpop.f32.mrb[0].mxu0
    %v6240 = vadd.f32 0.0, %v6239
    %v6241 = vpop.f32.mrb[0].mxu0
    %6242 = vdwg.mxu0
    %v6243 = vsel %vm2821, %v6235, -inf
    %v6244 = vsel %vm2821, %v6240, -inf
    %v6245 = vmax.f32 %v6243, %v6244
    %v6246 = vrot.slane %v6245, 4
    %v6247 = vmax.f32 %v6245, %v6246
    %v6248 = vrot.slane %v6247, 2
    %v6249 = vmax.f32 %v6247, %v6248
    %v6250 = vrot.slane %v6249, 1
    %v6251 = vmax.f32 %v6249, %v6250
    %v6252 = vsub.f32 %v6235, %v6251
    %v6253 = vsub.f32 %v6240, %v6251
    %v6254 = vmul.f32 %v6252, 1.442695
    %v6255 = vpow.pop %v6254
    %v6256 = vmul.f32 %v6253, 1.442695
    %v6257 = vpow.pop %v6256
    %6258 = vmatprep.subr.mxu0 0.0
    %6259 = vmatpush1.msra.mxu0 %v6255
    %6260 = vmatprep.subr.mxu0 0.0
    %6261 = vmatpush1.msra.mxu0 %v6257
    %6262 = vmatprep.subr.mxu0 0.0
    %6263 = vmatpush1.msra.mxu0 0.0
    %6264 = vmatprep.subr.mxu0 0.0
    %6265 = vmatpush1.msra.mxu0 0.0
    %6266 = vmatprep.subr.mxu0 0.0
    %6267 = vmatpush1.msra.mxu0 0.0
    %6268 = vmatprep.subr.mxu0 0.0
    %6269 = vmatpush1.msra.mxu0 0.0
    %6270 = vmatprep.subr.mxu0 0.0
    %6271 = vmatpush1.msra.mxu0 0.0
    %6272 = vmatprep.subr.mxu0 0.0
    %6273 = vmatpush1.msra.mxu0 0.0
    %6274 = vmatprep.subr.mxu0 0.0
    %6275 = vmatpush1.msra.mxu0 0.0
    %6276 = vmatprep.subr.mxu0 0.0
    %6277 = vmatpush1.msra.mxu0 0.0
    %6278 = vmatprep.subr.mxu0 0.0
    %6279 = vmatpush1.msra.mxu0 0.0
    %6280 = vmatprep.subr.mxu0 0.0
    %6281 = vmatpush1.msra.mxu0 0.0
    %6282 = vmatprep.subr.mxu0 0.0
    %6283 = vmatpush1.msra.mxu0 0.0
    %6284 = vmatprep.subr.mxu0 0.0
    %6285 = vmatpush1.msra.mxu0 0.0
    %6286 = vmatprep.subr.mxu0 0.0
    %6287 = vmatpush1.msra.mxu0 0.0
    %6288 = vmatprep.subr.mxu0 0.0
    %6289 = vmatpush1.msra.mxu0 0.0
    %6290 = vmatprep.subr.mxu0 0.0
    %6291 = vmatpush1.msra.mxu0 0.0
    %6292 = vmatprep.subr.mxu0 0.0
    %6293 = vmatpush1.msra.mxu0 0.0
    %6294 = vmatprep.subr.mxu0 0.0
    %6295 = vmatpush1.msra.mxu0 0.0
    %6296 = vmatprep.subr.mxu0 0.0
    %6297 = vmatpush1.msra.mxu0 0.0
    %6298 = vmatprep.subr.mxu0 0.0
    %6299 = vmatpush1.msra.mxu0 0.0
    %6300 = vmatprep.subr.mxu0 0.0
    %6301 = vmatpush1.msra.mxu0 0.0
    %6302 = vmatprep.subr.mxu0 0.0
    %6303 = vmatpush1.msra.mxu0 0.0
    %6304 = vmatprep.subr.mxu0 0.0
    %6305 = vmatpush1.msra.mxu0 0.0
    %6306 = vmatprep.subr.mxu0 0.0
    %6307 = vmatpush1.msra.mxu0 0.0
    %6308 = vmatprep.subr.mxu0 0.0
    %6309 = vmatpush1.msra.mxu0 0.0
    %6310 = vmatprep.subr.mxu0 0.0
    %6311 = vmatpush1.msra.mxu0 0.0
    %6312 = vmatprep.subr.mxu0 0.0
    %6313 = vmatpush1.msra.mxu0 0.0
    %6314 = vmatprep.subr.mxu0 0.0
    %6315 = vmatpush1.msra.mxu0 0.0
    %6316 = vmatprep.subr.mxu0 0.0
    %6317 = vmatpush1.msra.mxu0 0.0
    %6318 = vmatprep.subr.mxu0 0.0
    %6319 = vmatpush1.msra.mxu0 0.0
    %6320 = vmatprep.subr.mxu0 0.0
    %6321 = vmatpush1.msra.mxu0 0.0
    %6322 = vmatprep.mubr.f32.mxu0 0.0
    %6323 = vmatmul.mubr.f32.gmra.mrb[0].mxu0 %v2940
    %v6324 = vpop.f32.mrb[0].mxu0
    %v6325 = vadd.f32 0.0, %v6324
    %v6326 = vpop.f32.mrb[0].mxu0
    %6327 = vmatprep.mubr.f32.mxu0 0.0
    %6328 = vmatmul.mubr.f32.gmra.mrb[0].mxu0 %v2943
    %v6329 = vpop.f32.mrb[0].mxu0
    %v6330 = vadd.f32 0.0, %v6329
    %v6331 = vpop.f32.mrb[0].mxu0
    %6332 = vdwg.mxu0
    %v6333 = vrcp.pop %v6325
    %v6334 = vmul.f32 %v6255, %v6333
    %v6335 = vrcp.pop %v6330
    %v6336 = vmul.f32 %v6257, %v6335
    %v6338 = vsel %vm2821, %v6334, 0
    %v6341 = vsel %vm2821, %v6336, 0
    %6343 = vmatprep.subr.mxu0 0.0
    %6344 = vmatpush1.msra.mxu0 %v3818
    %6345 = vmatprep.subr.mxu0 0.0
    %6346 = vmatpush1.msra.mxu0 0.0
    %6347 = vmatprep.subr.mxu0 0.0
    %6348 = vmatpush1.msra.mxu0 0.0
    %6349 = vmatprep.subr.mxu0 0.0
    %6350 = vmatpush1.msra.mxu0 0.0
    %6351 = vmatprep.subr.mxu0 0.0
    %6352 = vmatpush1.msra.mxu0 0.0
    %6353 = vmatprep.subr.mxu0 0.0
    %6354 = vmatpush1.msra.mxu0 0.0
    %6355 = vmatprep.subr.mxu0 0.0
    %6356 = vmatpush1.msra.mxu0 0.0
    %6357 = vmatprep.subr.mxu0 0.0
    %6358 = vmatpush1.msra.mxu0 0.0
    %6359 = vmatprep.subr.mxu0 0.0
    %6360 = vmatpush1.msra.mxu0 0.0
    %6361 = vmatprep.subr.mxu0 0.0
    %6362 = vmatpush1.msra.mxu0 0.0
    %6363 = vmatprep.subr.mxu0 0.0
    %6364 = vmatpush1.msra.mxu0 0.0
    %6365 = vmatprep.subr.mxu0 0.0
    %6366 = vmatpush1.msra.mxu0 0.0
    %6367 = vmatprep.subr.mxu0 0.0
    %6368 = vmatpush1.msra.mxu0 0.0
    %6369 = vmatprep.subr.mxu0 0.0
    %6370 = vmatpush1.msra.mxu0 0.0
    %6371 = vmatprep.subr.mxu0 0.0
    %6372 = vmatpush1.msra.mxu0 0.0
    %6373 = vmatprep.subr.mxu0 0.0
    %6374 = vmatpush1.msra.mxu0 0.0
    %6375 = vmatprep.subr.mxu0 0.0
    %6376 = vmatpush1.msra.mxu0 0.0
    %6377 = vmatprep.subr.mxu0 0.0
    %6378 = vmatpush1.msra.mxu0 0.0
    %6379 = vmatprep.subr.mxu0 0.0
    %6380 = vmatpush1.msra.mxu0 0.0
    %6381 = vmatprep.subr.mxu0 0.0
    %6382 = vmatpush1.msra.mxu0 0.0
    %6383 = vmatprep.subr.mxu0 0.0
    %6384 = vmatpush1.msra.mxu0 0.0
    %6385 = vmatprep.subr.mxu0 0.0
    %6386 = vmatpush1.msra.mxu0 0.0
    %6387 = vmatprep.subr.mxu0 0.0
    %6388 = vmatpush1.msra.mxu0 0.0
    %6389 = vmatprep.subr.mxu0 0.0
    %6390 = vmatpush1.msra.mxu0 0.0
    %6391 = vmatprep.subr.mxu0 0.0
    %6392 = vmatpush1.msra.mxu0 0.0
    %6393 = vmatprep.subr.mxu0 0.0
    %6394 = vmatpush1.msra.mxu0 0.0
    %6395 = vmatprep.subr.mxu0 0.0
    %6396 = vmatpush1.msra.mxu0 0.0
    %6397 = vmatprep.subr.mxu0 0.0
    %6398 = vmatpush1.msra.mxu0 0.0
    %6399 = vmatprep.subr.mxu0 0.0
    %6400 = vmatpush1.msra.mxu0 0.0
    %6401 = vmatprep.subr.mxu0 0.0
    %6402 = vmatpush1.msra.mxu0 0.0
    %6403 = vmatprep.subr.mxu0 0.0
    %6404 = vmatpush1.msra.mxu0 0.0
    %6405 = vmatprep.subr.mxu0 0.0
    %6406 = vmatpush1.msra.mxu0 0.0
    %6407 = vmatprep.mubr.f32.mxu0 0.0
    %6408 = vmatmul.mubr.f32.gmra.mrb[0].mxu0 %v6338
    %v6409 = vpop.f32.mrb[0].mxu0
    %v6410 = vadd.f32 0.0, %v6409
    %v6411 = vpop.f32.mrb[0].mxu0
    %6412 = vmatprep.mubr.f32.mxu0 0.0
    %6413 = vmatmul.mubr.f32.gmra.mrb[0].mxu0 %v6341
    %v6414 = vpop.f32.mrb[0].mxu0
    %v6415 = vadd.f32 0.0, %v6414
    %v6416 = vpop.f32.mrb[0].mxu0
    %6417 = vdwg.mxu0
    %v6418 = vmul.f32 %v6410, %v3629
    %v6419 = vmul.f32 %v6415, %v3631
    %6420 = vmatprep.subr.mxu0 0.0
    %6421 = vmatpush1.msra.mxu0 %v6418
    %6422 = vmatprep.subr.mxu0 0.0
    %6423 = vmatpush1.msra.mxu0 %v6419
    %6424 = vmatprep.subr.mxu0 0.0
    %6425 = vmatpush1.msra.mxu0 0.0
    %6426 = vmatprep.subr.mxu0 0.0
    %6427 = vmatpush1.msra.mxu0 0.0
    %6428 = vmatprep.subr.mxu0 0.0
    %6429 = vmatpush1.msra.mxu0 0.0
    %6430 = vmatprep.subr.mxu0 0.0
    %6431 = vmatpush1.msra.mxu0 0.0
    %6432 = vmatprep.subr.mxu0 0.0
    %6433 = vmatpush1.msra.mxu0 0.0
    %6434 = vmatprep.subr.mxu0 0.0
    %6435 = vmatpush1.msra.mxu0 0.0
    %6436 = vmatprep.subr.mxu0 0.0
    %6437 = vmatpush1.msra.mxu0 0.0
    %6438 = vmatprep.subr.mxu0 0.0
    %6439 = vmatpush1.msra.mxu0 0.0
    %6440 = vmatprep.subr.mxu0 0.0
    %6441 = vmatpush1.msra.mxu0 0.0
    %6442 = vmatprep.subr.mxu0 0.0
    %6443 = vmatpush1.msra.mxu0 0.0
    %6444 = vmatprep.subr.mxu0 0.0
    %6445 = vmatpush1.msra.mxu0 0.0
    %6446 = vmatprep.subr.mxu0 0.0
    %6447 = vmatpush1.msra.mxu0 0.0
    %6448 = vmatprep.subr.mxu0 0.0
    %6449 = vmatpush1.msra.mxu0 0.0
    %6450 = vmatprep.subr.mxu0 0.0
    %6451 = vmatpush1.msra.mxu0 0.0
    %6452 = vmatprep.subr.mxu0 0.0
    %6453 = vmatpush1.msra.mxu0 0.0
    %6454 = vmatprep.subr.mxu0 0.0
    %6455 = vmatpush1.msra.mxu0 0.0
    %6456 = vmatprep.subr.mxu0 0.0
    %6457 = vmatpush1.msra.mxu0 0.0
    %6458 = vmatprep.subr.mxu0 0.0
    %6459 = vmatpush1.msra.mxu0 0.0
    %6460 = vmatprep.subr.mxu0 0.0
    %6461 = vmatpush1.msra.mxu0 0.0
    %6462 = vmatprep.subr.mxu0 0.0
    %6463 = vmatpush1.msra.mxu0 0.0
    %6464 = vmatprep.subr.mxu0 0.0
    %6465 = vmatpush1.msra.mxu0 0.0
    %6466 = vmatprep.subr.mxu0 0.0
    %6467 = vmatpush1.msra.mxu0 0.0
    %6468 = vmatprep.subr.mxu0 0.0
    %6469 = vmatpush1.msra.mxu0 0.0
    %6470 = vmatprep.subr.mxu0 0.0
    %6471 = vmatpush1.msra.mxu0 0.0
    %6472 = vmatprep.subr.mxu0 0.0
    %6473 = vmatpush1.msra.mxu0 0.0
    %6474 = vmatprep.subr.mxu0 0.0
    %6475 = vmatpush1.msra.mxu0 0.0
    %6476 = vmatprep.subr.mxu0 0.0
    %6477 = vmatpush1.msra.mxu0 0.0
    %6478 = vmatprep.subr.mxu0 0.0
    %6479 = vmatpush1.msra.mxu0 0.0
    %6480 = vmatprep.subr.mxu0 0.0
    %6481 = vmatpush1.msra.mxu0 0.0
    %6482 = vmatprep.subr.mxu0 0.0
    %6483 = vmatpush1.msra.mxu0 0.0
    %6484 = vmatprep.mubr.f32.mxu0 0.0
    %6485 = vmatmul.mubr.f32.gmra.mrb[0].mxu0 %v3898
    %v6486 = vpop.f32.mrb[0].mxu0
    %v6487 = vadd.f32 0.0, %v6486
    %v6488 = vpop.f32.mrb[0].mxu0
    %6489 = vdwg.mxu0
    %v6491 = vsel %vm228, %v6487, 0
    %6493 = vmatprep.subr.mxu0 0.0
    %6494 = vmatpush1.msra.mxu0 %v3174
    %6495 = vmatprep.subr.mxu0 0.0
    %6496 = vmatpush1.msra.mxu0 %v3175
    %6497 = vmatprep.subr.mxu0 0.0
    %6498 = vmatpush1.msra.mxu0 %v3176
    %6499 = vmatprep.subr.mxu0 0.0
    %6500 = vmatpush1.msra.mxu0 %v3177
    %6501 = vmatprep.subr.mxu0 0.0
    %6502 = vmatpush1.msra.mxu0 0.0
    %6503 = vmatprep.subr.mxu0 0.0
    %6504 = vmatpush1.msra.mxu0 0.0
    %6505 = vmatprep.subr.mxu0 0.0
    %6506 = vmatpush1.msra.mxu0 0.0
    %6507 = vmatprep.subr.mxu0 0.0
    %6508 = vmatpush1.msra.mxu0 0.0
    %6509 = vmatprep.subr.mxu0 0.0
    %6510 = vmatpush1.msra.mxu0 0.0
    %6511 = vmatprep.subr.mxu0 0.0
    %6512 = vmatpush1.msra.mxu0 0.0
    %6513 = vmatprep.subr.mxu0 0.0
    %6514 = vmatpush1.msra.mxu0 0.0
    %6515 = vmatprep.subr.mxu0 0.0
    %6516 = vmatpush1.msra.mxu0 0.0
    %6517 = vmatprep.subr.mxu0 0.0
    %6518 = vmatpush1.msra.mxu0 0.0
    %6519 = vmatprep.subr.mxu0 0.0
    %6520 = vmatpush1.msra.mxu0 0.0
    %6521 = vmatprep.subr.mxu0 0.0
    %6522 = vmatpush1.msra.mxu0 0.0
    %6523 = vmatprep.subr.mxu0 0.0
    %6524 = vmatpush1.msra.mxu0 0.0
    %6525 = vmatprep.subr.mxu0 0.0
    %6526 = vmatpush1.msra.mxu0 0.0
    %6527 = vmatprep.subr.mxu0 0.0
    %6528 = vmatpush1.msra.mxu0 0.0
    %6529 = vmatprep.subr.mxu0 0.0
    %6530 = vmatpush1.msra.mxu0 0.0
    %6531 = vmatprep.subr.mxu0 0.0
    %6532 = vmatpush1.msra.mxu0 0.0
    %6533 = vmatprep.subr.mxu0 0.0
    %6534 = vmatpush1.msra.mxu0 0.0
    %6535 = vmatprep.subr.mxu0 0.0
    %6536 = vmatpush1.msra.mxu0 0.0
    %6537 = vmatprep.subr.mxu0 0.0
    %6538 = vmatpush1.msra.mxu0 0.0
    %6539 = vmatprep.subr.mxu0 0.0
    %6540 = vmatpush1.msra.mxu0 0.0
    %6541 = vmatprep.subr.mxu0 0.0
    %6542 = vmatpush1.msra.mxu0 0.0
    %6543 = vmatprep.subr.mxu0 0.0
    %6544 = vmatpush1.msra.mxu0 0.0
    %6545 = vmatprep.subr.mxu0 0.0
    %6546 = vmatpush1.msra.mxu0 0.0
    %6547 = vmatprep.subr.mxu0 0.0
    %6548 = vmatpush1.msra.mxu0 0.0
    %6549 = vmatprep.subr.mxu0 0.0
    %6550 = vmatpush1.msra.mxu0 0.0
    %6551 = vmatprep.subr.mxu0 0.0
    %6552 = vmatpush1.msra.mxu0 0.0
    %6553 = vmatprep.subr.mxu0 0.0
    %6554 = vmatpush1.msra.mxu0 0.0
    %6555 = vmatprep.subr.mxu0 0.0
    %6556 = vmatpush1.msra.mxu0 0.0
    %6557 = vmatprep.mubr.f32.mxu0 0.0
    %6558 = vmatmul.mubr.f32.gmra.mrb[0].mxu0 %v6491
    %v6559 = vpop.f32.mrb[0].mxu0
    %v6560 = vadd.f32 %v3973, %v6559
    %v6561 = vpop.f32.mrb[0].mxu0
    %6562 = vdwg.mxu0
    %v6563 = vsel %vm3515, %v6560, 0.0
    %6564 = vadd.xlane.f32.xlu0 %v6563
    %v6565 = vpop.xlane.xlu0 %6564
    %v6566 = vmul.f32 %v6565, %v3519
    %v6567 = vsub.f32 %v6560, %v6566
    %v6568 = vmul.f32 %v6567, %v6567
    %v6569 = vsel %vm3515, %v6568, 0.0
    %6570 = vadd.xlane.f32.xlu0 %v6569
    %v6571 = vpop.xlane.xlu0 %6570
    %v6572 = vmul.f32 %v6571, %v3519
    %v6573 = vadd.f32 %v6572, 1e-05
    %v6574 = vrsqrt.pop %v6573
    %v6575 = vmul.f32 %v6567, %v6574
    %v6576 = vmul.f32 %v6575, %v4063
    %v6577 = vadd.f32 %v6576, %v4068
    %6578 = vst.msk [vmem:[#allocation4 + $0x6] sm:$0x3] %vm3515, %v6577
    %v6579 = vld [vmem:[#allocation4] sm:$0xff]
    %v6580 = vld [vmem:[#allocation5 + $0x218] sm:$0xff]
    %v6581 = vld [vmem:[#allocation5 + $0x220] sm:$0xff]
    %v6582 = vld [vmem:[#allocation5 + $0x228] sm:$0xff]
    %v6583 = vld [vmem:[#allocation5 + $0x230] sm:$0xff]
    %v6584 = vld [vmem:[#allocation5 + $0x238] sm:$0x1]
    %v6585 = vlaneseq
    %v6586 = vshrl.u32 %v6585, 7
    %v6587 = vsub.s32 0, %v6586
    %v6588 = vrot.slane %v6584, %v6587
    %v6590 = vsel %vm228, %v6579, 0
    %6592 = vmatprep.subr.mxu0 0.0
    %6593 = vmatpush1.msra.mxu0 %v6580
    %6594 = vmatprep.subr.mxu0 0.0
    %6595 = vmatpush1.msra.mxu0 %v6581
    %6596 = vmatprep.subr.mxu0 0.0
    %6597 = vmatpush1.msra.mxu0 %v6582
    %6598 = vmatprep.subr.mxu0 0.0
    %6599 = vmatpush1.msra.mxu0 %v6583
    %6600 = vmatprep.subr.mxu0 0.0
    %6601 = vmatpush1.msra.mxu0 0.0
    %6602 = vmatprep.subr.mxu0 0.0
    %6603 = vmatpush1.msra.mxu0 0.0
    %6604 = vmatprep.subr.mxu0 0.0
    %6605 = vmatpush1.msra.mxu0 0.0
    %6606 = vmatprep.subr.mxu0 0.0
    %6607 = vmatpush1.msra.mxu0 0.0
    %6608 = vmatprep.subr.mxu0 0.0
    %6609 = vmatpush1.msra.mxu0 0.0
    %6610 = vmatprep.subr.mxu0 0.0
    %6611 = vmatpush1.msra.mxu0 0.0
    %6612 = vmatprep.subr.mxu0 0.0
    %6613 = vmatpush1.msra.mxu0 0.0
    %6614 = vmatprep.subr.mxu0 0.0
    %6615 = vmatpush1.msra.mxu0 0.0
    %6616 = vmatprep.subr.mxu0 0.0
    %6617 = vmatpush1.msra.mxu0 0.0
    %6618 = vmatprep.subr.mxu0 0.0
    %6619 = vmatpush1.msra.mxu0 0.0
    %6620 = vmatprep.subr.mxu0 0.0
    %6621 = vmatpush1.msra.mxu0 0.0
    %6622 = vmatprep.subr.mxu0 0.0
    %6623 = vmatpush1.msra.mxu0 0.0
    %6624 = vmatprep.subr.mxu0 0.0
    %6625 = vmatpush1.msra.mxu0 0.0
    %6626 = vmatprep.subr.mxu0 0.0
    %6627 = vmatpush1.msra.mxu0 0.0
    %6628 = vmatprep.subr.mxu0 0.0
    %6629 = vmatpush1.msra.mxu0 0.0
    %6630 = vmatprep.subr.mxu0 0.0
    %6631 = vmatpush1.msra.mxu0 0.0
    %6632 = vmatprep.subr.mxu0 0.0
    %6633 = vmatpush1.msra.mxu0 0.0
    %6634 = vmatprep.subr.mxu0 0.0
    %6635 = vmatpush1.msra.mxu0 0.0
    %6636 = vmatprep.subr.mxu0 0.0
    %6637 = vmatpush1.msra.mxu0 0.0
    %6638 = vmatprep.subr.mxu0 0.0
    %6639 = vmatpush1.msra.mxu0 0.0
    %6640 = vmatprep.subr.mxu0 0.0
    %6641 = vmatpush1.msra.mxu0 0.0
    %6642 = vmatprep.subr.mxu0 0.0
    %6643 = vmatpush1.msra.mxu0 0.0
    %6644 = vmatprep.subr.mxu0 0.0
    %6645 = vmatpush1.msra.mxu0 0.0
    %6646 = vmatprep.subr.mxu0 0.0
    %6647 = vmatpush1.msra.mxu0 0.0
    %6648 = vmatprep.subr.mxu0 0.0
    %6649 = vmatpush1.msra.mxu0 0.0
    %6650 = vmatprep.subr.mxu0 0.0
    %6651 = vmatpush1.msra.mxu0 0.0
    %6652 = vmatprep.subr.mxu0 0.0
    %6653 = vmatpush1.msra.mxu0 0.0
    %6654 = vmatprep.subr.mxu0 0.0
    %6655 = vmatpush1.msra.mxu0 0.0
    %6656 = vmatprep.mubr.f32.mxu0 0.0
    %6657 = vmatmul.mubr.f32.gmra.mrb[0].mxu0 %v6590
    %v6658 = vpop.f32.mrb[0].mxu0
    %v6659 = vadd.f32 %v6588, %v6658
    %v6660 = vpop.f32.mrb[0].mxu0
    %6661 = vdwg.mxu0
    %v6662 = vlaneseq
    %v6663 = vand.u32 %v6662, 127
    %vm6664 = vcmp.eq.s32.totalorder %v6663, 0
    %vm6665 = vcmp.eq.s32.totalorder %v6663, 1
    %v6666 = vxor.u32 %v6659, 2147483648
    %v6667 = vmul.f32 %v6666, 1.442695
    %v6668 = vpow.pop %v6667
    %v6669 = vadd.f32 %v6668, 1.0
    %v6670 = vrcp.pop %v6669
    %v6671 = vmul.f32 1.0, %v6670
    %v6672 = vmax.f32 %v6659, 0.0
    %vm6673 = vcmp.ne.f32.partialorder %v6659, %v6659
    %v6674 = vadd.f32 %v6659, 0.0
    %v6675 = vand.u32 2147483647, %v6659
    %v6676 = vsub.f32 0.0, %v6675
    %v6677 = vmul.f32 %v6676, 1.442695
    %v6678 = vpow.pop %v6677
    %v6679 = vadd.f32 %v6678, 1.0
    %v6680 = vlog2.pop %v6679
    %v6681 = vmul.f32 %v6680, 0.6931472
    %v6682 = vmul.f32 -0.5, %v6678
    %v6683 = vadd.f32 %v6682, 1.0
    %v6684 = vmul.f32 %v6683, %v6678
    %v6685 = vand.u32 2147483647, %v6678
    %vm6686 = vcmp.lt.f32.partialorder %v6685, 0.0004427343
    %v6687 = vsel %vm6686, %v6684, %v6681
    %v6688 = vadd.f32 %v6672, %v6687
    %v6689 = vsel %vm6673, %v6674, %v6688
    %v6690 = vsel %vm6665, %v6671, %v6689
    %v6691 = vsel %vm6664, %v6659, %v6690
    %vm6692 = vcmask 23552
    %6693 = vst.msk [vmem:[%s5] sm:$0xff] %vm6692, %v6691
    %vm6694 = vcmp.ne.f32.partialorder %v6579, %v6579
    %v6695 = vsel %vm6694, 1.0, 0.0
    %v6696 = vsel %vm228, %v6695, -inf
    %6697 = vmax.xlane.f32.xlu0 %v6696
    %v6698 = vpop.xlane.xlu0 %6697
    %v6699 = vrot.slane %v6698, 4
    %v6700 = vmax.f32 %v6698, %v6699
    %v6701 = vrot.slane %v6700, 2
    %v6702 = vmax.f32 %v6700, %v6701
    %v6703 = vrot.slane %v6702, 1
    %v6704 = vmax.f32 %v6702, %v6703
    %vm6705 = vcmask 0
    %6706 = vst.msk [vmem:[#allocation8] sm:$0x1] %vm6705, %v6704
    // Predicated region
    $region26: #{model_forward.1} parent=1 // pred_check
      _
    $region27: #{model_forward.1} parent=1 // pred_check_branch
      %6708 = sbr.rel (0) target = $region29
    $region28: #{model_forward.1} parent=1 // pred_region
      _
    $region29: #{model_forward.1} parent=1 // pred_fallthru
      _
    // Predicated region
    $region30: #{model_forward.1} parent=1 // pred_check
      _
    $region31: #{model_forward.1} parent=1 // pred_check_branch
      %6710 = sbr.rel (0) target = $region33
    $region32: #{model_forward.1} parent=1 // pred_region
      %s6712 = ssub.s32 16, 16
      %6713 = vsyncadd [#allocation7], %s6712
      %s6715 = sshll.u32 [#allocation8], 4
      %s6716 = int_to_ptr.vmem [resolvable:$true] %s6715
      %6718 = dma.vmem_to_hbm [thread:$0]  %s6716, 16, %s6, [#allocation7]
    $region33: #{model_forward.1} parent=1 // pred_fallthru
      _
    // Predicated region
    $region34: #{model_forward.1} parent=1 // pred_check
      _
    $region35: #{model_forward.1} parent=1 // pred_check_branch
      %6720 = sbr.rel (0) target = $region37
    $region36: #{model_forward.1} parent=1 // pred_region
      _
    $region37: #{model_forward.1} parent=1 // pred_fallthru
      _
    // Predicated region
    $region38: #{model_forward.1} parent=1 // pred_check
      _
    $region39: #{model_forward.1} parent=1 // pred_check_branch
      %6722 = sbr.rel (0) target = $region41
    $region40: #{model_forward.1} parent=1 // pred_region
      %6723 = dma.done [#allocation7], 16
    $region41: #{model_forward.1} parent=1 // pred_fallthru
      _
    %6724 = vsyncpa [#allocation6], 1
    %6725 = vsyncpa [#allocation7], 1

</llo_original>
